<compile_context>
chip_gen: v6e
topology: v6e:2x2x1
jax: 0.10.0
libtpu: 0.0.40
codegen_flags: <defaults>
</compile_context>

<pallas_src>
import numpy as np
import jax
import jax.numpy as jnp
from jax import lax
from jax.experimental import pallas as pl
from jax.experimental.pallas import tpu as pltpu

F32 = jnp.float32
BF16 = jnp.bfloat16

# flat-spatial widths (the input row stride 32 is kept through the conv stack)
C1_W = 892   # conv1 out: lane = 32*oy + ox,     oy, ox < 28
P1_W = 859   # pool1 out: lane = 64*py + 2*px,   py, px < 14
C2_W = 595   # conv2 out: lane = 64*oy + 2*ox,   oy, ox < 10
P2_W = 529   # pool2 out: lane = 128*py + 4*px,  py, px < 5


# ------------------------------ fused kernel -------------------------------

def _lenet_kernel(x_ref, w1_ref, b1_ref, w2_ref, b2_ref, wbig_ref, fc1b_ref,
                  fc2w_ref, fc2b_ref, fc3w_ref, fc3b_ref,
                  out_ref, im1_s, im2_s):
    # ---- im2col for conv1: tap (i, j) -> sublane rows 8k..8k+7 (k = 5i+j) --
    # x_ref is (8, 1024): 3 real channels + 5 zero rows, so each tap store is
    # a full aligned (8, C1_W) tile write; zero rows match zero weight cols.
    for i in range(5):
        for j in range(5):
            k = 5 * i + j
            s = 32 * i + j
            im1_s[8 * k:8 * k + 8, :] = x_ref[:, s:s + C1_W]

    # ---- conv1: one MXU matmul (bf16 operands, f32 acc) + bias + ReLU ------
    a1 = jnp.dot(w1_ref[...], im1_s[...].astype(BF16),
                 preferred_element_type=F32)                     # (8, 892)
    r1 = jnp.maximum(a1 + b1_ref[...], 0.0)                      # rows 6,7 == 0

    # ---- pool1: 2x2 / stride 2 = 3 lane-shifted maxes (VPU, f32) -----------
    p1 = jnp.maximum(jnp.maximum(r1[:, 0:P1_W], r1[:, 1:P1_W + 1]),
                     jnp.maximum(r1[:, 32:32 + P1_W], r1[:, 33:33 + P1_W]))

    # ---- im2col for conv2 ---------------------------------------------------
    for i in range(5):
        for j in range(5):
            k = 5 * i + j
            s = 64 * i + 2 * j
            im2_s[8 * k:8 * k + 8, :] = p1[:, s:s + C2_W]

    # ---- conv2 + bias + ReLU ------------------------------------------------
    a2 = jnp.dot(w2_ref[...], im2_s[...].astype(BF16),
                 preferred_element_type=F32)                     # (16, 595)
    r2 = jnp.maximum(a2 + b2_ref[...], 0.0)

    # ---- pool2 --------------------------------------------------------------
    p2 = jnp.maximum(jnp.maximum(r2[:, 0:P2_W], r2[:, 2:2 + P2_W]),
                     jnp.maximum(r2[:, 64:64 + P2_W], r2[:, 66:66 + P2_W]))

    # ---- fused (lane selection + torch.flatten + fc1) as ONE matmul --------
    # Wbig[q, 128*c + n] = fc1_w[n, 25*c + 5*py + px] for valid q = 128*py+4*px
    # and zero elsewhere, so invalid p2 lanes (finite garbage) are masked out.
    hblk = jnp.dot(p2.astype(BF16), wbig_ref[...],
                   preferred_element_type=F32)                   # (16, 2048)
    h = fc1b_ref[...]                                            # (1, 128)
    for c in range(16):                      # sum the 16 lane-aligned blocks
        h = h + hblk[c:c + 1, 128 * c:128 * (c + 1)]
    h = jnp.maximum(h, 0.0)

    # ---- fc2 + ReLU, fc3 (128-lane padded; pad lanes stay exactly zero) ----
    h = jnp.maximum(jnp.dot(h.astype(BF16), fc2w_ref[...],
                            preferred_element_type=F32) + fc2b_ref[...], 0.0)
    o = jnp.dot(h.astype(BF16), fc3w_ref[...],
                preferred_element_type=F32) + fc3b_ref[...]
    out_ref[...] = o                                  # lane-dense (1, 128) store


# ------------------------------- wrapper ------------------------------------

def net_forward(kparams, x_nchw):
    """x_nchw: (B, 3, 32, 32) -> (B, 3) logits.

    B == 1 matches the PyTorch module exactly (torch.flatten collapses the
    batch dim, so the original Net only admits one image); B > 1 applies the
    same per-image network over a "parallel" batch grid axis.
    """
    B = x_nchw.shape[0]
    assert x_nchw.shape[1:] == (3, 32, 32)
    x = x_nchw.reshape(B, 3, 1024).astype(F32)
    x = jnp.pad(x, ((0, 0), (0, 5), (0, 0)))          # (B, 8, 1024), rows 3..7 = 0

    const = lambda b: (0, 0)                          # weights: resident across grid
    in_specs = [
        pl.BlockSpec((None, 8, 1024), lambda b: (b, 0, 0)),   # image b
        pl.BlockSpec((8, 200), const),                        # conv1 weight (bf16)
        pl.BlockSpec((8, 1), const),                          # conv1 bias   (f32)
        pl.BlockSpec((16, 200), const),                       # conv2 weight (bf16)
        pl.BlockSpec((16, 1), const),                         # conv2 bias   (f32)
        pl.BlockSpec((529, 2048), const),                     # fused sel+fc1 (bf16)
        pl.BlockSpec((1, 128), const),                        # fc1 bias     (f32)
        pl.BlockSpec((128, 128), const),                      # fc2 weight   (bf16)
        pl.BlockSpec((1, 128), const),                        # fc2 bias     (f32)
        pl.BlockSpec((128, 128), const),                      # fc3 weight   (bf16)
        pl.BlockSpec((1, 128), const),                        # fc3 bias     (f32)
    ]

    flops_per_img = 2 * (8 * 200 * C1_W + 16 * 200 * C2_W + 16 * 529 * 2048
                         + 128 * 128 + 128 * 128)
    weight_bytes = sum(int(v.size) * v.dtype.itemsize for v in kparams.values())
    cost = pl.CostEstimate(flops=B * flops_per_img, transcendentals=0,
                           bytes_accessed=weight_bytes + B * (8 * 1024 * 4 + 512))

    out = pl.pallas_call(
        _lenet_kernel,
        grid=(B,),
        in_specs=in_specs,
        out_specs=pl.BlockSpec((None, 1, 128), lambda b: (b, 0, 0)),
        out_shape=jax.ShapeDtypeStruct((B, 1, 128), F32),
        scratch_shapes=[
            pltpu.VMEM((200, C1_W), F32),    # conv1 im2col (25 taps x 8 rows)
            pltpu.VMEM((200, C2_W), F32),    # conv2 im2col
        ],
        compiler_params=pltpu.CompilerParams(
            dimension_semantics=("parallel",)),
        cost_estimate=cost,
    )(x, kparams["w1p"], kparams["b1"], kparams["w2p"], kparams["b2"],
      kparams["wbig"], kparams["fc1b"], kparams["fc2w"], kparams["fc2b"],
      kparams["fc3w"], kparams["fc3b"])
    return out[:, 0, :3]


# ------------------------------ parameters ----------------------------------

def init_params(key):
    """PyTorch-default-like (uniform +/- 1/sqrt(fan_in)) raw parameters."""
    def uinit(k, shape, fan_in):
        bound = 1.0 / (fan_in ** 0.5)
        return jax.random.uniform(k, shape, F32, -bound, bound)

    ks = jax.random.split(key, 10)
    return {
        "conv1_w": uinit(ks[0], (6, 3, 5, 5), 3 * 25),
        "conv1_b": uinit(ks[1], (6,), 3 * 25),
        "conv2_w": uinit(ks[2], (16, 6, 5, 5), 6 * 25),
        "conv2_b": uinit(ks[3], (16,), 6 * 25),
        "fc1_w": uinit(ks[4], (120, 400), 400),
        "fc1_b": uinit(ks[5], (120,), 400),
        "fc2_w": uinit(ks[6], (84, 120), 120),
        "fc2_b": uinit(ks[7], (84,), 120),
        "fc3_w": uinit(ks[8], (3, 84), 84),
        "fc3_b": uinit(ks[9], (3,), 84),
    }


def pack_params(raw):
    """One-time repack of PyTorch-layout weights into the kernel layout."""
    # Conv weights -> (out, 8*(5i+j)+c), channel dim zero-padded to 8; conv1's
    # output dim also padded 6 -> 8 so its ReLU/pool rows stay exactly zero.
    w1 = jnp.transpose(raw["conv1_w"], (0, 2, 3, 1))                  # (6,5,5,3)
    w1p = jnp.pad(w1, ((0, 2), (0, 0), (0, 0), (0, 5))).reshape(8, 200)
    b1 = jnp.pad(raw["conv1_b"], (0, 2)).reshape(8, 1)
    w2 = jnp.transpose(raw["conv2_w"], (0, 2, 3, 1))                  # (16,5,5,6)
    w2p = jnp.pad(w2, ((0, 0), (0, 0), (0, 0), (0, 2))).reshape(16, 200)
    b2 = raw["conv2_b"].reshape(16, 1)

    # Fused lane-selection + torch.flatten + fc1 weight (block-diagonal over
    # the 16 conv2 channels): Wbig[q, 128*c + n] = fc1_w[n, 25*c + 5*py + px]
    # for valid q = 128*py + 4*px (py, px < 5), zero elsewhere.
    sel = np.zeros((P2_W, 25), np.float32)
    for py in range(5):
        for px in range(5):
            sel[128 * py + 4 * px, 5 * py + px] = 1.0
    fc1 = np.asarray(raw["fc1_w"], np.float32).reshape(120, 16, 25)   # [n, c, r]
    blocks = [np.pad(sel @ fc1[:, c, :].T, ((0, 0), (0, 8)))          # (529, 128)
              for c in range(16)]
    wbig = jnp.asarray(np.concatenate(blocks, axis=1))                # (529, 2048)

    fc2w = jnp.pad(raw["fc2_w"].T, ((0, 8), (0, 44)))                 # (128, 128)
    fc3w = jnp.pad(raw["fc3_w"].T, ((0, 44), (0, 125)))               # (128, 128)

    return {
        "w1p": w1p.astype(BF16), "b1": b1.astype(F32),
        "w2p": w2p.astype(BF16), "b2": b2.astype(F32),
        "wbig": wbig.astype(BF16),
        "fc1b": jnp.pad(raw["fc1_b"], (0, 8)).reshape(1, 128).astype(F32),
        "fc2w": fc2w.astype(BF16),
        "fc2b": jnp.pad(raw["fc2_b"], (0, 44)).reshape(1, 128).astype(F32),
        "fc3w": fc3w.astype(BF16),
        "fc3b": jnp.pad(raw["fc3_b"], (0, 125)).reshape(1, 128).astype(F32),
    }


# -------------------------- plain-XLA reference -----------------------------

def reference_forward(raw, x_nchw):
    """Float32 HIGHEST-precision reference for one (1,3,32,32) image -> (3,)."""
    hp = lax.Precision.HIGHEST
    y = lax.conv_general_dilated(
        x_nchw, raw["conv1_w"], (1, 1), "VALID",
        dimension_numbers=("NCHW", "OIHW", "NCHW"), precision=hp)
    y = jnp.maximum(y + raw["conv1_b"][None, :, None, None], 0.0)
    y = y.reshape(1, 6, 14, 2, 14, 2).max(axis=(3, 5))
    y = lax.conv_general_dilated(
        y, raw["conv2_w"], (1, 1), "VALID",
        dimension_numbers=("NCHW", "OIHW", "NCHW"), precision=hp)
    y = jnp.maximum(y + raw["conv2_b"][None, :, None, None], 0.0)
    y = y.reshape(1, 16, 5, 2, 5, 2).max(axis=(3, 5))
    f = y.reshape(-1)                                                 # (400,)
    h = jnp.maximum(jnp.dot(raw["fc1_w"], f, precision=hp) + raw["fc1_b"], 0.0)
    h = jnp.maximum(jnp.dot(raw["fc2_w"], h, precision=hp) + raw["fc2_b"], 0.0)
    return jnp.dot(raw["fc3_w"], h, precision=hp) + raw["fc3_b"]


# ---------------------------------- main -------------------------------------

if __name__ == "__main__":
    key = jax.random.PRNGKey(0)
    pkey, xkey, bkey = jax.random.split(key, 3)
    raw = init_params(pkey)
    kparams = pack_params(raw)

    fwd = jax.jit(net_forward)

    # 1) Exact module semantics: torch.flatten(x) collapses the batch dim, so
    #    the original Net only admits a single (1, 3, 32, 32) image.
    x1 = jax.random.normal(xkey, (1, 3, 32, 32), dtype=jnp.float32)
    out1 = jax.block_until_ready(fwd(kparams, x1))
    assert out1.shape == (1, 3) and out1.dtype == jnp.float32
    ref1 = reference_forward(raw, x1)
    assert jnp.allclose(out1[0], ref1, rtol=2e-2, atol=2e-2), (out1, ref1)

    # 2) Batched path exercising the "parallel" batch grid axis (v7x 2nd core).
    # TODO(synk): batch>1 deviates from the literal torch.flatten(x) (which
    # would break fc1); it applies the standard per-image LeNet forward.
    xb = jax.random.normal(bkey, (4, 3, 32, 32), dtype=jnp.float32)
    outb = jax.block_until_ready(fwd(kparams, xb))
    refb = jnp.stack([reference_forward(raw, xb[i:i + 1]) for i in range(4)])
    assert outb.shape == (4, 3)
    assert jnp.allclose(outb, refb, rtol=2e-2, atol=2e-2), (outb, refb)

    print("KERNEL_OK")
</pallas_src>

<mosaic_0001>
module attributes {stable_mosaic.version = 11 : i64} {
  func.func @_lenet_kernel(%arg0: i32, %arg1: memref<1x8x1024xf32, #tpu.memory_space<vmem>>, %arg2: memref<8x200xbf16, #tpu.memory_space<vmem>>, %arg3: memref<8x1xf32, #tpu.memory_space<vmem>>, %arg4: memref<16x200xbf16, #tpu.memory_space<vmem>>, %arg5: memref<16x1xf32, #tpu.memory_space<vmem>>, %arg6: memref<529x2048xbf16, #tpu.memory_space<vmem>>, %arg7: memref<1x128xf32, #tpu.memory_space<vmem>>, %arg8: memref<128x128xbf16, #tpu.memory_space<vmem>>, %arg9: memref<1x128xf32, #tpu.memory_space<vmem>>, %arg10: memref<128x128xbf16, #tpu.memory_space<vmem>>, %arg11: memref<1x128xf32, #tpu.memory_space<vmem>>, %arg12: memref<1x1x128xf32, #tpu.memory_space<vmem>>, %arg13: memref<200x892xf32, #tpu.memory_space<vmem>>, %arg14: memref<200x595xf32, #tpu.memory_space<vmem>>) attributes {dimension_semantics = [#tpu.dimension_semantics<parallel>], iteration_bounds = array<i64: 1>, scalar_prefetch = 0 : i64, scratch_operands = 2 : i64, tpu.core_type = #tpu.core_type<tc>, window_params = [{transform_indices = @transform_0, window_bounds = array<i64: 1, 8, 1024>}, {pipeline_mode = #tpu.pipeline_mode<synchronous>, transform_indices = @transform_1, window_bounds = array<i64: 8, 200>}, {pipeline_mode = #tpu.pipeline_mode<synchronous>, transform_indices = @transform_2, window_bounds = array<i64: 8, 1>}, {pipeline_mode = #tpu.pipeline_mode<synchronous>, transform_indices = @transform_3, window_bounds = array<i64: 16, 200>}, {pipeline_mode = #tpu.pipeline_mode<synchronous>, transform_indices = @transform_4, window_bounds = array<i64: 16, 1>}, {pipeline_mode = #tpu.pipeline_mode<synchronous>, transform_indices = @transform_5, window_bounds = array<i64: 529, 2048>}, {pipeline_mode = #tpu.pipeline_mode<synchronous>, transform_indices = @transform_6, window_bounds = array<i64: 1, 128>}, {pipeline_mode = #tpu.pipeline_mode<synchronous>, transform_indices = @transform_7, window_bounds = array<i64: 128, 128>}, {pipeline_mode = #tpu.pipeline_mode<synchronous>, transform_indices = @transform_8, window_bounds = array<i64: 1, 128>}, {pipeline_mode = #tpu.pipeline_mode<synchronous>, transform_indices = @transform_9, window_bounds = array<i64: 128, 128>}, {pipeline_mode = #tpu.pipeline_mode<synchronous>, transform_indices = @transform_10, window_bounds = array<i64: 1, 128>}, {transform_indices = @transform_11, window_bounds = array<i64: 1, 1, 128>}]} {
    %c0 = arith.constant 0 : index
    %c0_0 = arith.constant 0 : index
    %c0_1 = arith.constant 0 : index
    %0 = vector.load %arg1[%c0, %c0_0, %c0_1] : memref<1x8x1024xf32, #tpu.memory_space<vmem>>, vector<1x8x892xf32>
    %1 = vector.shape_cast %0 : vector<1x8x892xf32> to vector<8x892xf32>
    %c0_2 = arith.constant 0 : index
    %c0_3 = arith.constant 0 : index
    %2 = vector.load %arg13[%c0_2, %c0_3] : memref<200x892xf32, #tpu.memory_space<vmem>>, vector<8x892xf32>
    tpu.vector_store %arg13[%c0_2, %c0_3], %1 {strides = array<i32>} : memref<200x892xf32, #tpu.memory_space<vmem>>, vector<8x892xf32>,
    %c0_4 = arith.constant 0 : index
    %c0_5 = arith.constant 0 : index
    %c1 = arith.constant 1 : index
    %3 = vector.load %arg1[%c0_4, %c0_5, %c1] : memref<1x8x1024xf32, #tpu.memory_space<vmem>>, vector<1x8x892xf32>
    %4 = vector.shape_cast %3 : vector<1x8x892xf32> to vector<8x892xf32>
    %c8 = arith.constant 8 : index
    %c0_6 = arith.constant 0 : index
    %5 = vector.load %arg13[%c8, %c0_6] : memref<200x892xf32, #tpu.memory_space<vmem>>, vector<8x892xf32>
    tpu.vector_store %arg13[%c8, %c0_6], %4 {strides = array<i32>} : memref<200x892xf32, #tpu.memory_space<vmem>>, vector<8x892xf32>,
    %c0_7 = arith.constant 0 : index
    %c0_8 = arith.constant 0 : index
    %c2 = arith.constant 2 : index
    %6 = vector.load %arg1[%c0_7, %c0_8, %c2] : memref<1x8x1024xf32, #tpu.memory_space<vmem>>, vector<1x8x892xf32>
    %7 = vector.shape_cast %6 : vector<1x8x892xf32> to vector<8x892xf32>
    %c16 = arith.constant 16 : index
    %c0_9 = arith.constant 0 : index
    %8 = vector.load %arg13[%c16, %c0_9] : memref<200x892xf32, #tpu.memory_space<vmem>>, vector<8x892xf32>
    tpu.vector_store %arg13[%c16, %c0_9], %7 {strides = array<i32>} : memref<200x892xf32, #tpu.memory_space<vmem>>, vector<8x892xf32>,
    %c0_10 = arith.constant 0 : index
    %c0_11 = arith.constant 0 : index
    %c3 = arith.constant 3 : index
    %9 = vector.load %arg1[%c0_10, %c0_11, %c3] : memref<1x8x1024xf32, #tpu.memory_space<vmem>>, vector<1x8x892xf32>
    %10 = vector.shape_cast %9 : vector<1x8x892xf32> to vector<8x892xf32>
    %c24 = arith.constant 24 : index
    %c0_12 = arith.constant 0 : index
    %11 = vector.load %arg13[%c24, %c0_12] : memref<200x892xf32, #tpu.memory_space<vmem>>, vector<8x892xf32>
    tpu.vector_store %arg13[%c24, %c0_12], %10 {strides = array<i32>} : memref<200x892xf32, #tpu.memory_space<vmem>>, vector<8x892xf32>,
    %c0_13 = arith.constant 0 : index
    %c0_14 = arith.constant 0 : index
    %c4 = arith.constant 4 : index
    %12 = vector.load %arg1[%c0_13, %c0_14, %c4] : memref<1x8x1024xf32, #tpu.memory_space<vmem>>, vector<1x8x892xf32>
    %13 = vector.shape_cast %12 : vector<1x8x892xf32> to vector<8x892xf32>
    %c32 = arith.constant 32 : index
    %c0_15 = arith.constant 0 : index
    %14 = vector.load %arg13[%c32, %c0_15] : memref<200x892xf32, #tpu.memory_space<vmem>>, vector<8x892xf32>
    tpu.vector_store %arg13[%c32, %c0_15], %13 {strides = array<i32>} : memref<200x892xf32, #tpu.memory_space<vmem>>, vector<8x892xf32>,
    %c0_16 = arith.constant 0 : index
    %c0_17 = arith.constant 0 : index
    %c32_18 = arith.constant 32 : index
    %15 = vector.load %arg1[%c0_16, %c0_17, %c32_18] : memref<1x8x1024xf32, #tpu.memory_space<vmem>>, vector<1x8x892xf32>
    %16 = vector.shape_cast %15 : vector<1x8x892xf32> to vector<8x892xf32>
    %c40 = arith.constant 40 : index
    %c0_19 = arith.constant 0 : index
    %17 = vector.load %arg13[%c40, %c0_19] : memref<200x892xf32, #tpu.memory_space<vmem>>, vector<8x892xf32>
    tpu.vector_store %arg13[%c40, %c0_19], %16 {strides = array<i32>} : memref<200x892xf32, #tpu.memory_space<vmem>>, vector<8x892xf32>,
    %c0_20 = arith.constant 0 : index
    %c0_21 = arith.constant 0 : index
    %c33 = arith.constant 33 : index
    %18 = vector.load %arg1[%c0_20, %c0_21, %c33] : memref<1x8x1024xf32, #tpu.memory_space<vmem>>, vector<1x8x892xf32>
    %19 = vector.shape_cast %18 : vector<1x8x892xf32> to vector<8x892xf32>
    %c48 = arith.constant 48 : index
    %c0_22 = arith.constant 0 : index
    %20 = vector.load %arg13[%c48, %c0_22] : memref<200x892xf32, #tpu.memory_space<vmem>>, vector<8x892xf32>
    tpu.vector_store %arg13[%c48, %c0_22], %19 {strides = array<i32>} : memref<200x892xf32, #tpu.memory_space<vmem>>, vector<8x892xf32>,
    %c0_23 = arith.constant 0 : index
    %c0_24 = arith.constant 0 : index
    %c34 = arith.constant 34 : index
    %21 = vector.load %arg1[%c0_23, %c0_24, %c34] : memref<1x8x1024xf32, #tpu.memory_space<vmem>>, vector<1x8x892xf32>
    %22 = vector.shape_cast %21 : vector<1x8x892xf32> to vector<8x892xf32>
    %c56 = arith.constant 56 : index
    %c0_25 = arith.constant 0 : index
    %23 = vector.load %arg13[%c56, %c0_25] : memref<200x892xf32, #tpu.memory_space<vmem>>, vector<8x892xf32>
    tpu.vector_store %arg13[%c56, %c0_25], %22 {strides = array<i32>} : memref<200x892xf32, #tpu.memory_space<vmem>>, vector<8x892xf32>,
    %c0_26 = arith.constant 0 : index
    %c0_27 = arith.constant 0 : index
    %c35 = arith.constant 35 : index
    %24 = vector.load %arg1[%c0_26, %c0_27, %c35] : memref<1x8x1024xf32, #tpu.memory_space<vmem>>, vector<1x8x892xf32>
    %25 = vector.shape_cast %24 : vector<1x8x892xf32> to vector<8x892xf32>
    %c64 = arith.constant 64 : index
    %c0_28 = arith.constant 0 : index
    %26 = vector.load %arg13[%c64, %c0_28] : memref<200x892xf32, #tpu.memory_space<vmem>>, vector<8x892xf32>
    tpu.vector_store %arg13[%c64, %c0_28], %25 {strides = array<i32>} : memref<200x892xf32, #tpu.memory_space<vmem>>, vector<8x892xf32>,
    %c0_29 = arith.constant 0 : index
    %c0_30 = arith.constant 0 : index
    %c36 = arith.constant 36 : index
    %27 = vector.load %arg1[%c0_29, %c0_30, %c36] : memref<1x8x1024xf32, #tpu.memory_space<vmem>>, vector<1x8x892xf32>
    %28 = vector.shape_cast %27 : vector<1x8x892xf32> to vector<8x892xf32>
    %c72 = arith.constant 72 : index
    %c0_31 = arith.constant 0 : index
    %29 = vector.load %arg13[%c72, %c0_31] : memref<200x892xf32, #tpu.memory_space<vmem>>, vector<8x892xf32>
    tpu.vector_store %arg13[%c72, %c0_31], %28 {strides = array<i32>} : memref<200x892xf32, #tpu.memory_space<vmem>>, vector<8x892xf32>,
    %c0_32 = arith.constant 0 : index
    %c0_33 = arith.constant 0 : index
    %c64_34 = arith.constant 64 : index
    %30 = vector.load %arg1[%c0_32, %c0_33, %c64_34] : memref<1x8x1024xf32, #tpu.memory_space<vmem>>, vector<1x8x892xf32>
    %31 = vector.shape_cast %30 : vector<1x8x892xf32> to vector<8x892xf32>
    %c80 = arith.constant 80 : index
    %c0_35 = arith.constant 0 : index
    %32 = vector.load %arg13[%c80, %c0_35] : memref<200x892xf32, #tpu.memory_space<vmem>>, vector<8x892xf32>
    tpu.vector_store %arg13[%c80, %c0_35], %31 {strides = array<i32>} : memref<200x892xf32, #tpu.memory_space<vmem>>, vector<8x892xf32>,
    %c0_36 = arith.constant 0 : index
    %c0_37 = arith.constant 0 : index
    %c65 = arith.constant 65 : index
    %33 = vector.load %arg1[%c0_36, %c0_37, %c65] : memref<1x8x1024xf32, #tpu.memory_space<vmem>>, vector<1x8x892xf32>
    %34 = vector.shape_cast %33 : vector<1x8x892xf32> to vector<8x892xf32>
    %c88 = arith.constant 88 : index
    %c0_38 = arith.constant 0 : index
    %35 = vector.load %arg13[%c88, %c0_38] : memref<200x892xf32, #tpu.memory_space<vmem>>, vector<8x892xf32>
    tpu.vector_store %arg13[%c88, %c0_38], %34 {strides = array<i32>} : memref<200x892xf32, #tpu.memory_space<vmem>>, vector<8x892xf32>,
    %c0_39 = arith.constant 0 : index
    %c0_40 = arith.constant 0 : index
    %c66 = arith.constant 66 : index
    %36 = vector.load %arg1[%c0_39, %c0_40, %c66] : memref<1x8x1024xf32, #tpu.memory_space<vmem>>, vector<1x8x892xf32>
    %37 = vector.shape_cast %36 : vector<1x8x892xf32> to vector<8x892xf32>
    %c96 = arith.constant 96 : index
    %c0_41 = arith.constant 0 : index
    %38 = vector.load %arg13[%c96, %c0_41] : memref<200x892xf32, #tpu.memory_space<vmem>>, vector<8x892xf32>
    tpu.vector_store %arg13[%c96, %c0_41], %37 {strides = array<i32>} : memref<200x892xf32, #tpu.memory_space<vmem>>, vector<8x892xf32>,
    %c0_42 = arith.constant 0 : index
    %c0_43 = arith.constant 0 : index
    %c67 = arith.constant 67 : index
    %39 = vector.load %arg1[%c0_42, %c0_43, %c67] : memref<1x8x1024xf32, #tpu.memory_space<vmem>>, vector<1x8x892xf32>
    %40 = vector.shape_cast %39 : vector<1x8x892xf32> to vector<8x892xf32>
    %c104 = arith.constant 104 : index
    %c0_44 = arith.constant 0 : index
    %41 = vector.load %arg13[%c104, %c0_44] : memref<200x892xf32, #tpu.memory_space<vmem>>, vector<8x892xf32>
    tpu.vector_store %arg13[%c104, %c0_44], %40 {strides = array<i32>} : memref<200x892xf32, #tpu.memory_space<vmem>>, vector<8x892xf32>,
    %c0_45 = arith.constant 0 : index
    %c0_46 = arith.constant 0 : index
    %c68 = arith.constant 68 : index
    %42 = vector.load %arg1[%c0_45, %c0_46, %c68] : memref<1x8x1024xf32, #tpu.memory_space<vmem>>, vector<1x8x892xf32>
    %43 = vector.shape_cast %42 : vector<1x8x892xf32> to vector<8x892xf32>
    %c112 = arith.constant 112 : index
    %c0_47 = arith.constant 0 : index
    %44 = vector.load %arg13[%c112, %c0_47] : memref<200x892xf32, #tpu.memory_space<vmem>>, vector<8x892xf32>
    tpu.vector_store %arg13[%c112, %c0_47], %43 {strides = array<i32>} : memref<200x892xf32, #tpu.memory_space<vmem>>, vector<8x892xf32>,
    %c0_48 = arith.constant 0 : index
    %c0_49 = arith.constant 0 : index
    %c96_50 = arith.constant 96 : index
    %45 = vector.load %arg1[%c0_48, %c0_49, %c96_50] : memref<1x8x1024xf32, #tpu.memory_space<vmem>>, vector<1x8x892xf32>
    %46 = vector.shape_cast %45 : vector<1x8x892xf32> to vector<8x892xf32>
    %c120 = arith.constant 120 : index
    %c0_51 = arith.constant 0 : index
    %47 = vector.load %arg13[%c120, %c0_51] : memref<200x892xf32, #tpu.memory_space<vmem>>, vector<8x892xf32>
    tpu.vector_store %arg13[%c120, %c0_51], %46 {strides = array<i32>} : memref<200x892xf32, #tpu.memory_space<vmem>>, vector<8x892xf32>,
    %c0_52 = arith.constant 0 : index
    %c0_53 = arith.constant 0 : index
    %c97 = arith.constant 97 : index
    %48 = vector.load %arg1[%c0_52, %c0_53, %c97] : memref<1x8x1024xf32, #tpu.memory_space<vmem>>, vector<1x8x892xf32>
    %49 = vector.shape_cast %48 : vector<1x8x892xf32> to vector<8x892xf32>
    %c128 = arith.constant 128 : index
    %c0_54 = arith.constant 0 : index
    %50 = vector.load %arg13[%c128, %c0_54] : memref<200x892xf32, #tpu.memory_space<vmem>>, vector<8x892xf32>
    tpu.vector_store %arg13[%c128, %c0_54], %49 {strides = array<i32>} : memref<200x892xf32, #tpu.memory_space<vmem>>, vector<8x892xf32>,
    %c0_55 = arith.constant 0 : index
    %c0_56 = arith.constant 0 : index
    %c98 = arith.constant 98 : index
    %51 = vector.load %arg1[%c0_55, %c0_56, %c98] : memref<1x8x1024xf32, #tpu.memory_space<vmem>>, vector<1x8x892xf32>
    %52 = vector.shape_cast %51 : vector<1x8x892xf32> to vector<8x892xf32>
    %c136 = arith.constant 136 : index
    %c0_57 = arith.constant 0 : index
    %53 = vector.load %arg13[%c136, %c0_57] : memref<200x892xf32, #tpu.memory_space<vmem>>, vector<8x892xf32>
    tpu.vector_store %arg13[%c136, %c0_57], %52 {strides = array<i32>} : memref<200x892xf32, #tpu.memory_space<vmem>>, vector<8x892xf32>,
    %c0_58 = arith.constant 0 : index
    %c0_59 = arith.constant 0 : index
    %c99 = arith.constant 99 : index
    %54 = vector.load %arg1[%c0_58, %c0_59, %c99] : memref<1x8x1024xf32, #tpu.memory_space<vmem>>, vector<1x8x892xf32>
    %55 = vector.shape_cast %54 : vector<1x8x892xf32> to vector<8x892xf32>
    %c144 = arith.constant 144 : index
    %c0_60 = arith.constant 0 : index
    %56 = vector.load %arg13[%c144, %c0_60] : memref<200x892xf32, #tpu.memory_space<vmem>>, vector<8x892xf32>
    tpu.vector_store %arg13[%c144, %c0_60], %55 {strides = array<i32>} : memref<200x892xf32, #tpu.memory_space<vmem>>, vector<8x892xf32>,
    %c0_61 = arith.constant 0 : index
    %c0_62 = arith.constant 0 : index
    %c100 = arith.constant 100 : index
    %57 = vector.load %arg1[%c0_61, %c0_62, %c100] : memref<1x8x1024xf32, #tpu.memory_space<vmem>>, vector<1x8x892xf32>
    %58 = vector.shape_cast %57 : vector<1x8x892xf32> to vector<8x892xf32>
    %c152 = arith.constant 152 : index
    %c0_63 = arith.constant 0 : index
    %59 = vector.load %arg13[%c152, %c0_63] : memref<200x892xf32, #tpu.memory_space<vmem>>, vector<8x892xf32>
    tpu.vector_store %arg13[%c152, %c0_63], %58 {strides = array<i32>} : memref<200x892xf32, #tpu.memory_space<vmem>>, vector<8x892xf32>,
    %c0_64 = arith.constant 0 : index
    %c0_65 = arith.constant 0 : index
    %c128_66 = arith.constant 128 : index
    %60 = vector.load %arg1[%c0_64, %c0_65, %c128_66] : memref<1x8x1024xf32, #tpu.memory_space<vmem>>, vector<1x8x892xf32>
    %61 = vector.shape_cast %60 : vector<1x8x892xf32> to vector<8x892xf32>
    %c160 = arith.constant 160 : index
    %c0_67 = arith.constant 0 : index
    %62 = vector.load %arg13[%c160, %c0_67] : memref<200x892xf32, #tpu.memory_space<vmem>>, vector<8x892xf32>
    tpu.vector_store %arg13[%c160, %c0_67], %61 {strides = array<i32>} : memref<200x892xf32, #tpu.memory_space<vmem>>, vector<8x892xf32>,
    %c0_68 = arith.constant 0 : index
    %c0_69 = arith.constant 0 : index
    %c129 = arith.constant 129 : index
    %63 = vector.load %arg1[%c0_68, %c0_69, %c129] : memref<1x8x1024xf32, #tpu.memory_space<vmem>>, vector<1x8x892xf32>
    %64 = vector.shape_cast %63 : vector<1x8x892xf32> to vector<8x892xf32>
    %c168 = arith.constant 168 : index
    %c0_70 = arith.constant 0 : index
    %65 = vector.load %arg13[%c168, %c0_70] : memref<200x892xf32, #tpu.memory_space<vmem>>, vector<8x892xf32>
    tpu.vector_store %arg13[%c168, %c0_70], %64 {strides = array<i32>} : memref<200x892xf32, #tpu.memory_space<vmem>>, vector<8x892xf32>,
    %c0_71 = arith.constant 0 : index
    %c0_72 = arith.constant 0 : index
    %c130 = arith.constant 130 : index
    %66 = vector.load %arg1[%c0_71, %c0_72, %c130] : memref<1x8x1024xf32, #tpu.memory_space<vmem>>, vector<1x8x892xf32>
    %67 = vector.shape_cast %66 : vector<1x8x892xf32> to vector<8x892xf32>
    %c176 = arith.constant 176 : index
    %c0_73 = arith.constant 0 : index
    %68 = vector.load %arg13[%c176, %c0_73] : memref<200x892xf32, #tpu.memory_space<vmem>>, vector<8x892xf32>
    tpu.vector_store %arg13[%c176, %c0_73], %67 {strides = array<i32>} : memref<200x892xf32, #tpu.memory_space<vmem>>, vector<8x892xf32>,
    %c0_74 = arith.constant 0 : index
    %c0_75 = arith.constant 0 : index
    %c131 = arith.constant 131 : index
    %69 = vector.load %arg1[%c0_74, %c0_75, %c131] : memref<1x8x1024xf32, #tpu.memory_space<vmem>>, vector<1x8x892xf32>
    %70 = vector.shape_cast %69 : vector<1x8x892xf32> to vector<8x892xf32>
    %c184 = arith.constant 184 : index
    %c0_76 = arith.constant 0 : index
    %71 = vector.load %arg13[%c184, %c0_76] : memref<200x892xf32, #tpu.memory_space<vmem>>, vector<8x892xf32>
    tpu.vector_store %arg13[%c184, %c0_76], %70 {strides = array<i32>} : memref<200x892xf32, #tpu.memory_space<vmem>>, vector<8x892xf32>,
    %c0_77 = arith.constant 0 : index
    %c0_78 = arith.constant 0 : index
    %c132 = arith.constant 132 : index
    %72 = vector.load %arg1[%c0_77, %c0_78, %c132] : memref<1x8x1024xf32, #tpu.memory_space<vmem>>, vector<1x8x892xf32>
    %73 = vector.shape_cast %72 : vector<1x8x892xf32> to vector<8x892xf32>
    %c192 = arith.constant 192 : index
    %c0_79 = arith.constant 0 : index
    %74 = vector.load %arg13[%c192, %c0_79] : memref<200x892xf32, #tpu.memory_space<vmem>>, vector<8x892xf32>
    tpu.vector_store %arg13[%c192, %c0_79], %73 {strides = array<i32>} : memref<200x892xf32, #tpu.memory_space<vmem>>, vector<8x892xf32>,
    %c0_80 = arith.constant 0 : index
    %c0_81 = arith.constant 0 : index
    %75 = vector.load %arg2[%c0_80, %c0_81] : memref<8x200xbf16, #tpu.memory_space<vmem>>, vector<8x200xbf16>
    %c0_82 = arith.constant 0 : index
    %c0_83 = arith.constant 0 : index
    %76 = vector.load %arg13[%c0_82, %c0_83] : memref<200x892xf32, #tpu.memory_space<vmem>>, vector<200x892xf32>
    %77 = arith.truncf %76 : vector<200x892xf32> to vector<200x892xbf16>
    %cst = arith.constant dense<0.000000e+00> : vector<8x892xf32>
    %78 = tpu.matmul %75, %77, %cst {dimension_numbers = #tpu.dot_dimension_numbers<[1], [0], [0], [1], [0, 0, 1, 1], [], []>} : vector<8x200xbf16>, vector<200x892xbf16>, vector<8x892xf32> -> vector<8x892xf32>
    %c0_84 = arith.constant 0 : index
    %c0_85 = arith.constant 0 : index
    %79 = vector.load %arg3[%c0_84, %c0_85] : memref<8x1xf32, #tpu.memory_space<vmem>>, vector<8x1xf32>
    %80 = vector.broadcast %79 : vector<8x1xf32> to vector<8x892xf32>
    %81 = arith.addf %78, %80 : vector<8x892xf32>
    %cst_86 = arith.constant 0.000000e+00 : f32
    %82 = vector.broadcast %cst_86 : f32 to vector<8x892xf32>
    %83 = arith.maximumf %81, %82 : vector<8x892xf32>
    %84 = vector.extract_strided_slice %83 {offsets = [0, 0], sizes = [8, 859], strides = [1, 1]} : vector<8x892xf32> to vector<8x859xf32>
    %85 = vector.extract_strided_slice %83 {offsets = [0, 1], sizes = [8, 859], strides = [1, 1]} : vector<8x892xf32> to vector<8x859xf32>
    %86 = arith.maximumf %84, %85 : vector<8x859xf32>
    %87 = vector.extract_strided_slice %83 {offsets = [0, 32], sizes = [8, 859], strides = [1, 1]} : vector<8x892xf32> to vector<8x859xf32>
    %88 = vector.extract_strided_slice %83 {offsets = [0, 33], sizes = [8, 859], strides = [1, 1]} : vector<8x892xf32> to vector<8x859xf32>
    %89 = arith.maximumf %87, %88 : vector<8x859xf32>
    %90 = arith.maximumf %86, %89 : vector<8x859xf32>
    %91 = vector.extract_strided_slice %90 {offsets = [0, 0], sizes = [8, 595], strides = [1, 1]} : vector<8x859xf32> to vector<8x595xf32>
    %c0_87 = arith.constant 0 : index
    %c0_88 = arith.constant 0 : index
    %92 = vector.load %arg14[%c0_87, %c0_88] : memref<200x595xf32, #tpu.memory_space<vmem>>, vector<8x595xf32>
    tpu.vector_store %arg14[%c0_87, %c0_88], %91 {strides = array<i32>} : memref<200x595xf32, #tpu.memory_space<vmem>>, vector<8x595xf32>,
    %93 = vector.extract_strided_slice %90 {offsets = [0, 2], sizes = [8, 595], strides = [1, 1]} : vector<8x859xf32> to vector<8x595xf32>
    %c8_89 = arith.constant 8 : index
    %c0_90 = arith.constant 0 : index
    %94 = vector.load %arg14[%c8_89, %c0_90] : memref<200x595xf32, #tpu.memory_space<vmem>>, vector<8x595xf32>
    tpu.vector_store %arg14[%c8_89, %c0_90], %93 {strides = array<i32>} : memref<200x595xf32, #tpu.memory_space<vmem>>, vector<8x595xf32>,
    %95 = vector.extract_strided_slice %90 {offsets = [0, 4], sizes = [8, 595], strides = [1, 1]} : vector<8x859xf32> to vector<8x595xf32>
    %c16_91 = arith.constant 16 : index
    %c0_92 = arith.constant 0 : index
    %96 = vector.load %arg14[%c16_91, %c0_92] : memref<200x595xf32, #tpu.memory_space<vmem>>, vector<8x595xf32>
    tpu.vector_store %arg14[%c16_91, %c0_92], %95 {strides = array<i32>} : memref<200x595xf32, #tpu.memory_space<vmem>>, vector<8x595xf32>,
    %97 = vector.extract_strided_slice %90 {offsets = [0, 6], sizes = [8, 595], strides = [1, 1]} : vector<8x859xf32> to vector<8x595xf32>
    %c24_93 = arith.constant 24 : index
    %c0_94 = arith.constant 0 : index
    %98 = vector.load %arg14[%c24_93, %c0_94] : memref<200x595xf32, #tpu.memory_space<vmem>>, vector<8x595xf32>
    tpu.vector_store %arg14[%c24_93, %c0_94], %97 {strides = array<i32>} : memref<200x595xf32, #tpu.memory_space<vmem>>, vector<8x595xf32>,
    %99 = vector.extract_strided_slice %90 {offsets = [0, 8], sizes = [8, 595], strides = [1, 1]} : vector<8x859xf32> to vector<8x595xf32>
    %c32_95 = arith.constant 32 : index
    %c0_96 = arith.constant 0 : index
    %100 = vector.load %arg14[%c32_95, %c0_96] : memref<200x595xf32, #tpu.memory_space<vmem>>, vector<8x595xf32>
    tpu.vector_store %arg14[%c32_95, %c0_96], %99 {strides = array<i32>} : memref<200x595xf32, #tpu.memory_space<vmem>>, vector<8x595xf32>,
    %101 = vector.extract_strided_slice %90 {offsets = [0, 64], sizes = [8, 595], strides = [1, 1]} : vector<8x859xf32> to vector<8x595xf32>
    %c40_97 = arith.constant 40 : index
    %c0_98 = arith.constant 0 : index
    %102 = vector.load %arg14[%c40_97, %c0_98] : memref<200x595xf32, #tpu.memory_space<vmem>>, vector<8x595xf32>
    tpu.vector_store %arg14[%c40_97, %c0_98], %101 {strides = array<i32>} : memref<200x595xf32, #tpu.memory_space<vmem>>, vector<8x595xf32>,
    %103 = vector.extract_strided_slice %90 {offsets = [0, 66], sizes = [8, 595], strides = [1, 1]} : vector<8x859xf32> to vector<8x595xf32>
    %c48_99 = arith.constant 48 : index
    %c0_100 = arith.constant 0 : index
    %104 = vector.load %arg14[%c48_99, %c0_100] : memref<200x595xf32, #tpu.memory_space<vmem>>, vector<8x595xf32>
    tpu.vector_store %arg14[%c48_99, %c0_100], %103 {strides = array<i32>} : memref<200x595xf32, #tpu.memory_space<vmem>>, vector<8x595xf32>,
    %105 = vector.extract_strided_slice %90 {offsets = [0, 68], sizes = [8, 595], strides = [1, 1]} : vector<8x859xf32> to vector<8x595xf32>
    %c56_101 = arith.constant 56 : index
    %c0_102 = arith.constant 0 : index
    %106 = vector.load %arg14[%c56_101, %c0_102] : memref<200x595xf32, #tpu.memory_space<vmem>>, vector<8x595xf32>
    tpu.vector_store %arg14[%c56_101, %c0_102], %105 {strides = array<i32>} : memref<200x595xf32, #tpu.memory_space<vmem>>, vector<8x595xf32>,
    %107 = vector.extract_strided_slice %90 {offsets = [0, 70], sizes = [8, 595], strides = [1, 1]} : vector<8x859xf32> to vector<8x595xf32>
    %c64_103 = arith.constant 64 : index
    %c0_104 = arith.constant 0 : index
    %108 = vector.load %arg14[%c64_103, %c0_104] : memref<200x595xf32, #tpu.memory_space<vmem>>, vector<8x595xf32>
    tpu.vector_store %arg14[%c64_103, %c0_104], %107 {strides = array<i32>} : memref<200x595xf32, #tpu.memory_space<vmem>>, vector<8x595xf32>,
    %109 = vector.extract_strided_slice %90 {offsets = [0, 72], sizes = [8, 595], strides = [1, 1]} : vector<8x859xf32> to vector<8x595xf32>
    %c72_105 = arith.constant 72 : index
    %c0_106 = arith.constant 0 : index
    %110 = vector.load %arg14[%c72_105, %c0_106] : memref<200x595xf32, #tpu.memory_space<vmem>>, vector<8x595xf32>
    tpu.vector_store %arg14[%c72_105, %c0_106], %109 {strides = array<i32>} : memref<200x595xf32, #tpu.memory_space<vmem>>, vector<8x595xf32>,
    %111 = vector.extract_strided_slice %90 {offsets = [0, 128], sizes = [8, 595], strides = [1, 1]} : vector<8x859xf32> to vector<8x595xf32>
    %c80_107 = arith.constant 80 : index
    %c0_108 = arith.constant 0 : index
    %112 = vector.load %arg14[%c80_107, %c0_108] : memref<200x595xf32, #tpu.memory_space<vmem>>, vector<8x595xf32>
    tpu.vector_store %arg14[%c80_107, %c0_108], %111 {strides = array<i32>} : memref<200x595xf32, #tpu.memory_space<vmem>>, vector<8x595xf32>,
    %113 = vector.extract_strided_slice %90 {offsets = [0, 130], sizes = [8, 595], strides = [1, 1]} : vector<8x859xf32> to vector<8x595xf32>
    %c88_109 = arith.constant 88 : index
    %c0_110 = arith.constant 0 : index
    %114 = vector.load %arg14[%c88_109, %c0_110] : memref<200x595xf32, #tpu.memory_space<vmem>>, vector<8x595xf32>
    tpu.vector_store %arg14[%c88_109, %c0_110], %113 {strides = array<i32>} : memref<200x595xf32, #tpu.memory_space<vmem>>, vector<8x595xf32>,
    %115 = vector.extract_strided_slice %90 {offsets = [0, 132], sizes = [8, 595], strides = [1, 1]} : vector<8x859xf32> to vector<8x595xf32>
    %c96_111 = arith.constant 96 : index
    %c0_112 = arith.constant 0 : index
    %116 = vector.load %arg14[%c96_111, %c0_112] : memref<200x595xf32, #tpu.memory_space<vmem>>, vector<8x595xf32>
    tpu.vector_store %arg14[%c96_111, %c0_112], %115 {strides = array<i32>} : memref<200x595xf32, #tpu.memory_space<vmem>>, vector<8x595xf32>,
    %117 = vector.extract_strided_slice %90 {offsets = [0, 134], sizes = [8, 595], strides = [1, 1]} : vector<8x859xf32> to vector<8x595xf32>
    %c104_113 = arith.constant 104 : index
    %c0_114 = arith.constant 0 : index
    %118 = vector.load %arg14[%c104_113, %c0_114] : memref<200x595xf32, #tpu.memory_space<vmem>>, vector<8x595xf32>
    tpu.vector_store %arg14[%c104_113, %c0_114], %117 {strides = array<i32>} : memref<200x595xf32, #tpu.memory_space<vmem>>, vector<8x595xf32>,
    %119 = vector.extract_strided_slice %90 {offsets = [0, 136], sizes = [8, 595], strides = [1, 1]} : vector<8x859xf32> to vector<8x595xf32>
    %c112_115 = arith.constant 112 : index
    %c0_116 = arith.constant 0 : index
    %120 = vector.load %arg14[%c112_115, %c0_116] : memref<200x595xf32, #tpu.memory_space<vmem>>, vector<8x595xf32>
    tpu.vector_store %arg14[%c112_115, %c0_116], %119 {strides = array<i32>} : memref<200x595xf32, #tpu.memory_space<vmem>>, vector<8x595xf32>,
    %121 = vector.extract_strided_slice %90 {offsets = [0, 192], sizes = [8, 595], strides = [1, 1]} : vector<8x859xf32> to vector<8x595xf32>
    %c120_117 = arith.constant 120 : index
    %c0_118 = arith.constant 0 : index
    %122 = vector.load %arg14[%c120_117, %c0_118] : memref<200x595xf32, #tpu.memory_space<vmem>>, vector<8x595xf32>
    tpu.vector_store %arg14[%c120_117, %c0_118], %121 {strides = array<i32>} : memref<200x595xf32, #tpu.memory_space<vmem>>, vector<8x595xf32>,
    %123 = vector.extract_strided_slice %90 {offsets = [0, 194], sizes = [8, 595], strides = [1, 1]} : vector<8x859xf32> to vector<8x595xf32>
    %c128_119 = arith.constant 128 : index
    %c0_120 = arith.constant 0 : index
    %124 = vector.load %arg14[%c128_119, %c0_120] : memref<200x595xf32, #tpu.memory_space<vmem>>, vector<8x595xf32>
    tpu.vector_store %arg14[%c128_119, %c0_120], %123 {strides = array<i32>} : memref<200x595xf32, #tpu.memory_space<vmem>>, vector<8x595xf32>,
    %125 = vector.extract_strided_slice %90 {offsets = [0, 196], sizes = [8, 595], strides = [1, 1]} : vector<8x859xf32> to vector<8x595xf32>
    %c136_121 = arith.constant 136 : index
    %c0_122 = arith.constant 0 : index
    %126 = vector.load %arg14[%c136_121, %c0_122] : memref<200x595xf32, #tpu.memory_space<vmem>>, vector<8x595xf32>
    tpu.vector_store %arg14[%c136_121, %c0_122], %125 {strides = array<i32>} : memref<200x595xf32, #tpu.memory_space<vmem>>, vector<8x595xf32>,
    %127 = vector.extract_strided_slice %90 {offsets = [0, 198], sizes = [8, 595], strides = [1, 1]} : vector<8x859xf32> to vector<8x595xf32>
    %c144_123 = arith.constant 144 : index
    %c0_124 = arith.constant 0 : index
    %128 = vector.load %arg14[%c144_123, %c0_124] : memref<200x595xf32, #tpu.memory_space<vmem>>, vector<8x595xf32>
    tpu.vector_store %arg14[%c144_123, %c0_124], %127 {strides = array<i32>} : memref<200x595xf32, #tpu.memory_space<vmem>>, vector<8x595xf32>,
    %129 = vector.extract_strided_slice %90 {offsets = [0, 200], sizes = [8, 595], strides = [1, 1]} : vector<8x859xf32> to vector<8x595xf32>
    %c152_125 = arith.constant 152 : index
    %c0_126 = arith.constant 0 : index
    %130 = vector.load %arg14[%c152_125, %c0_126] : memref<200x595xf32, #tpu.memory_space<vmem>>, vector<8x595xf32>
    tpu.vector_store %arg14[%c152_125, %c0_126], %129 {strides = array<i32>} : memref<200x595xf32, #tpu.memory_space<vmem>>, vector<8x595xf32>,
    %131 = vector.extract_strided_slice %90 {offsets = [0, 256], sizes = [8, 595], strides = [1, 1]} : vector<8x859xf32> to vector<8x595xf32>
    %c160_127 = arith.constant 160 : index
    %c0_128 = arith.constant 0 : index
    %132 = vector.load %arg14[%c160_127, %c0_128] : memref<200x595xf32, #tpu.memory_space<vmem>>, vector<8x595xf32>
    tpu.vector_store %arg14[%c160_127, %c0_128], %131 {strides = array<i32>} : memref<200x595xf32, #tpu.memory_space<vmem>>, vector<8x595xf32>,
    %133 = vector.extract_strided_slice %90 {offsets = [0, 258], sizes = [8, 595], strides = [1, 1]} : vector<8x859xf32> to vector<8x595xf32>
    %c168_129 = arith.constant 168 : index
    %c0_130 = arith.constant 0 : index
    %134 = vector.load %arg14[%c168_129, %c0_130] : memref<200x595xf32, #tpu.memory_space<vmem>>, vector<8x595xf32>
    tpu.vector_store %arg14[%c168_129, %c0_130], %133 {strides = array<i32>} : memref<200x595xf32, #tpu.memory_space<vmem>>, vector<8x595xf32>,
    %135 = vector.extract_strided_slice %90 {offsets = [0, 260], sizes = [8, 595], strides = [1, 1]} : vector<8x859xf32> to vector<8x595xf32>
    %c176_131 = arith.constant 176 : index
    %c0_132 = arith.constant 0 : index
    %136 = vector.load %arg14[%c176_131, %c0_132] : memref<200x595xf32, #tpu.memory_space<vmem>>, vector<8x595xf32>
    tpu.vector_store %arg14[%c176_131, %c0_132], %135 {strides = array<i32>} : memref<200x595xf32, #tpu.memory_space<vmem>>, vector<8x595xf32>,
    %137 = vector.extract_strided_slice %90 {offsets = [0, 262], sizes = [8, 595], strides = [1, 1]} : vector<8x859xf32> to vector<8x595xf32>
    %c184_133 = arith.constant 184 : index
    %c0_134 = arith.constant 0 : index
    %138 = vector.load %arg14[%c184_133, %c0_134] : memref<200x595xf32, #tpu.memory_space<vmem>>, vector<8x595xf32>
    tpu.vector_store %arg14[%c184_133, %c0_134], %137 {strides = array<i32>} : memref<200x595xf32, #tpu.memory_space<vmem>>, vector<8x595xf32>,
    %139 = vector.extract_strided_slice %90 {offsets = [0, 264], sizes = [8, 595], strides = [1, 1]} : vector<8x859xf32> to vector<8x595xf32>
    %c192_135 = arith.constant 192 : index
    %c0_136 = arith.constant 0 : index
    %140 = vector.load %arg14[%c192_135, %c0_136] : memref<200x595xf32, #tpu.memory_space<vmem>>, vector<8x595xf32>
    tpu.vector_store %arg14[%c192_135, %c0_136], %139 {strides = array<i32>} : memref<200x595xf32, #tpu.memory_space<vmem>>, vector<8x595xf32>,
    %c0_137 = arith.constant 0 : index
    %c0_138 = arith.constant 0 : index
    %141 = vector.load %arg4[%c0_137, %c0_138] : memref<16x200xbf16, #tpu.memory_space<vmem>>, vector<16x200xbf16>
    %c0_139 = arith.constant 0 : index
    %c0_140 = arith.constant 0 : index
    %142 = vector.load %arg14[%c0_139, %c0_140] : memref<200x595xf32, #tpu.memory_space<vmem>>, vector<200x595xf32>
    %143 = arith.truncf %142 : vector<200x595xf32> to vector<200x595xbf16>
    %cst_141 = arith.constant dense<0.000000e+00> : vector<16x595xf32>
    %144 = tpu.matmul %141, %143, %cst_141 {dimension_numbers = #tpu.dot_dimension_numbers<[1], [0], [0], [1], [0, 0, 1, 1], [], []>} : vector<16x200xbf16>, vector<200x595xbf16>, vector<16x595xf32> -> vector<16x595xf32>
    %c0_142 = arith.constant 0 : index
    %c0_143 = arith.constant 0 : index
    %145 = vector.load %arg5[%c0_142, %c0_143] : memref<16x1xf32, #tpu.memory_space<vmem>>, vector<16x1xf32>
    %146 = vector.broadcast %145 : vector<16x1xf32> to vector<16x595xf32>
    %147 = arith.addf %144, %146 : vector<16x595xf32>
    %cst_144 = arith.constant 0.000000e+00 : f32
    %148 = vector.broadcast %cst_144 : f32 to vector<16x595xf32>
    %149 = arith.maximumf %147, %148 : vector<16x595xf32>
    %150 = vector.extract_strided_slice %149 {offsets = [0, 0], sizes = [16, 529], strides = [1, 1]} : vector<16x595xf32> to vector<16x529xf32>
    %151 = vector.extract_strided_slice %149 {offsets = [0, 2], sizes = [16, 529], strides = [1, 1]} : vector<16x595xf32> to vector<16x529xf32>
    %152 = arith.maximumf %150, %151 : vector<16x529xf32>
    %153 = vector.extract_strided_slice %149 {offsets = [0, 64], sizes = [16, 529], strides = [1, 1]} : vector<16x595xf32> to vector<16x529xf32>
    %154 = vector.extract_strided_slice %149 {offsets = [0, 66], sizes = [16, 529], strides = [1, 1]} : vector<16x595xf32> to vector<16x529xf32>
    %155 = arith.maximumf %153, %154 : vector<16x529xf32>
    %156 = arith.maximumf %152, %155 : vector<16x529xf32>
    %157 = arith.truncf %156 : vector<16x529xf32> to vector<16x529xbf16>
    %c0_145 = arith.constant 0 : index
    %c0_146 = arith.constant 0 : index
    %158 = vector.load %arg6[%c0_145, %c0_146] : memref<529x2048xbf16, #tpu.memory_space<vmem>>, vector<529x2048xbf16>
    %cst_147 = arith.constant dense<0.000000e+00> : vector<16x2048xf32>
    %159 = tpu.matmul %157, %158, %cst_147 {dimension_numbers = #tpu.dot_dimension_numbers<[1], [0], [0], [1], [0, 0, 1, 1], [], []>} : vector<16x529xbf16>, vector<529x2048xbf16>, vector<16x2048xf32> -> vector<16x2048xf32>
    %c0_148 = arith.constant 0 : index
    %c0_149 = arith.constant 0 : index
    %160 = vector.load %arg7[%c0_148, %c0_149] : memref<1x128xf32, #tpu.memory_space<vmem>>, vector<1x128xf32>
    %161 = vector.extract_strided_slice %159 {offsets = [0, 0], sizes = [1, 128], strides = [1, 1]} : vector<16x2048xf32> to vector<1x128xf32>
    %162 = arith.addf %160, %161 : vector<1x128xf32>
    %163 = vector.extract_strided_slice %159 {offsets = [1, 128], sizes = [1, 128], strides = [1, 1]} : vector<16x2048xf32> to vector<1x128xf32>
    %164 = arith.addf %162, %163 : vector<1x128xf32>
    %165 = vector.extract_strided_slice %159 {offsets = [2, 256], sizes = [1, 128], strides = [1, 1]} : vector<16x2048xf32> to vector<1x128xf32>
    %166 = arith.addf %164, %165 : vector<1x128xf32>
    %167 = vector.extract_strided_slice %159 {offsets = [3, 384], sizes = [1, 128], strides = [1, 1]} : vector<16x2048xf32> to vector<1x128xf32>
    %168 = arith.addf %166, %167 : vector<1x128xf32>
    %169 = vector.extract_strided_slice %159 {offsets = [4, 512], sizes = [1, 128], strides = [1, 1]} : vector<16x2048xf32> to vector<1x128xf32>
    %170 = arith.addf %168, %169 : vector<1x128xf32>
    %171 = vector.extract_strided_slice %159 {offsets = [5, 640], sizes = [1, 128], strides = [1, 1]} : vector<16x2048xf32> to vector<1x128xf32>
    %172 = arith.addf %170, %171 : vector<1x128xf32>
    %173 = vector.extract_strided_slice %159 {offsets = [6, 768], sizes = [1, 128], strides = [1, 1]} : vector<16x2048xf32> to vector<1x128xf32>
    %174 = arith.addf %172, %173 : vector<1x128xf32>
    %175 = vector.extract_strided_slice %159 {offsets = [7, 896], sizes = [1, 128], strides = [1, 1]} : vector<16x2048xf32> to vector<1x128xf32>
    %176 = arith.addf %174, %175 : vector<1x128xf32>
    %177 = vector.extract_strided_slice %159 {offsets = [8, 1024], sizes = [1, 128], strides = [1, 1]} : vector<16x2048xf32> to vector<1x128xf32>
    %178 = arith.addf %176, %177 : vector<1x128xf32>
    %179 = vector.extract_strided_slice %159 {offsets = [9, 1152], sizes = [1, 128], strides = [1, 1]} : vector<16x2048xf32> to vector<1x128xf32>
    %180 = arith.addf %178, %179 : vector<1x128xf32>
    %181 = vector.extract_strided_slice %159 {offsets = [10, 1280], sizes = [1, 128], strides = [1, 1]} : vector<16x2048xf32> to vector<1x128xf32>
    %182 = arith.addf %180, %181 : vector<1x128xf32>
    %183 = vector.extract_strided_slice %159 {offsets = [11, 1408], sizes = [1, 128], strides = [1, 1]} : vector<16x2048xf32> to vector<1x128xf32>
    %184 = arith.addf %182, %183 : vector<1x128xf32>
    %185 = vector.extract_strided_slice %159 {offsets = [12, 1536], sizes = [1, 128], strides = [1, 1]} : vector<16x2048xf32> to vector<1x128xf32>
    %186 = arith.addf %184, %185 : vector<1x128xf32>
    %187 = vector.extract_strided_slice %159 {offsets = [13, 1664], sizes = [1, 128], strides = [1, 1]} : vector<16x2048xf32> to vector<1x128xf32>
    %188 = arith.addf %186, %187 : vector<1x128xf32>
    %189 = vector.extract_strided_slice %159 {offsets = [14, 1792], sizes = [1, 128], strides = [1, 1]} : vector<16x2048xf32> to vector<1x128xf32>
    %190 = arith.addf %188, %189 : vector<1x128xf32>
    %191 = vector.extract_strided_slice %159 {offsets = [15, 1920], sizes = [1, 128], strides = [1, 1]} : vector<16x2048xf32> to vector<1x128xf32>
    %192 = arith.addf %190, %191 : vector<1x128xf32>
    %cst_150 = arith.constant 0.000000e+00 : f32
    %193 = vector.broadcast %cst_150 : f32 to vector<1x128xf32>
    %194 = arith.maximumf %192, %193 : vector<1x128xf32>
    %195 = arith.truncf %194 : vector<1x128xf32> to vector<1x128xbf16>
    %c0_151 = arith.constant 0 : index
    %c0_152 = arith.constant 0 : index
    %196 = vector.load %arg8[%c0_151, %c0_152] : memref<128x128xbf16, #tpu.memory_space<vmem>>, vector<128x128xbf16>
    %cst_153 = arith.constant dense<0.000000e+00> : vector<1x128xf32>
    %197 = tpu.matmul %195, %196, %cst_153 {dimension_numbers = #tpu.dot_dimension_numbers<[1], [0], [0], [1], [0, 0, 1, 1], [], []>} : vector<1x128xbf16>, vector<128x128xbf16>, vector<1x128xf32> -> vector<1x128xf32>
    %c0_154 = arith.constant 0 : index
    %c0_155 = arith.constant 0 : index
    %198 = vector.load %arg9[%c0_154, %c0_155] : memref<1x128xf32, #tpu.memory_space<vmem>>, vector<1x128xf32>
    %199 = arith.addf %197, %198 : vector<1x128xf32>
    %cst_156 = arith.constant 0.000000e+00 : f32
    %200 = vector.broadcast %cst_156 : f32 to vector<1x128xf32>
    %201 = arith.maximumf %199, %200 : vector<1x128xf32>
    %202 = arith.truncf %201 : vector<1x128xf32> to vector<1x128xbf16>
    %c0_157 = arith.constant 0 : index
    %c0_158 = arith.constant 0 : index
    %203 = vector.load %arg10[%c0_157, %c0_158] : memref<128x128xbf16, #tpu.memory_space<vmem>>, vector<128x128xbf16>
    %cst_159 = arith.constant dense<0.000000e+00> : vector<1x128xf32>
    %204 = tpu.matmul %202, %203, %cst_159 {dimension_numbers = #tpu.dot_dimension_numbers<[1], [0], [0], [1], [0, 0, 1, 1], [], []>} : vector<1x128xbf16>, vector<128x128xbf16>, vector<1x128xf32> -> vector<1x128xf32>
    %c0_160 = arith.constant 0 : index
    %c0_161 = arith.constant 0 : index
    %205 = vector.load %arg11[%c0_160, %c0_161] : memref<1x128xf32, #tpu.memory_space<vmem>>, vector<1x128xf32>
    %206 = arith.addf %204, %205 : vector<1x128xf32>
    %c0_162 = arith.constant 0 : index
    %c0_163 = arith.constant 0 : index
    %c0_164 = arith.constant 0 : index
    %207 = vector.load %arg12[%c0_162, %c0_163, %c0_164] : memref<1x1x128xf32, #tpu.memory_space<vmem>>, vector<1x1x128xf32>
    %208 = vector.shape_cast %207 : vector<1x1x128xf32> to vector<1x128xf32>
    %209 = vector.shape_cast %206 : vector<1x128xf32> to vector<1x1x128xf32>
    tpu.vector_store %arg12[%c0_162, %c0_163, %c0_164], %209 {strides = array<i32>} : memref<1x1x128xf32, #tpu.memory_space<vmem>>, vector<1x1x128xf32>,
    return
  }
  func.func @transform_0(%arg0: i32) -> (i32, i32, i32) {
    %c0_i32 = arith.constant 0 : i32
    %c0_i32_0 = arith.constant 0 : i32
    %c0_i32_1 = arith.constant 0 : i32
    return %arg0, %c0_i32, %c0_i32_0 : i32, i32, i32
  }
  func.func @transform_1(%arg0: i32) -> (i32, i32) {
    %c0_i32 = arith.constant 0 : i32
    %c0_i32_0 = arith.constant 0 : i32
    %c0_i32_1 = arith.constant 0 : i32
    return %c0_i32, %c0_i32_0 : i32, i32
  }
  func.func @transform_2(%arg0: i32) -> (i32, i32) {
    %c0_i32 = arith.constant 0 : i32
    %c0_i32_0 = arith.constant 0 : i32
    %c0_i32_1 = arith.constant 0 : i32
    return %c0_i32, %c0_i32_0 : i32, i32
  }
  func.func @transform_3(%arg0: i32) -> (i32, i32) {
    %c0_i32 = arith.constant 0 : i32
    %c0_i32_0 = arith.constant 0 : i32
    %c0_i32_1 = arith.constant 0 : i32
    return %c0_i32, %c0_i32_0 : i32, i32
  }
  func.func @transform_4(%arg0: i32) -> (i32, i32) {
    %c0_i32 = arith.constant 0 : i32
    %c0_i32_0 = arith.constant 0 : i32
    %c0_i32_1 = arith.constant 0 : i32
    return %c0_i32, %c0_i32_0 : i32, i32
  }
  func.func @transform_5(%arg0: i32) -> (i32, i32) {
    %c0_i32 = arith.constant 0 : i32
    %c0_i32_0 = arith.constant 0 : i32
    %c0_i32_1 = arith.constant 0 : i32
    return %c0_i32, %c0_i32_0 : i32, i32
  }
  func.func @transform_6(%arg0: i32) -> (i32, i32) {
    %c0_i32 = arith.constant 0 : i32
    %c0_i32_0 = arith.constant 0 : i32
    %c0_i32_1 = arith.constant 0 : i32
    return %c0_i32, %c0_i32_0 : i32, i32
  }
  func.func @transform_7(%arg0: i32) -> (i32, i32) {
    %c0_i32 = arith.constant 0 : i32
    %c0_i32_0 = arith.constant 0 : i32
    %c0_i32_1 = arith.constant 0 : i32
    return %c0_i32, %c0_i32_0 : i32, i32
  }
  func.func @transform_8(%arg0: i32) -> (i32, i32) {
    %c0_i32 = arith.constant 0 : i32
    %c0_i32_0 = arith.constant 0 : i32
    %c0_i32_1 = arith.constant 0 : i32
    return %c0_i32, %c0_i32_0 : i32, i32
  }
  func.func @transform_9(%arg0: i32) -> (i32, i32) {
    %c0_i32 = arith.constant 0 : i32
    %c0_i32_0 = arith.constant 0 : i32
    %c0_i32_1 = arith.constant 0 : i32
    return %c0_i32, %c0_i32_0 : i32, i32
  }
  func.func @transform_10(%arg0: i32) -> (i32, i32) {
    %c0_i32 = arith.constant 0 : i32
    %c0_i32_0 = arith.constant 0 : i32
    %c0_i32_1 = arith.constant 0 : i32
    return %c0_i32, %c0_i32_0 : i32, i32
  }
  func.func @transform_11(%arg0: i32) -> (i32, i32, i32) {
    %c0_i32 = arith.constant 0 : i32
    %c0_i32_0 = arith.constant 0 : i32
    %c0_i32_1 = arith.constant 0 : i32
    return %arg0, %c0_i32, %c0_i32_0 : i32, i32, i32
  }
}

</mosaic_0001>

<llo_original>
// kernel: net_forward.1
$region0: #{net_forward.1}
  #allocation0 [shape = 'u32[]', space=smem, size = 0x4, offset = 0x4, fixed_abs, tag = 'smem constant byte address 0x4 - core index']
  #allocation1 [shape = 'u32[144,128]{1,0:T(1,128)}', space=vmem, size = 0x12000, scoped, tag = 'internal scratch']
  #allocation2 [shape = 'f32[200,892]{1,0:T(8,128)}', space=vmem, size = 0xaf000, scoped, tag = 'scratch operand']
  #allocation3 [shape = 'f32[200,595]{1,0:T(8,128)}', space=vmem, size = 0x7d000, scoped, tag = 'scratch operand']
  %s0 = inlined_call_operand.vmem [shape: f32[1,8,1024], index: 0, kind: input, shape index: {}]
  %s1 = inlined_call_operand.hbm [shape: bf16[8,200], index: 1, kind: input, shape index: {}]
  %s2 = inlined_call_operand.vmem [shape: f32[8,1], index: 2, kind: input, shape index: {}]
  %s3 = inlined_call_operand.hbm [shape: bf16[16,200], index: 3, kind: input, shape index: {}]
  %s4 = inlined_call_operand.vmem [shape: f32[16,1], index: 4, kind: input, shape index: {}]
  %s5 = inlined_call_operand.hbm [shape: bf16[529,2048], index: 5, kind: input, shape index: {}]
  %s6 = inlined_call_operand.hbm [shape: f32[1,128], index: 6, kind: input, shape index: {}]
  %s7 = inlined_call_operand.hbm [shape: bf16[128,128], index: 7, kind: input, shape index: {}]
  %s8 = inlined_call_operand.hbm [shape: f32[1,128], index: 8, kind: input, shape index: {}]
  %s9 = inlined_call_operand.hbm [shape: bf16[128,128], index: 9, kind: input, shape index: {}]
  %s10 = inlined_call_operand.hbm [shape: f32[1,128], index: 10, kind: input, shape index: {}]
  %s11 = inlined_call_operand.vmem [shape: f32[1,1,128], index: 11, kind: output, shape index: {}]
  %s12 = sld [smem:[#allocation0]]
  $region86: #{net_forward.1} parent=0
    _
  %s14 = ssub.s32 1, %s12
  %s15 = scalar_select 0, %s14, %s12
  $region1: #{net_forward.1} parent=0
    #allocation4 [shape = 'u8[4096]{0}', space=vmem, size = 0x1000, scoped, tag = 'input window, operand 1, single buffered']
    #allocation5 [shape = 's32[1]{0}', space=sflag, size = 0x4, scoped, tag = 'scoped memory for net_forward.1']
    #allocation6 [shape = 'u8[8192]{0}', space=vmem, size = 0x2000, scoped, tag = 'input window, operand 3, single buffered']
    #allocation7 [shape = 's32[1]{0}', space=sflag, size = 0x4, scoped, tag = 'scoped memory for net_forward.1']
    #allocation8 [shape = 'u8[2195456]{0}', space=vmem, size = 0x218000, scoped, tag = 'input window, operand 5, single buffered']
    #allocation9 [shape = 'u8[512]{0}', space=vmem, size = 0x400, scoped, tag = 'input window, operand 6, single buffered']
    #allocation10 [shape = 's32[1]{0}', space=sflag, size = 0x4, scoped, tag = 'scoped memory for net_forward.1']
    #allocation11 [shape = 'u8[32768]{0}', space=vmem, size = 0x8000, scoped, tag = 'input window, operand 7, single buffered']
    #allocation12 [shape = 'u8[512]{0}', space=vmem, size = 0x400, scoped, tag = 'input window, operand 8, single buffered']
    #allocation13 [shape = 's32[1]{0}', space=sflag, size = 0x4, scoped, tag = 'scoped memory for net_forward.1']
    #allocation14 [shape = 'u8[32768]{0}', space=vmem, size = 0x8000, scoped, tag = 'input window, operand 9, single buffered']
    #allocation15 [shape = 'u8[512]{0}', space=vmem, size = 0x400, scoped, tag = 'input window, operand 10, single buffered']
    #allocation16 [shape = 's32[1]{0}', space=sflag, size = 0x4, scoped, tag = 'scoped memory for net_forward.1']
    %16 = vsyncpa [#allocation5], 0
    %17 = vsyncpa [#allocation7], 0
    %18 = vsyncpa [#allocation10], 0
    %19 = vsyncpa [#allocation13], 0
    %20 = vsyncpa [#allocation16], 0
    // Predicated region
    $region2: #{net_forward.1} parent=1 // pred_check
      _
    $region3: #{net_forward.1} parent=1 // pred_check_branch
      %22 = sbr.rel (0) target = $region5
    $region4: #{net_forward.1} parent=1 // pred_region
      _
    $region5: #{net_forward.1} parent=1 // pred_fallthru
      _
    // Predicated region
    $region6: #{net_forward.1} parent=1 // pred_check
      _
    $region7: #{net_forward.1} parent=1 // pred_check_branch
      %24 = sbr.rel (0) target = $region9
    $region8: #{net_forward.1} parent=1 // pred_region
      %s26 = ssub.s32 128, 128
      %27 = vsyncadd [#allocation5], %s26
      %s29 = sshll.u32 [#allocation4], 4
      %s30 = int_to_ptr.vmem [resolvable:$true] %s29
      %32 = dma.hbm_to_vmem [thread:$0]  %s1, 128, %s30, [#allocation5]
    $region9: #{net_forward.1} parent=1 // pred_fallthru
      _
    // Predicated region
    $region10: #{net_forward.1} parent=1 // pred_check
      _
    $region11: #{net_forward.1} parent=1 // pred_check_branch
      %34 = sbr.rel (0) target = $region13
    $region12: #{net_forward.1} parent=1 // pred_region
      _
    $region13: #{net_forward.1} parent=1 // pred_fallthru
      _
    // Predicated region
    $region14: #{net_forward.1} parent=1 // pred_check
      _
    $region15: #{net_forward.1} parent=1 // pred_check_branch
      %36 = sbr.rel (0) target = $region17
    $region16: #{net_forward.1} parent=1 // pred_region
      %s38 = ssub.s32 256, 256
      %39 = vsyncadd [#allocation7], %s38
      %s40 = sshll.u32 [#allocation6], 4
      %s41 = int_to_ptr.vmem [resolvable:$true] %s40
      %46 = dma.hbm_to_vmem [thread:$0]  %s3, 256, %s41, [#allocation7], 128, 128, 8
    $region17: #{net_forward.1} parent=1 // pred_fallthru
      _
    // Predicated region
    $region18: #{net_forward.1} parent=1 // pred_check
      _
    $region19: #{net_forward.1} parent=1 // pred_check_branch
      %48 = sbr.rel (0) target = $region21
    $region20: #{net_forward.1} parent=1 // pred_region
      _
    $region21: #{net_forward.1} parent=1 // pred_fallthru
      _
    // Predicated region
    $region22: #{net_forward.1} parent=1 // pred_check
      _
    $region23: #{net_forward.1} parent=1 // pred_check_branch
      %50 = sbr.rel (0) target = $region25
    $region24: #{net_forward.1} parent=1 // pred_region
      %s52 = ssub.s32 68608, 68608
      %53 = vsyncadd [#allocation7], %s52
      %s54 = sshll.u32 [#allocation8], 4
      %s55 = int_to_ptr.vmem [resolvable:$true] %s54
      %60 = dma.hbm_to_vmem [thread:$0]  %s5, 68608, %s55, [#allocation7], 1024, 1024, 64
    $region25: #{net_forward.1} parent=1 // pred_fallthru
      _
    // Predicated region
    $region26: #{net_forward.1} parent=1 // pred_check
      _
    $region27: #{net_forward.1} parent=1 // pred_check_branch
      %62 = sbr.rel (0) target = $region29
    $region28: #{net_forward.1} parent=1 // pred_region
      %s64 = ssub.s32 16, 16
      %65 = vsyncadd [#allocation10], %s64
      %s67 = sshll.u32 [#allocation9], 4
      %s68 = int_to_ptr.vmem [resolvable:$true] %s67
      %70 = dma.hbm_to_vmem [thread:$0]  %s6, 16, %s68, [#allocation10]
    $region29: #{net_forward.1} parent=1 // pred_fallthru
      _
    // Predicated region
    $region30: #{net_forward.1} parent=1 // pred_check
      _
    $region31: #{net_forward.1} parent=1 // pred_check_branch
      %72 = sbr.rel (0) target = $region33
    $region32: #{net_forward.1} parent=1 // pred_region
      %s74 = ssub.s32 1024, 1024
      %75 = vsyncadd [#allocation10], %s74
      %s76 = sshll.u32 [#allocation11], 4
      %s77 = int_to_ptr.vmem [resolvable:$true] %s76
      %82 = dma.hbm_to_vmem [thread:$0]  %s7, 1024, %s77, [#allocation10], 64, 64, 4
    $region33: #{net_forward.1} parent=1 // pred_fallthru
      _
    // Predicated region
    $region34: #{net_forward.1} parent=1 // pred_check
      _
    $region35: #{net_forward.1} parent=1 // pred_check_branch
      %84 = sbr.rel (0) target = $region37
    $region36: #{net_forward.1} parent=1 // pred_region
      %s86 = ssub.s32 16, 16
      %87 = vsyncadd [#allocation13], %s86
      %s89 = sshll.u32 [#allocation12], 4
      %s90 = int_to_ptr.vmem [resolvable:$true] %s89
      %92 = dma.hbm_to_vmem [thread:$0]  %s8, 16, %s90, [#allocation13]
    $region37: #{net_forward.1} parent=1 // pred_fallthru
      _
    // Predicated region
    $region38: #{net_forward.1} parent=1 // pred_check
      _
    $region39: #{net_forward.1} parent=1 // pred_check_branch
      %94 = sbr.rel (0) target = $region41
    $region40: #{net_forward.1} parent=1 // pred_region
      %s96 = ssub.s32 1024, 1024
      %97 = vsyncadd [#allocation13], %s96
      %s98 = sshll.u32 [#allocation14], 4
      %s99 = int_to_ptr.vmem [resolvable:$true] %s98
      %104 = dma.hbm_to_vmem [thread:$0]  %s9, 1024, %s99, [#allocation13], 64, 64, 4
    $region41: #{net_forward.1} parent=1 // pred_fallthru
      _
    // Predicated region
    $region42: #{net_forward.1} parent=1 // pred_check
      _
    $region43: #{net_forward.1} parent=1 // pred_check_branch
      %106 = sbr.rel (0) target = $region45
    $region44: #{net_forward.1} parent=1 // pred_region
      %s108 = ssub.s32 16, 16
      %109 = vsyncadd [#allocation16], %s108
      %s111 = sshll.u32 [#allocation15], 4
      %s112 = int_to_ptr.vmem [resolvable:$true] %s111
      %114 = dma.hbm_to_vmem [thread:$0]  %s10, 16, %s112, [#allocation16]
    $region45: #{net_forward.1} parent=1 // pred_fallthru
      _
    // Predicated region
    $region46: #{net_forward.1} parent=1 // pred_check
      _
    $region47: #{net_forward.1} parent=1 // pred_check_branch
      %116 = sbr.rel (0) target = $region49
    $region48: #{net_forward.1} parent=1 // pred_region
      %117 = dma.done [#allocation5], 128
    $region49: #{net_forward.1} parent=1 // pred_fallthru
      _
    // Predicated region
    $region50: #{net_forward.1} parent=1 // pred_check
      _
    $region51: #{net_forward.1} parent=1 // pred_check_branch
      %119 = sbr.rel (0) target = $region53
    $region52: #{net_forward.1} parent=1 // pred_region
      %120 = dma.done [#allocation7], 256
    $region53: #{net_forward.1} parent=1 // pred_fallthru
      _
    // Predicated region
    $region54: #{net_forward.1} parent=1 // pred_check
      _
    $region55: #{net_forward.1} parent=1 // pred_check_branch
      %122 = sbr.rel (0) target = $region57
    $region56: #{net_forward.1} parent=1 // pred_region
      %123 = dma.done [#allocation7], 68608
    $region57: #{net_forward.1} parent=1 // pred_fallthru
      _
    // Predicated region
    $region58: #{net_forward.1} parent=1 // pred_check
      _
    $region59: #{net_forward.1} parent=1 // pred_check_branch
      %125 = sbr.rel (0) target = $region61
    $region60: #{net_forward.1} parent=1 // pred_region
      %126 = dma.done [#allocation10], 16
    $region61: #{net_forward.1} parent=1 // pred_fallthru
      _
    // Predicated region
    $region62: #{net_forward.1} parent=1 // pred_check
      _
    $region63: #{net_forward.1} parent=1 // pred_check_branch
      %128 = sbr.rel (0) target = $region65
    $region64: #{net_forward.1} parent=1 // pred_region
      %129 = dma.done [#allocation10], 1024
    $region65: #{net_forward.1} parent=1 // pred_fallthru
      _
    // Predicated region
    $region66: #{net_forward.1} parent=1 // pred_check
      _
    $region67: #{net_forward.1} parent=1 // pred_check_branch
      %131 = sbr.rel (0) target = $region69
    $region68: #{net_forward.1} parent=1 // pred_region
      %132 = dma.done [#allocation13], 16
    $region69: #{net_forward.1} parent=1 // pred_fallthru
      _
    // Predicated region
    $region70: #{net_forward.1} parent=1 // pred_check
      _
    $region71: #{net_forward.1} parent=1 // pred_check_branch
      %134 = sbr.rel (0) target = $region73
    $region72: #{net_forward.1} parent=1 // pred_region
      %135 = dma.done [#allocation13], 1024
    $region73: #{net_forward.1} parent=1 // pred_fallthru
      _
    // Predicated region
    $region74: #{net_forward.1} parent=1 // pred_check
      _
    $region75: #{net_forward.1} parent=1 // pred_check_branch
      %137 = sbr.rel (0) target = $region77
    $region76: #{net_forward.1} parent=1 // pred_region
      %138 = dma.done [#allocation16], 16
    $region77: #{net_forward.1} parent=1 // pred_fallthru
      _
    %v140 = vld [vmem:[%s0] sm:$0xff]
    %v141 = vld [vmem:[%s0 + $0x8] sm:$0xff]
    %v142 = vld [vmem:[%s0 + $0x10] sm:$0xff]
    %v143 = vld [vmem:[%s0 + $0x18] sm:$0xff]
    %v144 = vld [vmem:[%s0 + $0x20] sm:$0xff]
    %v145 = vld [vmem:[%s0 + $0x28] sm:$0xff]
    %v146 = vld [vmem:[%s0 + $0x30] sm:$0xff]
    %147 = vst [vmem:[#allocation2] sm:$0xff] %v140
    %148 = vst [vmem:[#allocation2 + $0x8] sm:$0xff] %v141
    %149 = vst [vmem:[#allocation2 + $0x10] sm:$0xff] %v142
    %150 = vst [vmem:[#allocation2 + $0x18] sm:$0xff] %v143
    %151 = vst [vmem:[#allocation2 + $0x20] sm:$0xff] %v144
    %152 = vst [vmem:[#allocation2 + $0x28] sm:$0xff] %v145
    %vm153 = vcmask 1014784
    %154 = vst.msk [vmem:[#allocation2 + $0x30] sm:$0xff] %vm153, %v146
    %v155 = vld [vmem:[%s0] sm:$0xff]
    %v156 = vld [vmem:[%s0 + $0x8] sm:$0xff]
    %v157 = vld [vmem:[%s0 + $0x10] sm:$0xff]
    %v158 = vld [vmem:[%s0 + $0x18] sm:$0xff]
    %v159 = vld [vmem:[%s0 + $0x20] sm:$0xff]
    %v160 = vld [vmem:[%s0 + $0x28] sm:$0xff]
    %v161 = vld [vmem:[%s0 + $0x30] sm:$0xff]
    %169 = vrot.lane.b32.xlu0 %v155, 127
    %v170 = vpop.permute.xlu0 %169
    %171 = vrot.lane.b32.xlu0 %v156, 127
    %v172 = vpop.permute.xlu0 %171
    %173 = vrot.lane.b32.xlu0 %v157, 127
    %v174 = vpop.permute.xlu0 %173
    %175 = vrot.lane.b32.xlu0 %v158, 127
    %v176 = vpop.permute.xlu0 %175
    %177 = vrot.lane.b32.xlu0 %v159, 127
    %v178 = vpop.permute.xlu0 %177
    %179 = vrot.lane.b32.xlu0 %v160, 127
    %v180 = vpop.permute.xlu0 %179
    %181 = vrot.lane.b32.xlu0 %v161, 127
    %v182 = vpop.permute.xlu0 %181
    %vm183 = vcmask 1039360
    %v184 = vsel %vm183, %v170, %v172
    %v185 = vsel %vm183, %v172, %v174
    %v186 = vsel %vm183, %v174, %v176
    %v187 = vsel %vm183, %v176, %v178
    %v188 = vsel %vm183, %v178, %v180
    %v189 = vsel %vm183, %v180, %v182
    %197 = vst [vmem:[#allocation2 + $0x38] sm:$0xff] %v184
    %198 = vst [vmem:[#allocation2 + $0x40] sm:$0xff] %v185
    %199 = vst [vmem:[#allocation2 + $0x48] sm:$0xff] %v186
    %200 = vst [vmem:[#allocation2 + $0x50] sm:$0xff] %v187
    %201 = vst [vmem:[#allocation2 + $0x58] sm:$0xff] %v188
    %202 = vst [vmem:[#allocation2 + $0x60] sm:$0xff] %v189
    %203 = vst.msk [vmem:[#allocation2 + $0x68] sm:$0xff] %vm153, %v182
    %v204 = vld [vmem:[%s0] sm:$0xff]
    %v205 = vld [vmem:[%s0 + $0x8] sm:$0xff]
    %v206 = vld [vmem:[%s0 + $0x10] sm:$0xff]
    %v207 = vld [vmem:[%s0 + $0x18] sm:$0xff]
    %v208 = vld [vmem:[%s0 + $0x20] sm:$0xff]
    %v209 = vld [vmem:[%s0 + $0x28] sm:$0xff]
    %v210 = vld [vmem:[%s0 + $0x30] sm:$0xff]
    %218 = vrot.lane.b32.xlu0 %v204, 126
    %v219 = vpop.permute.xlu0 %218
    %220 = vrot.lane.b32.xlu0 %v205, 126
    %v221 = vpop.permute.xlu0 %220
    %222 = vrot.lane.b32.xlu0 %v206, 126
    %v223 = vpop.permute.xlu0 %222
    %224 = vrot.lane.b32.xlu0 %v207, 126
    %v225 = vpop.permute.xlu0 %224
    %226 = vrot.lane.b32.xlu0 %v208, 126
    %v227 = vpop.permute.xlu0 %226
    %228 = vrot.lane.b32.xlu0 %v209, 126
    %v229 = vpop.permute.xlu0 %228
    %230 = vrot.lane.b32.xlu0 %v210, 126
    %v231 = vpop.permute.xlu0 %230
    %vm232 = vcmask 1031168
    %v233 = vsel %vm232, %v219, %v221
    %v234 = vsel %vm232, %v221, %v223
    %v235 = vsel %vm232, %v223, %v225
    %v236 = vsel %vm232, %v225, %v227
    %v237 = vsel %vm232, %v227, %v229
    %v238 = vsel %vm232, %v229, %v231
    %246 = vst [vmem:[#allocation2 + $0x70] sm:$0xff] %v233
    %247 = vst [vmem:[#allocation2 + $0x78] sm:$0xff] %v234
    %248 = vst [vmem:[#allocation2 + $0x80] sm:$0xff] %v235
    %249 = vst [vmem:[#allocation2 + $0x88] sm:$0xff] %v236
    %250 = vst [vmem:[#allocation2 + $0x90] sm:$0xff] %v237
    %251 = vst [vmem:[#allocation2 + $0x98] sm:$0xff] %v238
    %252 = vst.msk [vmem:[#allocation2 + $0xa0] sm:$0xff] %vm153, %v231
    %v253 = vld [vmem:[%s0] sm:$0xff]
    %v254 = vld [vmem:[%s0 + $0x8] sm:$0xff]
    %v255 = vld [vmem:[%s0 + $0x10] sm:$0xff]
    %v256 = vld [vmem:[%s0 + $0x18] sm:$0xff]
    %v257 = vld [vmem:[%s0 + $0x20] sm:$0xff]
    %v258 = vld [vmem:[%s0 + $0x28] sm:$0xff]
    %v259 = vld [vmem:[%s0 + $0x30] sm:$0xff]
    %267 = vrot.lane.b32.xlu0 %v253, 125
    %v268 = vpop.permute.xlu0 %267
    %269 = vrot.lane.b32.xlu0 %v254, 125
    %v270 = vpop.permute.xlu0 %269
    %271 = vrot.lane.b32.xlu0 %v255, 125
    %v272 = vpop.permute.xlu0 %271
    %273 = vrot.lane.b32.xlu0 %v256, 125
    %v274 = vpop.permute.xlu0 %273
    %275 = vrot.lane.b32.xlu0 %v257, 125
    %v276 = vpop.permute.xlu0 %275
    %277 = vrot.lane.b32.xlu0 %v258, 125
    %v278 = vpop.permute.xlu0 %277
    %279 = vrot.lane.b32.xlu0 %v259, 125
    %v280 = vpop.permute.xlu0 %279
    %vm281 = vcmask 1022976
    %v282 = vsel %vm281, %v268, %v270
    %v283 = vsel %vm281, %v270, %v272
    %v284 = vsel %vm281, %v272, %v274
    %v285 = vsel %vm281, %v274, %v276
    %v286 = vsel %vm281, %v276, %v278
    %v287 = vsel %vm281, %v278, %v280
    %295 = vst [vmem:[#allocation2 + $0xa8] sm:$0xff] %v282
    %296 = vst [vmem:[#allocation2 + $0xb0] sm:$0xff] %v283
    %297 = vst [vmem:[#allocation2 + $0xb8] sm:$0xff] %v284
    %298 = vst [vmem:[#allocation2 + $0xc0] sm:$0xff] %v285
    %299 = vst [vmem:[#allocation2 + $0xc8] sm:$0xff] %v286
    %300 = vst [vmem:[#allocation2 + $0xd0] sm:$0xff] %v287
    %301 = vst.msk [vmem:[#allocation2 + $0xd8] sm:$0xff] %vm153, %v280
    %v302 = vld [vmem:[%s0] sm:$0xff]
    %v303 = vld [vmem:[%s0 + $0x8] sm:$0xff]
    %v304 = vld [vmem:[%s0 + $0x10] sm:$0xff]
    %v305 = vld [vmem:[%s0 + $0x18] sm:$0xff]
    %v306 = vld [vmem:[%s0 + $0x20] sm:$0xff]
    %v307 = vld [vmem:[%s0 + $0x28] sm:$0xff]
    %v308 = vld [vmem:[%s0 + $0x30] sm:$0xff]
    %316 = vrot.lane.b32.xlu0 %v302, 124
    %v317 = vpop.permute.xlu0 %316
    %318 = vrot.lane.b32.xlu0 %v303, 124
    %v319 = vpop.permute.xlu0 %318
    %320 = vrot.lane.b32.xlu0 %v304, 124
    %v321 = vpop.permute.xlu0 %320
    %322 = vrot.lane.b32.xlu0 %v305, 124
    %v323 = vpop.permute.xlu0 %322
    %324 = vrot.lane.b32.xlu0 %v306, 124
    %v325 = vpop.permute.xlu0 %324
    %326 = vrot.lane.b32.xlu0 %v307, 124
    %v327 = vpop.permute.xlu0 %326
    %328 = vrot.lane.b32.xlu0 %v308, 124
    %v329 = vpop.permute.xlu0 %328
    %v330 = vsel %vm153, %v317, %v319
    %v331 = vsel %vm153, %v319, %v321
    %v332 = vsel %vm153, %v321, %v323
    %v333 = vsel %vm153, %v323, %v325
    %v334 = vsel %vm153, %v325, %v327
    %v335 = vsel %vm153, %v327, %v329
    %343 = vst [vmem:[#allocation2 + $0xe0] sm:$0xff] %v330
    %344 = vst [vmem:[#allocation2 + $0xe8] sm:$0xff] %v331
    %345 = vst [vmem:[#allocation2 + $0xf0] sm:$0xff] %v332
    %346 = vst [vmem:[#allocation2 + $0xf8] sm:$0xff] %v333
    %347 = vst [vmem:[#allocation2 + $0x100] sm:$0xff] %v334
    %348 = vst [vmem:[#allocation2 + $0x108] sm:$0xff] %v335
    %349 = vst.msk [vmem:[#allocation2 + $0x110] sm:$0xff] %vm153, %v329
    %v350 = vld [vmem:[%s0] sm:$0xff]
    %v351 = vld [vmem:[%s0 + $0x8] sm:$0xff]
    %v352 = vld [vmem:[%s0 + $0x10] sm:$0xff]
    %v353 = vld [vmem:[%s0 + $0x18] sm:$0xff]
    %v354 = vld [vmem:[%s0 + $0x20] sm:$0xff]
    %v355 = vld [vmem:[%s0 + $0x28] sm:$0xff]
    %v356 = vld [vmem:[%s0 + $0x30] sm:$0xff]
    %v357 = vld [vmem:[%s0 + $0x38] sm:$0xff]
    %366 = vrot.lane.b32.xlu0 %v350, 96
    %v367 = vpop.permute.xlu0 %366
    %368 = vrot.lane.b32.xlu0 %v351, 96
    %v369 = vpop.permute.xlu0 %368
    %370 = vrot.lane.b32.xlu0 %v352, 96
    %v371 = vpop.permute.xlu0 %370
    %372 = vrot.lane.b32.xlu0 %v353, 96
    %v373 = vpop.permute.xlu0 %372
    %374 = vrot.lane.b32.xlu0 %v354, 96
    %v375 = vpop.permute.xlu0 %374
    %376 = vrot.lane.b32.xlu0 %v355, 96
    %v377 = vpop.permute.xlu0 %376
    %378 = vrot.lane.b32.xlu0 %v356, 96
    %v379 = vpop.permute.xlu0 %378
    %380 = vrot.lane.b32.xlu0 %v357, 96
    %v381 = vpop.permute.xlu0 %380
    %vm382 = vcmask 785408
    %v383 = vsel %vm382, %v367, %v369
    %v384 = vsel %vm382, %v369, %v371
    %v385 = vsel %vm382, %v371, %v373
    %v386 = vsel %vm382, %v373, %v375
    %v387 = vsel %vm382, %v375, %v377
    %v388 = vsel %vm382, %v377, %v379
    %v389 = vsel %vm382, %v379, %v381
    %397 = vst [vmem:[#allocation2 + $0x118] sm:$0xff] %v383
    %398 = vst [vmem:[#allocation2 + $0x120] sm:$0xff] %v384
    %399 = vst [vmem:[#allocation2 + $0x128] sm:$0xff] %v385
    %400 = vst [vmem:[#allocation2 + $0x130] sm:$0xff] %v386
    %401 = vst [vmem:[#allocation2 + $0x138] sm:$0xff] %v387
    %402 = vst [vmem:[#allocation2 + $0x140] sm:$0xff] %v388
    %403 = vst.msk [vmem:[#allocation2 + $0x148] sm:$0xff] %vm153, %v389
    %v404 = vld [vmem:[%s0] sm:$0xff]
    %v405 = vld [vmem:[%s0 + $0x8] sm:$0xff]
    %v406 = vld [vmem:[%s0 + $0x10] sm:$0xff]
    %v407 = vld [vmem:[%s0 + $0x18] sm:$0xff]
    %v408 = vld [vmem:[%s0 + $0x20] sm:$0xff]
    %v409 = vld [vmem:[%s0 + $0x28] sm:$0xff]
    %v410 = vld [vmem:[%s0 + $0x30] sm:$0xff]
    %v411 = vld [vmem:[%s0 + $0x38] sm:$0xff]
    %420 = vrot.lane.b32.xlu0 %v404, 95
    %v421 = vpop.permute.xlu0 %420
    %422 = vrot.lane.b32.xlu0 %v405, 95
    %v423 = vpop.permute.xlu0 %422
    %424 = vrot.lane.b32.xlu0 %v406, 95
    %v425 = vpop.permute.xlu0 %424
    %426 = vrot.lane.b32.xlu0 %v407, 95
    %v427 = vpop.permute.xlu0 %426
    %428 = vrot.lane.b32.xlu0 %v408, 95
    %v429 = vpop.permute.xlu0 %428
    %430 = vrot.lane.b32.xlu0 %v409, 95
    %v431 = vpop.permute.xlu0 %430
    %432 = vrot.lane.b32.xlu0 %v410, 95
    %v433 = vpop.permute.xlu0 %432
    %434 = vrot.lane.b32.xlu0 %v411, 95
    %v435 = vpop.permute.xlu0 %434
    %vm436 = vcmask 777216
    %v437 = vsel %vm436, %v421, %v423
    %v438 = vsel %vm436, %v423, %v425
    %v439 = vsel %vm436, %v425, %v427
    %v440 = vsel %vm436, %v427, %v429
    %v441 = vsel %vm436, %v429, %v431
    %v442 = vsel %vm436, %v431, %v433
    %v443 = vsel %vm436, %v433, %v435
    %451 = vst [vmem:[#allocation2 + $0x150] sm:$0xff] %v437
    %452 = vst [vmem:[#allocation2 + $0x158] sm:$0xff] %v438
    %453 = vst [vmem:[#allocation2 + $0x160] sm:$0xff] %v439
    %454 = vst [vmem:[#allocation2 + $0x168] sm:$0xff] %v440
    %455 = vst [vmem:[#allocation2 + $0x170] sm:$0xff] %v441
    %456 = vst [vmem:[#allocation2 + $0x178] sm:$0xff] %v442
    %457 = vst.msk [vmem:[#allocation2 + $0x180] sm:$0xff] %vm153, %v443
    %v458 = vld [vmem:[%s0] sm:$0xff]
    %v459 = vld [vmem:[%s0 + $0x8] sm:$0xff]
    %v460 = vld [vmem:[%s0 + $0x10] sm:$0xff]
    %v461 = vld [vmem:[%s0 + $0x18] sm:$0xff]
    %v462 = vld [vmem:[%s0 + $0x20] sm:$0xff]
    %v463 = vld [vmem:[%s0 + $0x28] sm:$0xff]
    %v464 = vld [vmem:[%s0 + $0x30] sm:$0xff]
    %v465 = vld [vmem:[%s0 + $0x38] sm:$0xff]
    %474 = vrot.lane.b32.xlu0 %v458, 94
    %v475 = vpop.permute.xlu0 %474
    %476 = vrot.lane.b32.xlu0 %v459, 94
    %v477 = vpop.permute.xlu0 %476
    %478 = vrot.lane.b32.xlu0 %v460, 94
    %v479 = vpop.permute.xlu0 %478
    %480 = vrot.lane.b32.xlu0 %v461, 94
    %v481 = vpop.permute.xlu0 %480
    %482 = vrot.lane.b32.xlu0 %v462, 94
    %v483 = vpop.permute.xlu0 %482
    %484 = vrot.lane.b32.xlu0 %v463, 94
    %v485 = vpop.permute.xlu0 %484
    %486 = vrot.lane.b32.xlu0 %v464, 94
    %v487 = vpop.permute.xlu0 %486
    %488 = vrot.lane.b32.xlu0 %v465, 94
    %v489 = vpop.permute.xlu0 %488
    %vm490 = vcmask 769024
    %v491 = vsel %vm490, %v475, %v477
    %v492 = vsel %vm490, %v477, %v479
    %v493 = vsel %vm490, %v479, %v481
    %v494 = vsel %vm490, %v481, %v483
    %v495 = vsel %vm490, %v483, %v485
    %v496 = vsel %vm490, %v485, %v487
    %v497 = vsel %vm490, %v487, %v489
    %505 = vst [vmem:[#allocation2 + $0x188] sm:$0xff] %v491
    %506 = vst [vmem:[#allocation2 + $0x190] sm:$0xff] %v492
    %507 = vst [vmem:[#allocation2 + $0x198] sm:$0xff] %v493
    %508 = vst [vmem:[#allocation2 + $0x1a0] sm:$0xff] %v494
    %509 = vst [vmem:[#allocation2 + $0x1a8] sm:$0xff] %v495
    %510 = vst [vmem:[#allocation2 + $0x1b0] sm:$0xff] %v496
    %511 = vst.msk [vmem:[#allocation2 + $0x1b8] sm:$0xff] %vm153, %v497
    %v512 = vld [vmem:[%s0] sm:$0xff]
    %v513 = vld [vmem:[%s0 + $0x8] sm:$0xff]
    %v514 = vld [vmem:[%s0 + $0x10] sm:$0xff]
    %v515 = vld [vmem:[%s0 + $0x18] sm:$0xff]
    %v516 = vld [vmem:[%s0 + $0x20] sm:$0xff]
    %v517 = vld [vmem:[%s0 + $0x28] sm:$0xff]
    %v518 = vld [vmem:[%s0 + $0x30] sm:$0xff]
    %v519 = vld [vmem:[%s0 + $0x38] sm:$0xff]
    %528 = vrot.lane.b32.xlu0 %v512, 93
    %v529 = vpop.permute.xlu0 %528
    %530 = vrot.lane.b32.xlu0 %v513, 93
    %v531 = vpop.permute.xlu0 %530
    %532 = vrot.lane.b32.xlu0 %v514, 93
    %v533 = vpop.permute.xlu0 %532
    %534 = vrot.lane.b32.xlu0 %v515, 93
    %v535 = vpop.permute.xlu0 %534
    %536 = vrot.lane.b32.xlu0 %v516, 93
    %v537 = vpop.permute.xlu0 %536
    %538 = vrot.lane.b32.xlu0 %v517, 93
    %v539 = vpop.permute.xlu0 %538
    %540 = vrot.lane.b32.xlu0 %v518, 93
    %v541 = vpop.permute.xlu0 %540
    %542 = vrot.lane.b32.xlu0 %v519, 93
    %v543 = vpop.permute.xlu0 %542
    %vm544 = vcmask 760832
    %v545 = vsel %vm544, %v529, %v531
    %v546 = vsel %vm544, %v531, %v533
    %v547 = vsel %vm544, %v533, %v535
    %v548 = vsel %vm544, %v535, %v537
    %v549 = vsel %vm544, %v537, %v539
    %v550 = vsel %vm544, %v539, %v541
    %v551 = vsel %vm544, %v541, %v543
    %559 = vst [vmem:[#allocation2 + $0x1c0] sm:$0xff] %v545
    %560 = vst [vmem:[#allocation2 + $0x1c8] sm:$0xff] %v546
    %561 = vst [vmem:[#allocation2 + $0x1d0] sm:$0xff] %v547
    %562 = vst [vmem:[#allocation2 + $0x1d8] sm:$0xff] %v548
    %563 = vst [vmem:[#allocation2 + $0x1e0] sm:$0xff] %v549
    %564 = vst [vmem:[#allocation2 + $0x1e8] sm:$0xff] %v550
    %565 = vst.msk [vmem:[#allocation2 + $0x1f0] sm:$0xff] %vm153, %v551
    %v566 = vld [vmem:[%s0] sm:$0xff]
    %v567 = vld [vmem:[%s0 + $0x8] sm:$0xff]
    %v568 = vld [vmem:[%s0 + $0x10] sm:$0xff]
    %v569 = vld [vmem:[%s0 + $0x18] sm:$0xff]
    %v570 = vld [vmem:[%s0 + $0x20] sm:$0xff]
    %v571 = vld [vmem:[%s0 + $0x28] sm:$0xff]
    %v572 = vld [vmem:[%s0 + $0x30] sm:$0xff]
    %v573 = vld [vmem:[%s0 + $0x38] sm:$0xff]
    %582 = vrot.lane.b32.xlu0 %v566, 92
    %v583 = vpop.permute.xlu0 %582
    %584 = vrot.lane.b32.xlu0 %v567, 92
    %v585 = vpop.permute.xlu0 %584
    %586 = vrot.lane.b32.xlu0 %v568, 92
    %v587 = vpop.permute.xlu0 %586
    %588 = vrot.lane.b32.xlu0 %v569, 92
    %v589 = vpop.permute.xlu0 %588
    %590 = vrot.lane.b32.xlu0 %v570, 92
    %v591 = vpop.permute.xlu0 %590
    %592 = vrot.lane.b32.xlu0 %v571, 92
    %v593 = vpop.permute.xlu0 %592
    %594 = vrot.lane.b32.xlu0 %v572, 92
    %v595 = vpop.permute.xlu0 %594
    %596 = vrot.lane.b32.xlu0 %v573, 92
    %v597 = vpop.permute.xlu0 %596
    %vm598 = vcmask 752640
    %v599 = vsel %vm598, %v583, %v585
    %v600 = vsel %vm598, %v585, %v587
    %v601 = vsel %vm598, %v587, %v589
    %v602 = vsel %vm598, %v589, %v591
    %v603 = vsel %vm598, %v591, %v593
    %v604 = vsel %vm598, %v593, %v595
    %v605 = vsel %vm598, %v595, %v597
    %613 = vst [vmem:[#allocation2 + $0x1f8] sm:$0xff] %v599
    %614 = vst [vmem:[#allocation2 + $0x200] sm:$0xff] %v600
    %615 = vst [vmem:[#allocation2 + $0x208] sm:$0xff] %v601
    %616 = vst [vmem:[#allocation2 + $0x210] sm:$0xff] %v602
    %617 = vst [vmem:[#allocation2 + $0x218] sm:$0xff] %v603
    %618 = vst [vmem:[#allocation2 + $0x220] sm:$0xff] %v604
    %619 = vst.msk [vmem:[#allocation2 + $0x228] sm:$0xff] %vm153, %v605
    %v620 = vld [vmem:[%s0] sm:$0xff]
    %v621 = vld [vmem:[%s0 + $0x8] sm:$0xff]
    %v622 = vld [vmem:[%s0 + $0x10] sm:$0xff]
    %v623 = vld [vmem:[%s0 + $0x18] sm:$0xff]
    %v624 = vld [vmem:[%s0 + $0x20] sm:$0xff]
    %v625 = vld [vmem:[%s0 + $0x28] sm:$0xff]
    %v626 = vld [vmem:[%s0 + $0x30] sm:$0xff]
    %v627 = vld [vmem:[%s0 + $0x38] sm:$0xff]
    %636 = vrot.lane.b32.xlu0 %v620, 64
    %v637 = vpop.permute.xlu0 %636
    %638 = vrot.lane.b32.xlu0 %v621, 64
    %v639 = vpop.permute.xlu0 %638
    %640 = vrot.lane.b32.xlu0 %v622, 64
    %v641 = vpop.permute.xlu0 %640
    %642 = vrot.lane.b32.xlu0 %v623, 64
    %v643 = vpop.permute.xlu0 %642
    %644 = vrot.lane.b32.xlu0 %v624, 64
    %v645 = vpop.permute.xlu0 %644
    %646 = vrot.lane.b32.xlu0 %v625, 64
    %v647 = vpop.permute.xlu0 %646
    %648 = vrot.lane.b32.xlu0 %v626, 64
    %v649 = vpop.permute.xlu0 %648
    %650 = vrot.lane.b32.xlu0 %v627, 64
    %v651 = vpop.permute.xlu0 %650
    %vm652 = vcmask 523264
    %v653 = vsel %vm652, %v637, %v639
    %v654 = vsel %vm652, %v639, %v641
    %v655 = vsel %vm652, %v641, %v643
    %v656 = vsel %vm652, %v643, %v645
    %v657 = vsel %vm652, %v645, %v647
    %v658 = vsel %vm652, %v647, %v649
    %v659 = vsel %vm652, %v649, %v651
    %667 = vst [vmem:[#allocation2 + $0x230] sm:$0xff] %v653
    %668 = vst [vmem:[#allocation2 + $0x238] sm:$0xff] %v654
    %669 = vst [vmem:[#allocation2 + $0x240] sm:$0xff] %v655
    %670 = vst [vmem:[#allocation2 + $0x248] sm:$0xff] %v656
    %671 = vst [vmem:[#allocation2 + $0x250] sm:$0xff] %v657
    %672 = vst [vmem:[#allocation2 + $0x258] sm:$0xff] %v658
    %673 = vst.msk [vmem:[#allocation2 + $0x260] sm:$0xff] %vm153, %v659
    %v674 = vld [vmem:[%s0] sm:$0xff]
    %v675 = vld [vmem:[%s0 + $0x8] sm:$0xff]
    %v676 = vld [vmem:[%s0 + $0x10] sm:$0xff]
    %v677 = vld [vmem:[%s0 + $0x18] sm:$0xff]
    %v678 = vld [vmem:[%s0 + $0x20] sm:$0xff]
    %v679 = vld [vmem:[%s0 + $0x28] sm:$0xff]
    %v680 = vld [vmem:[%s0 + $0x30] sm:$0xff]
    %v681 = vld [vmem:[%s0 + $0x38] sm:$0xff]
    %690 = vrot.lane.b32.xlu0 %v674, 63
    %v691 = vpop.permute.xlu0 %690
    %692 = vrot.lane.b32.xlu0 %v675, 63
    %v693 = vpop.permute.xlu0 %692
    %694 = vrot.lane.b32.xlu0 %v676, 63
    %v695 = vpop.permute.xlu0 %694
    %696 = vrot.lane.b32.xlu0 %v677, 63
    %v697 = vpop.permute.xlu0 %696
    %698 = vrot.lane.b32.xlu0 %v678, 63
    %v699 = vpop.permute.xlu0 %698
    %700 = vrot.lane.b32.xlu0 %v679, 63
    %v701 = vpop.permute.xlu0 %700
    %702 = vrot.lane.b32.xlu0 %v680, 63
    %v703 = vpop.permute.xlu0 %702
    %704 = vrot.lane.b32.xlu0 %v681, 63
    %v705 = vpop.permute.xlu0 %704
    %vm706 = vcmask 515072
    %v707 = vsel %vm706, %v691, %v693
    %v708 = vsel %vm706, %v693, %v695
    %v709 = vsel %vm706, %v695, %v697
    %v710 = vsel %vm706, %v697, %v699
    %v711 = vsel %vm706, %v699, %v701
    %v712 = vsel %vm706, %v701, %v703
    %v713 = vsel %vm706, %v703, %v705
    %721 = vst [vmem:[#allocation2 + $0x268] sm:$0xff] %v707
    %722 = vst [vmem:[#allocation2 + $0x270] sm:$0xff] %v708
    %723 = vst [vmem:[#allocation2 + $0x278] sm:$0xff] %v709
    %724 = vst [vmem:[#allocation2 + $0x280] sm:$0xff] %v710
    %725 = vst [vmem:[#allocation2 + $0x288] sm:$0xff] %v711
    %726 = vst [vmem:[#allocation2 + $0x290] sm:$0xff] %v712
    %727 = vst.msk [vmem:[#allocation2 + $0x298] sm:$0xff] %vm153, %v713
    %v728 = vld [vmem:[%s0] sm:$0xff]
    %v729 = vld [vmem:[%s0 + $0x8] sm:$0xff]
    %v730 = vld [vmem:[%s0 + $0x10] sm:$0xff]
    %v731 = vld [vmem:[%s0 + $0x18] sm:$0xff]
    %v732 = vld [vmem:[%s0 + $0x20] sm:$0xff]
    %v733 = vld [vmem:[%s0 + $0x28] sm:$0xff]
    %v734 = vld [vmem:[%s0 + $0x30] sm:$0xff]
    %v735 = vld [vmem:[%s0 + $0x38] sm:$0xff]
    %744 = vrot.lane.b32.xlu0 %v728, 62
    %v745 = vpop.permute.xlu0 %744
    %746 = vrot.lane.b32.xlu0 %v729, 62
    %v747 = vpop.permute.xlu0 %746
    %748 = vrot.lane.b32.xlu0 %v730, 62
    %v749 = vpop.permute.xlu0 %748
    %750 = vrot.lane.b32.xlu0 %v731, 62
    %v751 = vpop.permute.xlu0 %750
    %752 = vrot.lane.b32.xlu0 %v732, 62
    %v753 = vpop.permute.xlu0 %752
    %754 = vrot.lane.b32.xlu0 %v733, 62
    %v755 = vpop.permute.xlu0 %754
    %756 = vrot.lane.b32.xlu0 %v734, 62
    %v757 = vpop.permute.xlu0 %756
    %758 = vrot.lane.b32.xlu0 %v735, 62
    %v759 = vpop.permute.xlu0 %758
    %vm760 = vcmask 506880
    %v761 = vsel %vm760, %v745, %v747
    %v762 = vsel %vm760, %v747, %v749
    %v763 = vsel %vm760, %v749, %v751
    %v764 = vsel %vm760, %v751, %v753
    %v765 = vsel %vm760, %v753, %v755
    %v766 = vsel %vm760, %v755, %v757
    %v767 = vsel %vm760, %v757, %v759
    %775 = vst [vmem:[#allocation2 + $0x2a0] sm:$0xff] %v761
    %776 = vst [vmem:[#allocation2 + $0x2a8] sm:$0xff] %v762
    %777 = vst [vmem:[#allocation2 + $0x2b0] sm:$0xff] %v763
    %778 = vst [vmem:[#allocation2 + $0x2b8] sm:$0xff] %v764
    %779 = vst [vmem:[#allocation2 + $0x2c0] sm:$0xff] %v765
    %780 = vst [vmem:[#allocation2 + $0x2c8] sm:$0xff] %v766
    %781 = vst.msk [vmem:[#allocation2 + $0x2d0] sm:$0xff] %vm153, %v767
    %v782 = vld [vmem:[%s0] sm:$0xff]
    %v783 = vld [vmem:[%s0 + $0x8] sm:$0xff]
    %v784 = vld [vmem:[%s0 + $0x10] sm:$0xff]
    %v785 = vld [vmem:[%s0 + $0x18] sm:$0xff]
    %v786 = vld [vmem:[%s0 + $0x20] sm:$0xff]
    %v787 = vld [vmem:[%s0 + $0x28] sm:$0xff]
    %v788 = vld [vmem:[%s0 + $0x30] sm:$0xff]
    %v789 = vld [vmem:[%s0 + $0x38] sm:$0xff]
    %798 = vrot.lane.b32.xlu0 %v782, 61
    %v799 = vpop.permute.xlu0 %798
    %800 = vrot.lane.b32.xlu0 %v783, 61
    %v801 = vpop.permute.xlu0 %800
    %802 = vrot.lane.b32.xlu0 %v784, 61
    %v803 = vpop.permute.xlu0 %802
    %804 = vrot.lane.b32.xlu0 %v785, 61
    %v805 = vpop.permute.xlu0 %804
    %806 = vrot.lane.b32.xlu0 %v786, 61
    %v807 = vpop.permute.xlu0 %806
    %808 = vrot.lane.b32.xlu0 %v787, 61
    %v809 = vpop.permute.xlu0 %808
    %810 = vrot.lane.b32.xlu0 %v788, 61
    %v811 = vpop.permute.xlu0 %810
    %812 = vrot.lane.b32.xlu0 %v789, 61
    %v813 = vpop.permute.xlu0 %812
    %vm814 = vcmask 498688
    %v815 = vsel %vm814, %v799, %v801
    %v816 = vsel %vm814, %v801, %v803
    %v817 = vsel %vm814, %v803, %v805
    %v818 = vsel %vm814, %v805, %v807
    %v819 = vsel %vm814, %v807, %v809
    %v820 = vsel %vm814, %v809, %v811
    %v821 = vsel %vm814, %v811, %v813
    %829 = vst [vmem:[#allocation2 + $0x2d8] sm:$0xff] %v815
    %830 = vst [vmem:[#allocation2 + $0x2e0] sm:$0xff] %v816
    %831 = vst [vmem:[#allocation2 + $0x2e8] sm:$0xff] %v817
    %832 = vst [vmem:[#allocation2 + $0x2f0] sm:$0xff] %v818
    %833 = vst [vmem:[#allocation2 + $0x2f8] sm:$0xff] %v819
    %834 = vst [vmem:[#allocation2 + $0x300] sm:$0xff] %v820
    %835 = vst.msk [vmem:[#allocation2 + $0x308] sm:$0xff] %vm153, %v821
    %v836 = vld [vmem:[%s0] sm:$0xff]
    %v837 = vld [vmem:[%s0 + $0x8] sm:$0xff]
    %v838 = vld [vmem:[%s0 + $0x10] sm:$0xff]
    %v839 = vld [vmem:[%s0 + $0x18] sm:$0xff]
    %v840 = vld [vmem:[%s0 + $0x20] sm:$0xff]
    %v841 = vld [vmem:[%s0 + $0x28] sm:$0xff]
    %v842 = vld [vmem:[%s0 + $0x30] sm:$0xff]
    %v843 = vld [vmem:[%s0 + $0x38] sm:$0xff]
    %852 = vrot.lane.b32.xlu0 %v836, 60
    %v853 = vpop.permute.xlu0 %852
    %854 = vrot.lane.b32.xlu0 %v837, 60
    %v855 = vpop.permute.xlu0 %854
    %856 = vrot.lane.b32.xlu0 %v838, 60
    %v857 = vpop.permute.xlu0 %856
    %858 = vrot.lane.b32.xlu0 %v839, 60
    %v859 = vpop.permute.xlu0 %858
    %860 = vrot.lane.b32.xlu0 %v840, 60
    %v861 = vpop.permute.xlu0 %860
    %862 = vrot.lane.b32.xlu0 %v841, 60
    %v863 = vpop.permute.xlu0 %862
    %864 = vrot.lane.b32.xlu0 %v842, 60
    %v865 = vpop.permute.xlu0 %864
    %866 = vrot.lane.b32.xlu0 %v843, 60
    %v867 = vpop.permute.xlu0 %866
    %vm868 = vcmask 490496
    %v869 = vsel %vm868, %v853, %v855
    %v870 = vsel %vm868, %v855, %v857
    %v871 = vsel %vm868, %v857, %v859
    %v872 = vsel %vm868, %v859, %v861
    %v873 = vsel %vm868, %v861, %v863
    %v874 = vsel %vm868, %v863, %v865
    %v875 = vsel %vm868, %v865, %v867
    %883 = vst [vmem:[#allocation2 + $0x310] sm:$0xff] %v869
    %884 = vst [vmem:[#allocation2 + $0x318] sm:$0xff] %v870
    %885 = vst [vmem:[#allocation2 + $0x320] sm:$0xff] %v871
    %886 = vst [vmem:[#allocation2 + $0x328] sm:$0xff] %v872
    %887 = vst [vmem:[#allocation2 + $0x330] sm:$0xff] %v873
    %888 = vst [vmem:[#allocation2 + $0x338] sm:$0xff] %v874
    %889 = vst.msk [vmem:[#allocation2 + $0x340] sm:$0xff] %vm153, %v875
    %v890 = vld [vmem:[%s0] sm:$0xff]
    %v891 = vld [vmem:[%s0 + $0x8] sm:$0xff]
    %v892 = vld [vmem:[%s0 + $0x10] sm:$0xff]
    %v893 = vld [vmem:[%s0 + $0x18] sm:$0xff]
    %v894 = vld [vmem:[%s0 + $0x20] sm:$0xff]
    %v895 = vld [vmem:[%s0 + $0x28] sm:$0xff]
    %v896 = vld [vmem:[%s0 + $0x30] sm:$0xff]
    %v897 = vld [vmem:[%s0 + $0x38] sm:$0xff]
    %906 = vrot.lane.b32.xlu0 %v890, 32
    %v907 = vpop.permute.xlu0 %906
    %908 = vrot.lane.b32.xlu0 %v891, 32
    %v909 = vpop.permute.xlu0 %908
    %910 = vrot.lane.b32.xlu0 %v892, 32
    %v911 = vpop.permute.xlu0 %910
    %912 = vrot.lane.b32.xlu0 %v893, 32
    %v913 = vpop.permute.xlu0 %912
    %914 = vrot.lane.b32.xlu0 %v894, 32
    %v915 = vpop.permute.xlu0 %914
    %916 = vrot.lane.b32.xlu0 %v895, 32
    %v917 = vpop.permute.xlu0 %916
    %918 = vrot.lane.b32.xlu0 %v896, 32
    %v919 = vpop.permute.xlu0 %918
    %920 = vrot.lane.b32.xlu0 %v897, 32
    %v921 = vpop.permute.xlu0 %920
    %vm922 = vcmask 261120
    %v923 = vsel %vm922, %v907, %v909
    %v924 = vsel %vm922, %v909, %v911
    %v925 = vsel %vm922, %v911, %v913
    %v926 = vsel %vm922, %v913, %v915
    %v927 = vsel %vm922, %v915, %v917
    %v928 = vsel %vm922, %v917, %v919
    %v929 = vsel %vm922, %v919, %v921
    %937 = vst [vmem:[#allocation2 + $0x348] sm:$0xff] %v923
    %938 = vst [vmem:[#allocation2 + $0x350] sm:$0xff] %v924
    %939 = vst [vmem:[#allocation2 + $0x358] sm:$0xff] %v925
    %940 = vst [vmem:[#allocation2 + $0x360] sm:$0xff] %v926
    %941 = vst [vmem:[#allocation2 + $0x368] sm:$0xff] %v927
    %942 = vst [vmem:[#allocation2 + $0x370] sm:$0xff] %v928
    %943 = vst.msk [vmem:[#allocation2 + $0x378] sm:$0xff] %vm153, %v929
    %v944 = vld [vmem:[%s0] sm:$0xff]
    %v945 = vld [vmem:[%s0 + $0x8] sm:$0xff]
    %v946 = vld [vmem:[%s0 + $0x10] sm:$0xff]
    %v947 = vld [vmem:[%s0 + $0x18] sm:$0xff]
    %v948 = vld [vmem:[%s0 + $0x20] sm:$0xff]
    %v949 = vld [vmem:[%s0 + $0x28] sm:$0xff]
    %v950 = vld [vmem:[%s0 + $0x30] sm:$0xff]
    %v951 = vld [vmem:[%s0 + $0x38] sm:$0xff]
    %960 = vrot.lane.b32.xlu0 %v944, 31
    %v961 = vpop.permute.xlu0 %960
    %962 = vrot.lane.b32.xlu0 %v945, 31
    %v963 = vpop.permute.xlu0 %962
    %964 = vrot.lane.b32.xlu0 %v946, 31
    %v965 = vpop.permute.xlu0 %964
    %966 = vrot.lane.b32.xlu0 %v947, 31
    %v967 = vpop.permute.xlu0 %966
    %968 = vrot.lane.b32.xlu0 %v948, 31
    %v969 = vpop.permute.xlu0 %968
    %970 = vrot.lane.b32.xlu0 %v949, 31
    %v971 = vpop.permute.xlu0 %970
    %972 = vrot.lane.b32.xlu0 %v950, 31
    %v973 = vpop.permute.xlu0 %972
    %974 = vrot.lane.b32.xlu0 %v951, 31
    %v975 = vpop.permute.xlu0 %974
    %vm976 = vcmask 252928
    %v977 = vsel %vm976, %v961, %v963
    %v978 = vsel %vm976, %v963, %v965
    %v979 = vsel %vm976, %v965, %v967
    %v980 = vsel %vm976, %v967, %v969
    %v981 = vsel %vm976, %v969, %v971
    %v982 = vsel %vm976, %v971, %v973
    %v983 = vsel %vm976, %v973, %v975
    %991 = vst [vmem:[#allocation2 + $0x380] sm:$0xff] %v977
    %992 = vst [vmem:[#allocation2 + $0x388] sm:$0xff] %v978
    %993 = vst [vmem:[#allocation2 + $0x390] sm:$0xff] %v979
    %994 = vst [vmem:[#allocation2 + $0x398] sm:$0xff] %v980
    %995 = vst [vmem:[#allocation2 + $0x3a0] sm:$0xff] %v981
    %996 = vst [vmem:[#allocation2 + $0x3a8] sm:$0xff] %v982
    %997 = vst.msk [vmem:[#allocation2 + $0x3b0] sm:$0xff] %vm153, %v983
    %v998 = vld [vmem:[%s0] sm:$0xff]
    %v999 = vld [vmem:[%s0 + $0x8] sm:$0xff]
    %v1000 = vld [vmem:[%s0 + $0x10] sm:$0xff]
    %v1001 = vld [vmem:[%s0 + $0x18] sm:$0xff]
    %v1002 = vld [vmem:[%s0 + $0x20] sm:$0xff]
    %v1003 = vld [vmem:[%s0 + $0x28] sm:$0xff]
    %v1004 = vld [vmem:[%s0 + $0x30] sm:$0xff]
    %v1005 = vld [vmem:[%s0 + $0x38] sm:$0xff]
    %1014 = vrot.lane.b32.xlu0 %v998, 30
    %v1015 = vpop.permute.xlu0 %1014
    %1016 = vrot.lane.b32.xlu0 %v999, 30
    %v1017 = vpop.permute.xlu0 %1016
    %1018 = vrot.lane.b32.xlu0 %v1000, 30
    %v1019 = vpop.permute.xlu0 %1018
    %1020 = vrot.lane.b32.xlu0 %v1001, 30
    %v1021 = vpop.permute.xlu0 %1020
    %1022 = vrot.lane.b32.xlu0 %v1002, 30
    %v1023 = vpop.permute.xlu0 %1022
    %1024 = vrot.lane.b32.xlu0 %v1003, 30
    %v1025 = vpop.permute.xlu0 %1024
    %1026 = vrot.lane.b32.xlu0 %v1004, 30
    %v1027 = vpop.permute.xlu0 %1026
    %1028 = vrot.lane.b32.xlu0 %v1005, 30
    %v1029 = vpop.permute.xlu0 %1028
    %vm1030 = vcmask 244736
    %v1031 = vsel %vm1030, %v1015, %v1017
    %v1032 = vsel %vm1030, %v1017, %v1019
    %v1033 = vsel %vm1030, %v1019, %v1021
    %v1034 = vsel %vm1030, %v1021, %v1023
    %v1035 = vsel %vm1030, %v1023, %v1025
    %v1036 = vsel %vm1030, %v1025, %v1027
    %v1037 = vsel %vm1030, %v1027, %v1029
    %1045 = vst [vmem:[#allocation2 + $0x3b8] sm:$0xff] %v1031
    %1046 = vst [vmem:[#allocation2 + $0x3c0] sm:$0xff] %v1032
    %1047 = vst [vmem:[#allocation2 + $0x3c8] sm:$0xff] %v1033
    %1048 = vst [vmem:[#allocation2 + $0x3d0] sm:$0xff] %v1034
    %1049 = vst [vmem:[#allocation2 + $0x3d8] sm:$0xff] %v1035
    %1050 = vst [vmem:[#allocation2 + $0x3e0] sm:$0xff] %v1036
    %1051 = vst.msk [vmem:[#allocation2 + $0x3e8] sm:$0xff] %vm153, %v1037
    %v1052 = vld [vmem:[%s0] sm:$0xff]
    %v1053 = vld [vmem:[%s0 + $0x8] sm:$0xff]
    %v1054 = vld [vmem:[%s0 + $0x10] sm:$0xff]
    %v1055 = vld [vmem:[%s0 + $0x18] sm:$0xff]
    %v1056 = vld [vmem:[%s0 + $0x20] sm:$0xff]
    %v1057 = vld [vmem:[%s0 + $0x28] sm:$0xff]
    %v1058 = vld [vmem:[%s0 + $0x30] sm:$0xff]
    %v1059 = vld [vmem:[%s0 + $0x38] sm:$0xff]
    %1068 = vrot.lane.b32.xlu0 %v1052, 29
    %v1069 = vpop.permute.xlu0 %1068
    %1070 = vrot.lane.b32.xlu0 %v1053, 29
    %v1071 = vpop.permute.xlu0 %1070
    %1072 = vrot.lane.b32.xlu0 %v1054, 29
    %v1073 = vpop.permute.xlu0 %1072
    %1074 = vrot.lane.b32.xlu0 %v1055, 29
    %v1075 = vpop.permute.xlu0 %1074
    %1076 = vrot.lane.b32.xlu0 %v1056, 29
    %v1077 = vpop.permute.xlu0 %1076
    %1078 = vrot.lane.b32.xlu0 %v1057, 29
    %v1079 = vpop.permute.xlu0 %1078
    %1080 = vrot.lane.b32.xlu0 %v1058, 29
    %v1081 = vpop.permute.xlu0 %1080
    %1082 = vrot.lane.b32.xlu0 %v1059, 29
    %v1083 = vpop.permute.xlu0 %1082
    %vm1084 = vcmask 236544
    %v1085 = vsel %vm1084, %v1069, %v1071
    %v1086 = vsel %vm1084, %v1071, %v1073
    %v1087 = vsel %vm1084, %v1073, %v1075
    %v1088 = vsel %vm1084, %v1075, %v1077
    %v1089 = vsel %vm1084, %v1077, %v1079
    %v1090 = vsel %vm1084, %v1079, %v1081
    %v1091 = vsel %vm1084, %v1081, %v1083
    %1099 = vst [vmem:[#allocation2 + $0x3f0] sm:$0xff] %v1085
    %1100 = vst [vmem:[#allocation2 + $0x3f8] sm:$0xff] %v1086
    %1101 = vst [vmem:[#allocation2 + $0x400] sm:$0xff] %v1087
    %1102 = vst [vmem:[#allocation2 + $0x408] sm:$0xff] %v1088
    %1103 = vst [vmem:[#allocation2 + $0x410] sm:$0xff] %v1089
    %1104 = vst [vmem:[#allocation2 + $0x418] sm:$0xff] %v1090
    %1105 = vst.msk [vmem:[#allocation2 + $0x420] sm:$0xff] %vm153, %v1091
    %v1106 = vld [vmem:[%s0] sm:$0xff]
    %v1107 = vld [vmem:[%s0 + $0x8] sm:$0xff]
    %v1108 = vld [vmem:[%s0 + $0x10] sm:$0xff]
    %v1109 = vld [vmem:[%s0 + $0x18] sm:$0xff]
    %v1110 = vld [vmem:[%s0 + $0x20] sm:$0xff]
    %v1111 = vld [vmem:[%s0 + $0x28] sm:$0xff]
    %v1112 = vld [vmem:[%s0 + $0x30] sm:$0xff]
    %v1113 = vld [vmem:[%s0 + $0x38] sm:$0xff]
    %1122 = vrot.lane.b32.xlu0 %v1106, 28
    %v1123 = vpop.permute.xlu0 %1122
    %1124 = vrot.lane.b32.xlu0 %v1107, 28
    %v1125 = vpop.permute.xlu0 %1124
    %1126 = vrot.lane.b32.xlu0 %v1108, 28
    %v1127 = vpop.permute.xlu0 %1126
    %1128 = vrot.lane.b32.xlu0 %v1109, 28
    %v1129 = vpop.permute.xlu0 %1128
    %1130 = vrot.lane.b32.xlu0 %v1110, 28
    %v1131 = vpop.permute.xlu0 %1130
    %1132 = vrot.lane.b32.xlu0 %v1111, 28
    %v1133 = vpop.permute.xlu0 %1132
    %1134 = vrot.lane.b32.xlu0 %v1112, 28
    %v1135 = vpop.permute.xlu0 %1134
    %1136 = vrot.lane.b32.xlu0 %v1113, 28
    %v1137 = vpop.permute.xlu0 %1136
    %vm1138 = vcmask 228352
    %v1139 = vsel %vm1138, %v1123, %v1125
    %v1140 = vsel %vm1138, %v1125, %v1127
    %v1141 = vsel %vm1138, %v1127, %v1129
    %v1142 = vsel %vm1138, %v1129, %v1131
    %v1143 = vsel %vm1138, %v1131, %v1133
    %v1144 = vsel %vm1138, %v1133, %v1135
    %v1145 = vsel %vm1138, %v1135, %v1137
    %1153 = vst [vmem:[#allocation2 + $0x428] sm:$0xff] %v1139
    %1154 = vst [vmem:[#allocation2 + $0x430] sm:$0xff] %v1140
    %1155 = vst [vmem:[#allocation2 + $0x438] sm:$0xff] %v1141
    %1156 = vst [vmem:[#allocation2 + $0x440] sm:$0xff] %v1142
    %1157 = vst [vmem:[#allocation2 + $0x448] sm:$0xff] %v1143
    %1158 = vst [vmem:[#allocation2 + $0x450] sm:$0xff] %v1144
    %1159 = vst.msk [vmem:[#allocation2 + $0x458] sm:$0xff] %vm153, %v1145
    %v1160 = vld [vmem:[%s0 + $0x8] sm:$0xff]
    %v1161 = vld [vmem:[%s0 + $0x10] sm:$0xff]
    %v1162 = vld [vmem:[%s0 + $0x18] sm:$0xff]
    %v1163 = vld [vmem:[%s0 + $0x20] sm:$0xff]
    %v1164 = vld [vmem:[%s0 + $0x28] sm:$0xff]
    %v1165 = vld [vmem:[%s0 + $0x30] sm:$0xff]
    %v1166 = vld [vmem:[%s0 + $0x38] sm:$0xff]
    %1167 = vst [vmem:[#allocation2 + $0x460] sm:$0xff] %v1160
    %1168 = vst [vmem:[#allocation2 + $0x468] sm:$0xff] %v1161
    %1169 = vst [vmem:[#allocation2 + $0x470] sm:$0xff] %v1162
    %1170 = vst [vmem:[#allocation2 + $0x478] sm:$0xff] %v1163
    %1171 = vst [vmem:[#allocation2 + $0x480] sm:$0xff] %v1164
    %1172 = vst [vmem:[#allocation2 + $0x488] sm:$0xff] %v1165
    %1173 = vst.msk [vmem:[#allocation2 + $0x490] sm:$0xff] %vm153, %v1166
    %v1174 = vld [vmem:[%s0 + $0x8] sm:$0xff]
    %v1175 = vld [vmem:[%s0 + $0x10] sm:$0xff]
    %v1176 = vld [vmem:[%s0 + $0x18] sm:$0xff]
    %v1177 = vld [vmem:[%s0 + $0x20] sm:$0xff]
    %v1178 = vld [vmem:[%s0 + $0x28] sm:$0xff]
    %v1179 = vld [vmem:[%s0 + $0x30] sm:$0xff]
    %v1180 = vld [vmem:[%s0 + $0x38] sm:$0xff]
    %1188 = vrot.lane.b32.xlu0 %v1174, 127
    %v1189 = vpop.permute.xlu0 %1188
    %1190 = vrot.lane.b32.xlu0 %v1175, 127
    %v1191 = vpop.permute.xlu0 %1190
    %1192 = vrot.lane.b32.xlu0 %v1176, 127
    %v1193 = vpop.permute.xlu0 %1192
    %1194 = vrot.lane.b32.xlu0 %v1177, 127
    %v1195 = vpop.permute.xlu0 %1194
    %1196 = vrot.lane.b32.xlu0 %v1178, 127
    %v1197 = vpop.permute.xlu0 %1196
    %1198 = vrot.lane.b32.xlu0 %v1179, 127
    %v1199 = vpop.permute.xlu0 %1198
    %1200 = vrot.lane.b32.xlu0 %v1180, 127
    %v1201 = vpop.permute.xlu0 %1200
    %v1202 = vsel %vm183, %v1189, %v1191
    %v1203 = vsel %vm183, %v1191, %v1193
    %v1204 = vsel %vm183, %v1193, %v1195
    %v1205 = vsel %vm183, %v1195, %v1197
    %v1206 = vsel %vm183, %v1197, %v1199
    %v1207 = vsel %vm183, %v1199, %v1201
    %1215 = vst [vmem:[#allocation2 + $0x498] sm:$0xff] %v1202
    %1216 = vst [vmem:[#allocation2 + $0x4a0] sm:$0xff] %v1203
    %1217 = vst [vmem:[#allocation2 + $0x4a8] sm:$0xff] %v1204
    %1218 = vst [vmem:[#allocation2 + $0x4b0] sm:$0xff] %v1205
    %1219 = vst [vmem:[#allocation2 + $0x4b8] sm:$0xff] %v1206
    %1220 = vst [vmem:[#allocation2 + $0x4c0] sm:$0xff] %v1207
    %1221 = vst.msk [vmem:[#allocation2 + $0x4c8] sm:$0xff] %vm153, %v1201
    %v1222 = vld [vmem:[%s0 + $0x8] sm:$0xff]
    %v1223 = vld [vmem:[%s0 + $0x10] sm:$0xff]
    %v1224 = vld [vmem:[%s0 + $0x18] sm:$0xff]
    %v1225 = vld [vmem:[%s0 + $0x20] sm:$0xff]
    %v1226 = vld [vmem:[%s0 + $0x28] sm:$0xff]
    %v1227 = vld [vmem:[%s0 + $0x30] sm:$0xff]
    %v1228 = vld [vmem:[%s0 + $0x38] sm:$0xff]
    %1236 = vrot.lane.b32.xlu0 %v1222, 126
    %v1237 = vpop.permute.xlu0 %1236
    %1238 = vrot.lane.b32.xlu0 %v1223, 126
    %v1239 = vpop.permute.xlu0 %1238
    %1240 = vrot.lane.b32.xlu0 %v1224, 126
    %v1241 = vpop.permute.xlu0 %1240
    %1242 = vrot.lane.b32.xlu0 %v1225, 126
    %v1243 = vpop.permute.xlu0 %1242
    %1244 = vrot.lane.b32.xlu0 %v1226, 126
    %v1245 = vpop.permute.xlu0 %1244
    %1246 = vrot.lane.b32.xlu0 %v1227, 126
    %v1247 = vpop.permute.xlu0 %1246
    %1248 = vrot.lane.b32.xlu0 %v1228, 126
    %v1249 = vpop.permute.xlu0 %1248
    %v1250 = vsel %vm232, %v1237, %v1239
    %v1251 = vsel %vm232, %v1239, %v1241
    %v1252 = vsel %vm232, %v1241, %v1243
    %v1253 = vsel %vm232, %v1243, %v1245
    %v1254 = vsel %vm232, %v1245, %v1247
    %v1255 = vsel %vm232, %v1247, %v1249
    %1263 = vst [vmem:[#allocation2 + $0x4d0] sm:$0xff] %v1250
    %1264 = vst [vmem:[#allocation2 + $0x4d8] sm:$0xff] %v1251
    %1265 = vst [vmem:[#allocation2 + $0x4e0] sm:$0xff] %v1252
    %1266 = vst [vmem:[#allocation2 + $0x4e8] sm:$0xff] %v1253
    %1267 = vst [vmem:[#allocation2 + $0x4f0] sm:$0xff] %v1254
    %1268 = vst [vmem:[#allocation2 + $0x4f8] sm:$0xff] %v1255
    %1269 = vst.msk [vmem:[#allocation2 + $0x500] sm:$0xff] %vm153, %v1249
    %v1270 = vld [vmem:[%s0 + $0x8] sm:$0xff]
    %v1271 = vld [vmem:[%s0 + $0x10] sm:$0xff]
    %v1272 = vld [vmem:[%s0 + $0x18] sm:$0xff]
    %v1273 = vld [vmem:[%s0 + $0x20] sm:$0xff]
    %v1274 = vld [vmem:[%s0 + $0x28] sm:$0xff]
    %v1275 = vld [vmem:[%s0 + $0x30] sm:$0xff]
    %v1276 = vld [vmem:[%s0 + $0x38] sm:$0xff]
    %1284 = vrot.lane.b32.xlu0 %v1270, 125
    %v1285 = vpop.permute.xlu0 %1284
    %1286 = vrot.lane.b32.xlu0 %v1271, 125
    %v1287 = vpop.permute.xlu0 %1286
    %1288 = vrot.lane.b32.xlu0 %v1272, 125
    %v1289 = vpop.permute.xlu0 %1288
    %1290 = vrot.lane.b32.xlu0 %v1273, 125
    %v1291 = vpop.permute.xlu0 %1290
    %1292 = vrot.lane.b32.xlu0 %v1274, 125
    %v1293 = vpop.permute.xlu0 %1292
    %1294 = vrot.lane.b32.xlu0 %v1275, 125
    %v1295 = vpop.permute.xlu0 %1294
    %1296 = vrot.lane.b32.xlu0 %v1276, 125
    %v1297 = vpop.permute.xlu0 %1296
    %v1298 = vsel %vm281, %v1285, %v1287
    %v1299 = vsel %vm281, %v1287, %v1289
    %v1300 = vsel %vm281, %v1289, %v1291
    %v1301 = vsel %vm281, %v1291, %v1293
    %v1302 = vsel %vm281, %v1293, %v1295
    %v1303 = vsel %vm281, %v1295, %v1297
    %1311 = vst [vmem:[#allocation2 + $0x508] sm:$0xff] %v1298
    %1312 = vst [vmem:[#allocation2 + $0x510] sm:$0xff] %v1299
    %1313 = vst [vmem:[#allocation2 + $0x518] sm:$0xff] %v1300
    %1314 = vst [vmem:[#allocation2 + $0x520] sm:$0xff] %v1301
    %1315 = vst [vmem:[#allocation2 + $0x528] sm:$0xff] %v1302
    %1316 = vst [vmem:[#allocation2 + $0x530] sm:$0xff] %v1303
    %1317 = vst.msk [vmem:[#allocation2 + $0x538] sm:$0xff] %vm153, %v1297
    %v1318 = vld [vmem:[%s0 + $0x8] sm:$0xff]
    %v1319 = vld [vmem:[%s0 + $0x10] sm:$0xff]
    %v1320 = vld [vmem:[%s0 + $0x18] sm:$0xff]
    %v1321 = vld [vmem:[%s0 + $0x20] sm:$0xff]
    %v1322 = vld [vmem:[%s0 + $0x28] sm:$0xff]
    %v1323 = vld [vmem:[%s0 + $0x30] sm:$0xff]
    %v1324 = vld [vmem:[%s0 + $0x38] sm:$0xff]
    %1332 = vrot.lane.b32.xlu0 %v1318, 124
    %v1333 = vpop.permute.xlu0 %1332
    %1334 = vrot.lane.b32.xlu0 %v1319, 124
    %v1335 = vpop.permute.xlu0 %1334
    %1336 = vrot.lane.b32.xlu0 %v1320, 124
    %v1337 = vpop.permute.xlu0 %1336
    %1338 = vrot.lane.b32.xlu0 %v1321, 124
    %v1339 = vpop.permute.xlu0 %1338
    %1340 = vrot.lane.b32.xlu0 %v1322, 124
    %v1341 = vpop.permute.xlu0 %1340
    %1342 = vrot.lane.b32.xlu0 %v1323, 124
    %v1343 = vpop.permute.xlu0 %1342
    %1344 = vrot.lane.b32.xlu0 %v1324, 124
    %v1345 = vpop.permute.xlu0 %1344
    %v1346 = vsel %vm153, %v1333, %v1335
    %v1347 = vsel %vm153, %v1335, %v1337
    %v1348 = vsel %vm153, %v1337, %v1339
    %v1349 = vsel %vm153, %v1339, %v1341
    %v1350 = vsel %vm153, %v1341, %v1343
    %v1351 = vsel %vm153, %v1343, %v1345
    %1359 = vst [vmem:[#allocation2 + $0x540] sm:$0xff] %v1346
    %1360 = vst [vmem:[#allocation2 + $0x548] sm:$0xff] %v1347
    %1361 = vst [vmem:[#allocation2 + $0x550] sm:$0xff] %v1348
    %1362 = vst [vmem:[#allocation2 + $0x558] sm:$0xff] %v1349
    %1363 = vst [vmem:[#allocation2 + $0x560] sm:$0xff] %v1350
    %1364 = vst [vmem:[#allocation2 + $0x568] sm:$0xff] %v1351
    %1365 = vst.msk [vmem:[#allocation2 + $0x570] sm:$0xff] %vm153, %v1345
    %v1366 = vld [vmem:[#allocation4] sm:$0xff]
    %v1367 = vld [vmem:[#allocation2] sm:$0xff]
    %v1368 = vld [vmem:[#allocation2 + $0x8] sm:$0xff]
    %v1369 = vld [vmem:[#allocation2 + $0x10] sm:$0xff]
    %v1370 = vld [vmem:[#allocation2 + $0x18] sm:$0xff]
    %v1371 = vld [vmem:[#allocation2 + $0x20] sm:$0xff]
    %v1372 = vld [vmem:[#allocation2 + $0x28] sm:$0xff]
    %v1373 = vld [vmem:[#allocation2 + $0x30] sm:$0xff]
    %v1374 = vld [vmem:[#allocation2 + $0x38] sm:$0xff]
    %v1375 = vld [vmem:[#allocation2 + $0x40] sm:$0xff]
    %v1376 = vld [vmem:[#allocation2 + $0x48] sm:$0xff]
    %v1377 = vld [vmem:[#allocation2 + $0x50] sm:$0xff]
    %v1378 = vld [vmem:[#allocation2 + $0x58] sm:$0xff]
    %v1379 = vld [vmem:[#allocation2 + $0x60] sm:$0xff]
    %v1380 = vld [vmem:[#allocation2 + $0x68] sm:$0xff]
    %v1381 = vld [vmem:[#allocation2 + $0x70] sm:$0xff]
    %v1382 = vld [vmem:[#allocation2 + $0x78] sm:$0xff]
    %v1383 = vld [vmem:[#allocation2 + $0x80] sm:$0xff]
    %v1384 = vld [vmem:[#allocation2 + $0x88] sm:$0xff]
    %v1385 = vld [vmem:[#allocation2 + $0x90] sm:$0xff]
    %v1386 = vld [vmem:[#allocation2 + $0x98] sm:$0xff]
    %v1387 = vld [vmem:[#allocation2 + $0xa0] sm:$0xff]
    %v1388 = vld [vmem:[#allocation2 + $0xa8] sm:$0xff]
    %v1389 = vld [vmem:[#allocation2 + $0xb0] sm:$0xff]
    %v1390 = vld [vmem:[#allocation2 + $0xb8] sm:$0xff]
    %v1391 = vld [vmem:[#allocation2 + $0xc0] sm:$0xff]
    %v1392 = vld [vmem:[#allocation2 + $0xc8] sm:$0xff]
    %v1393 = vld [vmem:[#allocation2 + $0xd0] sm:$0xff]
    %v1394 = vld [vmem:[#allocation2 + $0xd8] sm:$0xff]
    %v1395 = vld [vmem:[#allocation2 + $0xe0] sm:$0xff]
    %v1396 = vld [vmem:[#allocation2 + $0xe8] sm:$0xff]
    %v1397 = vld [vmem:[#allocation2 + $0xf0] sm:$0xff]
    %v1398 = vld [vmem:[#allocation2 + $0xf8] sm:$0xff]
    %v1399 = vld [vmem:[#allocation2 + $0x100] sm:$0xff]
    %v1400 = vld [vmem:[#allocation2 + $0x108] sm:$0xff]
    %v1401 = vld [vmem:[#allocation2 + $0x110] sm:$0xff]
    %v1402 = vld [vmem:[#allocation2 + $0x118] sm:$0xff]
    %v1403 = vld [vmem:[#allocation2 + $0x120] sm:$0xff]
    %v1404 = vld [vmem:[#allocation2 + $0x128] sm:$0xff]
    %v1405 = vld [vmem:[#allocation2 + $0x130] sm:$0xff]
    %v1406 = vld [vmem:[#allocation2 + $0x138] sm:$0xff]
    %v1407 = vld [vmem:[#allocation2 + $0x140] sm:$0xff]
    %v1408 = vld [vmem:[#allocation2 + $0x148] sm:$0xff]
    %v1409 = vld [vmem:[#allocation2 + $0x150] sm:$0xff]
    %v1410 = vld [vmem:[#allocation2 + $0x158] sm:$0xff]
    %v1411 = vld [vmem:[#allocation2 + $0x160] sm:$0xff]
    %v1412 = vld [vmem:[#allocation2 + $0x168] sm:$0xff]
    %v1413 = vld [vmem:[#allocation2 + $0x170] sm:$0xff]
    %v1414 = vld [vmem:[#allocation2 + $0x178] sm:$0xff]
    %v1415 = vld [vmem:[#allocation2 + $0x180] sm:$0xff]
    %v1416 = vld [vmem:[#allocation2 + $0x188] sm:$0xff]
    %v1417 = vld [vmem:[#allocation2 + $0x190] sm:$0xff]
    %v1418 = vld [vmem:[#allocation2 + $0x198] sm:$0xff]
    %v1419 = vld [vmem:[#allocation2 + $0x1a0] sm:$0xff]
    %v1420 = vld [vmem:[#allocation2 + $0x1a8] sm:$0xff]
    %v1421 = vld [vmem:[#allocation2 + $0x1b0] sm:$0xff]
    %v1422 = vld [vmem:[#allocation2 + $0x1b8] sm:$0xff]
    %v1423 = vld [vmem:[#allocation2 + $0x1c0] sm:$0xff]
    %v1424 = vld [vmem:[#allocation2 + $0x1c8] sm:$0xff]
    %v1425 = vld [vmem:[#allocation2 + $0x1d0] sm:$0xff]
    %v1426 = vld [vmem:[#allocation2 + $0x1d8] sm:$0xff]
    %v1427 = vld [vmem:[#allocation2 + $0x1e0] sm:$0xff]
    %v1428 = vld [vmem:[#allocation2 + $0x1e8] sm:$0xff]
    %v1429 = vld [vmem:[#allocation2 + $0x1f0] sm:$0xff]
    %v1430 = vld [vmem:[#allocation2 + $0x1f8] sm:$0xff]
    %v1431 = vld [vmem:[#allocation2 + $0x200] sm:$0xff]
    %v1432 = vld [vmem:[#allocation2 + $0x208] sm:$0xff]
    %v1433 = vld [vmem:[#allocation2 + $0x210] sm:$0xff]
    %v1434 = vld [vmem:[#allocation2 + $0x218] sm:$0xff]
    %v1435 = vld [vmem:[#allocation2 + $0x220] sm:$0xff]
    %v1436 = vld [vmem:[#allocation2 + $0x228] sm:$0xff]
    %v1437 = vld [vmem:[#allocation2 + $0x230] sm:$0xff]
    %v1438 = vld [vmem:[#allocation2 + $0x238] sm:$0xff]
    %v1439 = vld [vmem:[#allocation2 + $0x240] sm:$0xff]
    %v1440 = vld [vmem:[#allocation2 + $0x248] sm:$0xff]
    %v1441 = vld [vmem:[#allocation2 + $0x250] sm:$0xff]
    %v1442 = vld [vmem:[#allocation2 + $0x258] sm:$0xff]
    %v1443 = vld [vmem:[#allocation2 + $0x260] sm:$0xff]
    %v1444 = vld [vmem:[#allocation2 + $0x268] sm:$0xff]
    %v1445 = vld [vmem:[#allocation2 + $0x270] sm:$0xff]
    %v1446 = vld [vmem:[#allocation2 + $0x278] sm:$0xff]
    %v1447 = vld [vmem:[#allocation2 + $0x280] sm:$0xff]
    %v1448 = vld [vmem:[#allocation2 + $0x288] sm:$0xff]
    %v1449 = vld [vmem:[#allocation2 + $0x290] sm:$0xff]
    %v1450 = vld [vmem:[#allocation2 + $0x298] sm:$0xff]
    %v1451 = vld [vmem:[#allocation2 + $0x2a0] sm:$0xff]
    %v1452 = vld [vmem:[#allocation2 + $0x2a8] sm:$0xff]
    %v1453 = vld [vmem:[#allocation2 + $0x2b0] sm:$0xff]
    %v1454 = vld [vmem:[#allocation2 + $0x2b8] sm:$0xff]
    %v1455 = vld [vmem:[#allocation2 + $0x2c0] sm:$0xff]
    %v1456 = vld [vmem:[#allocation2 + $0x2c8] sm:$0xff]
    %v1457 = vld [vmem:[#allocation2 + $0x2d0] sm:$0xff]
    %v1458 = vld [vmem:[#allocation2 + $0x2d8] sm:$0xff]
    %v1459 = vld [vmem:[#allocation2 + $0x2e0] sm:$0xff]
    %v1460 = vld [vmem:[#allocation2 + $0x2e8] sm:$0xff]
    %v1461 = vld [vmem:[#allocation2 + $0x2f0] sm:$0xff]
    %v1462 = vld [vmem:[#allocation2 + $0x2f8] sm:$0xff]
    %v1463 = vld [vmem:[#allocation2 + $0x300] sm:$0xff]
    %v1464 = vld [vmem:[#allocation2 + $0x308] sm:$0xff]
    %v1465 = vld [vmem:[#allocation2 + $0x310] sm:$0xff]
    %v1466 = vld [vmem:[#allocation2 + $0x318] sm:$0xff]
    %v1467 = vld [vmem:[#allocation2 + $0x320] sm:$0xff]
    %v1468 = vld [vmem:[#allocation2 + $0x328] sm:$0xff]
    %v1469 = vld [vmem:[#allocation2 + $0x330] sm:$0xff]
    %v1470 = vld [vmem:[#allocation2 + $0x338] sm:$0xff]
    %v1471 = vld [vmem:[#allocation2 + $0x340] sm:$0xff]
    %v1472 = vld [vmem:[#allocation2 + $0x348] sm:$0xff]
    %v1473 = vld [vmem:[#allocation2 + $0x350] sm:$0xff]
    %v1474 = vld [vmem:[#allocation2 + $0x358] sm:$0xff]
    %v1475 = vld [vmem:[#allocation2 + $0x360] sm:$0xff]
    %v1476 = vld [vmem:[#allocation2 + $0x368] sm:$0xff]
    %v1477 = vld [vmem:[#allocation2 + $0x370] sm:$0xff]
    %v1478 = vld [vmem:[#allocation2 + $0x378] sm:$0xff]
    %v1479 = vld [vmem:[#allocation2 + $0x380] sm:$0xff]
    %v1480 = vld [vmem:[#allocation2 + $0x388] sm:$0xff]
    %v1481 = vld [vmem:[#allocation2 + $0x390] sm:$0xff]
    %v1482 = vld [vmem:[#allocation2 + $0x398] sm:$0xff]
    %v1483 = vld [vmem:[#allocation2 + $0x3a0] sm:$0xff]
    %v1484 = vld [vmem:[#allocation2 + $0x3a8] sm:$0xff]
    %v1485 = vld [vmem:[#allocation2 + $0x3b0] sm:$0xff]
    %v1486 = vld [vmem:[#allocation2 + $0x3b8] sm:$0xff]
    %v1487 = vld [vmem:[#allocation2 + $0x3c0] sm:$0xff]
    %v1488 = vld [vmem:[#allocation2 + $0x3c8] sm:$0xff]
    %v1489 = vld [vmem:[#allocation2 + $0x3d0] sm:$0xff]
    %v1490 = vld [vmem:[#allocation2 + $0x3d8] sm:$0xff]
    %v1491 = vld [vmem:[#allocation2 + $0x3e0] sm:$0xff]
    %v1492 = vld [vmem:[#allocation2 + $0x3e8] sm:$0xff]
    %v1493 = vld [vmem:[#allocation2 + $0x3f0] sm:$0xff]
    %v1494 = vld [vmem:[#allocation2 + $0x3f8] sm:$0xff]
    %v1495 = vld [vmem:[#allocation2 + $0x400] sm:$0xff]
    %v1496 = vld [vmem:[#allocation2 + $0x408] sm:$0xff]
    %v1497 = vld [vmem:[#allocation2 + $0x410] sm:$0xff]
    %v1498 = vld [vmem:[#allocation2 + $0x418] sm:$0xff]
    %v1499 = vld [vmem:[#allocation2 + $0x420] sm:$0xff]
    %v1500 = vld [vmem:[#allocation2 + $0x428] sm:$0xff]
    %v1501 = vld [vmem:[#allocation2 + $0x430] sm:$0xff]
    %v1502 = vld [vmem:[#allocation2 + $0x438] sm:$0xff]
    %v1503 = vld [vmem:[#allocation2 + $0x440] sm:$0xff]
    %v1504 = vld [vmem:[#allocation2 + $0x448] sm:$0xff]
    %v1505 = vld [vmem:[#allocation2 + $0x450] sm:$0xff]
    %v1506 = vld [vmem:[#allocation2 + $0x458] sm:$0xff]
    %v1507 = vld [vmem:[#allocation2 + $0x460] sm:$0xff]
    %v1508 = vld [vmem:[#allocation2 + $0x468] sm:$0xff]
    %v1509 = vld [vmem:[#allocation2 + $0x470] sm:$0xff]
    %v1510 = vld [vmem:[#allocation2 + $0x478] sm:$0xff]
    %v1511 = vld [vmem:[#allocation2 + $0x480] sm:$0xff]
    %v1512 = vld [vmem:[#allocation2 + $0x488] sm:$0xff]
    %v1513 = vld [vmem:[#allocation2 + $0x490] sm:$0xff]
    %v1514 = vld [vmem:[#allocation2 + $0x498] sm:$0xff]
    %v1515 = vld [vmem:[#allocation2 + $0x4a0] sm:$0xff]
    %v1516 = vld [vmem:[#allocation2 + $0x4a8] sm:$0xff]
    %v1517 = vld [vmem:[#allocation2 + $0x4b0] sm:$0xff]
    %v1518 = vld [vmem:[#allocation2 + $0x4b8] sm:$0xff]
    %v1519 = vld [vmem:[#allocation2 + $0x4c0] sm:$0xff]
    %v1520 = vld [vmem:[#allocation2 + $0x4c8] sm:$0xff]
    %v1521 = vld [vmem:[#allocation2 + $0x4d0] sm:$0xff]
    %v1522 = vld [vmem:[#allocation2 + $0x4d8] sm:$0xff]
    %v1523 = vld [vmem:[#allocation2 + $0x4e0] sm:$0xff]
    %v1524 = vld [vmem:[#allocation2 + $0x4e8] sm:$0xff]
    %v1525 = vld [vmem:[#allocation2 + $0x4f0] sm:$0xff]
    %v1526 = vld [vmem:[#allocation2 + $0x4f8] sm:$0xff]
    %v1527 = vld [vmem:[#allocation2 + $0x500] sm:$0xff]
    %v1528 = vld [vmem:[#allocation2 + $0x508] sm:$0xff]
    %v1529 = vld [vmem:[#allocation2 + $0x510] sm:$0xff]
    %v1530 = vld [vmem:[#allocation2 + $0x518] sm:$0xff]
    %v1531 = vld [vmem:[#allocation2 + $0x520] sm:$0xff]
    %v1532 = vld [vmem:[#allocation2 + $0x528] sm:$0xff]
    %v1533 = vld [vmem:[#allocation2 + $0x530] sm:$0xff]
    %v1534 = vld [vmem:[#allocation2 + $0x538] sm:$0xff]
    %v1535 = vld [vmem:[#allocation2 + $0x540] sm:$0xff]
    %v1536 = vld [vmem:[#allocation2 + $0x548] sm:$0xff]
    %v1537 = vld [vmem:[#allocation2 + $0x550] sm:$0xff]
    %v1538 = vld [vmem:[#allocation2 + $0x558] sm:$0xff]
    %v1539 = vld [vmem:[#allocation2 + $0x560] sm:$0xff]
    %v1540 = vld [vmem:[#allocation2 + $0x568] sm:$0xff]
    %v1541 = vld [vmem:[#allocation2 + $0x570] sm:$0xff]
    %v1542 = vpack.c.bf16 %v1374, %v1367
    %v1543 = vpack.c.bf16 %v1375, %v1368
    %v1544 = vpack.c.bf16 %v1376, %v1369
    %v1545 = vpack.c.bf16 %v1377, %v1370
    %v1546 = vpack.c.bf16 %v1378, %v1371
    %v1547 = vpack.c.bf16 %v1379, %v1372
    %v1548 = vpack.c.bf16 %v1380, %v1373
    %v1549 = vpack.c.bf16 %v1388, %v1381
    %v1550 = vpack.c.bf16 %v1389, %v1382
    %v1551 = vpack.c.bf16 %v1390, %v1383
    %v1552 = vpack.c.bf16 %v1391, %v1384
    %v1553 = vpack.c.bf16 %v1392, %v1385
    %v1554 = vpack.c.bf16 %v1393, %v1386
    %v1555 = vpack.c.bf16 %v1394, %v1387
    %v1556 = vpack.c.bf16 %v1402, %v1395
    %v1557 = vpack.c.bf16 %v1403, %v1396
    %v1558 = vpack.c.bf16 %v1404, %v1397
    %v1559 = vpack.c.bf16 %v1405, %v1398
    %v1560 = vpack.c.bf16 %v1406, %v1399
    %v1561 = vpack.c.bf16 %v1407, %v1400
    %v1562 = vpack.c.bf16 %v1408, %v1401
    %v1563 = vpack.c.bf16 %v1416, %v1409
    %v1564 = vpack.c.bf16 %v1417, %v1410
    %v1565 = vpack.c.bf16 %v1418, %v1411
    %v1566 = vpack.c.bf16 %v1419, %v1412
    %v1567 = vpack.c.bf16 %v1420, %v1413
    %v1568 = vpack.c.bf16 %v1421, %v1414
    %v1569 = vpack.c.bf16 %v1422, %v1415
    %v1570 = vpack.c.bf16 %v1430, %v1423
    %v1571 = vpack.c.bf16 %v1431, %v1424
    %v1572 = vpack.c.bf16 %v1432, %v1425
    %v1573 = vpack.c.bf16 %v1433, %v1426
    %v1574 = vpack.c.bf16 %v1434, %v1427
    %v1575 = vpack.c.bf16 %v1435, %v1428
    %v1576 = vpack.c.bf16 %v1436, %v1429
    %v1577 = vpack.c.bf16 %v1444, %v1437
    %v1578 = vpack.c.bf16 %v1445, %v1438
    %v1579 = vpack.c.bf16 %v1446, %v1439
    %v1580 = vpack.c.bf16 %v1447, %v1440
    %v1581 = vpack.c.bf16 %v1448, %v1441
    %v1582 = vpack.c.bf16 %v1449, %v1442
    %v1583 = vpack.c.bf16 %v1450, %v1443
    %v1584 = vpack.c.bf16 %v1458, %v1451
    %v1585 = vpack.c.bf16 %v1459, %v1452
    %v1586 = vpack.c.bf16 %v1460, %v1453
    %v1587 = vpack.c.bf16 %v1461, %v1454
    %v1588 = vpack.c.bf16 %v1462, %v1455
    %v1589 = vpack.c.bf16 %v1463, %v1456
    %v1590 = vpack.c.bf16 %v1464, %v1457
    %v1591 = vpack.c.bf16 %v1472, %v1465
    %v1592 = vpack.c.bf16 %v1473, %v1466
    %v1593 = vpack.c.bf16 %v1474, %v1467
    %v1594 = vpack.c.bf16 %v1475, %v1468
    %v1595 = vpack.c.bf16 %v1476, %v1469
    %v1596 = vpack.c.bf16 %v1477, %v1470
    %v1597 = vpack.c.bf16 %v1478, %v1471
    %v1598 = vpack.c.bf16 %v1486, %v1479
    %v1599 = vpack.c.bf16 %v1487, %v1480
    %v1600 = vpack.c.bf16 %v1488, %v1481
    %v1601 = vpack.c.bf16 %v1489, %v1482
    %v1602 = vpack.c.bf16 %v1490, %v1483
    %v1603 = vpack.c.bf16 %v1491, %v1484
    %v1604 = vpack.c.bf16 %v1492, %v1485
    %v1605 = vpack.c.bf16 %v1500, %v1493
    %v1606 = vpack.c.bf16 %v1501, %v1494
    %v1607 = vpack.c.bf16 %v1502, %v1495
    %v1608 = vpack.c.bf16 %v1503, %v1496
    %v1609 = vpack.c.bf16 %v1504, %v1497
    %v1610 = vpack.c.bf16 %v1505, %v1498
    %v1611 = vpack.c.bf16 %v1506, %v1499
    %v1612 = vpack.c.bf16 %v1514, %v1507
    %v1613 = vpack.c.bf16 %v1515, %v1508
    %v1614 = vpack.c.bf16 %v1516, %v1509
    %v1615 = vpack.c.bf16 %v1517, %v1510
    %v1616 = vpack.c.bf16 %v1518, %v1511
    %v1617 = vpack.c.bf16 %v1519, %v1512
    %v1618 = vpack.c.bf16 %v1520, %v1513
    %v1619 = vpack.c.bf16 %v1528, %v1521
    %v1620 = vpack.c.bf16 %v1529, %v1522
    %v1621 = vpack.c.bf16 %v1530, %v1523
    %v1622 = vpack.c.bf16 %v1531, %v1524
    %v1623 = vpack.c.bf16 %v1532, %v1525
    %v1624 = vpack.c.bf16 %v1533, %v1526
    %v1625 = vpack.c.bf16 %v1534, %v1527
    %v1626 = vpack.c.bf16 %v1535, %v1535
    %v1627 = vpack.c.bf16 %v1536, %v1536
    %v1628 = vpack.c.bf16 %v1537, %v1537
    %v1629 = vpack.c.bf16 %v1538, %v1538
    %v1630 = vpack.c.bf16 %v1539, %v1539
    %v1631 = vpack.c.bf16 %v1540, %v1540
    %v1632 = vpack.c.bf16 %v1541, %v1541
    %v1633 = vld [vmem:[%s2] sm:$0xff]
    %1635 = vset.pattern.permute.xlu0 0
    %1636 = vperm.xlu0 %1635, %v1633
    %v1637 = vpop.permute.xlu0 %1636
    %v1640 = vunpack.c.l.b16 %v1366
    %v1641 = vunpack.c.h.b16 %v1366
    %v1642 = vpack.c.b16 %v1640, %v1640
    %v1643 = vpack.c.b16 %v1641, %v1641
    %vm1645 = vcmask 588800
    %v1647 = vsel %vm1645, %v1643, 0
    %vm1649 = vcmask 1043456
    %v1651 = vsel %vm1649, %v1626, 0
    %v1654 = vsel %vm1649, %v1627, 0
    %v1657 = vsel %vm1649, %v1628, 0
    %v1660 = vsel %vm1649, %v1629, 0
    %v1663 = vsel %vm1649, %v1630, 0
    %v1666 = vsel %vm1649, %v1631, 0
    %v1669 = vsel %vm1649, %v1632, 0
    %1671 = vmatprep.subr.bf16.mxu0 %v1592
    %1672 = vmatpush1.bf16.msra.mxu0 %v1591
    %1673 = vmatprep.subr.bf16.mxu0 %v1585
    %1674 = vmatpush1.bf16.msra.mxu0 %v1584
    %1675 = vmatprep.subr.bf16.mxu0 %v1578
    %1676 = vmatpush1.bf16.msra.mxu0 %v1577
    %1677 = vmatprep.subr.bf16.mxu0 %v1571
    %1678 = vmatpush1.bf16.msra.mxu0 %v1570
    %1679 = vmatprep.subr.bf16.mxu0 %v1564
    %1680 = vmatpush1.bf16.msra.mxu0 %v1563
    %1681 = vmatprep.subr.bf16.mxu0 %v1557
    %1682 = vmatpush1.bf16.msra.mxu0 %v1556
    %1683 = vmatprep.subr.bf16.mxu0 %v1550
    %1684 = vmatpush1.bf16.msra.mxu0 %v1549
    %1685 = vmatprep.subr.bf16.mxu0 %v1543
    %1686 = vmatpush1.bf16.msra.mxu0 %v1542
    %1687 = vmatprep.subr.bf16.mxu0 0
    %1688 = vmatpush2.bf16.msra.mxu0 0
    %1689 = vmatprep.subr.bf16.mxu0 0
    %1690 = vmatpush2.bf16.msra.mxu0 0
    %1691 = vmatprep.subr.bf16.mxu0 0
    %1692 = vmatpush2.bf16.msra.mxu0 0
    %1693 = vmatprep.subr.bf16.mxu0 %v1654
    %1694 = vmatpush2.bf16.msra.mxu0 %v1651
    %1695 = vmatprep.subr.bf16.mxu0 %v1620
    %1696 = vmatpush2.bf16.msra.mxu0 %v1619
    %1697 = vmatprep.subr.bf16.mxu0 %v1613
    %1698 = vmatpush2.bf16.msra.mxu0 %v1612
    %1699 = vmatprep.subr.bf16.mxu0 %v1606
    %1700 = vmatpush2.bf16.msra.mxu0 %v1605
    %1701 = vmatprep.subr.bf16.mxu0 %v1599
    %1702 = vmatpush2.bf16.msra.mxu0 %v1598
    %1703 = vmatprep.mubr.bf16.mxu0 %v1647
    %1704 = vmatmul.mubr.bf16.gmra.mxu0 %v1642
    %v1705 = vpop.f32.mrf.mxu0
    %v1706 = vadd.f32 %v1637, %v1705
    %v1707 = vpop.f32.mrf.mxu0
    %v1708 = vadd.f32 %v1637, %v1707
    %v1709 = vpop.f32.mrf.mxu0
    %v1710 = vpop.f32.mrf.mxu0
    %1711 = vdwg.mxu0
    %1712 = vmatprep.subr.bf16.mxu0 %v1594
    %1713 = vmatpush1.bf16.msra.mxu0 %v1593
    %1714 = vmatprep.subr.bf16.mxu0 %v1587
    %1715 = vmatpush1.bf16.msra.mxu0 %v1586
    %1716 = vmatprep.subr.bf16.mxu0 %v1580
    %1717 = vmatpush1.bf16.msra.mxu0 %v1579
    %1718 = vmatprep.subr.bf16.mxu0 %v1573
    %1719 = vmatpush1.bf16.msra.mxu0 %v1572
    %1720 = vmatprep.subr.bf16.mxu0 %v1566
    %1721 = vmatpush1.bf16.msra.mxu0 %v1565
    %1722 = vmatprep.subr.bf16.mxu0 %v1559
    %1723 = vmatpush1.bf16.msra.mxu0 %v1558
    %1724 = vmatprep.subr.bf16.mxu0 %v1552
    %1725 = vmatpush1.bf16.msra.mxu0 %v1551
    %1726 = vmatprep.subr.bf16.mxu0 %v1545
    %1727 = vmatpush1.bf16.msra.mxu0 %v1544
    %1728 = vmatprep.subr.bf16.mxu0 0
    %1729 = vmatpush2.bf16.msra.mxu0 0
    %1730 = vmatprep.subr.bf16.mxu0 0
    %1731 = vmatpush2.bf16.msra.mxu0 0
    %1732 = vmatprep.subr.bf16.mxu0 0
    %1733 = vmatpush2.bf16.msra.mxu0 0
    %1734 = vmatprep.subr.bf16.mxu0 %v1660
    %1735 = vmatpush2.bf16.msra.mxu0 %v1657
    %1736 = vmatprep.subr.bf16.mxu0 %v1622
    %1737 = vmatpush2.bf16.msra.mxu0 %v1621
    %1738 = vmatprep.subr.bf16.mxu0 %v1615
    %1739 = vmatpush2.bf16.msra.mxu0 %v1614
    %1740 = vmatprep.subr.bf16.mxu0 %v1608
    %1741 = vmatpush2.bf16.msra.mxu0 %v1607
    %1742 = vmatprep.subr.bf16.mxu0 %v1601
    %1743 = vmatpush2.bf16.msra.mxu0 %v1600
    %1744 = vmatprep.mubr.bf16.mxu0 %v1647
    %1745 = vmatmul.mubr.bf16.gmra.mxu0 %v1642
    %v1746 = vpop.f32.mrf.mxu0
    %v1747 = vadd.f32 %v1637, %v1746
    %v1748 = vpop.f32.mrf.mxu0
    %v1749 = vadd.f32 %v1637, %v1748
    %v1750 = vpop.f32.mrf.mxu0
    %v1751 = vpop.f32.mrf.mxu0
    %1752 = vdwg.mxu0
    %1753 = vmatprep.subr.bf16.mxu0 %v1596
    %1754 = vmatpush1.bf16.msra.mxu0 %v1595
    %1755 = vmatprep.subr.bf16.mxu0 %v1589
    %1756 = vmatpush1.bf16.msra.mxu0 %v1588
    %1757 = vmatprep.subr.bf16.mxu0 %v1582
    %1758 = vmatpush1.bf16.msra.mxu0 %v1581
    %1759 = vmatprep.subr.bf16.mxu0 %v1575
    %1760 = vmatpush1.bf16.msra.mxu0 %v1574
    %1761 = vmatprep.subr.bf16.mxu0 %v1568
    %1762 = vmatpush1.bf16.msra.mxu0 %v1567
    %1763 = vmatprep.subr.bf16.mxu0 %v1561
    %1764 = vmatpush1.bf16.msra.mxu0 %v1560
    %1765 = vmatprep.subr.bf16.mxu0 %v1554
    %1766 = vmatpush1.bf16.msra.mxu0 %v1553
    %1767 = vmatprep.subr.bf16.mxu0 %v1547
    %1768 = vmatpush1.bf16.msra.mxu0 %v1546
    %1769 = vmatprep.subr.bf16.mxu0 0
    %1770 = vmatpush2.bf16.msra.mxu0 0
    %1771 = vmatprep.subr.bf16.mxu0 0
    %1772 = vmatpush2.bf16.msra.mxu0 0
    %1773 = vmatprep.subr.bf16.mxu0 0
    %1774 = vmatpush2.bf16.msra.mxu0 0
    %1775 = vmatprep.subr.bf16.mxu0 %v1666
    %1776 = vmatpush2.bf16.msra.mxu0 %v1663
    %1777 = vmatprep.subr.bf16.mxu0 %v1624
    %1778 = vmatpush2.bf16.msra.mxu0 %v1623
    %1779 = vmatprep.subr.bf16.mxu0 %v1617
    %1780 = vmatpush2.bf16.msra.mxu0 %v1616
    %1781 = vmatprep.subr.bf16.mxu0 %v1610
    %1782 = vmatpush2.bf16.msra.mxu0 %v1609
    %1783 = vmatprep.subr.bf16.mxu0 %v1603
    %1784 = vmatpush2.bf16.msra.mxu0 %v1602
    %1785 = vmatprep.mubr.bf16.mxu0 %v1647
    %1786 = vmatmul.mubr.bf16.gmra.mxu0 %v1642
    %v1787 = vpop.f32.mrf.mxu0
    %v1788 = vadd.f32 %v1637, %v1787
    %v1789 = vpop.f32.mrf.mxu0
    %v1790 = vadd.f32 %v1637, %v1789
    %v1791 = vpop.f32.mrf.mxu0
    %v1792 = vpop.f32.mrf.mxu0
    %1793 = vdwg.mxu0
    %1794 = vmatprep.subr.bf16.mxu0 0
    %1795 = vmatpush1.bf16.msra.mxu0 %v1597
    %1796 = vmatprep.subr.bf16.mxu0 0
    %1797 = vmatpush1.bf16.msra.mxu0 %v1590
    %1798 = vmatprep.subr.bf16.mxu0 0
    %1799 = vmatpush1.bf16.msra.mxu0 %v1583
    %1800 = vmatprep.subr.bf16.mxu0 0
    %1801 = vmatpush1.bf16.msra.mxu0 %v1576
    %1802 = vmatprep.subr.bf16.mxu0 0
    %1803 = vmatpush1.bf16.msra.mxu0 %v1569
    %1804 = vmatprep.subr.bf16.mxu0 0
    %1805 = vmatpush1.bf16.msra.mxu0 %v1562
    %1806 = vmatprep.subr.bf16.mxu0 0
    %1807 = vmatpush1.bf16.msra.mxu0 %v1555
    %1808 = vmatprep.subr.bf16.mxu0 0
    %1809 = vmatpush1.bf16.msra.mxu0 %v1548
    %1810 = vmatprep.subr.bf16.mxu0 0
    %1811 = vmatpush2.bf16.msra.mxu0 0
    %1812 = vmatprep.subr.bf16.mxu0 0
    %1813 = vmatpush2.bf16.msra.mxu0 0
    %1814 = vmatprep.subr.bf16.mxu0 0
    %1815 = vmatpush2.bf16.msra.mxu0 0
    %1816 = vmatprep.subr.bf16.mxu0 0
    %1817 = vmatpush2.bf16.msra.mxu0 %v1669
    %1818 = vmatprep.subr.bf16.mxu0 0
    %1819 = vmatpush2.bf16.msra.mxu0 %v1625
    %1820 = vmatprep.subr.bf16.mxu0 0
    %1821 = vmatpush2.bf16.msra.mxu0 %v1618
    %1822 = vmatprep.subr.bf16.mxu0 0
    %1823 = vmatpush2.bf16.msra.mxu0 %v1611
    %1824 = vmatprep.subr.bf16.mxu0 0
    %1825 = vmatpush2.bf16.msra.mxu0 %v1604
    %1826 = vmatprep.mubr.bf16.mxu0 %v1647
    %1827 = vmatmul.mubr.bf16.gmra.mxu0 %v1642
    %v1828 = vpop.f32.mrf.mxu0
    %v1829 = vadd.f32 %v1637, %v1828
    %v1830 = vpop.f32.mrf.mxu0
    %v1831 = vpop.f32.mrf.mxu0
    %v1832 = vpop.f32.mrf.mxu0
    %1833 = vdwg.mxu0
    %v1834 = vmax.f32 %v1706, 0.0
    %v1835 = vmax.f32 %v1708, 0.0
    %v1836 = vmax.f32 %v1747, 0.0
    %v1837 = vmax.f32 %v1749, 0.0
    %v1838 = vmax.f32 %v1788, 0.0
    %v1839 = vmax.f32 %v1790, 0.0
    %v1840 = vmax.f32 %v1829, 0.0
    %1848 = vrot.lane.b32.xlu0 %v1834, 127
    %v1849 = vpop.permute.xlu0 %1848
    %1850 = vrot.lane.b32.xlu0 %v1835, 127
    %v1851 = vpop.permute.xlu0 %1850
    %1852 = vrot.lane.b32.xlu0 %v1836, 127
    %v1853 = vpop.permute.xlu0 %1852
    %1854 = vrot.lane.b32.xlu0 %v1837, 127
    %v1855 = vpop.permute.xlu0 %1854
    %1856 = vrot.lane.b32.xlu0 %v1838, 127
    %v1857 = vpop.permute.xlu0 %1856
    %1858 = vrot.lane.b32.xlu0 %v1839, 127
    %v1859 = vpop.permute.xlu0 %1858
    %1860 = vrot.lane.b32.xlu0 %v1840, 127
    %v1861 = vpop.permute.xlu0 %1860
    %v1862 = vsel %vm183, %v1849, %v1851
    %v1863 = vsel %vm183, %v1851, %v1853
    %v1864 = vsel %vm183, %v1853, %v1855
    %v1865 = vsel %vm183, %v1855, %v1857
    %v1866 = vsel %vm183, %v1857, %v1859
    %v1867 = vsel %vm183, %v1859, %v1861
    %v1875 = vmax.f32 %v1834, %v1862
    %v1876 = vmax.f32 %v1835, %v1863
    %v1877 = vmax.f32 %v1836, %v1864
    %v1878 = vmax.f32 %v1837, %v1865
    %v1879 = vmax.f32 %v1838, %v1866
    %v1880 = vmax.f32 %v1839, %v1867
    %v1881 = vmax.f32 %v1840, %v1861
    %1889 = vrot.lane.b32.xlu0 %v1875, 96
    %v1890 = vpop.permute.xlu0 %1889
    %1891 = vrot.lane.b32.xlu0 %v1876, 96
    %v1892 = vpop.permute.xlu0 %1891
    %1893 = vrot.lane.b32.xlu0 %v1877, 96
    %v1894 = vpop.permute.xlu0 %1893
    %1895 = vrot.lane.b32.xlu0 %v1878, 96
    %v1896 = vpop.permute.xlu0 %1895
    %1897 = vrot.lane.b32.xlu0 %v1879, 96
    %v1898 = vpop.permute.xlu0 %1897
    %1899 = vrot.lane.b32.xlu0 %v1880, 96
    %v1900 = vpop.permute.xlu0 %1899
    %1901 = vrot.lane.b32.xlu0 %v1881, 96
    %v1902 = vpop.permute.xlu0 %1901
    %v1903 = vsel %vm382, %v1890, %v1892
    %v1904 = vsel %vm382, %v1892, %v1894
    %v1905 = vsel %vm382, %v1894, %v1896
    %v1906 = vsel %vm382, %v1896, %v1898
    %v1907 = vsel %vm382, %v1898, %v1900
    %v1908 = vsel %vm382, %v1900, %v1902
    %v1916 = vmax.f32 %v1875, %v1903
    %v1917 = vmax.f32 %v1876, %v1904
    %v1918 = vmax.f32 %v1877, %v1905
    %v1919 = vmax.f32 %v1878, %v1906
    %v1920 = vmax.f32 %v1879, %v1907
    %v1921 = vmax.f32 %v1880, %v1908
    %v1922 = vmax.f32 %v1881, %v1902
    %1923 = vst [vmem:[#allocation3] sm:$0xff] %v1916
    %1924 = vst [vmem:[#allocation3 + $0x8] sm:$0xff] %v1917
    %1925 = vst [vmem:[#allocation3 + $0x10] sm:$0xff] %v1918
    %1926 = vst [vmem:[#allocation3 + $0x18] sm:$0xff] %v1919
    %vm1927 = vcmask 678912
    %1928 = vst.msk [vmem:[#allocation3 + $0x20] sm:$0xff] %vm1927, %v1920
    %1934 = vrot.lane.b32.xlu0 %v1916, 126
    %v1935 = vpop.permute.xlu0 %1934
    %1936 = vrot.lane.b32.xlu0 %v1917, 126
    %v1937 = vpop.permute.xlu0 %1936
    %1938 = vrot.lane.b32.xlu0 %v1918, 126
    %v1939 = vpop.permute.xlu0 %1938
    %1940 = vrot.lane.b32.xlu0 %v1919, 126
    %v1941 = vpop.permute.xlu0 %1940
    %1942 = vrot.lane.b32.xlu0 %v1920, 126
    %v1943 = vpop.permute.xlu0 %1942
    %v1944 = vsel %vm232, %v1935, %v1937
    %v1945 = vsel %vm232, %v1937, %v1939
    %v1946 = vsel %vm232, %v1939, %v1941
    %v1947 = vsel %vm232, %v1941, %v1943
    %1953 = vst [vmem:[#allocation3 + $0x28] sm:$0xff] %v1944
    %1954 = vst [vmem:[#allocation3 + $0x30] sm:$0xff] %v1945
    %1955 = vst [vmem:[#allocation3 + $0x38] sm:$0xff] %v1946
    %1956 = vst [vmem:[#allocation3 + $0x40] sm:$0xff] %v1947
    %1957 = vst.msk [vmem:[#allocation3 + $0x48] sm:$0xff] %vm1927, %v1943
    %1958 = vrot.lane.b32.xlu0 %v1916, 124
    %v1959 = vpop.permute.xlu0 %1958
    %1960 = vrot.lane.b32.xlu0 %v1917, 124
    %v1961 = vpop.permute.xlu0 %1960
    %1962 = vrot.lane.b32.xlu0 %v1918, 124
    %v1963 = vpop.permute.xlu0 %1962
    %1964 = vrot.lane.b32.xlu0 %v1919, 124
    %v1965 = vpop.permute.xlu0 %1964
    %1966 = vrot.lane.b32.xlu0 %v1920, 124
    %v1967 = vpop.permute.xlu0 %1966
    %v1968 = vsel %vm153, %v1959, %v1961
    %v1969 = vsel %vm153, %v1961, %v1963
    %v1970 = vsel %vm153, %v1963, %v1965
    %v1971 = vsel %vm153, %v1965, %v1967
    %1977 = vst [vmem:[#allocation3 + $0x50] sm:$0xff] %v1968
    %1978 = vst [vmem:[#allocation3 + $0x58] sm:$0xff] %v1969
    %1979 = vst [vmem:[#allocation3 + $0x60] sm:$0xff] %v1970
    %1980 = vst [vmem:[#allocation3 + $0x68] sm:$0xff] %v1971
    %1981 = vst.msk [vmem:[#allocation3 + $0x70] sm:$0xff] %vm1927, %v1967
    %1982 = vrot.lane.b32.xlu0 %v1916, 122
    %v1983 = vpop.permute.xlu0 %1982
    %1984 = vrot.lane.b32.xlu0 %v1917, 122
    %v1985 = vpop.permute.xlu0 %1984
    %1986 = vrot.lane.b32.xlu0 %v1918, 122
    %v1987 = vpop.permute.xlu0 %1986
    %1988 = vrot.lane.b32.xlu0 %v1919, 122
    %v1989 = vpop.permute.xlu0 %1988
    %1990 = vrot.lane.b32.xlu0 %v1920, 122
    %v1991 = vpop.permute.xlu0 %1990
    %vm1992 = vcmask 998400
    %v1993 = vsel %vm1992, %v1983, %v1985
    %v1994 = vsel %vm1992, %v1985, %v1987
    %v1995 = vsel %vm1992, %v1987, %v1989
    %v1996 = vsel %vm1992, %v1989, %v1991
    %2002 = vst [vmem:[#allocation3 + $0x78] sm:$0xff] %v1993
    %2003 = vst [vmem:[#allocation3 + $0x80] sm:$0xff] %v1994
    %2004 = vst [vmem:[#allocation3 + $0x88] sm:$0xff] %v1995
    %2005 = vst [vmem:[#allocation3 + $0x90] sm:$0xff] %v1996
    %2006 = vst.msk [vmem:[#allocation3 + $0x98] sm:$0xff] %vm1927, %v1991
    %2007 = vrot.lane.b32.xlu0 %v1916, 120
    %v2008 = vpop.permute.xlu0 %2007
    %2009 = vrot.lane.b32.xlu0 %v1917, 120
    %v2010 = vpop.permute.xlu0 %2009
    %2011 = vrot.lane.b32.xlu0 %v1918, 120
    %v2012 = vpop.permute.xlu0 %2011
    %2013 = vrot.lane.b32.xlu0 %v1919, 120
    %v2014 = vpop.permute.xlu0 %2013
    %2015 = vrot.lane.b32.xlu0 %v1920, 120
    %v2016 = vpop.permute.xlu0 %2015
    %vm2017 = vcmask 982016
    %v2018 = vsel %vm2017, %v2008, %v2010
    %v2019 = vsel %vm2017, %v2010, %v2012
    %v2020 = vsel %vm2017, %v2012, %v2014
    %v2021 = vsel %vm2017, %v2014, %v2016
    %2027 = vst [vmem:[#allocation3 + $0xa0] sm:$0xff] %v2018
    %2028 = vst [vmem:[#allocation3 + $0xa8] sm:$0xff] %v2019
    %2029 = vst [vmem:[#allocation3 + $0xb0] sm:$0xff] %v2020
    %2030 = vst [vmem:[#allocation3 + $0xb8] sm:$0xff] %v2021
    %2031 = vst.msk [vmem:[#allocation3 + $0xc0] sm:$0xff] %vm1927, %v2016
    %2033 = vrot.lane.b32.xlu0 %v1916, 64
    %v2034 = vpop.permute.xlu0 %2033
    %2035 = vrot.lane.b32.xlu0 %v1917, 64
    %v2036 = vpop.permute.xlu0 %2035
    %2037 = vrot.lane.b32.xlu0 %v1918, 64
    %v2038 = vpop.permute.xlu0 %2037
    %2039 = vrot.lane.b32.xlu0 %v1919, 64
    %v2040 = vpop.permute.xlu0 %2039
    %2041 = vrot.lane.b32.xlu0 %v1920, 64
    %v2042 = vpop.permute.xlu0 %2041
    %2043 = vrot.lane.b32.xlu0 %v1921, 64
    %v2044 = vpop.permute.xlu0 %2043
    %v2045 = vsel %vm652, %v2034, %v2036
    %v2046 = vsel %vm652, %v2036, %v2038
    %v2047 = vsel %vm652, %v2038, %v2040
    %v2048 = vsel %vm652, %v2040, %v2042
    %v2049 = vsel %vm652, %v2042, %v2044
    %2055 = vst [vmem:[#allocation3 + $0xc8] sm:$0xff] %v2045
    %2056 = vst [vmem:[#allocation3 + $0xd0] sm:$0xff] %v2046
    %2057 = vst [vmem:[#allocation3 + $0xd8] sm:$0xff] %v2047
    %2058 = vst [vmem:[#allocation3 + $0xe0] sm:$0xff] %v2048
    %2059 = vst.msk [vmem:[#allocation3 + $0xe8] sm:$0xff] %vm1927, %v2049
    %2060 = vrot.lane.b32.xlu0 %v1916, 62
    %v2061 = vpop.permute.xlu0 %2060
    %2062 = vrot.lane.b32.xlu0 %v1917, 62
    %v2063 = vpop.permute.xlu0 %2062
    %2064 = vrot.lane.b32.xlu0 %v1918, 62
    %v2065 = vpop.permute.xlu0 %2064
    %2066 = vrot.lane.b32.xlu0 %v1919, 62
    %v2067 = vpop.permute.xlu0 %2066
    %2068 = vrot.lane.b32.xlu0 %v1920, 62
    %v2069 = vpop.permute.xlu0 %2068
    %2070 = vrot.lane.b32.xlu0 %v1921, 62
    %v2071 = vpop.permute.xlu0 %2070
    %v2072 = vsel %vm760, %v2061, %v2063
    %v2073 = vsel %vm760, %v2063, %v2065
    %v2074 = vsel %vm760, %v2065, %v2067
    %v2075 = vsel %vm760, %v2067, %v2069
    %v2076 = vsel %vm760, %v2069, %v2071
    %2082 = vst [vmem:[#allocation3 + $0xf0] sm:$0xff] %v2072
    %2083 = vst [vmem:[#allocation3 + $0xf8] sm:$0xff] %v2073
    %2084 = vst [vmem:[#allocation3 + $0x100] sm:$0xff] %v2074
    %2085 = vst [vmem:[#allocation3 + $0x108] sm:$0xff] %v2075
    %2086 = vst.msk [vmem:[#allocation3 + $0x110] sm:$0xff] %vm1927, %v2076
    %2087 = vrot.lane.b32.xlu0 %v1916, 60
    %v2088 = vpop.permute.xlu0 %2087
    %2089 = vrot.lane.b32.xlu0 %v1917, 60
    %v2090 = vpop.permute.xlu0 %2089
    %2091 = vrot.lane.b32.xlu0 %v1918, 60
    %v2092 = vpop.permute.xlu0 %2091
    %2093 = vrot.lane.b32.xlu0 %v1919, 60
    %v2094 = vpop.permute.xlu0 %2093
    %2095 = vrot.lane.b32.xlu0 %v1920, 60
    %v2096 = vpop.permute.xlu0 %2095
    %2097 = vrot.lane.b32.xlu0 %v1921, 60
    %v2098 = vpop.permute.xlu0 %2097
    %v2099 = vsel %vm868, %v2088, %v2090
    %v2100 = vsel %vm868, %v2090, %v2092
    %v2101 = vsel %vm868, %v2092, %v2094
    %v2102 = vsel %vm868, %v2094, %v2096
    %v2103 = vsel %vm868, %v2096, %v2098
    %2109 = vst [vmem:[#allocation3 + $0x118] sm:$0xff] %v2099
    %2110 = vst [vmem:[#allocation3 + $0x120] sm:$0xff] %v2100
    %2111 = vst [vmem:[#allocation3 + $0x128] sm:$0xff] %v2101
    %2112 = vst [vmem:[#allocation3 + $0x130] sm:$0xff] %v2102
    %2113 = vst.msk [vmem:[#allocation3 + $0x138] sm:$0xff] %vm1927, %v2103
    %2114 = vrot.lane.b32.xlu0 %v1916, 58
    %v2115 = vpop.permute.xlu0 %2114
    %2116 = vrot.lane.b32.xlu0 %v1917, 58
    %v2117 = vpop.permute.xlu0 %2116
    %2118 = vrot.lane.b32.xlu0 %v1918, 58
    %v2119 = vpop.permute.xlu0 %2118
    %2120 = vrot.lane.b32.xlu0 %v1919, 58
    %v2121 = vpop.permute.xlu0 %2120
    %2122 = vrot.lane.b32.xlu0 %v1920, 58
    %v2123 = vpop.permute.xlu0 %2122
    %2124 = vrot.lane.b32.xlu0 %v1921, 58
    %v2125 = vpop.permute.xlu0 %2124
    %vm2126 = vcmask 474112
    %v2127 = vsel %vm2126, %v2115, %v2117
    %v2128 = vsel %vm2126, %v2117, %v2119
    %v2129 = vsel %vm2126, %v2119, %v2121
    %v2130 = vsel %vm2126, %v2121, %v2123
    %v2131 = vsel %vm2126, %v2123, %v2125
    %2137 = vst [vmem:[#allocation3 + $0x140] sm:$0xff] %v2127
    %2138 = vst [vmem:[#allocation3 + $0x148] sm:$0xff] %v2128
    %2139 = vst [vmem:[#allocation3 + $0x150] sm:$0xff] %v2129
    %2140 = vst [vmem:[#allocation3 + $0x158] sm:$0xff] %v2130
    %2141 = vst.msk [vmem:[#allocation3 + $0x160] sm:$0xff] %vm1927, %v2131
    %2142 = vrot.lane.b32.xlu0 %v1916, 56
    %v2143 = vpop.permute.xlu0 %2142
    %2144 = vrot.lane.b32.xlu0 %v1917, 56
    %v2145 = vpop.permute.xlu0 %2144
    %2146 = vrot.lane.b32.xlu0 %v1918, 56
    %v2147 = vpop.permute.xlu0 %2146
    %2148 = vrot.lane.b32.xlu0 %v1919, 56
    %v2149 = vpop.permute.xlu0 %2148
    %2150 = vrot.lane.b32.xlu0 %v1920, 56
    %v2151 = vpop.permute.xlu0 %2150
    %2152 = vrot.lane.b32.xlu0 %v1921, 56
    %v2153 = vpop.permute.xlu0 %2152
    %vm2154 = vcmask 457728
    %v2155 = vsel %vm2154, %v2143, %v2145
    %v2156 = vsel %vm2154, %v2145, %v2147
    %v2157 = vsel %vm2154, %v2147, %v2149
    %v2158 = vsel %vm2154, %v2149, %v2151
    %v2159 = vsel %vm2154, %v2151, %v2153
    %2165 = vst [vmem:[#allocation3 + $0x168] sm:$0xff] %v2155
    %2166 = vst [vmem:[#allocation3 + $0x170] sm:$0xff] %v2156
    %2167 = vst [vmem:[#allocation3 + $0x178] sm:$0xff] %v2157
    %2168 = vst [vmem:[#allocation3 + $0x180] sm:$0xff] %v2158
    %2169 = vst.msk [vmem:[#allocation3 + $0x188] sm:$0xff] %vm1927, %v2159
    %2170 = vst [vmem:[#allocation3 + $0x190] sm:$0xff] %v1917
    %2171 = vst [vmem:[#allocation3 + $0x198] sm:$0xff] %v1918
    %2172 = vst [vmem:[#allocation3 + $0x1a0] sm:$0xff] %v1919
    %2173 = vst [vmem:[#allocation3 + $0x1a8] sm:$0xff] %v1920
    %2174 = vst.msk [vmem:[#allocation3 + $0x1b0] sm:$0xff] %vm1927, %v1921
    %2175 = vrot.lane.b32.xlu0 %v1921, 126
    %v2176 = vpop.permute.xlu0 %2175
    %v2177 = vsel %vm232, %v1943, %v2176
    %2180 = vst [vmem:[#allocation3 + $0x1b8] sm:$0xff] %v1945
    %2181 = vst [vmem:[#allocation3 + $0x1c0] sm:$0xff] %v1946
    %2182 = vst [vmem:[#allocation3 + $0x1c8] sm:$0xff] %v1947
    %2183 = vst [vmem:[#allocation3 + $0x1d0] sm:$0xff] %v2177
    %2184 = vst.msk [vmem:[#allocation3 + $0x1d8] sm:$0xff] %vm1927, %v2176
    %2185 = vrot.lane.b32.xlu0 %v1921, 124
    %v2186 = vpop.permute.xlu0 %2185
    %v2187 = vsel %vm153, %v1967, %v2186
    %2190 = vst [vmem:[#allocation3 + $0x1e0] sm:$0xff] %v1969
    %2191 = vst [vmem:[#allocation3 + $0x1e8] sm:$0xff] %v1970
    %2192 = vst [vmem:[#allocation3 + $0x1f0] sm:$0xff] %v1971
    %2193 = vst [vmem:[#allocation3 + $0x1f8] sm:$0xff] %v2187
    %2194 = vst.msk [vmem:[#allocation3 + $0x200] sm:$0xff] %vm1927, %v2186
    %2195 = vrot.lane.b32.xlu0 %v1921, 122
    %v2196 = vpop.permute.xlu0 %2195
    %v2197 = vsel %vm1992, %v1991, %v2196
    %2200 = vst [vmem:[#allocation3 + $0x208] sm:$0xff] %v1994
    %2201 = vst [vmem:[#allocation3 + $0x210] sm:$0xff] %v1995
    %2202 = vst [vmem:[#allocation3 + $0x218] sm:$0xff] %v1996
    %2203 = vst [vmem:[#allocation3 + $0x220] sm:$0xff] %v2197
    %2204 = vst.msk [vmem:[#allocation3 + $0x228] sm:$0xff] %vm1927, %v2196
    %2205 = vrot.lane.b32.xlu0 %v1921, 120
    %v2206 = vpop.permute.xlu0 %2205
    %v2207 = vsel %vm2017, %v2016, %v2206
    %2210 = vst [vmem:[#allocation3 + $0x230] sm:$0xff] %v2019
    %2211 = vst [vmem:[#allocation3 + $0x238] sm:$0xff] %v2020
    %2212 = vst [vmem:[#allocation3 + $0x240] sm:$0xff] %v2021
    %2213 = vst [vmem:[#allocation3 + $0x248] sm:$0xff] %v2207
    %2214 = vst.msk [vmem:[#allocation3 + $0x250] sm:$0xff] %vm1927, %v2206
    %2216 = vrot.lane.b32.xlu0 %v1922, 64
    %v2217 = vpop.permute.xlu0 %2216
    %v2218 = vsel %vm652, %v2044, %v2217
    %2220 = vst [vmem:[#allocation3 + $0x258] sm:$0xff] %v2046
    %2221 = vst [vmem:[#allocation3 + $0x260] sm:$0xff] %v2047
    %2222 = vst [vmem:[#allocation3 + $0x268] sm:$0xff] %v2048
    %2223 = vst [vmem:[#allocation3 + $0x270] sm:$0xff] %v2049
    %2224 = vst.msk [vmem:[#allocation3 + $0x278] sm:$0xff] %vm1927, %v2218
    %2225 = vrot.lane.b32.xlu0 %v1922, 62
    %v2226 = vpop.permute.xlu0 %2225
    %v2227 = vsel %vm760, %v2071, %v2226
    %2229 = vst [vmem:[#allocation3 + $0x280] sm:$0xff] %v2073
    %2230 = vst [vmem:[#allocation3 + $0x288] sm:$0xff] %v2074
    %2231 = vst [vmem:[#allocation3 + $0x290] sm:$0xff] %v2075
    %2232 = vst [vmem:[#allocation3 + $0x298] sm:$0xff] %v2076
    %2233 = vst.msk [vmem:[#allocation3 + $0x2a0] sm:$0xff] %vm1927, %v2227
    %2234 = vrot.lane.b32.xlu0 %v1922, 60
    %v2235 = vpop.permute.xlu0 %2234
    %v2236 = vsel %vm868, %v2098, %v2235
    %2238 = vst [vmem:[#allocation3 + $0x2a8] sm:$0xff] %v2100
    %2239 = vst [vmem:[#allocation3 + $0x2b0] sm:$0xff] %v2101
    %2240 = vst [vmem:[#allocation3 + $0x2b8] sm:$0xff] %v2102
    %2241 = vst [vmem:[#allocation3 + $0x2c0] sm:$0xff] %v2103
    %2242 = vst.msk [vmem:[#allocation3 + $0x2c8] sm:$0xff] %vm1927, %v2236
    %2243 = vrot.lane.b32.xlu0 %v1922, 58
    %v2244 = vpop.permute.xlu0 %2243
    %v2245 = vsel %vm2126, %v2125, %v2244
    %2247 = vst [vmem:[#allocation3 + $0x2d0] sm:$0xff] %v2128
    %2248 = vst [vmem:[#allocation3 + $0x2d8] sm:$0xff] %v2129
    %2249 = vst [vmem:[#allocation3 + $0x2e0] sm:$0xff] %v2130
    %2250 = vst [vmem:[#allocation3 + $0x2e8] sm:$0xff] %v2131
    %2251 = vst.msk [vmem:[#allocation3 + $0x2f0] sm:$0xff] %vm1927, %v2245
    %2252 = vrot.lane.b32.xlu0 %v1922, 56
    %v2253 = vpop.permute.xlu0 %2252
    %v2254 = vsel %vm2154, %v2153, %v2253
    %2256 = vst [vmem:[#allocation3 + $0x2f8] sm:$0xff] %v2156
    %2257 = vst [vmem:[#allocation3 + $0x300] sm:$0xff] %v2157
    %2258 = vst [vmem:[#allocation3 + $0x308] sm:$0xff] %v2158
    %2259 = vst [vmem:[#allocation3 + $0x310] sm:$0xff] %v2159
    %2260 = vst.msk [vmem:[#allocation3 + $0x318] sm:$0xff] %vm1927, %v2254
    %2261 = vst [vmem:[#allocation3 + $0x320] sm:$0xff] %v1918
    %2262 = vst [vmem:[#allocation3 + $0x328] sm:$0xff] %v1919
    %2263 = vst [vmem:[#allocation3 + $0x330] sm:$0xff] %v1920
    %2264 = vst [vmem:[#allocation3 + $0x338] sm:$0xff] %v1921
    %2265 = vst.msk [vmem:[#allocation3 + $0x340] sm:$0xff] %vm1927, %v1922
    %2266 = vrot.lane.b32.xlu0 %v1922, 126
    %v2267 = vpop.permute.xlu0 %2266
    %v2268 = vsel %vm232, %v2176, %v2267
    %2271 = vst [vmem:[#allocation3 + $0x348] sm:$0xff] %v1946
    %2272 = vst [vmem:[#allocation3 + $0x350] sm:$0xff] %v1947
    %2273 = vst [vmem:[#allocation3 + $0x358] sm:$0xff] %v2177
    %2274 = vst [vmem:[#allocation3 + $0x360] sm:$0xff] %v2268
    %2275 = vst.msk [vmem:[#allocation3 + $0x368] sm:$0xff] %vm1927, %v2267
    %2276 = vrot.lane.b32.xlu0 %v1922, 124
    %v2277 = vpop.permute.xlu0 %2276
    %v2278 = vsel %vm153, %v2186, %v2277
    %2281 = vst [vmem:[#allocation3 + $0x370] sm:$0xff] %v1970
    %2282 = vst [vmem:[#allocation3 + $0x378] sm:$0xff] %v1971
    %2283 = vst [vmem:[#allocation3 + $0x380] sm:$0xff] %v2187
    %2284 = vst [vmem:[#allocation3 + $0x388] sm:$0xff] %v2278
    %2285 = vst.msk [vmem:[#allocation3 + $0x390] sm:$0xff] %vm1927, %v2277
    %2286 = vrot.lane.b32.xlu0 %v1922, 122
    %v2287 = vpop.permute.xlu0 %2286
    %v2288 = vsel %vm1992, %v2196, %v2287
    %2291 = vst [vmem:[#allocation3 + $0x398] sm:$0xff] %v1995
    %2292 = vst [vmem:[#allocation3 + $0x3a0] sm:$0xff] %v1996
    %2293 = vst [vmem:[#allocation3 + $0x3a8] sm:$0xff] %v2197
    %2294 = vst [vmem:[#allocation3 + $0x3b0] sm:$0xff] %v2288
    %2295 = vst.msk [vmem:[#allocation3 + $0x3b8] sm:$0xff] %vm1927, %v2287
    %2296 = vrot.lane.b32.xlu0 %v1922, 120
    %v2297 = vpop.permute.xlu0 %2296
    %v2298 = vsel %vm2017, %v2206, %v2297
    %2301 = vst [vmem:[#allocation3 + $0x3c0] sm:$0xff] %v2020
    %2302 = vst [vmem:[#allocation3 + $0x3c8] sm:$0xff] %v2021
    %2303 = vst [vmem:[#allocation3 + $0x3d0] sm:$0xff] %v2207
    %2304 = vst [vmem:[#allocation3 + $0x3d8] sm:$0xff] %v2298
    %2305 = vst.msk [vmem:[#allocation3 + $0x3e0] sm:$0xff] %vm1927, %v2297
    %v2306 = vld [vmem:[#allocation6] sm:$0xff]
    %v2307 = vld [vmem:[#allocation6 + $0x8] sm:$0xff]
    %v2308 = vld [vmem:[#allocation3] sm:$0xff]
    %v2309 = vld [vmem:[#allocation3 + $0x8] sm:$0xff]
    %v2310 = vld [vmem:[#allocation3 + $0x10] sm:$0xff]
    %v2311 = vld [vmem:[#allocation3 + $0x18] sm:$0xff]
    %v2312 = vld [vmem:[#allocation3 + $0x20] sm:$0xff]
    %v2313 = vld [vmem:[#allocation3 + $0x28] sm:$0xff]
    %v2314 = vld [vmem:[#allocation3 + $0x30] sm:$0xff]
    %v2315 = vld [vmem:[#allocation3 + $0x38] sm:$0xff]
    %v2316 = vld [vmem:[#allocation3 + $0x40] sm:$0xff]
    %v2317 = vld [vmem:[#allocation3 + $0x48] sm:$0xff]
    %v2318 = vld [vmem:[#allocation3 + $0x50] sm:$0xff]
    %v2319 = vld [vmem:[#allocation3 + $0x58] sm:$0xff]
    %v2320 = vld [vmem:[#allocation3 + $0x60] sm:$0xff]
    %v2321 = vld [vmem:[#allocation3 + $0x68] sm:$0xff]
    %v2322 = vld [vmem:[#allocation3 + $0x70] sm:$0xff]
    %v2323 = vld [vmem:[#allocation3 + $0x78] sm:$0xff]
    %v2324 = vld [vmem:[#allocation3 + $0x80] sm:$0xff]
    %v2325 = vld [vmem:[#allocation3 + $0x88] sm:$0xff]
    %v2326 = vld [vmem:[#allocation3 + $0x90] sm:$0xff]
    %v2327 = vld [vmem:[#allocation3 + $0x98] sm:$0xff]
    %v2328 = vld [vmem:[#allocation3 + $0xa0] sm:$0xff]
    %v2329 = vld [vmem:[#allocation3 + $0xa8] sm:$0xff]
    %v2330 = vld [vmem:[#allocation3 + $0xb0] sm:$0xff]
    %v2331 = vld [vmem:[#allocation3 + $0xb8] sm:$0xff]
    %v2332 = vld [vmem:[#allocation3 + $0xc0] sm:$0xff]
    %v2333 = vld [vmem:[#allocation3 + $0xc8] sm:$0xff]
    %v2334 = vld [vmem:[#allocation3 + $0xd0] sm:$0xff]
    %v2335 = vld [vmem:[#allocation3 + $0xd8] sm:$0xff]
    %v2336 = vld [vmem:[#allocation3 + $0xe0] sm:$0xff]
    %v2337 = vld [vmem:[#allocation3 + $0xe8] sm:$0xff]
    %v2338 = vld [vmem:[#allocation3 + $0xf0] sm:$0xff]
    %v2339 = vld [vmem:[#allocation3 + $0xf8] sm:$0xff]
    %v2340 = vld [vmem:[#allocation3 + $0x100] sm:$0xff]
    %v2341 = vld [vmem:[#allocation3 + $0x108] sm:$0xff]
    %v2342 = vld [vmem:[#allocation3 + $0x110] sm:$0xff]
    %v2343 = vld [vmem:[#allocation3 + $0x118] sm:$0xff]
    %v2344 = vld [vmem:[#allocation3 + $0x120] sm:$0xff]
    %v2345 = vld [vmem:[#allocation3 + $0x128] sm:$0xff]
    %v2346 = vld [vmem:[#allocation3 + $0x130] sm:$0xff]
    %v2347 = vld [vmem:[#allocation3 + $0x138] sm:$0xff]
    %v2348 = vld [vmem:[#allocation3 + $0x140] sm:$0xff]
    %v2349 = vld [vmem:[#allocation3 + $0x148] sm:$0xff]
    %v2350 = vld [vmem:[#allocation3 + $0x150] sm:$0xff]
    %v2351 = vld [vmem:[#allocation3 + $0x158] sm:$0xff]
    %v2352 = vld [vmem:[#allocation3 + $0x160] sm:$0xff]
    %v2353 = vld [vmem:[#allocation3 + $0x168] sm:$0xff]
    %v2354 = vld [vmem:[#allocation3 + $0x170] sm:$0xff]
    %v2355 = vld [vmem:[#allocation3 + $0x178] sm:$0xff]
    %v2356 = vld [vmem:[#allocation3 + $0x180] sm:$0xff]
    %v2357 = vld [vmem:[#allocation3 + $0x188] sm:$0xff]
    %v2358 = vld [vmem:[#allocation3 + $0x190] sm:$0xff]
    %v2359 = vld [vmem:[#allocation3 + $0x198] sm:$0xff]
    %v2360 = vld [vmem:[#allocation3 + $0x1a0] sm:$0xff]
    %v2361 = vld [vmem:[#allocation3 + $0x1a8] sm:$0xff]
    %v2362 = vld [vmem:[#allocation3 + $0x1b0] sm:$0xff]
    %v2363 = vld [vmem:[#allocation3 + $0x1b8] sm:$0xff]
    %v2364 = vld [vmem:[#allocation3 + $0x1c0] sm:$0xff]
    %v2365 = vld [vmem:[#allocation3 + $0x1c8] sm:$0xff]
    %v2366 = vld [vmem:[#allocation3 + $0x1d0] sm:$0xff]
    %v2367 = vld [vmem:[#allocation3 + $0x1d8] sm:$0xff]
    %v2368 = vld [vmem:[#allocation3 + $0x1e0] sm:$0xff]
    %v2369 = vld [vmem:[#allocation3 + $0x1e8] sm:$0xff]
    %v2370 = vld [vmem:[#allocation3 + $0x1f0] sm:$0xff]
    %v2371 = vld [vmem:[#allocation3 + $0x1f8] sm:$0xff]
    %v2372 = vld [vmem:[#allocation3 + $0x200] sm:$0xff]
    %v2373 = vld [vmem:[#allocation3 + $0x208] sm:$0xff]
    %v2374 = vld [vmem:[#allocation3 + $0x210] sm:$0xff]
    %v2375 = vld [vmem:[#allocation3 + $0x218] sm:$0xff]
    %v2376 = vld [vmem:[#allocation3 + $0x220] sm:$0xff]
    %v2377 = vld [vmem:[#allocation3 + $0x228] sm:$0xff]
    %v2378 = vld [vmem:[#allocation3 + $0x230] sm:$0xff]
    %v2379 = vld [vmem:[#allocation3 + $0x238] sm:$0xff]
    %v2380 = vld [vmem:[#allocation3 + $0x240] sm:$0xff]
    %v2381 = vld [vmem:[#allocation3 + $0x248] sm:$0xff]
    %v2382 = vld [vmem:[#allocation3 + $0x250] sm:$0xff]
    %v2383 = vld [vmem:[#allocation3 + $0x258] sm:$0xff]
    %v2384 = vld [vmem:[#allocation3 + $0x260] sm:$0xff]
    %v2385 = vld [vmem:[#allocation3 + $0x268] sm:$0xff]
    %v2386 = vld [vmem:[#allocation3 + $0x270] sm:$0xff]
    %v2387 = vld [vmem:[#allocation3 + $0x278] sm:$0xff]
    %v2388 = vld [vmem:[#allocation3 + $0x280] sm:$0xff]
    %v2389 = vld [vmem:[#allocation3 + $0x288] sm:$0xff]
    %v2390 = vld [vmem:[#allocation3 + $0x290] sm:$0xff]
    %v2391 = vld [vmem:[#allocation3 + $0x298] sm:$0xff]
    %v2392 = vld [vmem:[#allocation3 + $0x2a0] sm:$0xff]
    %v2393 = vld [vmem:[#allocation3 + $0x2a8] sm:$0xff]
    %v2394 = vld [vmem:[#allocation3 + $0x2b0] sm:$0xff]
    %v2395 = vld [vmem:[#allocation3 + $0x2b8] sm:$0xff]
    %v2396 = vld [vmem:[#allocation3 + $0x2c0] sm:$0xff]
    %v2397 = vld [vmem:[#allocation3 + $0x2c8] sm:$0xff]
    %v2398 = vld [vmem:[#allocation3 + $0x2d0] sm:$0xff]
    %v2399 = vld [vmem:[#allocation3 + $0x2d8] sm:$0xff]
    %v2400 = vld [vmem:[#allocation3 + $0x2e0] sm:$0xff]
    %v2401 = vld [vmem:[#allocation3 + $0x2e8] sm:$0xff]
    %v2402 = vld [vmem:[#allocation3 + $0x2f0] sm:$0xff]
    %v2403 = vld [vmem:[#allocation3 + $0x2f8] sm:$0xff]
    %v2404 = vld [vmem:[#allocation3 + $0x300] sm:$0xff]
    %v2405 = vld [vmem:[#allocation3 + $0x308] sm:$0xff]
    %v2406 = vld [vmem:[#allocation3 + $0x310] sm:$0xff]
    %v2407 = vld [vmem:[#allocation3 + $0x318] sm:$0xff]
    %v2408 = vld [vmem:[#allocation3 + $0x320] sm:$0xff]
    %v2409 = vld [vmem:[#allocation3 + $0x328] sm:$0xff]
    %v2410 = vld [vmem:[#allocation3 + $0x330] sm:$0xff]
    %v2411 = vld [vmem:[#allocation3 + $0x338] sm:$0xff]
    %v2412 = vld [vmem:[#allocation3 + $0x340] sm:$0xff]
    %v2413 = vld [vmem:[#allocation3 + $0x348] sm:$0xff]
    %v2414 = vld [vmem:[#allocation3 + $0x350] sm:$0xff]
    %v2415 = vld [vmem:[#allocation3 + $0x358] sm:$0xff]
    %v2416 = vld [vmem:[#allocation3 + $0x360] sm:$0xff]
    %v2417 = vld [vmem:[#allocation3 + $0x368] sm:$0xff]
    %v2418 = vld [vmem:[#allocation3 + $0x370] sm:$0xff]
    %v2419 = vld [vmem:[#allocation3 + $0x378] sm:$0xff]
    %v2420 = vld [vmem:[#allocation3 + $0x380] sm:$0xff]
    %v2421 = vld [vmem:[#allocation3 + $0x388] sm:$0xff]
    %v2422 = vld [vmem:[#allocation3 + $0x390] sm:$0xff]
    %v2423 = vld [vmem:[#allocation3 + $0x398] sm:$0xff]
    %v2424 = vld [vmem:[#allocation3 + $0x3a0] sm:$0xff]
    %v2425 = vld [vmem:[#allocation3 + $0x3a8] sm:$0xff]
    %v2426 = vld [vmem:[#allocation3 + $0x3b0] sm:$0xff]
    %v2427 = vld [vmem:[#allocation3 + $0x3b8] sm:$0xff]
    %v2428 = vld [vmem:[#allocation3 + $0x3c0] sm:$0xff]
    %v2429 = vld [vmem:[#allocation3 + $0x3c8] sm:$0xff]
    %v2430 = vld [vmem:[#allocation3 + $0x3d0] sm:$0xff]
    %v2431 = vld [vmem:[#allocation3 + $0x3d8] sm:$0xff]
    %v2432 = vld [vmem:[#allocation3 + $0x3e0] sm:$0xff]
    %v2433 = vpack.c.bf16 %v2313, %v2308
    %v2434 = vpack.c.bf16 %v2314, %v2309
    %v2435 = vpack.c.bf16 %v2315, %v2310
    %v2436 = vpack.c.bf16 %v2316, %v2311
    %v2437 = vpack.c.bf16 %v2317, %v2312
    %v2438 = vpack.c.bf16 %v2323, %v2318
    %v2439 = vpack.c.bf16 %v2324, %v2319
    %v2440 = vpack.c.bf16 %v2325, %v2320
    %v2441 = vpack.c.bf16 %v2326, %v2321
    %v2442 = vpack.c.bf16 %v2327, %v2322
    %v2443 = vpack.c.bf16 %v2333, %v2328
    %v2444 = vpack.c.bf16 %v2334, %v2329
    %v2445 = vpack.c.bf16 %v2335, %v2330
    %v2446 = vpack.c.bf16 %v2336, %v2331
    %v2447 = vpack.c.bf16 %v2337, %v2332
    %v2448 = vpack.c.bf16 %v2343, %v2338
    %v2449 = vpack.c.bf16 %v2344, %v2339
    %v2450 = vpack.c.bf16 %v2345, %v2340
    %v2451 = vpack.c.bf16 %v2346, %v2341
    %v2452 = vpack.c.bf16 %v2347, %v2342
    %v2453 = vpack.c.bf16 %v2353, %v2348
    %v2454 = vpack.c.bf16 %v2354, %v2349
    %v2455 = vpack.c.bf16 %v2355, %v2350
    %v2456 = vpack.c.bf16 %v2356, %v2351
    %v2457 = vpack.c.bf16 %v2357, %v2352
    %v2458 = vpack.c.bf16 %v2363, %v2358
    %v2459 = vpack.c.bf16 %v2364, %v2359
    %v2460 = vpack.c.bf16 %v2365, %v2360
    %v2461 = vpack.c.bf16 %v2366, %v2361
    %v2462 = vpack.c.bf16 %v2367, %v2362
    %v2463 = vpack.c.bf16 %v2373, %v2368
    %v2464 = vpack.c.bf16 %v2374, %v2369
    %v2465 = vpack.c.bf16 %v2375, %v2370
    %v2466 = vpack.c.bf16 %v2376, %v2371
    %v2467 = vpack.c.bf16 %v2377, %v2372
    %v2468 = vpack.c.bf16 %v2383, %v2378
    %v2469 = vpack.c.bf16 %v2384, %v2379
    %v2470 = vpack.c.bf16 %v2385, %v2380
    %v2471 = vpack.c.bf16 %v2386, %v2381
    %v2472 = vpack.c.bf16 %v2387, %v2382
    %v2473 = vpack.c.bf16 %v2393, %v2388
    %v2474 = vpack.c.bf16 %v2394, %v2389
    %v2475 = vpack.c.bf16 %v2395, %v2390
    %v2476 = vpack.c.bf16 %v2396, %v2391
    %v2477 = vpack.c.bf16 %v2397, %v2392
    %v2478 = vpack.c.bf16 %v2403, %v2398
    %v2479 = vpack.c.bf16 %v2404, %v2399
    %v2480 = vpack.c.bf16 %v2405, %v2400
    %v2481 = vpack.c.bf16 %v2406, %v2401
    %v2482 = vpack.c.bf16 %v2407, %v2402
    %v2483 = vpack.c.bf16 %v2413, %v2408
    %v2484 = vpack.c.bf16 %v2414, %v2409
    %v2485 = vpack.c.bf16 %v2415, %v2410
    %v2486 = vpack.c.bf16 %v2416, %v2411
    %v2487 = vpack.c.bf16 %v2417, %v2412
    %v2488 = vpack.c.bf16 %v2423, %v2418
    %v2489 = vpack.c.bf16 %v2424, %v2419
    %v2490 = vpack.c.bf16 %v2425, %v2420
    %v2491 = vpack.c.bf16 %v2426, %v2421
    %v2492 = vpack.c.bf16 %v2427, %v2422
    %v2493 = vpack.c.bf16 %v2428, %v2428
    %v2494 = vpack.c.bf16 %v2429, %v2429
    %v2495 = vpack.c.bf16 %v2430, %v2430
    %v2496 = vpack.c.bf16 %v2431, %v2431
    %v2497 = vpack.c.bf16 %v2432, %v2432
    %v2498 = vld [vmem:[%s4] sm:$0xff]
    %v2499 = vld [vmem:[%s4 + $0x8] sm:$0xff]
    %2501 = vset.pattern.permute.xlu0 0
    %2502 = vperm.xlu0 %2501, %v2498
    %v2503 = vpop.permute.xlu0 %2502
    %2506 = vset.pattern.permute.xlu0 0
    %2507 = vperm.xlu0 %2506, %v2499
    %v2508 = vpop.permute.xlu0 %2507
    %v2512 = vunpack.c.l.b16 %v2306
    %v2513 = vunpack.c.h.b16 %v2306
    %v2514 = vunpack.c.l.b16 %v2307
    %v2515 = vunpack.c.h.b16 %v2307
    %v2516 = vpack.c.b16 %v2514, %v2512
    %v2517 = vpack.c.b16 %v2515, %v2513
    %v2520 = vsel %vm1645, %v2517, 0
    %v2523 = vsel %vm1649, %v2493, 0
    %v2526 = vsel %vm1649, %v2494, 0
    %v2529 = vsel %vm1649, %v2495, 0
    %v2532 = vsel %vm1649, %v2496, 0
    %v2535 = vsel %vm1649, %v2497, 0
    %2537 = vmatprep.subr.bf16.mxu0 %v2469
    %2538 = vmatpush1.bf16.msra.mxu0 %v2468
    %2539 = vmatprep.subr.bf16.mxu0 %v2464
    %2540 = vmatpush1.bf16.msra.mxu0 %v2463
    %2541 = vmatprep.subr.bf16.mxu0 %v2459
    %2542 = vmatpush1.bf16.msra.mxu0 %v2458
    %2543 = vmatprep.subr.bf16.mxu0 %v2454
    %2544 = vmatpush1.bf16.msra.mxu0 %v2453
    %2545 = vmatprep.subr.bf16.mxu0 %v2449
    %2546 = vmatpush1.bf16.msra.mxu0 %v2448
    %2547 = vmatprep.subr.bf16.mxu0 %v2444
    %2548 = vmatpush1.bf16.msra.mxu0 %v2443
    %2549 = vmatprep.subr.bf16.mxu0 %v2439
    %2550 = vmatpush1.bf16.msra.mxu0 %v2438
    %2551 = vmatprep.subr.bf16.mxu0 %v2434
    %2552 = vmatpush1.bf16.msra.mxu0 %v2433
    %2553 = vmatprep.subr.bf16.mxu0 0
    %2554 = vmatpush2.bf16.msra.mxu0 0
    %2555 = vmatprep.subr.bf16.mxu0 0
    %2556 = vmatpush2.bf16.msra.mxu0 0
    %2557 = vmatprep.subr.bf16.mxu0 0
    %2558 = vmatpush2.bf16.msra.mxu0 0
    %2559 = vmatprep.subr.bf16.mxu0 %v2526
    %2560 = vmatpush2.bf16.msra.mxu0 %v2523
    %2561 = vmatprep.subr.bf16.mxu0 %v2489
    %2562 = vmatpush2.bf16.msra.mxu0 %v2488
    %2563 = vmatprep.subr.bf16.mxu0 %v2484
    %2564 = vmatpush2.bf16.msra.mxu0 %v2483
    %2565 = vmatprep.subr.bf16.mxu0 %v2479
    %2566 = vmatpush2.bf16.msra.mxu0 %v2478
    %2567 = vmatprep.subr.bf16.mxu0 %v2474
    %2568 = vmatpush2.bf16.msra.mxu0 %v2473
    %2569 = vmatprep.mubr.bf16.mxu0 %v2520
    %2570 = vmatmul.mubr.bf16.gmra.mxu0 %v2516
    %v2571 = vpop.f32.mrf.mxu0
    %v2572 = vadd.f32 %v2503, %v2571
    %v2573 = vpop.f32.mrf.mxu0
    %v2574 = vadd.f32 %v2503, %v2573
    %v2575 = vpop.f32.mrf.mxu0
    %v2576 = vadd.f32 %v2508, %v2575
    %v2577 = vpop.f32.mrf.mxu0
    %v2578 = vadd.f32 %v2508, %v2577
    %2579 = vdwg.mxu0
    %2580 = vmatprep.subr.bf16.mxu0 %v2471
    %2581 = vmatpush1.bf16.msra.mxu0 %v2470
    %2582 = vmatprep.subr.bf16.mxu0 %v2466
    %2583 = vmatpush1.bf16.msra.mxu0 %v2465
    %2584 = vmatprep.subr.bf16.mxu0 %v2461
    %2585 = vmatpush1.bf16.msra.mxu0 %v2460
    %2586 = vmatprep.subr.bf16.mxu0 %v2456
    %2587 = vmatpush1.bf16.msra.mxu0 %v2455
    %2588 = vmatprep.subr.bf16.mxu0 %v2451
    %2589 = vmatpush1.bf16.msra.mxu0 %v2450
    %2590 = vmatprep.subr.bf16.mxu0 %v2446
    %2591 = vmatpush1.bf16.msra.mxu0 %v2445
    %2592 = vmatprep.subr.bf16.mxu0 %v2441
    %2593 = vmatpush1.bf16.msra.mxu0 %v2440
    %2594 = vmatprep.subr.bf16.mxu0 %v2436
    %2595 = vmatpush1.bf16.msra.mxu0 %v2435
    %2596 = vmatprep.subr.bf16.mxu0 0
    %2597 = vmatpush2.bf16.msra.mxu0 0
    %2598 = vmatprep.subr.bf16.mxu0 0
    %2599 = vmatpush2.bf16.msra.mxu0 0
    %2600 = vmatprep.subr.bf16.mxu0 0
    %2601 = vmatpush2.bf16.msra.mxu0 0
    %2602 = vmatprep.subr.bf16.mxu0 %v2532
    %2603 = vmatpush2.bf16.msra.mxu0 %v2529
    %2604 = vmatprep.subr.bf16.mxu0 %v2491
    %2605 = vmatpush2.bf16.msra.mxu0 %v2490
    %2606 = vmatprep.subr.bf16.mxu0 %v2486
    %2607 = vmatpush2.bf16.msra.mxu0 %v2485
    %2608 = vmatprep.subr.bf16.mxu0 %v2481
    %2609 = vmatpush2.bf16.msra.mxu0 %v2480
    %2610 = vmatprep.subr.bf16.mxu0 %v2476
    %2611 = vmatpush2.bf16.msra.mxu0 %v2475
    %2612 = vmatprep.mubr.bf16.mxu0 %v2520
    %2613 = vmatmul.mubr.bf16.gmra.mxu0 %v2516
    %v2614 = vpop.f32.mrf.mxu0
    %v2615 = vadd.f32 %v2503, %v2614
    %v2616 = vpop.f32.mrf.mxu0
    %v2617 = vadd.f32 %v2503, %v2616
    %v2618 = vpop.f32.mrf.mxu0
    %v2619 = vadd.f32 %v2508, %v2618
    %v2620 = vpop.f32.mrf.mxu0
    %v2621 = vadd.f32 %v2508, %v2620
    %2622 = vdwg.mxu0
    %2623 = vmatprep.subr.bf16.mxu0 0
    %2624 = vmatpush1.bf16.msra.mxu0 %v2472
    %2625 = vmatprep.subr.bf16.mxu0 0
    %2626 = vmatpush1.bf16.msra.mxu0 %v2467
    %2627 = vmatprep.subr.bf16.mxu0 0
    %2628 = vmatpush1.bf16.msra.mxu0 %v2462
    %2629 = vmatprep.subr.bf16.mxu0 0
    %2630 = vmatpush1.bf16.msra.mxu0 %v2457
    %2631 = vmatprep.subr.bf16.mxu0 0
    %2632 = vmatpush1.bf16.msra.mxu0 %v2452
    %2633 = vmatprep.subr.bf16.mxu0 0
    %2634 = vmatpush1.bf16.msra.mxu0 %v2447
    %2635 = vmatprep.subr.bf16.mxu0 0
    %2636 = vmatpush1.bf16.msra.mxu0 %v2442
    %2637 = vmatprep.subr.bf16.mxu0 0
    %2638 = vmatpush1.bf16.msra.mxu0 %v2437
    %2639 = vmatprep.subr.bf16.mxu0 0
    %2640 = vmatpush2.bf16.msra.mxu0 0
    %2641 = vmatprep.subr.bf16.mxu0 0
    %2642 = vmatpush2.bf16.msra.mxu0 0
    %2643 = vmatprep.subr.bf16.mxu0 0
    %2644 = vmatpush2.bf16.msra.mxu0 0
    %2645 = vmatprep.subr.bf16.mxu0 0
    %2646 = vmatpush2.bf16.msra.mxu0 %v2535
    %2647 = vmatprep.subr.bf16.mxu0 0
    %2648 = vmatpush2.bf16.msra.mxu0 %v2492
    %2649 = vmatprep.subr.bf16.mxu0 0
    %2650 = vmatpush2.bf16.msra.mxu0 %v2487
    %2651 = vmatprep.subr.bf16.mxu0 0
    %2652 = vmatpush2.bf16.msra.mxu0 %v2482
    %2653 = vmatprep.subr.bf16.mxu0 0
    %2654 = vmatpush2.bf16.msra.mxu0 %v2477
    %2655 = vmatprep.mubr.bf16.mxu0 %v2520
    %2656 = vmatmul.mubr.bf16.gmra.mxu0 %v2516
    %v2657 = vpop.f32.mrf.mxu0
    %v2658 = vadd.f32 %v2503, %v2657
    %v2659 = vpop.f32.mrf.mxu0
    %v2660 = vpop.f32.mrf.mxu0
    %v2661 = vadd.f32 %v2508, %v2660
    %v2662 = vpop.f32.mrf.mxu0
    %2663 = vdwg.mxu0
    %v2664 = vmax.f32 %v2572, 0.0
    %v2665 = vmax.f32 %v2574, 0.0
    %v2666 = vmax.f32 %v2615, 0.0
    %v2667 = vmax.f32 %v2617, 0.0
    %v2668 = vmax.f32 %v2658, 0.0
    %v2669 = vmax.f32 %v2576, 0.0
    %v2670 = vmax.f32 %v2578, 0.0
    %v2671 = vmax.f32 %v2619, 0.0
    %v2672 = vmax.f32 %v2621, 0.0
    %v2673 = vmax.f32 %v2661, 0.0
    %2684 = vrot.lane.b32.xlu0 %v2664, 126
    %v2685 = vpop.permute.xlu0 %2684
    %2686 = vrot.lane.b32.xlu0 %v2665, 126
    %v2687 = vpop.permute.xlu0 %2686
    %2688 = vrot.lane.b32.xlu0 %v2666, 126
    %v2689 = vpop.permute.xlu0 %2688
    %2690 = vrot.lane.b32.xlu0 %v2667, 126
    %v2691 = vpop.permute.xlu0 %2690
    %2692 = vrot.lane.b32.xlu0 %v2668, 126
    %v2693 = vpop.permute.xlu0 %2692
    %2694 = vrot.lane.b32.xlu0 %v2669, 126
    %v2695 = vpop.permute.xlu0 %2694
    %2696 = vrot.lane.b32.xlu0 %v2670, 126
    %v2697 = vpop.permute.xlu0 %2696
    %2698 = vrot.lane.b32.xlu0 %v2671, 126
    %v2699 = vpop.permute.xlu0 %2698
    %2700 = vrot.lane.b32.xlu0 %v2672, 126
    %v2701 = vpop.permute.xlu0 %2700
    %2702 = vrot.lane.b32.xlu0 %v2673, 126
    %v2703 = vpop.permute.xlu0 %2702
    %v2704 = vsel %vm232, %v2685, %v2687
    %v2705 = vsel %vm232, %v2687, %v2689
    %v2706 = vsel %vm232, %v2689, %v2691
    %v2707 = vsel %vm232, %v2691, %v2693
    %v2708 = vsel %vm232, %v2695, %v2697
    %v2709 = vsel %vm232, %v2697, %v2699
    %v2710 = vsel %vm232, %v2699, %v2701
    %v2711 = vsel %vm232, %v2701, %v2703
    %v2722 = vmax.f32 %v2664, %v2704
    %v2723 = vmax.f32 %v2665, %v2705
    %v2724 = vmax.f32 %v2666, %v2706
    %v2725 = vmax.f32 %v2667, %v2707
    %v2726 = vmax.f32 %v2668, %v2693
    %v2727 = vmax.f32 %v2669, %v2708
    %v2728 = vmax.f32 %v2670, %v2709
    %v2729 = vmax.f32 %v2671, %v2710
    %v2730 = vmax.f32 %v2672, %v2711
    %v2731 = vmax.f32 %v2673, %v2703
    %2742 = vrot.lane.b32.xlu0 %v2722, 64
    %v2743 = vpop.permute.xlu0 %2742
    %2744 = vrot.lane.b32.xlu0 %v2723, 64
    %v2745 = vpop.permute.xlu0 %2744
    %2746 = vrot.lane.b32.xlu0 %v2724, 64
    %v2747 = vpop.permute.xlu0 %2746
    %2748 = vrot.lane.b32.xlu0 %v2725, 64
    %v2749 = vpop.permute.xlu0 %2748
    %2750 = vrot.lane.b32.xlu0 %v2726, 64
    %v2751 = vpop.permute.xlu0 %2750
    %2752 = vrot.lane.b32.xlu0 %v2727, 64
    %v2753 = vpop.permute.xlu0 %2752
    %2754 = vrot.lane.b32.xlu0 %v2728, 64
    %v2755 = vpop.permute.xlu0 %2754
    %2756 = vrot.lane.b32.xlu0 %v2729, 64
    %v2757 = vpop.permute.xlu0 %2756
    %2758 = vrot.lane.b32.xlu0 %v2730, 64
    %v2759 = vpop.permute.xlu0 %2758
    %2760 = vrot.lane.b32.xlu0 %v2731, 64
    %v2761 = vpop.permute.xlu0 %2760
    %v2762 = vsel %vm652, %v2743, %v2745
    %v2763 = vsel %vm652, %v2745, %v2747
    %v2764 = vsel %vm652, %v2747, %v2749
    %v2765 = vsel %vm652, %v2749, %v2751
    %v2766 = vsel %vm652, %v2753, %v2755
    %v2767 = vsel %vm652, %v2755, %v2757
    %v2768 = vsel %vm652, %v2757, %v2759
    %v2769 = vsel %vm652, %v2759, %v2761
    %v2780 = vmax.f32 %v2722, %v2762
    %v2781 = vmax.f32 %v2723, %v2763
    %v2782 = vmax.f32 %v2724, %v2764
    %v2783 = vmax.f32 %v2725, %v2765
    %v2784 = vmax.f32 %v2726, %v2751
    %v2785 = vmax.f32 %v2727, %v2766
    %v2786 = vmax.f32 %v2728, %v2767
    %v2787 = vmax.f32 %v2729, %v2768
    %v2788 = vmax.f32 %v2730, %v2769
    %v2789 = vmax.f32 %v2731, %v2761
    %v2790 = vpack.c.bf16 %v2785, %v2780
    %v2791 = vpack.c.bf16 %v2786, %v2781
    %v2792 = vpack.c.bf16 %v2787, %v2782
    %v2793 = vpack.c.bf16 %v2788, %v2783
    %v2794 = vpack.c.bf16 %v2789, %v2784
    %v2795 = vld [vmem:[#allocation8] sm:$0xff]
    %v2796 = vld [vmem:[#allocation8 + $0x8] sm:$0xff]
    %v2797 = vld [vmem:[#allocation8 + $0x10] sm:$0xff]
    %v2798 = vld [vmem:[#allocation8 + $0x18] sm:$0xff]
    %v2799 = vld [vmem:[#allocation8 + $0x20] sm:$0xff]
    %v2800 = vld [vmem:[#allocation8 + $0x28] sm:$0xff]
    %v2801 = vld [vmem:[#allocation8 + $0x30] sm:$0xff]
    %v2802 = vld [vmem:[#allocation8 + $0x38] sm:$0xff]
    %v2803 = vld [vmem:[#allocation8 + $0x40] sm:$0xff]
    %v2804 = vld [vmem:[#allocation8 + $0x48] sm:$0xff]
    %v2805 = vld [vmem:[#allocation8 + $0x50] sm:$0xff]
    %v2806 = vld [vmem:[#allocation8 + $0x58] sm:$0xff]
    %v2807 = vld [vmem:[#allocation8 + $0x60] sm:$0xff]
    %v2808 = vld [vmem:[#allocation8 + $0x68] sm:$0xff]
    %v2809 = vld [vmem:[#allocation8 + $0x70] sm:$0xff]
    %v2810 = vld [vmem:[#allocation8 + $0x78] sm:$0xff]
    %v2811 = vld [vmem:[#allocation8 + $0x80] sm:$0xff]
    %v2812 = vld [vmem:[#allocation8 + $0x88] sm:$0xff]
    %v2813 = vld [vmem:[#allocation8 + $0x90] sm:$0xff]
    %v2814 = vld [vmem:[#allocation8 + $0x98] sm:$0xff]
    %v2815 = vld [vmem:[#allocation8 + $0xa0] sm:$0xff]
    %v2816 = vld [vmem:[#allocation8 + $0xa8] sm:$0xff]
    %v2817 = vld [vmem:[#allocation8 + $0xb0] sm:$0xff]
    %v2818 = vld [vmem:[#allocation8 + $0xb8] sm:$0xff]
    %v2819 = vld [vmem:[#allocation8 + $0xc0] sm:$0xff]
    %v2820 = vld [vmem:[#allocation8 + $0xc8] sm:$0xff]
    %v2821 = vld [vmem:[#allocation8 + $0xd0] sm:$0xff]
    %v2822 = vld [vmem:[#allocation8 + $0xd8] sm:$0xff]
    %v2823 = vld [vmem:[#allocation8 + $0xe0] sm:$0xff]
    %v2824 = vld [vmem:[#allocation8 + $0xe8] sm:$0xff]
    %v2825 = vld [vmem:[#allocation8 + $0xf0] sm:$0xff]
    %v2826 = vld [vmem:[#allocation8 + $0xf8] sm:$0xff]
    %v2827 = vld [vmem:[#allocation8 + $0x100] sm:$0xff]
    %v2828 = vld [vmem:[#allocation8 + $0x108] sm:$0xff]
    %v2829 = vld [vmem:[#allocation8 + $0x110] sm:$0xff]
    %v2830 = vld [vmem:[#allocation8 + $0x118] sm:$0xff]
    %v2831 = vld [vmem:[#allocation8 + $0x120] sm:$0xff]
    %v2832 = vld [vmem:[#allocation8 + $0x128] sm:$0xff]
    %v2833 = vld [vmem:[#allocation8 + $0x130] sm:$0xff]
    %v2834 = vld [vmem:[#allocation8 + $0x138] sm:$0xff]
    %v2835 = vld [vmem:[#allocation8 + $0x140] sm:$0xff]
    %v2836 = vld [vmem:[#allocation8 + $0x148] sm:$0xff]
    %v2837 = vld [vmem:[#allocation8 + $0x150] sm:$0xff]
    %v2838 = vld [vmem:[#allocation8 + $0x158] sm:$0xff]
    %v2839 = vld [vmem:[#allocation8 + $0x160] sm:$0xff]
    %v2840 = vld [vmem:[#allocation8 + $0x168] sm:$0xff]
    %v2841 = vld [vmem:[#allocation8 + $0x170] sm:$0xff]
    %v2842 = vld [vmem:[#allocation8 + $0x178] sm:$0xff]
    %v2843 = vld [vmem:[#allocation8 + $0x180] sm:$0xff]
    %v2844 = vld [vmem:[#allocation8 + $0x188] sm:$0xff]
    %v2845 = vld [vmem:[#allocation8 + $0x190] sm:$0xff]
    %v2846 = vld [vmem:[#allocation8 + $0x198] sm:$0xff]
    %v2847 = vld [vmem:[#allocation8 + $0x1a0] sm:$0xff]
    %v2848 = vld [vmem:[#allocation8 + $0x1a8] sm:$0xff]
    %v2849 = vld [vmem:[#allocation8 + $0x1b0] sm:$0xff]
    %v2850 = vld [vmem:[#allocation8 + $0x1b8] sm:$0xff]
    %v2851 = vld [vmem:[#allocation8 + $0x1c0] sm:$0xff]
    %v2852 = vld [vmem:[#allocation8 + $0x1c8] sm:$0xff]
    %v2853 = vld [vmem:[#allocation8 + $0x1d0] sm:$0xff]
    %v2854 = vld [vmem:[#allocation8 + $0x1d8] sm:$0xff]
    %v2855 = vld [vmem:[#allocation8 + $0x1e0] sm:$0xff]
    %v2856 = vld [vmem:[#allocation8 + $0x1e8] sm:$0xff]
    %v2857 = vld [vmem:[#allocation8 + $0x1f0] sm:$0xff]
    %v2858 = vld [vmem:[#allocation8 + $0x1f8] sm:$0xff]
    %v2859 = vld [vmem:[#allocation8 + $0x200] sm:$0xff]
    %v2860 = vld [vmem:[#allocation8 + $0x208] sm:$0xff]
    %v2861 = vld [vmem:[#allocation8 + $0x210] sm:$0xff]
    %v2862 = vld [vmem:[#allocation8 + $0x218] sm:$0xff]
    %v2863 = vld [vmem:[#allocation8 + $0x220] sm:$0xff]
    %v2864 = vld [vmem:[#allocation8 + $0x228] sm:$0xff]
    %v2865 = vld [vmem:[#allocation8 + $0x230] sm:$0xff]
    %v2866 = vld [vmem:[#allocation8 + $0x238] sm:$0xff]
    %v2867 = vld [vmem:[#allocation8 + $0x240] sm:$0xff]
    %v2868 = vld [vmem:[#allocation8 + $0x248] sm:$0xff]
    %v2869 = vld [vmem:[#allocation8 + $0x250] sm:$0xff]
    %v2870 = vld [vmem:[#allocation8 + $0x258] sm:$0xff]
    %v2871 = vld [vmem:[#allocation8 + $0x260] sm:$0xff]
    %v2872 = vld [vmem:[#allocation8 + $0x268] sm:$0xff]
    %v2873 = vld [vmem:[#allocation8 + $0x270] sm:$0xff]
    %v2874 = vld [vmem:[#allocation8 + $0x278] sm:$0xff]
    %v2875 = vld [vmem:[#allocation8 + $0x280] sm:$0xff]
    %v2876 = vld [vmem:[#allocation8 + $0x288] sm:$0xff]
    %v2877 = vld [vmem:[#allocation8 + $0x290] sm:$0xff]
    %v2878 = vld [vmem:[#allocation8 + $0x298] sm:$0xff]
    %v2879 = vld [vmem:[#allocation8 + $0x2a0] sm:$0xff]
    %v2880 = vld [vmem:[#allocation8 + $0x2a8] sm:$0xff]
    %v2881 = vld [vmem:[#allocation8 + $0x2b0] sm:$0xff]
    %v2882 = vld [vmem:[#allocation8 + $0x2b8] sm:$0xff]
    %v2883 = vld [vmem:[#allocation8 + $0x2c0] sm:$0xff]
    %v2884 = vld [vmem:[#allocation8 + $0x2c8] sm:$0xff]
    %v2885 = vld [vmem:[#allocation8 + $0x2d0] sm:$0xff]
    %v2886 = vld [vmem:[#allocation8 + $0x2d8] sm:$0xff]
    %v2887 = vld [vmem:[#allocation8 + $0x2e0] sm:$0xff]
    %v2888 = vld [vmem:[#allocation8 + $0x2e8] sm:$0xff]
    %v2889 = vld [vmem:[#allocation8 + $0x2f0] sm:$0xff]
    %v2890 = vld [vmem:[#allocation8 + $0x2f8] sm:$0xff]
    %v2891 = vld [vmem:[#allocation8 + $0x300] sm:$0xff]
    %v2892 = vld [vmem:[#allocation8 + $0x308] sm:$0xff]
    %v2893 = vld [vmem:[#allocation8 + $0x310] sm:$0xff]
    %v2894 = vld [vmem:[#allocation8 + $0x318] sm:$0xff]
    %v2895 = vld [vmem:[#allocation8 + $0x320] sm:$0xff]
    %v2896 = vld [vmem:[#allocation8 + $0x328] sm:$0xff]
    %v2897 = vld [vmem:[#allocation8 + $0x330] sm:$0xff]
    %v2898 = vld [vmem:[#allocation8 + $0x338] sm:$0xff]
    %v2899 = vld [vmem:[#allocation8 + $0x340] sm:$0xff]
    %v2900 = vld [vmem:[#allocation8 + $0x348] sm:$0xff]
    %v2901 = vld [vmem:[#allocation8 + $0x350] sm:$0xff]
    %v2902 = vld [vmem:[#allocation8 + $0x358] sm:$0xff]
    %v2903 = vld [vmem:[#allocation8 + $0x360] sm:$0xff]
    %v2904 = vld [vmem:[#allocation8 + $0x368] sm:$0xff]
    %v2905 = vld [vmem:[#allocation8 + $0x370] sm:$0xff]
    %v2906 = vld [vmem:[#allocation8 + $0x378] sm:$0xff]
    %v2907 = vld [vmem:[#allocation8 + $0x380] sm:$0xff]
    %v2908 = vld [vmem:[#allocation8 + $0x388] sm:$0xff]
    %v2909 = vld [vmem:[#allocation8 + $0x390] sm:$0xff]
    %v2910 = vld [vmem:[#allocation8 + $0x398] sm:$0xff]
    %v2911 = vld [vmem:[#allocation8 + $0x3a0] sm:$0xff]
    %v2912 = vld [vmem:[#allocation8 + $0x3a8] sm:$0xff]
    %v2913 = vld [vmem:[#allocation8 + $0x3b0] sm:$0xff]
    %v2914 = vld [vmem:[#allocation8 + $0x3b8] sm:$0xff]
    %v2915 = vld [vmem:[#allocation8 + $0x3c0] sm:$0xff]
    %v2916 = vld [vmem:[#allocation8 + $0x3c8] sm:$0xff]
    %v2917 = vld [vmem:[#allocation8 + $0x3d0] sm:$0xff]
    %v2918 = vld [vmem:[#allocation8 + $0x3d8] sm:$0xff]
    %v2919 = vld [vmem:[#allocation8 + $0x3e0] sm:$0xff]
    %v2920 = vld [vmem:[#allocation8 + $0x3e8] sm:$0xff]
    %v2921 = vld [vmem:[#allocation8 + $0x3f0] sm:$0xff]
    %v2922 = vld [vmem:[#allocation8 + $0x3f8] sm:$0xff]
    %v2923 = vld [vmem:[#allocation8 + $0x400] sm:$0xff]
    %v2924 = vld [vmem:[#allocation8 + $0x408] sm:$0xff]
    %v2925 = vld [vmem:[#allocation8 + $0x410] sm:$0xff]
    %v2926 = vld [vmem:[#allocation8 + $0x418] sm:$0xff]
    %v2927 = vld [vmem:[#allocation8 + $0x420] sm:$0xff]
    %v2928 = vld [vmem:[#allocation8 + $0x428] sm:$0xff]
    %v2929 = vld [vmem:[#allocation8 + $0x430] sm:$0xff]
    %v2930 = vld [vmem:[#allocation8 + $0x438] sm:$0xff]
    %v2931 = vld [vmem:[#allocation8 + $0x440] sm:$0xff]
    %v2932 = vld [vmem:[#allocation8 + $0x448] sm:$0xff]
    %v2933 = vld [vmem:[#allocation8 + $0x450] sm:$0xff]
    %v2934 = vld [vmem:[#allocation8 + $0x458] sm:$0xff]
    %v2935 = vld [vmem:[#allocation8 + $0x460] sm:$0xff]
    %v2936 = vld [vmem:[#allocation8 + $0x468] sm:$0xff]
    %v2937 = vld [vmem:[#allocation8 + $0x470] sm:$0xff]
    %v2938 = vld [vmem:[#allocation8 + $0x478] sm:$0xff]
    %v2939 = vld [vmem:[#allocation8 + $0x480] sm:$0xff]
    %v2940 = vld [vmem:[#allocation8 + $0x488] sm:$0xff]
    %v2941 = vld [vmem:[#allocation8 + $0x490] sm:$0xff]
    %v2942 = vld [vmem:[#allocation8 + $0x498] sm:$0xff]
    %v2943 = vld [vmem:[#allocation8 + $0x4a0] sm:$0xff]
    %v2944 = vld [vmem:[#allocation8 + $0x4a8] sm:$0xff]
    %v2945 = vld [vmem:[#allocation8 + $0x4b0] sm:$0xff]
    %v2946 = vld [vmem:[#allocation8 + $0x4b8] sm:$0xff]
    %v2947 = vld [vmem:[#allocation8 + $0x4c0] sm:$0xff]
    %v2948 = vld [vmem:[#allocation8 + $0x4c8] sm:$0xff]
    %v2949 = vld [vmem:[#allocation8 + $0x4d0] sm:$0xff]
    %v2950 = vld [vmem:[#allocation8 + $0x4d8] sm:$0xff]
    %v2951 = vld [vmem:[#allocation8 + $0x4e0] sm:$0xff]
    %v2952 = vld [vmem:[#allocation8 + $0x4e8] sm:$0xff]
    %v2953 = vld [vmem:[#allocation8 + $0x4f0] sm:$0xff]
    %v2954 = vld [vmem:[#allocation8 + $0x4f8] sm:$0xff]
    %v2955 = vld [vmem:[#allocation8 + $0x500] sm:$0xff]
    %v2956 = vld [vmem:[#allocation8 + $0x508] sm:$0xff]
    %v2957 = vld [vmem:[#allocation8 + $0x510] sm:$0xff]
    %v2958 = vld [vmem:[#allocation8 + $0x518] sm:$0xff]
    %v2959 = vld [vmem:[#allocation8 + $0x520] sm:$0xff]
    %v2960 = vld [vmem:[#allocation8 + $0x528] sm:$0xff]
    %v2961 = vld [vmem:[#allocation8 + $0x530] sm:$0xff]
    %v2962 = vld [vmem:[#allocation8 + $0x538] sm:$0xff]
    %v2963 = vld [vmem:[#allocation8 + $0x540] sm:$0xff]
    %v2964 = vld [vmem:[#allocation8 + $0x548] sm:$0xff]
    %v2965 = vld [vmem:[#allocation8 + $0x550] sm:$0xff]
    %v2966 = vld [vmem:[#allocation8 + $0x558] sm:$0xff]
    %v2967 = vld [vmem:[#allocation8 + $0x560] sm:$0xff]
    %v2968 = vld [vmem:[#allocation8 + $0x568] sm:$0xff]
    %v2969 = vld [vmem:[#allocation8 + $0x570] sm:$0xff]
    %v2970 = vld [vmem:[#allocation8 + $0x578] sm:$0xff]
    %v2971 = vld [vmem:[#allocation8 + $0x580] sm:$0xff]
    %v2972 = vld [vmem:[#allocation8 + $0x588] sm:$0xff]
    %v2973 = vld [vmem:[#allocation8 + $0x590] sm:$0xff]
    %v2974 = vld [vmem:[#allocation8 + $0x598] sm:$0xff]
    %v2975 = vld [vmem:[#allocation8 + $0x5a0] sm:$0xff]
    %v2976 = vld [vmem:[#allocation8 + $0x5a8] sm:$0xff]
    %v2977 = vld [vmem:[#allocation8 + $0x5b0] sm:$0xff]
    %v2978 = vld [vmem:[#allocation8 + $0x5b8] sm:$0xff]
    %v2979 = vld [vmem:[#allocation8 + $0x5c0] sm:$0xff]
    %v2980 = vld [vmem:[#allocation8 + $0x5c8] sm:$0xff]
    %v2981 = vld [vmem:[#allocation8 + $0x5d0] sm:$0xff]
    %v2982 = vld [vmem:[#allocation8 + $0x5d8] sm:$0xff]
    %v2983 = vld [vmem:[#allocation8 + $0x5e0] sm:$0xff]
    %v2984 = vld [vmem:[#allocation8 + $0x5e8] sm:$0xff]
    %v2985 = vld [vmem:[#allocation8 + $0x5f0] sm:$0xff]
    %v2986 = vld [vmem:[#allocation8 + $0x5f8] sm:$0xff]
    %v2987 = vld [vmem:[#allocation8 + $0x600] sm:$0xff]
    %v2988 = vld [vmem:[#allocation8 + $0x608] sm:$0xff]
    %v2989 = vld [vmem:[#allocation8 + $0x610] sm:$0xff]
    %v2990 = vld [vmem:[#allocation8 + $0x618] sm:$0xff]
    %v2991 = vld [vmem:[#allocation8 + $0x620] sm:$0xff]
    %v2992 = vld [vmem:[#allocation8 + $0x628] sm:$0xff]
    %v2993 = vld [vmem:[#allocation8 + $0x630] sm:$0xff]
    %v2994 = vld [vmem:[#allocation8 + $0x638] sm:$0xff]
    %v2995 = vld [vmem:[#allocation8 + $0x640] sm:$0xff]
    %v2996 = vld [vmem:[#allocation8 + $0x648] sm:$0xff]
    %v2997 = vld [vmem:[#allocation8 + $0x650] sm:$0xff]
    %v2998 = vld [vmem:[#allocation8 + $0x658] sm:$0xff]
    %v2999 = vld [vmem:[#allocation8 + $0x660] sm:$0xff]
    %v3000 = vld [vmem:[#allocation8 + $0x668] sm:$0xff]
    %v3001 = vld [vmem:[#allocation8 + $0x670] sm:$0xff]
    %v3002 = vld [vmem:[#allocation8 + $0x678] sm:$0xff]
    %v3003 = vld [vmem:[#allocation8 + $0x680] sm:$0xff]
    %v3004 = vld [vmem:[#allocation8 + $0x688] sm:$0xff]
    %v3005 = vld [vmem:[#allocation8 + $0x690] sm:$0xff]
    %v3006 = vld [vmem:[#allocation8 + $0x698] sm:$0xff]
    %v3007 = vld [vmem:[#allocation8 + $0x6a0] sm:$0xff]
    %v3008 = vld [vmem:[#allocation8 + $0x6a8] sm:$0xff]
    %v3009 = vld [vmem:[#allocation8 + $0x6b0] sm:$0xff]
    %v3010 = vld [vmem:[#allocation8 + $0x6b8] sm:$0xff]
    %v3011 = vld [vmem:[#allocation8 + $0x6c0] sm:$0xff]
    %v3012 = vld [vmem:[#allocation8 + $0x6c8] sm:$0xff]
    %v3013 = vld [vmem:[#allocation8 + $0x6d0] sm:$0xff]
    %v3014 = vld [vmem:[#allocation8 + $0x6d8] sm:$0xff]
    %v3015 = vld [vmem:[#allocation8 + $0x6e0] sm:$0xff]
    %v3016 = vld [vmem:[#allocation8 + $0x6e8] sm:$0xff]
    %v3017 = vld [vmem:[#allocation8 + $0x6f0] sm:$0xff]
    %v3018 = vld [vmem:[#allocation8 + $0x6f8] sm:$0xff]
    %v3019 = vld [vmem:[#allocation8 + $0x700] sm:$0xff]
    %v3020 = vld [vmem:[#allocation8 + $0x708] sm:$0xff]
    %v3021 = vld [vmem:[#allocation8 + $0x710] sm:$0xff]
    %v3022 = vld [vmem:[#allocation8 + $0x718] sm:$0xff]
    %v3023 = vld [vmem:[#allocation8 + $0x720] sm:$0xff]
    %v3024 = vld [vmem:[#allocation8 + $0x728] sm:$0xff]
    %v3025 = vld [vmem:[#allocation8 + $0x730] sm:$0xff]
    %v3026 = vld [vmem:[#allocation8 + $0x738] sm:$0xff]
    %v3027 = vld [vmem:[#allocation8 + $0x740] sm:$0xff]
    %v3028 = vld [vmem:[#allocation8 + $0x748] sm:$0xff]
    %v3029 = vld [vmem:[#allocation8 + $0x750] sm:$0xff]
    %v3030 = vld [vmem:[#allocation8 + $0x758] sm:$0xff]
    %v3031 = vld [vmem:[#allocation8 + $0x760] sm:$0xff]
    %v3032 = vld [vmem:[#allocation8 + $0x768] sm:$0xff]
    %v3033 = vld [vmem:[#allocation8 + $0x770] sm:$0xff]
    %v3034 = vld [vmem:[#allocation8 + $0x778] sm:$0xff]
    %v3035 = vld [vmem:[#allocation8 + $0x780] sm:$0xff]
    %v3036 = vld [vmem:[#allocation8 + $0x788] sm:$0xff]
    %v3037 = vld [vmem:[#allocation8 + $0x790] sm:$0xff]
    %v3038 = vld [vmem:[#allocation8 + $0x798] sm:$0xff]
    %v3039 = vld [vmem:[#allocation8 + $0x7a0] sm:$0xff]
    %v3040 = vld [vmem:[#allocation8 + $0x7a8] sm:$0xff]
    %v3041 = vld [vmem:[#allocation8 + $0x7b0] sm:$0xff]
    %v3042 = vld [vmem:[#allocation8 + $0x7b8] sm:$0xff]
    %v3043 = vld [vmem:[#allocation8 + $0x7c0] sm:$0xff]
    %v3044 = vld [vmem:[#allocation8 + $0x7c8] sm:$0xff]
    %v3045 = vld [vmem:[#allocation8 + $0x7d0] sm:$0xff]
    %v3046 = vld [vmem:[#allocation8 + $0x7d8] sm:$0xff]
    %v3047 = vld [vmem:[#allocation8 + $0x7e0] sm:$0xff]
    %v3048 = vld [vmem:[#allocation8 + $0x7e8] sm:$0xff]
    %v3049 = vld [vmem:[#allocation8 + $0x7f0] sm:$0xff]
    %v3050 = vld [vmem:[#allocation8 + $0x7f8] sm:$0xff]
    %v3051 = vld [vmem:[#allocation8 + $0x800] sm:$0xff]
    %v3052 = vld [vmem:[#allocation8 + $0x808] sm:$0xff]
    %v3053 = vld [vmem:[#allocation8 + $0x810] sm:$0xff]
    %v3054 = vld [vmem:[#allocation8 + $0x818] sm:$0xff]
    %v3055 = vld [vmem:[#allocation8 + $0x820] sm:$0xff]
    %v3056 = vld [vmem:[#allocation8 + $0x828] sm:$0xff]
    %v3057 = vld [vmem:[#allocation8 + $0x830] sm:$0xff]
    %v3058 = vld [vmem:[#allocation8 + $0x838] sm:$0xff]
    %v3059 = vld [vmem:[#allocation8 + $0x840] sm:$0xff]
    %v3060 = vld [vmem:[#allocation8 + $0x848] sm:$0xff]
    %v3061 = vld [vmem:[#allocation8 + $0x850] sm:$0xff]
    %v3062 = vld [vmem:[#allocation8 + $0x858] sm:$0xff]
    %v3063 = vld [vmem:[#allocation8 + $0x860] sm:$0xff]
    %v3064 = vld [vmem:[#allocation8 + $0x868] sm:$0xff]
    %v3065 = vld [vmem:[#allocation8 + $0x870] sm:$0xff]
    %v3066 = vld [vmem:[#allocation8 + $0x878] sm:$0xff]
    %v3067 = vld [vmem:[#allocation8 + $0x880] sm:$0xff]
    %v3068 = vld [vmem:[#allocation8 + $0x888] sm:$0xff]
    %v3069 = vld [vmem:[#allocation8 + $0x890] sm:$0xff]
    %v3070 = vld [vmem:[#allocation8 + $0x898] sm:$0xff]
    %v3071 = vld [vmem:[#allocation8 + $0x8a0] sm:$0xff]
    %v3072 = vld [vmem:[#allocation8 + $0x8a8] sm:$0xff]
    %v3073 = vld [vmem:[#allocation8 + $0x8b0] sm:$0xff]
    %v3074 = vld [vmem:[#allocation8 + $0x8b8] sm:$0xff]
    %v3075 = vld [vmem:[#allocation8 + $0x8c0] sm:$0xff]
    %v3076 = vld [vmem:[#allocation8 + $0x8c8] sm:$0xff]
    %v3077 = vld [vmem:[#allocation8 + $0x8d0] sm:$0xff]
    %v3078 = vld [vmem:[#allocation8 + $0x8d8] sm:$0xff]
    %v3079 = vld [vmem:[#allocation8 + $0x8e0] sm:$0xff]
    %v3080 = vld [vmem:[#allocation8 + $0x8e8] sm:$0xff]
    %v3081 = vld [vmem:[#allocation8 + $0x8f0] sm:$0xff]
    %v3082 = vld [vmem:[#allocation8 + $0x8f8] sm:$0xff]
    %v3083 = vld [vmem:[#allocation8 + $0x900] sm:$0xff]
    %v3084 = vld [vmem:[#allocation8 + $0x908] sm:$0xff]
    %v3085 = vld [vmem:[#allocation8 + $0x910] sm:$0xff]
    %v3086 = vld [vmem:[#allocation8 + $0x918] sm:$0xff]
    %v3087 = vld [vmem:[#allocation8 + $0x920] sm:$0xff]
    %v3088 = vld [vmem:[#allocation8 + $0x928] sm:$0xff]
    %v3089 = vld [vmem:[#allocation8 + $0x930] sm:$0xff]
    %v3090 = vld [vmem:[#allocation8 + $0x938] sm:$0xff]
    %v3091 = vld [vmem:[#allocation8 + $0x940] sm:$0xff]
    %v3092 = vld [vmem:[#allocation8 + $0x948] sm:$0xff]
    %v3093 = vld [vmem:[#allocation8 + $0x950] sm:$0xff]
    %v3094 = vld [vmem:[#allocation8 + $0x958] sm:$0xff]
    %v3095 = vld [vmem:[#allocation8 + $0x960] sm:$0xff]
    %v3096 = vld [vmem:[#allocation8 + $0x968] sm:$0xff]
    %v3097 = vld [vmem:[#allocation8 + $0x970] sm:$0xff]
    %v3098 = vld [vmem:[#allocation8 + $0x978] sm:$0xff]
    %v3099 = vld [vmem:[#allocation8 + $0x980] sm:$0xff]
    %v3100 = vld [vmem:[#allocation8 + $0x988] sm:$0xff]
    %v3101 = vld [vmem:[#allocation8 + $0x990] sm:$0xff]
    %v3102 = vld [vmem:[#allocation8 + $0x998] sm:$0xff]
    %v3103 = vld [vmem:[#allocation8 + $0x9a0] sm:$0xff]
    %v3104 = vld [vmem:[#allocation8 + $0x9a8] sm:$0xff]
    %v3105 = vld [vmem:[#allocation8 + $0x9b0] sm:$0xff]
    %v3106 = vld [vmem:[#allocation8 + $0x9b8] sm:$0xff]
    %v3107 = vld [vmem:[#allocation8 + $0x9c0] sm:$0xff]
    %v3108 = vld [vmem:[#allocation8 + $0x9c8] sm:$0xff]
    %v3109 = vld [vmem:[#allocation8 + $0x9d0] sm:$0xff]
    %v3110 = vld [vmem:[#allocation8 + $0x9d8] sm:$0xff]
    %v3111 = vld [vmem:[#allocation8 + $0x9e0] sm:$0xff]
    %v3112 = vld [vmem:[#allocation8 + $0x9e8] sm:$0xff]
    %v3113 = vld [vmem:[#allocation8 + $0x9f0] sm:$0xff]
    %v3114 = vld [vmem:[#allocation8 + $0x9f8] sm:$0xff]
    %v3115 = vld [vmem:[#allocation8 + $0xa00] sm:$0xff]
    %v3116 = vld [vmem:[#allocation8 + $0xa08] sm:$0xff]
    %v3117 = vld [vmem:[#allocation8 + $0xa10] sm:$0xff]
    %v3118 = vld [vmem:[#allocation8 + $0xa18] sm:$0xff]
    %v3119 = vld [vmem:[#allocation8 + $0xa20] sm:$0xff]
    %v3120 = vld [vmem:[#allocation8 + $0xa28] sm:$0xff]
    %v3121 = vld [vmem:[#allocation8 + $0xa30] sm:$0xff]
    %v3122 = vld [vmem:[#allocation8 + $0xa38] sm:$0xff]
    %v3123 = vld [vmem:[#allocation8 + $0xa40] sm:$0xff]
    %v3124 = vld [vmem:[#allocation8 + $0xa48] sm:$0xff]
    %v3125 = vld [vmem:[#allocation8 + $0xa50] sm:$0xff]
    %v3126 = vld [vmem:[#allocation8 + $0xa58] sm:$0xff]
    %v3127 = vld [vmem:[#allocation8 + $0xa60] sm:$0xff]
    %v3128 = vld [vmem:[#allocation8 + $0xa68] sm:$0xff]
    %v3129 = vld [vmem:[#allocation8 + $0xa70] sm:$0xff]
    %v3130 = vld [vmem:[#allocation8 + $0xa78] sm:$0xff]
    %v3131 = vld [vmem:[#allocation8 + $0xa80] sm:$0xff]
    %v3132 = vld [vmem:[#allocation8 + $0xa88] sm:$0xff]
    %v3133 = vld [vmem:[#allocation8 + $0xa90] sm:$0xff]
    %v3134 = vld [vmem:[#allocation8 + $0xa98] sm:$0xff]
    %v3135 = vld [vmem:[#allocation8 + $0xaa0] sm:$0xff]
    %v3136 = vld [vmem:[#allocation8 + $0xaa8] sm:$0xff]
    %v3137 = vld [vmem:[#allocation8 + $0xab0] sm:$0xff]
    %v3138 = vld [vmem:[#allocation8 + $0xab8] sm:$0xff]
    %v3139 = vld [vmem:[#allocation8 + $0xac0] sm:$0xff]
    %v3140 = vld [vmem:[#allocation8 + $0xac8] sm:$0xff]
    %v3141 = vld [vmem:[#allocation8 + $0xad0] sm:$0xff]
    %v3142 = vld [vmem:[#allocation8 + $0xad8] sm:$0xff]
    %v3143 = vld [vmem:[#allocation8 + $0xae0] sm:$0xff]
    %v3144 = vld [vmem:[#allocation8 + $0xae8] sm:$0xff]
    %v3145 = vld [vmem:[#allocation8 + $0xaf0] sm:$0xff]
    %v3146 = vld [vmem:[#allocation8 + $0xaf8] sm:$0xff]
    %v3147 = vld [vmem:[#allocation8 + $0xb00] sm:$0xff]
    %v3148 = vld [vmem:[#allocation8 + $0xb08] sm:$0xff]
    %v3149 = vld [vmem:[#allocation8 + $0xb10] sm:$0xff]
    %v3150 = vld [vmem:[#allocation8 + $0xb18] sm:$0xff]
    %v3151 = vld [vmem:[#allocation8 + $0xb20] sm:$0xff]
    %v3152 = vld [vmem:[#allocation8 + $0xb28] sm:$0xff]
    %v3153 = vld [vmem:[#allocation8 + $0xb30] sm:$0xff]
    %v3154 = vld [vmem:[#allocation8 + $0xb38] sm:$0xff]
    %v3155 = vld [vmem:[#allocation8 + $0xb40] sm:$0xff]
    %v3156 = vld [vmem:[#allocation8 + $0xb48] sm:$0xff]
    %v3157 = vld [vmem:[#allocation8 + $0xb50] sm:$0xff]
    %v3158 = vld [vmem:[#allocation8 + $0xb58] sm:$0xff]
    %v3159 = vld [vmem:[#allocation8 + $0xb60] sm:$0xff]
    %v3160 = vld [vmem:[#allocation8 + $0xb68] sm:$0xff]
    %v3161 = vld [vmem:[#allocation8 + $0xb70] sm:$0xff]
    %v3162 = vld [vmem:[#allocation8 + $0xb78] sm:$0xff]
    %v3163 = vld [vmem:[#allocation8 + $0xb80] sm:$0xff]
    %v3164 = vld [vmem:[#allocation8 + $0xb88] sm:$0xff]
    %v3165 = vld [vmem:[#allocation8 + $0xb90] sm:$0xff]
    %v3166 = vld [vmem:[#allocation8 + $0xb98] sm:$0xff]
    %v3167 = vld [vmem:[#allocation8 + $0xba0] sm:$0xff]
    %v3168 = vld [vmem:[#allocation8 + $0xba8] sm:$0xff]
    %v3169 = vld [vmem:[#allocation8 + $0xbb0] sm:$0xff]
    %v3170 = vld [vmem:[#allocation8 + $0xbb8] sm:$0xff]
    %v3171 = vld [vmem:[#allocation8 + $0xbc0] sm:$0xff]
    %v3172 = vld [vmem:[#allocation8 + $0xbc8] sm:$0xff]
    %v3173 = vld [vmem:[#allocation8 + $0xbd0] sm:$0xff]
    %v3174 = vld [vmem:[#allocation8 + $0xbd8] sm:$0xff]
    %v3175 = vld [vmem:[#allocation8 + $0xbe0] sm:$0xff]
    %v3176 = vld [vmem:[#allocation8 + $0xbe8] sm:$0xff]
    %v3177 = vld [vmem:[#allocation8 + $0xbf0] sm:$0xff]
    %v3178 = vld [vmem:[#allocation8 + $0xbf8] sm:$0xff]
    %v3179 = vld [vmem:[#allocation8 + $0xc00] sm:$0xff]
    %v3180 = vld [vmem:[#allocation8 + $0xc08] sm:$0xff]
    %v3181 = vld [vmem:[#allocation8 + $0xc10] sm:$0xff]
    %v3182 = vld [vmem:[#allocation8 + $0xc18] sm:$0xff]
    %v3183 = vld [vmem:[#allocation8 + $0xc20] sm:$0xff]
    %v3184 = vld [vmem:[#allocation8 + $0xc28] sm:$0xff]
    %v3185 = vld [vmem:[#allocation8 + $0xc30] sm:$0xff]
    %v3186 = vld [vmem:[#allocation8 + $0xc38] sm:$0xff]
    %v3187 = vld [vmem:[#allocation8 + $0xc40] sm:$0xff]
    %v3188 = vld [vmem:[#allocation8 + $0xc48] sm:$0xff]
    %v3189 = vld [vmem:[#allocation8 + $0xc50] sm:$0xff]
    %v3190 = vld [vmem:[#allocation8 + $0xc58] sm:$0xff]
    %v3191 = vld [vmem:[#allocation8 + $0xc60] sm:$0xff]
    %v3192 = vld [vmem:[#allocation8 + $0xc68] sm:$0xff]
    %v3193 = vld [vmem:[#allocation8 + $0xc70] sm:$0xff]
    %v3194 = vld [vmem:[#allocation8 + $0xc78] sm:$0xff]
    %v3195 = vld [vmem:[#allocation8 + $0xc80] sm:$0xff]
    %v3196 = vld [vmem:[#allocation8 + $0xc88] sm:$0xff]
    %v3197 = vld [vmem:[#allocation8 + $0xc90] sm:$0xff]
    %v3198 = vld [vmem:[#allocation8 + $0xc98] sm:$0xff]
    %v3199 = vld [vmem:[#allocation8 + $0xca0] sm:$0xff]
    %v3200 = vld [vmem:[#allocation8 + $0xca8] sm:$0xff]
    %v3201 = vld [vmem:[#allocation8 + $0xcb0] sm:$0xff]
    %v3202 = vld [vmem:[#allocation8 + $0xcb8] sm:$0xff]
    %v3203 = vld [vmem:[#allocation8 + $0xcc0] sm:$0xff]
    %v3204 = vld [vmem:[#allocation8 + $0xcc8] sm:$0xff]
    %v3205 = vld [vmem:[#allocation8 + $0xcd0] sm:$0xff]
    %v3206 = vld [vmem:[#allocation8 + $0xcd8] sm:$0xff]
    %v3207 = vld [vmem:[#allocation8 + $0xce0] sm:$0xff]
    %v3208 = vld [vmem:[#allocation8 + $0xce8] sm:$0xff]
    %v3209 = vld [vmem:[#allocation8 + $0xcf0] sm:$0xff]
    %v3210 = vld [vmem:[#allocation8 + $0xcf8] sm:$0xff]
    %v3211 = vld [vmem:[#allocation8 + $0xd00] sm:$0xff]
    %v3212 = vld [vmem:[#allocation8 + $0xd08] sm:$0xff]
    %v3213 = vld [vmem:[#allocation8 + $0xd10] sm:$0xff]
    %v3214 = vld [vmem:[#allocation8 + $0xd18] sm:$0xff]
    %v3215 = vld [vmem:[#allocation8 + $0xd20] sm:$0xff]
    %v3216 = vld [vmem:[#allocation8 + $0xd28] sm:$0xff]
    %v3217 = vld [vmem:[#allocation8 + $0xd30] sm:$0xff]
    %v3218 = vld [vmem:[#allocation8 + $0xd38] sm:$0xff]
    %v3219 = vld [vmem:[#allocation8 + $0xd40] sm:$0xff]
    %v3220 = vld [vmem:[#allocation8 + $0xd48] sm:$0xff]
    %v3221 = vld [vmem:[#allocation8 + $0xd50] sm:$0xff]
    %v3222 = vld [vmem:[#allocation8 + $0xd58] sm:$0xff]
    %v3223 = vld [vmem:[#allocation8 + $0xd60] sm:$0xff]
    %v3224 = vld [vmem:[#allocation8 + $0xd68] sm:$0xff]
    %v3225 = vld [vmem:[#allocation8 + $0xd70] sm:$0xff]
    %v3226 = vld [vmem:[#allocation8 + $0xd78] sm:$0xff]
    %v3227 = vld [vmem:[#allocation8 + $0xd80] sm:$0xff]
    %v3228 = vld [vmem:[#allocation8 + $0xd88] sm:$0xff]
    %v3229 = vld [vmem:[#allocation8 + $0xd90] sm:$0xff]
    %v3230 = vld [vmem:[#allocation8 + $0xd98] sm:$0xff]
    %v3231 = vld [vmem:[#allocation8 + $0xda0] sm:$0xff]
    %v3232 = vld [vmem:[#allocation8 + $0xda8] sm:$0xff]
    %v3233 = vld [vmem:[#allocation8 + $0xdb0] sm:$0xff]
    %v3234 = vld [vmem:[#allocation8 + $0xdb8] sm:$0xff]
    %v3235 = vld [vmem:[#allocation8 + $0xdc0] sm:$0xff]
    %v3236 = vld [vmem:[#allocation8 + $0xdc8] sm:$0xff]
    %v3237 = vld [vmem:[#allocation8 + $0xdd0] sm:$0xff]
    %v3238 = vld [vmem:[#allocation8 + $0xdd8] sm:$0xff]
    %v3239 = vld [vmem:[#allocation8 + $0xde0] sm:$0xff]
    %v3240 = vld [vmem:[#allocation8 + $0xde8] sm:$0xff]
    %v3241 = vld [vmem:[#allocation8 + $0xdf0] sm:$0xff]
    %v3242 = vld [vmem:[#allocation8 + $0xdf8] sm:$0xff]
    %v3243 = vld [vmem:[#allocation8 + $0xe00] sm:$0xff]
    %v3244 = vld [vmem:[#allocation8 + $0xe08] sm:$0xff]
    %v3245 = vld [vmem:[#allocation8 + $0xe10] sm:$0xff]
    %v3246 = vld [vmem:[#allocation8 + $0xe18] sm:$0xff]
    %v3247 = vld [vmem:[#allocation8 + $0xe20] sm:$0xff]
    %v3248 = vld [vmem:[#allocation8 + $0xe28] sm:$0xff]
    %v3249 = vld [vmem:[#allocation8 + $0xe30] sm:$0xff]
    %v3250 = vld [vmem:[#allocation8 + $0xe38] sm:$0xff]
    %v3251 = vld [vmem:[#allocation8 + $0xe40] sm:$0xff]
    %v3252 = vld [vmem:[#allocation8 + $0xe48] sm:$0xff]
    %v3253 = vld [vmem:[#allocation8 + $0xe50] sm:$0xff]
    %v3254 = vld [vmem:[#allocation8 + $0xe58] sm:$0xff]
    %v3255 = vld [vmem:[#allocation8 + $0xe60] sm:$0xff]
    %v3256 = vld [vmem:[#allocation8 + $0xe68] sm:$0xff]
    %v3257 = vld [vmem:[#allocation8 + $0xe70] sm:$0xff]
    %v3258 = vld [vmem:[#allocation8 + $0xe78] sm:$0xff]
    %v3259 = vld [vmem:[#allocation8 + $0xe80] sm:$0xff]
    %v3260 = vld [vmem:[#allocation8 + $0xe88] sm:$0xff]
    %v3261 = vld [vmem:[#allocation8 + $0xe90] sm:$0xff]
    %v3262 = vld [vmem:[#allocation8 + $0xe98] sm:$0xff]
    %v3263 = vld [vmem:[#allocation8 + $0xea0] sm:$0xff]
    %v3264 = vld [vmem:[#allocation8 + $0xea8] sm:$0xff]
    %v3265 = vld [vmem:[#allocation8 + $0xeb0] sm:$0xff]
    %v3266 = vld [vmem:[#allocation8 + $0xeb8] sm:$0xff]
    %v3267 = vld [vmem:[#allocation8 + $0xec0] sm:$0xff]
    %v3268 = vld [vmem:[#allocation8 + $0xec8] sm:$0xff]
    %v3269 = vld [vmem:[#allocation8 + $0xed0] sm:$0xff]
    %v3270 = vld [vmem:[#allocation8 + $0xed8] sm:$0xff]
    %v3271 = vld [vmem:[#allocation8 + $0xee0] sm:$0xff]
    %v3272 = vld [vmem:[#allocation8 + $0xee8] sm:$0xff]
    %v3273 = vld [vmem:[#allocation8 + $0xef0] sm:$0xff]
    %v3274 = vld [vmem:[#allocation8 + $0xef8] sm:$0xff]
    %v3275 = vld [vmem:[#allocation8 + $0xf00] sm:$0xff]
    %v3276 = vld [vmem:[#allocation8 + $0xf08] sm:$0xff]
    %v3277 = vld [vmem:[#allocation8 + $0xf10] sm:$0xff]
    %v3278 = vld [vmem:[#allocation8 + $0xf18] sm:$0xff]
    %v3279 = vld [vmem:[#allocation8 + $0xf20] sm:$0xff]
    %v3280 = vld [vmem:[#allocation8 + $0xf28] sm:$0xff]
    %v3281 = vld [vmem:[#allocation8 + $0xf30] sm:$0xff]
    %v3282 = vld [vmem:[#allocation8 + $0xf38] sm:$0xff]
    %v3283 = vld [vmem:[#allocation8 + $0xf40] sm:$0xff]
    %v3284 = vld [vmem:[#allocation8 + $0xf48] sm:$0xff]
    %v3285 = vld [vmem:[#allocation8 + $0xf50] sm:$0xff]
    %v3286 = vld [vmem:[#allocation8 + $0xf58] sm:$0xff]
    %v3287 = vld [vmem:[#allocation8 + $0xf60] sm:$0xff]
    %v3288 = vld [vmem:[#allocation8 + $0xf68] sm:$0xff]
    %v3289 = vld [vmem:[#allocation8 + $0xf70] sm:$0xff]
    %v3290 = vld [vmem:[#allocation8 + $0xf78] sm:$0xff]
    %v3291 = vld [vmem:[#allocation8 + $0xf80] sm:$0xff]
    %v3292 = vld [vmem:[#allocation8 + $0xf88] sm:$0xff]
    %v3293 = vld [vmem:[#allocation8 + $0xf90] sm:$0xff]
    %v3294 = vld [vmem:[#allocation8 + $0xf98] sm:$0xff]
    %v3295 = vld [vmem:[#allocation8 + $0xfa0] sm:$0xff]
    %v3296 = vld [vmem:[#allocation8 + $0xfa8] sm:$0xff]
    %v3297 = vld [vmem:[#allocation8 + $0xfb0] sm:$0xff]
    %v3298 = vld [vmem:[#allocation8 + $0xfb8] sm:$0xff]
    %v3299 = vld [vmem:[#allocation8 + $0xfc0] sm:$0xff]
    %v3300 = vld [vmem:[#allocation8 + $0xfc8] sm:$0xff]
    %v3301 = vld [vmem:[#allocation8 + $0xfd0] sm:$0xff]
    %v3302 = vld [vmem:[#allocation8 + $0xfd8] sm:$0xff]
    %v3303 = vld [vmem:[#allocation8 + $0xfe0] sm:$0xff]
    %v3304 = vld [vmem:[#allocation8 + $0xfe8] sm:$0xff]
    %v3305 = vld [vmem:[#allocation8 + $0xff0] sm:$0xff]
    %v3306 = vld [vmem:[#allocation8 + $0xff8] sm:$0xff]
    %v3307 = vld [vmem:[#allocation8 + $0x1000] sm:$0xff]
    %v3308 = vld [vmem:[#allocation8 + $0x1008] sm:$0xff]
    %v3309 = vld [vmem:[#allocation8 + $0x1010] sm:$0xff]
    %v3310 = vld [vmem:[#allocation8 + $0x1018] sm:$0xff]
    %v3311 = vld [vmem:[#allocation8 + $0x1020] sm:$0xff]
    %v3312 = vld [vmem:[#allocation8 + $0x1028] sm:$0xff]
    %v3313 = vld [vmem:[#allocation8 + $0x1030] sm:$0xff]
    %v3314 = vld [vmem:[#allocation8 + $0x1038] sm:$0xff]
    %v3315 = vld [vmem:[#allocation8 + $0x1040] sm:$0xff]
    %v3316 = vld [vmem:[#allocation8 + $0x1048] sm:$0xff]
    %v3317 = vld [vmem:[#allocation8 + $0x1050] sm:$0xff]
    %v3318 = vld [vmem:[#allocation8 + $0x1058] sm:$0xff]
    %v3319 = vld [vmem:[#allocation8 + $0x1060] sm:$0xff]
    %v3320 = vld [vmem:[#allocation8 + $0x1068] sm:$0xff]
    %v3321 = vld [vmem:[#allocation8 + $0x1070] sm:$0xff]
    %v3322 = vld [vmem:[#allocation8 + $0x1078] sm:$0xff]
    %v3323 = vld [vmem:[#allocation8 + $0x1080] sm:$0x11]
    %v3324 = vld [vmem:[#allocation8 + $0x1088] sm:$0x11]
    %v3325 = vld [vmem:[#allocation8 + $0x1090] sm:$0x11]
    %v3326 = vld [vmem:[#allocation8 + $0x1098] sm:$0x11]
    %v3327 = vld [vmem:[#allocation8 + $0x10a0] sm:$0x11]
    %v3328 = vld [vmem:[#allocation8 + $0x10a8] sm:$0x11]
    %v3329 = vld [vmem:[#allocation8 + $0x10b0] sm:$0x11]
    %v3330 = vld [vmem:[#allocation8 + $0x10b8] sm:$0x11]
    %v3867 = vunpack.c.l.b16 %v2795
    %v3868 = vunpack.c.h.b16 %v2795
    %v3869 = vunpack.c.l.b16 %v2796
    %v3870 = vunpack.c.h.b16 %v2796
    %v3871 = vunpack.c.l.b16 %v2797
    %v3872 = vunpack.c.h.b16 %v2797
    %v3873 = vunpack.c.l.b16 %v2798
    %v3874 = vunpack.c.h.b16 %v2798
    %v3875 = vunpack.c.l.b16 %v2799
    %v3876 = vunpack.c.h.b16 %v2799
    %v3877 = vunpack.c.l.b16 %v2800
    %v3878 = vunpack.c.h.b16 %v2800
    %v3879 = vunpack.c.l.b16 %v2801
    %v3880 = vunpack.c.h.b16 %v2801
    %v3881 = vunpack.c.l.b16 %v2802
    %v3882 = vunpack.c.h.b16 %v2802
    %v3883 = vunpack.c.l.b16 %v2803
    %v3884 = vunpack.c.h.b16 %v2803
    %v3885 = vunpack.c.l.b16 %v2804
    %v3886 = vunpack.c.h.b16 %v2804
    %v3887 = vunpack.c.l.b16 %v2805
    %v3888 = vunpack.c.h.b16 %v2805
    %v3889 = vunpack.c.l.b16 %v2806
    %v3890 = vunpack.c.h.b16 %v2806
    %v3891 = vunpack.c.l.b16 %v2807
    %v3892 = vunpack.c.h.b16 %v2807
    %v3893 = vunpack.c.l.b16 %v2808
    %v3894 = vunpack.c.h.b16 %v2808
    %v3895 = vunpack.c.l.b16 %v2809
    %v3896 = vunpack.c.h.b16 %v2809
    %v3897 = vunpack.c.l.b16 %v2810
    %v3898 = vunpack.c.h.b16 %v2810
    %v3899 = vunpack.c.l.b16 %v2811
    %v3900 = vunpack.c.h.b16 %v2811
    %v3901 = vunpack.c.l.b16 %v2812
    %v3902 = vunpack.c.h.b16 %v2812
    %v3903 = vunpack.c.l.b16 %v2813
    %v3904 = vunpack.c.h.b16 %v2813
    %v3905 = vunpack.c.l.b16 %v2814
    %v3906 = vunpack.c.h.b16 %v2814
    %v3907 = vunpack.c.l.b16 %v2815
    %v3908 = vunpack.c.h.b16 %v2815
    %v3909 = vunpack.c.l.b16 %v2816
    %v3910 = vunpack.c.h.b16 %v2816
    %v3911 = vunpack.c.l.b16 %v2817
    %v3912 = vunpack.c.h.b16 %v2817
    %v3913 = vunpack.c.l.b16 %v2818
    %v3914 = vunpack.c.h.b16 %v2818
    %v3915 = vunpack.c.l.b16 %v2819
    %v3916 = vunpack.c.h.b16 %v2819
    %v3917 = vunpack.c.l.b16 %v2820
    %v3918 = vunpack.c.h.b16 %v2820
    %v3919 = vunpack.c.l.b16 %v2821
    %v3920 = vunpack.c.h.b16 %v2821
    %v3921 = vunpack.c.l.b16 %v2822
    %v3922 = vunpack.c.h.b16 %v2822
    %v3923 = vunpack.c.l.b16 %v2823
    %v3924 = vunpack.c.h.b16 %v2823
    %v3925 = vunpack.c.l.b16 %v2824
    %v3926 = vunpack.c.h.b16 %v2824
    %v3927 = vunpack.c.l.b16 %v2825
    %v3928 = vunpack.c.h.b16 %v2825
    %v3929 = vunpack.c.l.b16 %v2826
    %v3930 = vunpack.c.h.b16 %v2826
    %v3931 = vunpack.c.l.b16 %v2827
    %v3932 = vunpack.c.h.b16 %v2827
    %v3933 = vunpack.c.l.b16 %v2828
    %v3934 = vunpack.c.h.b16 %v2828
    %v3935 = vunpack.c.l.b16 %v2829
    %v3936 = vunpack.c.h.b16 %v2829
    %v3937 = vunpack.c.l.b16 %v2830
    %v3938 = vunpack.c.h.b16 %v2830
    %v3939 = vunpack.c.l.b16 %v2831
    %v3940 = vunpack.c.h.b16 %v2831
    %v3941 = vunpack.c.l.b16 %v2832
    %v3942 = vunpack.c.h.b16 %v2832
    %v3943 = vunpack.c.l.b16 %v2833
    %v3944 = vunpack.c.h.b16 %v2833
    %v3945 = vunpack.c.l.b16 %v2834
    %v3946 = vunpack.c.h.b16 %v2834
    %v3947 = vunpack.c.l.b16 %v2835
    %v3948 = vunpack.c.h.b16 %v2835
    %v3949 = vunpack.c.l.b16 %v2836
    %v3950 = vunpack.c.h.b16 %v2836
    %v3951 = vunpack.c.l.b16 %v2837
    %v3952 = vunpack.c.h.b16 %v2837
    %v3953 = vunpack.c.l.b16 %v2838
    %v3954 = vunpack.c.h.b16 %v2838
    %v3955 = vunpack.c.l.b16 %v2839
    %v3956 = vunpack.c.h.b16 %v2839
    %v3957 = vunpack.c.l.b16 %v2840
    %v3958 = vunpack.c.h.b16 %v2840
    %v3959 = vunpack.c.l.b16 %v2841
    %v3960 = vunpack.c.h.b16 %v2841
    %v3961 = vunpack.c.l.b16 %v2842
    %v3962 = vunpack.c.h.b16 %v2842
    %v3963 = vunpack.c.l.b16 %v2843
    %v3964 = vunpack.c.h.b16 %v2843
    %v3965 = vunpack.c.l.b16 %v2844
    %v3966 = vunpack.c.h.b16 %v2844
    %v3967 = vunpack.c.l.b16 %v2845
    %v3968 = vunpack.c.h.b16 %v2845
    %v3969 = vunpack.c.l.b16 %v2846
    %v3970 = vunpack.c.h.b16 %v2846
    %v3971 = vunpack.c.l.b16 %v2847
    %v3972 = vunpack.c.h.b16 %v2847
    %v3973 = vunpack.c.l.b16 %v2848
    %v3974 = vunpack.c.h.b16 %v2848
    %v3975 = vunpack.c.l.b16 %v2849
    %v3976 = vunpack.c.h.b16 %v2849
    %v3977 = vunpack.c.l.b16 %v2850
    %v3978 = vunpack.c.h.b16 %v2850
    %v3979 = vunpack.c.l.b16 %v2851
    %v3980 = vunpack.c.h.b16 %v2851
    %v3981 = vunpack.c.l.b16 %v2852
    %v3982 = vunpack.c.h.b16 %v2852
    %v3983 = vunpack.c.l.b16 %v2853
    %v3984 = vunpack.c.h.b16 %v2853
    %v3985 = vunpack.c.l.b16 %v2854
    %v3986 = vunpack.c.h.b16 %v2854
    %v3987 = vunpack.c.l.b16 %v2855
    %v3988 = vunpack.c.h.b16 %v2855
    %v3989 = vunpack.c.l.b16 %v2856
    %v3990 = vunpack.c.h.b16 %v2856
    %v3991 = vunpack.c.l.b16 %v2857
    %v3992 = vunpack.c.h.b16 %v2857
    %v3993 = vunpack.c.l.b16 %v2858
    %v3994 = vunpack.c.h.b16 %v2858
    %v3995 = vunpack.c.l.b16 %v2859
    %v3996 = vunpack.c.h.b16 %v2859
    %v3997 = vunpack.c.l.b16 %v2860
    %v3998 = vunpack.c.h.b16 %v2860
    %v3999 = vunpack.c.l.b16 %v2861
    %v4000 = vunpack.c.h.b16 %v2861
    %v4001 = vunpack.c.l.b16 %v2862
    %v4002 = vunpack.c.h.b16 %v2862
    %v4003 = vunpack.c.l.b16 %v2863
    %v4004 = vunpack.c.h.b16 %v2863
    %v4005 = vunpack.c.l.b16 %v2864
    %v4006 = vunpack.c.h.b16 %v2864
    %v4007 = vunpack.c.l.b16 %v2865
    %v4008 = vunpack.c.h.b16 %v2865
    %v4009 = vunpack.c.l.b16 %v2866
    %v4010 = vunpack.c.h.b16 %v2866
    %v4011 = vunpack.c.l.b16 %v2867
    %v4012 = vunpack.c.h.b16 %v2867
    %v4013 = vunpack.c.l.b16 %v2868
    %v4014 = vunpack.c.h.b16 %v2868
    %v4015 = vunpack.c.l.b16 %v2869
    %v4016 = vunpack.c.h.b16 %v2869
    %v4017 = vunpack.c.l.b16 %v2870
    %v4018 = vunpack.c.h.b16 %v2870
    %v4019 = vunpack.c.l.b16 %v2871
    %v4020 = vunpack.c.h.b16 %v2871
    %v4021 = vunpack.c.l.b16 %v2872
    %v4022 = vunpack.c.h.b16 %v2872
    %v4023 = vunpack.c.l.b16 %v2873
    %v4024 = vunpack.c.h.b16 %v2873
    %v4025 = vunpack.c.l.b16 %v2874
    %v4026 = vunpack.c.h.b16 %v2874
    %v4027 = vunpack.c.l.b16 %v2875
    %v4028 = vunpack.c.h.b16 %v2875
    %v4029 = vunpack.c.l.b16 %v2876
    %v4030 = vunpack.c.h.b16 %v2876
    %v4031 = vunpack.c.l.b16 %v2877
    %v4032 = vunpack.c.h.b16 %v2877
    %v4033 = vunpack.c.l.b16 %v2878
    %v4034 = vunpack.c.h.b16 %v2878
    %v4035 = vunpack.c.l.b16 %v2879
    %v4036 = vunpack.c.h.b16 %v2879
    %v4037 = vunpack.c.l.b16 %v2880
    %v4038 = vunpack.c.h.b16 %v2880
    %v4039 = vunpack.c.l.b16 %v2881
    %v4040 = vunpack.c.h.b16 %v2881
    %v4041 = vunpack.c.l.b16 %v2882
    %v4042 = vunpack.c.h.b16 %v2882
    %v4043 = vunpack.c.l.b16 %v2883
    %v4044 = vunpack.c.h.b16 %v2883
    %v4045 = vunpack.c.l.b16 %v2884
    %v4046 = vunpack.c.h.b16 %v2884
    %v4047 = vunpack.c.l.b16 %v2885
    %v4048 = vunpack.c.h.b16 %v2885
    %v4049 = vunpack.c.l.b16 %v2886
    %v4050 = vunpack.c.h.b16 %v2886
    %v4051 = vunpack.c.l.b16 %v2887
    %v4052 = vunpack.c.h.b16 %v2887
    %v4053 = vunpack.c.l.b16 %v2888
    %v4054 = vunpack.c.h.b16 %v2888
    %v4055 = vunpack.c.l.b16 %v2889
    %v4056 = vunpack.c.h.b16 %v2889
    %v4057 = vunpack.c.l.b16 %v2890
    %v4058 = vunpack.c.h.b16 %v2890
    %v4059 = vunpack.c.l.b16 %v2891
    %v4060 = vunpack.c.h.b16 %v2891
    %v4061 = vunpack.c.l.b16 %v2892
    %v4062 = vunpack.c.h.b16 %v2892
    %v4063 = vunpack.c.l.b16 %v2893
    %v4064 = vunpack.c.h.b16 %v2893
    %v4065 = vunpack.c.l.b16 %v2894
    %v4066 = vunpack.c.h.b16 %v2894
    %v4067 = vunpack.c.l.b16 %v2895
    %v4068 = vunpack.c.h.b16 %v2895
    %v4069 = vunpack.c.l.b16 %v2896
    %v4070 = vunpack.c.h.b16 %v2896
    %v4071 = vunpack.c.l.b16 %v2897
    %v4072 = vunpack.c.h.b16 %v2897
    %v4073 = vunpack.c.l.b16 %v2898
    %v4074 = vunpack.c.h.b16 %v2898
    %v4075 = vunpack.c.l.b16 %v2899
    %v4076 = vunpack.c.h.b16 %v2899
    %v4077 = vunpack.c.l.b16 %v2900
    %v4078 = vunpack.c.h.b16 %v2900
    %v4079 = vunpack.c.l.b16 %v2901
    %v4080 = vunpack.c.h.b16 %v2901
    %v4081 = vunpack.c.l.b16 %v2902
    %v4082 = vunpack.c.h.b16 %v2902
    %v4083 = vunpack.c.l.b16 %v2903
    %v4084 = vunpack.c.h.b16 %v2903
    %v4085 = vunpack.c.l.b16 %v2904
    %v4086 = vunpack.c.h.b16 %v2904
    %v4087 = vunpack.c.l.b16 %v2905
    %v4088 = vunpack.c.h.b16 %v2905
    %v4089 = vunpack.c.l.b16 %v2906
    %v4090 = vunpack.c.h.b16 %v2906
    %v4091 = vunpack.c.l.b16 %v2907
    %v4092 = vunpack.c.h.b16 %v2907
    %v4093 = vunpack.c.l.b16 %v2908
    %v4094 = vunpack.c.h.b16 %v2908
    %v4095 = vunpack.c.l.b16 %v2909
    %v4096 = vunpack.c.h.b16 %v2909
    %v4097 = vunpack.c.l.b16 %v2910
    %v4098 = vunpack.c.h.b16 %v2910
    %v4099 = vunpack.c.l.b16 %v2911
    %v4100 = vunpack.c.h.b16 %v2911
    %v4101 = vunpack.c.l.b16 %v2912
    %v4102 = vunpack.c.h.b16 %v2912
    %v4103 = vunpack.c.l.b16 %v2913
    %v4104 = vunpack.c.h.b16 %v2913
    %v4105 = vunpack.c.l.b16 %v2914
    %v4106 = vunpack.c.h.b16 %v2914
    %v4107 = vunpack.c.l.b16 %v2915
    %v4108 = vunpack.c.h.b16 %v2915
    %v4109 = vunpack.c.l.b16 %v2916
    %v4110 = vunpack.c.h.b16 %v2916
    %v4111 = vunpack.c.l.b16 %v2917
    %v4112 = vunpack.c.h.b16 %v2917
    %v4113 = vunpack.c.l.b16 %v2918
    %v4114 = vunpack.c.h.b16 %v2918
    %v4115 = vunpack.c.l.b16 %v2919
    %v4116 = vunpack.c.h.b16 %v2919
    %v4117 = vunpack.c.l.b16 %v2920
    %v4118 = vunpack.c.h.b16 %v2920
    %v4119 = vunpack.c.l.b16 %v2921
    %v4120 = vunpack.c.h.b16 %v2921
    %v4121 = vunpack.c.l.b16 %v2922
    %v4122 = vunpack.c.h.b16 %v2922
    %v4123 = vunpack.c.l.b16 %v2923
    %v4124 = vunpack.c.h.b16 %v2923
    %v4125 = vunpack.c.l.b16 %v2924
    %v4126 = vunpack.c.h.b16 %v2924
    %v4127 = vunpack.c.l.b16 %v2925
    %v4128 = vunpack.c.h.b16 %v2925
    %v4129 = vunpack.c.l.b16 %v2926
    %v4130 = vunpack.c.h.b16 %v2926
    %v4131 = vunpack.c.l.b16 %v2927
    %v4132 = vunpack.c.h.b16 %v2927
    %v4133 = vunpack.c.l.b16 %v2928
    %v4134 = vunpack.c.h.b16 %v2928
    %v4135 = vunpack.c.l.b16 %v2929
    %v4136 = vunpack.c.h.b16 %v2929
    %v4137 = vunpack.c.l.b16 %v2930
    %v4138 = vunpack.c.h.b16 %v2930
    %v4139 = vunpack.c.l.b16 %v2931
    %v4140 = vunpack.c.h.b16 %v2931
    %v4141 = vunpack.c.l.b16 %v2932
    %v4142 = vunpack.c.h.b16 %v2932
    %v4143 = vunpack.c.l.b16 %v2933
    %v4144 = vunpack.c.h.b16 %v2933
    %v4145 = vunpack.c.l.b16 %v2934
    %v4146 = vunpack.c.h.b16 %v2934
    %v4147 = vunpack.c.l.b16 %v2935
    %v4148 = vunpack.c.h.b16 %v2935
    %v4149 = vunpack.c.l.b16 %v2936
    %v4150 = vunpack.c.h.b16 %v2936
    %v4151 = vunpack.c.l.b16 %v2937
    %v4152 = vunpack.c.h.b16 %v2937
    %v4153 = vunpack.c.l.b16 %v2938
    %v4154 = vunpack.c.h.b16 %v2938
    %v4155 = vunpack.c.l.b16 %v2939
    %v4156 = vunpack.c.h.b16 %v2939
    %v4157 = vunpack.c.l.b16 %v2940
    %v4158 = vunpack.c.h.b16 %v2940
    %v4159 = vunpack.c.l.b16 %v2941
    %v4160 = vunpack.c.h.b16 %v2941
    %v4161 = vunpack.c.l.b16 %v2942
    %v4162 = vunpack.c.h.b16 %v2942
    %v4163 = vunpack.c.l.b16 %v2943
    %v4164 = vunpack.c.h.b16 %v2943
    %v4165 = vunpack.c.l.b16 %v2944
    %v4166 = vunpack.c.h.b16 %v2944
    %v4167 = vunpack.c.l.b16 %v2945
    %v4168 = vunpack.c.h.b16 %v2945
    %v4169 = vunpack.c.l.b16 %v2946
    %v4170 = vunpack.c.h.b16 %v2946
    %v4171 = vunpack.c.l.b16 %v2947
    %v4172 = vunpack.c.h.b16 %v2947
    %v4173 = vunpack.c.l.b16 %v2948
    %v4174 = vunpack.c.h.b16 %v2948
    %v4175 = vunpack.c.l.b16 %v2949
    %v4176 = vunpack.c.h.b16 %v2949
    %v4177 = vunpack.c.l.b16 %v2950
    %v4178 = vunpack.c.h.b16 %v2950
    %v4179 = vunpack.c.l.b16 %v2951
    %v4180 = vunpack.c.h.b16 %v2951
    %v4181 = vunpack.c.l.b16 %v2952
    %v4182 = vunpack.c.h.b16 %v2952
    %v4183 = vunpack.c.l.b16 %v2953
    %v4184 = vunpack.c.h.b16 %v2953
    %v4185 = vunpack.c.l.b16 %v2954
    %v4186 = vunpack.c.h.b16 %v2954
    %v4187 = vunpack.c.l.b16 %v2955
    %v4188 = vunpack.c.h.b16 %v2955
    %v4189 = vunpack.c.l.b16 %v2956
    %v4190 = vunpack.c.h.b16 %v2956
    %v4191 = vunpack.c.l.b16 %v2957
    %v4192 = vunpack.c.h.b16 %v2957
    %v4193 = vunpack.c.l.b16 %v2958
    %v4194 = vunpack.c.h.b16 %v2958
    %v4195 = vunpack.c.l.b16 %v2959
    %v4196 = vunpack.c.h.b16 %v2959
    %v4197 = vunpack.c.l.b16 %v2960
    %v4198 = vunpack.c.h.b16 %v2960
    %v4199 = vunpack.c.l.b16 %v2961
    %v4200 = vunpack.c.h.b16 %v2961
    %v4201 = vunpack.c.l.b16 %v2962
    %v4202 = vunpack.c.h.b16 %v2962
    %v4203 = vunpack.c.l.b16 %v2963
    %v4204 = vunpack.c.h.b16 %v2963
    %v4205 = vunpack.c.l.b16 %v2964
    %v4206 = vunpack.c.h.b16 %v2964
    %v4207 = vunpack.c.l.b16 %v2965
    %v4208 = vunpack.c.h.b16 %v2965
    %v4209 = vunpack.c.l.b16 %v2966
    %v4210 = vunpack.c.h.b16 %v2966
    %v4211 = vunpack.c.l.b16 %v2967
    %v4212 = vunpack.c.h.b16 %v2967
    %v4213 = vunpack.c.l.b16 %v2968
    %v4214 = vunpack.c.h.b16 %v2968
    %v4215 = vunpack.c.l.b16 %v2969
    %v4216 = vunpack.c.h.b16 %v2969
    %v4217 = vunpack.c.l.b16 %v2970
    %v4218 = vunpack.c.h.b16 %v2970
    %v4219 = vunpack.c.l.b16 %v2971
    %v4220 = vunpack.c.h.b16 %v2971
    %v4221 = vunpack.c.l.b16 %v2972
    %v4222 = vunpack.c.h.b16 %v2972
    %v4223 = vunpack.c.l.b16 %v2973
    %v4224 = vunpack.c.h.b16 %v2973
    %v4225 = vunpack.c.l.b16 %v2974
    %v4226 = vunpack.c.h.b16 %v2974
    %v4227 = vunpack.c.l.b16 %v2975
    %v4228 = vunpack.c.h.b16 %v2975
    %v4229 = vunpack.c.l.b16 %v2976
    %v4230 = vunpack.c.h.b16 %v2976
    %v4231 = vunpack.c.l.b16 %v2977
    %v4232 = vunpack.c.h.b16 %v2977
    %v4233 = vunpack.c.l.b16 %v2978
    %v4234 = vunpack.c.h.b16 %v2978
    %v4235 = vunpack.c.l.b16 %v2979
    %v4236 = vunpack.c.h.b16 %v2979
    %v4237 = vunpack.c.l.b16 %v2980
    %v4238 = vunpack.c.h.b16 %v2980
    %v4239 = vunpack.c.l.b16 %v2981
    %v4240 = vunpack.c.h.b16 %v2981
    %v4241 = vunpack.c.l.b16 %v2982
    %v4242 = vunpack.c.h.b16 %v2982
    %v4243 = vunpack.c.l.b16 %v2983
    %v4244 = vunpack.c.h.b16 %v2983
    %v4245 = vunpack.c.l.b16 %v2984
    %v4246 = vunpack.c.h.b16 %v2984
    %v4247 = vunpack.c.l.b16 %v2985
    %v4248 = vunpack.c.h.b16 %v2985
    %v4249 = vunpack.c.l.b16 %v2986
    %v4250 = vunpack.c.h.b16 %v2986
    %v4251 = vunpack.c.l.b16 %v2987
    %v4252 = vunpack.c.h.b16 %v2987
    %v4253 = vunpack.c.l.b16 %v2988
    %v4254 = vunpack.c.h.b16 %v2988
    %v4255 = vunpack.c.l.b16 %v2989
    %v4256 = vunpack.c.h.b16 %v2989
    %v4257 = vunpack.c.l.b16 %v2990
    %v4258 = vunpack.c.h.b16 %v2990
    %v4259 = vunpack.c.l.b16 %v2991
    %v4260 = vunpack.c.h.b16 %v2991
    %v4261 = vunpack.c.l.b16 %v2992
    %v4262 = vunpack.c.h.b16 %v2992
    %v4263 = vunpack.c.l.b16 %v2993
    %v4264 = vunpack.c.h.b16 %v2993
    %v4265 = vunpack.c.l.b16 %v2994
    %v4266 = vunpack.c.h.b16 %v2994
    %v4267 = vunpack.c.l.b16 %v2995
    %v4268 = vunpack.c.h.b16 %v2995
    %v4269 = vunpack.c.l.b16 %v2996
    %v4270 = vunpack.c.h.b16 %v2996
    %v4271 = vunpack.c.l.b16 %v2997
    %v4272 = vunpack.c.h.b16 %v2997
    %v4273 = vunpack.c.l.b16 %v2998
    %v4274 = vunpack.c.h.b16 %v2998
    %v4275 = vunpack.c.l.b16 %v2999
    %v4276 = vunpack.c.h.b16 %v2999
    %v4277 = vunpack.c.l.b16 %v3000
    %v4278 = vunpack.c.h.b16 %v3000
    %v4279 = vunpack.c.l.b16 %v3001
    %v4280 = vunpack.c.h.b16 %v3001
    %v4281 = vunpack.c.l.b16 %v3002
    %v4282 = vunpack.c.h.b16 %v3002
    %v4283 = vunpack.c.l.b16 %v3003
    %v4284 = vunpack.c.h.b16 %v3003
    %v4285 = vunpack.c.l.b16 %v3004
    %v4286 = vunpack.c.h.b16 %v3004
    %v4287 = vunpack.c.l.b16 %v3005
    %v4288 = vunpack.c.h.b16 %v3005
    %v4289 = vunpack.c.l.b16 %v3006
    %v4290 = vunpack.c.h.b16 %v3006
    %v4291 = vunpack.c.l.b16 %v3007
    %v4292 = vunpack.c.h.b16 %v3007
    %v4293 = vunpack.c.l.b16 %v3008
    %v4294 = vunpack.c.h.b16 %v3008
    %v4295 = vunpack.c.l.b16 %v3009
    %v4296 = vunpack.c.h.b16 %v3009
    %v4297 = vunpack.c.l.b16 %v3010
    %v4298 = vunpack.c.h.b16 %v3010
    %v4299 = vunpack.c.l.b16 %v3011
    %v4300 = vunpack.c.h.b16 %v3011
    %v4301 = vunpack.c.l.b16 %v3012
    %v4302 = vunpack.c.h.b16 %v3012
    %v4303 = vunpack.c.l.b16 %v3013
    %v4304 = vunpack.c.h.b16 %v3013
    %v4305 = vunpack.c.l.b16 %v3014
    %v4306 = vunpack.c.h.b16 %v3014
    %v4307 = vunpack.c.l.b16 %v3015
    %v4308 = vunpack.c.h.b16 %v3015
    %v4309 = vunpack.c.l.b16 %v3016
    %v4310 = vunpack.c.h.b16 %v3016
    %v4311 = vunpack.c.l.b16 %v3017
    %v4312 = vunpack.c.h.b16 %v3017
    %v4313 = vunpack.c.l.b16 %v3018
    %v4314 = vunpack.c.h.b16 %v3018
    %v4315 = vunpack.c.l.b16 %v3019
    %v4316 = vunpack.c.h.b16 %v3019
    %v4317 = vunpack.c.l.b16 %v3020
    %v4318 = vunpack.c.h.b16 %v3020
    %v4319 = vunpack.c.l.b16 %v3021
    %v4320 = vunpack.c.h.b16 %v3021
    %v4321 = vunpack.c.l.b16 %v3022
    %v4322 = vunpack.c.h.b16 %v3022
    %v4323 = vunpack.c.l.b16 %v3023
    %v4324 = vunpack.c.h.b16 %v3023
    %v4325 = vunpack.c.l.b16 %v3024
    %v4326 = vunpack.c.h.b16 %v3024
    %v4327 = vunpack.c.l.b16 %v3025
    %v4328 = vunpack.c.h.b16 %v3025
    %v4329 = vunpack.c.l.b16 %v3026
    %v4330 = vunpack.c.h.b16 %v3026
    %v4331 = vunpack.c.l.b16 %v3027
    %v4332 = vunpack.c.h.b16 %v3027
    %v4333 = vunpack.c.l.b16 %v3028
    %v4334 = vunpack.c.h.b16 %v3028
    %v4335 = vunpack.c.l.b16 %v3029
    %v4336 = vunpack.c.h.b16 %v3029
    %v4337 = vunpack.c.l.b16 %v3030
    %v4338 = vunpack.c.h.b16 %v3030
    %v4339 = vunpack.c.l.b16 %v3031
    %v4340 = vunpack.c.h.b16 %v3031
    %v4341 = vunpack.c.l.b16 %v3032
    %v4342 = vunpack.c.h.b16 %v3032
    %v4343 = vunpack.c.l.b16 %v3033
    %v4344 = vunpack.c.h.b16 %v3033
    %v4345 = vunpack.c.l.b16 %v3034
    %v4346 = vunpack.c.h.b16 %v3034
    %v4347 = vunpack.c.l.b16 %v3035
    %v4348 = vunpack.c.h.b16 %v3035
    %v4349 = vunpack.c.l.b16 %v3036
    %v4350 = vunpack.c.h.b16 %v3036
    %v4351 = vunpack.c.l.b16 %v3037
    %v4352 = vunpack.c.h.b16 %v3037
    %v4353 = vunpack.c.l.b16 %v3038
    %v4354 = vunpack.c.h.b16 %v3038
    %v4355 = vunpack.c.l.b16 %v3039
    %v4356 = vunpack.c.h.b16 %v3039
    %v4357 = vunpack.c.l.b16 %v3040
    %v4358 = vunpack.c.h.b16 %v3040
    %v4359 = vunpack.c.l.b16 %v3041
    %v4360 = vunpack.c.h.b16 %v3041
    %v4361 = vunpack.c.l.b16 %v3042
    %v4362 = vunpack.c.h.b16 %v3042
    %v4363 = vunpack.c.l.b16 %v3043
    %v4364 = vunpack.c.h.b16 %v3043
    %v4365 = vunpack.c.l.b16 %v3044
    %v4366 = vunpack.c.h.b16 %v3044
    %v4367 = vunpack.c.l.b16 %v3045
    %v4368 = vunpack.c.h.b16 %v3045
    %v4369 = vunpack.c.l.b16 %v3046
    %v4370 = vunpack.c.h.b16 %v3046
    %v4371 = vunpack.c.l.b16 %v3047
    %v4372 = vunpack.c.h.b16 %v3047
    %v4373 = vunpack.c.l.b16 %v3048
    %v4374 = vunpack.c.h.b16 %v3048
    %v4375 = vunpack.c.l.b16 %v3049
    %v4376 = vunpack.c.h.b16 %v3049
    %v4377 = vunpack.c.l.b16 %v3050
    %v4378 = vunpack.c.h.b16 %v3050
    %v4379 = vunpack.c.l.b16 %v3051
    %v4380 = vunpack.c.h.b16 %v3051
    %v4381 = vunpack.c.l.b16 %v3052
    %v4382 = vunpack.c.h.b16 %v3052
    %v4383 = vunpack.c.l.b16 %v3053
    %v4384 = vunpack.c.h.b16 %v3053
    %v4385 = vunpack.c.l.b16 %v3054
    %v4386 = vunpack.c.h.b16 %v3054
    %v4387 = vunpack.c.l.b16 %v3055
    %v4388 = vunpack.c.h.b16 %v3055
    %v4389 = vunpack.c.l.b16 %v3056
    %v4390 = vunpack.c.h.b16 %v3056
    %v4391 = vunpack.c.l.b16 %v3057
    %v4392 = vunpack.c.h.b16 %v3057
    %v4393 = vunpack.c.l.b16 %v3058
    %v4394 = vunpack.c.h.b16 %v3058
    %v4395 = vunpack.c.l.b16 %v3059
    %v4396 = vunpack.c.h.b16 %v3059
    %v4397 = vunpack.c.l.b16 %v3060
    %v4398 = vunpack.c.h.b16 %v3060
    %v4399 = vunpack.c.l.b16 %v3061
    %v4400 = vunpack.c.h.b16 %v3061
    %v4401 = vunpack.c.l.b16 %v3062
    %v4402 = vunpack.c.h.b16 %v3062
    %v4403 = vunpack.c.l.b16 %v3063
    %v4404 = vunpack.c.h.b16 %v3063
    %v4405 = vunpack.c.l.b16 %v3064
    %v4406 = vunpack.c.h.b16 %v3064
    %v4407 = vunpack.c.l.b16 %v3065
    %v4408 = vunpack.c.h.b16 %v3065
    %v4409 = vunpack.c.l.b16 %v3066
    %v4410 = vunpack.c.h.b16 %v3066
    %v4411 = vunpack.c.l.b16 %v3067
    %v4412 = vunpack.c.h.b16 %v3067
    %v4413 = vunpack.c.l.b16 %v3068
    %v4414 = vunpack.c.h.b16 %v3068
    %v4415 = vunpack.c.l.b16 %v3069
    %v4416 = vunpack.c.h.b16 %v3069
    %v4417 = vunpack.c.l.b16 %v3070
    %v4418 = vunpack.c.h.b16 %v3070
    %v4419 = vunpack.c.l.b16 %v3071
    %v4420 = vunpack.c.h.b16 %v3071
    %v4421 = vunpack.c.l.b16 %v3072
    %v4422 = vunpack.c.h.b16 %v3072
    %v4423 = vunpack.c.l.b16 %v3073
    %v4424 = vunpack.c.h.b16 %v3073
    %v4425 = vunpack.c.l.b16 %v3074
    %v4426 = vunpack.c.h.b16 %v3074
    %v4427 = vunpack.c.l.b16 %v3075
    %v4428 = vunpack.c.h.b16 %v3075
    %v4429 = vunpack.c.l.b16 %v3076
    %v4430 = vunpack.c.h.b16 %v3076
    %v4431 = vunpack.c.l.b16 %v3077
    %v4432 = vunpack.c.h.b16 %v3077
    %v4433 = vunpack.c.l.b16 %v3078
    %v4434 = vunpack.c.h.b16 %v3078
    %v4435 = vunpack.c.l.b16 %v3079
    %v4436 = vunpack.c.h.b16 %v3079
    %v4437 = vunpack.c.l.b16 %v3080
    %v4438 = vunpack.c.h.b16 %v3080
    %v4439 = vunpack.c.l.b16 %v3081
    %v4440 = vunpack.c.h.b16 %v3081
    %v4441 = vunpack.c.l.b16 %v3082
    %v4442 = vunpack.c.h.b16 %v3082
    %v4443 = vunpack.c.l.b16 %v3083
    %v4444 = vunpack.c.h.b16 %v3083
    %v4445 = vunpack.c.l.b16 %v3084
    %v4446 = vunpack.c.h.b16 %v3084
    %v4447 = vunpack.c.l.b16 %v3085
    %v4448 = vunpack.c.h.b16 %v3085
    %v4449 = vunpack.c.l.b16 %v3086
    %v4450 = vunpack.c.h.b16 %v3086
    %v4451 = vunpack.c.l.b16 %v3087
    %v4452 = vunpack.c.h.b16 %v3087
    %v4453 = vunpack.c.l.b16 %v3088
    %v4454 = vunpack.c.h.b16 %v3088
    %v4455 = vunpack.c.l.b16 %v3089
    %v4456 = vunpack.c.h.b16 %v3089
    %v4457 = vunpack.c.l.b16 %v3090
    %v4458 = vunpack.c.h.b16 %v3090
    %v4459 = vunpack.c.l.b16 %v3091
    %v4460 = vunpack.c.h.b16 %v3091
    %v4461 = vunpack.c.l.b16 %v3092
    %v4462 = vunpack.c.h.b16 %v3092
    %v4463 = vunpack.c.l.b16 %v3093
    %v4464 = vunpack.c.h.b16 %v3093
    %v4465 = vunpack.c.l.b16 %v3094
    %v4466 = vunpack.c.h.b16 %v3094
    %v4467 = vunpack.c.l.b16 %v3095
    %v4468 = vunpack.c.h.b16 %v3095
    %v4469 = vunpack.c.l.b16 %v3096
    %v4470 = vunpack.c.h.b16 %v3096
    %v4471 = vunpack.c.l.b16 %v3097
    %v4472 = vunpack.c.h.b16 %v3097
    %v4473 = vunpack.c.l.b16 %v3098
    %v4474 = vunpack.c.h.b16 %v3098
    %v4475 = vunpack.c.l.b16 %v3099
    %v4476 = vunpack.c.h.b16 %v3099
    %v4477 = vunpack.c.l.b16 %v3100
    %v4478 = vunpack.c.h.b16 %v3100
    %v4479 = vunpack.c.l.b16 %v3101
    %v4480 = vunpack.c.h.b16 %v3101
    %v4481 = vunpack.c.l.b16 %v3102
    %v4482 = vunpack.c.h.b16 %v3102
    %v4483 = vunpack.c.l.b16 %v3103
    %v4484 = vunpack.c.h.b16 %v3103
    %v4485 = vunpack.c.l.b16 %v3104
    %v4486 = vunpack.c.h.b16 %v3104
    %v4487 = vunpack.c.l.b16 %v3105
    %v4488 = vunpack.c.h.b16 %v3105
    %v4489 = vunpack.c.l.b16 %v3106
    %v4490 = vunpack.c.h.b16 %v3106
    %v4491 = vunpack.c.l.b16 %v3107
    %v4492 = vunpack.c.h.b16 %v3107
    %v4493 = vunpack.c.l.b16 %v3108
    %v4494 = vunpack.c.h.b16 %v3108
    %v4495 = vunpack.c.l.b16 %v3109
    %v4496 = vunpack.c.h.b16 %v3109
    %v4497 = vunpack.c.l.b16 %v3110
    %v4498 = vunpack.c.h.b16 %v3110
    %v4499 = vunpack.c.l.b16 %v3111
    %v4500 = vunpack.c.h.b16 %v3111
    %v4501 = vunpack.c.l.b16 %v3112
    %v4502 = vunpack.c.h.b16 %v3112
    %v4503 = vunpack.c.l.b16 %v3113
    %v4504 = vunpack.c.h.b16 %v3113
    %v4505 = vunpack.c.l.b16 %v3114
    %v4506 = vunpack.c.h.b16 %v3114
    %v4507 = vunpack.c.l.b16 %v3115
    %v4508 = vunpack.c.h.b16 %v3115
    %v4509 = vunpack.c.l.b16 %v3116
    %v4510 = vunpack.c.h.b16 %v3116
    %v4511 = vunpack.c.l.b16 %v3117
    %v4512 = vunpack.c.h.b16 %v3117
    %v4513 = vunpack.c.l.b16 %v3118
    %v4514 = vunpack.c.h.b16 %v3118
    %v4515 = vunpack.c.l.b16 %v3119
    %v4516 = vunpack.c.h.b16 %v3119
    %v4517 = vunpack.c.l.b16 %v3120
    %v4518 = vunpack.c.h.b16 %v3120
    %v4519 = vunpack.c.l.b16 %v3121
    %v4520 = vunpack.c.h.b16 %v3121
    %v4521 = vunpack.c.l.b16 %v3122
    %v4522 = vunpack.c.h.b16 %v3122
    %v4523 = vunpack.c.l.b16 %v3123
    %v4524 = vunpack.c.h.b16 %v3123
    %v4525 = vunpack.c.l.b16 %v3124
    %v4526 = vunpack.c.h.b16 %v3124
    %v4527 = vunpack.c.l.b16 %v3125
    %v4528 = vunpack.c.h.b16 %v3125
    %v4529 = vunpack.c.l.b16 %v3126
    %v4530 = vunpack.c.h.b16 %v3126
    %v4531 = vunpack.c.l.b16 %v3127
    %v4532 = vunpack.c.h.b16 %v3127
    %v4533 = vunpack.c.l.b16 %v3128
    %v4534 = vunpack.c.h.b16 %v3128
    %v4535 = vunpack.c.l.b16 %v3129
    %v4536 = vunpack.c.h.b16 %v3129
    %v4537 = vunpack.c.l.b16 %v3130
    %v4538 = vunpack.c.h.b16 %v3130
    %v4539 = vunpack.c.l.b16 %v3131
    %v4540 = vunpack.c.h.b16 %v3131
    %v4541 = vunpack.c.l.b16 %v3132
    %v4542 = vunpack.c.h.b16 %v3132
    %v4543 = vunpack.c.l.b16 %v3133
    %v4544 = vunpack.c.h.b16 %v3133
    %v4545 = vunpack.c.l.b16 %v3134
    %v4546 = vunpack.c.h.b16 %v3134
    %v4547 = vunpack.c.l.b16 %v3135
    %v4548 = vunpack.c.h.b16 %v3135
    %v4549 = vunpack.c.l.b16 %v3136
    %v4550 = vunpack.c.h.b16 %v3136
    %v4551 = vunpack.c.l.b16 %v3137
    %v4552 = vunpack.c.h.b16 %v3137
    %v4553 = vunpack.c.l.b16 %v3138
    %v4554 = vunpack.c.h.b16 %v3138
    %v4555 = vunpack.c.l.b16 %v3139
    %v4556 = vunpack.c.h.b16 %v3139
    %v4557 = vunpack.c.l.b16 %v3140
    %v4558 = vunpack.c.h.b16 %v3140
    %v4559 = vunpack.c.l.b16 %v3141
    %v4560 = vunpack.c.h.b16 %v3141
    %v4561 = vunpack.c.l.b16 %v3142
    %v4562 = vunpack.c.h.b16 %v3142
    %v4563 = vunpack.c.l.b16 %v3143
    %v4564 = vunpack.c.h.b16 %v3143
    %v4565 = vunpack.c.l.b16 %v3144
    %v4566 = vunpack.c.h.b16 %v3144
    %v4567 = vunpack.c.l.b16 %v3145
    %v4568 = vunpack.c.h.b16 %v3145
    %v4569 = vunpack.c.l.b16 %v3146
    %v4570 = vunpack.c.h.b16 %v3146
    %v4571 = vunpack.c.l.b16 %v3147
    %v4572 = vunpack.c.h.b16 %v3147
    %v4573 = vunpack.c.l.b16 %v3148
    %v4574 = vunpack.c.h.b16 %v3148
    %v4575 = vunpack.c.l.b16 %v3149
    %v4576 = vunpack.c.h.b16 %v3149
    %v4577 = vunpack.c.l.b16 %v3150
    %v4578 = vunpack.c.h.b16 %v3150
    %v4579 = vunpack.c.l.b16 %v3151
    %v4580 = vunpack.c.h.b16 %v3151
    %v4581 = vunpack.c.l.b16 %v3152
    %v4582 = vunpack.c.h.b16 %v3152
    %v4583 = vunpack.c.l.b16 %v3153
    %v4584 = vunpack.c.h.b16 %v3153
    %v4585 = vunpack.c.l.b16 %v3154
    %v4586 = vunpack.c.h.b16 %v3154
    %v4587 = vunpack.c.l.b16 %v3155
    %v4588 = vunpack.c.h.b16 %v3155
    %v4589 = vunpack.c.l.b16 %v3156
    %v4590 = vunpack.c.h.b16 %v3156
    %v4591 = vunpack.c.l.b16 %v3157
    %v4592 = vunpack.c.h.b16 %v3157
    %v4593 = vunpack.c.l.b16 %v3158
    %v4594 = vunpack.c.h.b16 %v3158
    %v4595 = vunpack.c.l.b16 %v3159
    %v4596 = vunpack.c.h.b16 %v3159
    %v4597 = vunpack.c.l.b16 %v3160
    %v4598 = vunpack.c.h.b16 %v3160
    %v4599 = vunpack.c.l.b16 %v3161
    %v4600 = vunpack.c.h.b16 %v3161
    %v4601 = vunpack.c.l.b16 %v3162
    %v4602 = vunpack.c.h.b16 %v3162
    %v4603 = vunpack.c.l.b16 %v3163
    %v4604 = vunpack.c.h.b16 %v3163
    %v4605 = vunpack.c.l.b16 %v3164
    %v4606 = vunpack.c.h.b16 %v3164
    %v4607 = vunpack.c.l.b16 %v3165
    %v4608 = vunpack.c.h.b16 %v3165
    %v4609 = vunpack.c.l.b16 %v3166
    %v4610 = vunpack.c.h.b16 %v3166
    %v4611 = vunpack.c.l.b16 %v3167
    %v4612 = vunpack.c.h.b16 %v3167
    %v4613 = vunpack.c.l.b16 %v3168
    %v4614 = vunpack.c.h.b16 %v3168
    %v4615 = vunpack.c.l.b16 %v3169
    %v4616 = vunpack.c.h.b16 %v3169
    %v4617 = vunpack.c.l.b16 %v3170
    %v4618 = vunpack.c.h.b16 %v3170
    %v4619 = vunpack.c.l.b16 %v3171
    %v4620 = vunpack.c.h.b16 %v3171
    %v4621 = vunpack.c.l.b16 %v3172
    %v4622 = vunpack.c.h.b16 %v3172
    %v4623 = vunpack.c.l.b16 %v3173
    %v4624 = vunpack.c.h.b16 %v3173
    %v4625 = vunpack.c.l.b16 %v3174
    %v4626 = vunpack.c.h.b16 %v3174
    %v4627 = vunpack.c.l.b16 %v3175
    %v4628 = vunpack.c.h.b16 %v3175
    %v4629 = vunpack.c.l.b16 %v3176
    %v4630 = vunpack.c.h.b16 %v3176
    %v4631 = vunpack.c.l.b16 %v3177
    %v4632 = vunpack.c.h.b16 %v3177
    %v4633 = vunpack.c.l.b16 %v3178
    %v4634 = vunpack.c.h.b16 %v3178
    %v4635 = vunpack.c.l.b16 %v3179
    %v4636 = vunpack.c.h.b16 %v3179
    %v4637 = vunpack.c.l.b16 %v3180
    %v4638 = vunpack.c.h.b16 %v3180
    %v4639 = vunpack.c.l.b16 %v3181
    %v4640 = vunpack.c.h.b16 %v3181
    %v4641 = vunpack.c.l.b16 %v3182
    %v4642 = vunpack.c.h.b16 %v3182
    %v4643 = vunpack.c.l.b16 %v3183
    %v4644 = vunpack.c.h.b16 %v3183
    %v4645 = vunpack.c.l.b16 %v3184
    %v4646 = vunpack.c.h.b16 %v3184
    %v4647 = vunpack.c.l.b16 %v3185
    %v4648 = vunpack.c.h.b16 %v3185
    %v4649 = vunpack.c.l.b16 %v3186
    %v4650 = vunpack.c.h.b16 %v3186
    %v4651 = vunpack.c.l.b16 %v3187
    %v4652 = vunpack.c.h.b16 %v3187
    %v4653 = vunpack.c.l.b16 %v3188
    %v4654 = vunpack.c.h.b16 %v3188
    %v4655 = vunpack.c.l.b16 %v3189
    %v4656 = vunpack.c.h.b16 %v3189
    %v4657 = vunpack.c.l.b16 %v3190
    %v4658 = vunpack.c.h.b16 %v3190
    %v4659 = vunpack.c.l.b16 %v3191
    %v4660 = vunpack.c.h.b16 %v3191
    %v4661 = vunpack.c.l.b16 %v3192
    %v4662 = vunpack.c.h.b16 %v3192
    %v4663 = vunpack.c.l.b16 %v3193
    %v4664 = vunpack.c.h.b16 %v3193
    %v4665 = vunpack.c.l.b16 %v3194
    %v4666 = vunpack.c.h.b16 %v3194
    %v4667 = vunpack.c.l.b16 %v3195
    %v4668 = vunpack.c.h.b16 %v3195
    %v4669 = vunpack.c.l.b16 %v3196
    %v4670 = vunpack.c.h.b16 %v3196
    %v4671 = vunpack.c.l.b16 %v3197
    %v4672 = vunpack.c.h.b16 %v3197
    %v4673 = vunpack.c.l.b16 %v3198
    %v4674 = vunpack.c.h.b16 %v3198
    %v4675 = vunpack.c.l.b16 %v3199
    %v4676 = vunpack.c.h.b16 %v3199
    %v4677 = vunpack.c.l.b16 %v3200
    %v4678 = vunpack.c.h.b16 %v3200
    %v4679 = vunpack.c.l.b16 %v3201
    %v4680 = vunpack.c.h.b16 %v3201
    %v4681 = vunpack.c.l.b16 %v3202
    %v4682 = vunpack.c.h.b16 %v3202
    %v4683 = vunpack.c.l.b16 %v3203
    %v4684 = vunpack.c.h.b16 %v3203
    %v4685 = vunpack.c.l.b16 %v3204
    %v4686 = vunpack.c.h.b16 %v3204
    %v4687 = vunpack.c.l.b16 %v3205
    %v4688 = vunpack.c.h.b16 %v3205
    %v4689 = vunpack.c.l.b16 %v3206
    %v4690 = vunpack.c.h.b16 %v3206
    %v4691 = vunpack.c.l.b16 %v3207
    %v4692 = vunpack.c.h.b16 %v3207
    %v4693 = vunpack.c.l.b16 %v3208
    %v4694 = vunpack.c.h.b16 %v3208
    %v4695 = vunpack.c.l.b16 %v3209
    %v4696 = vunpack.c.h.b16 %v3209
    %v4697 = vunpack.c.l.b16 %v3210
    %v4698 = vunpack.c.h.b16 %v3210
    %v4699 = vunpack.c.l.b16 %v3211
    %v4700 = vunpack.c.h.b16 %v3211
    %v4701 = vunpack.c.l.b16 %v3212
    %v4702 = vunpack.c.h.b16 %v3212
    %v4703 = vunpack.c.l.b16 %v3213
    %v4704 = vunpack.c.h.b16 %v3213
    %v4705 = vunpack.c.l.b16 %v3214
    %v4706 = vunpack.c.h.b16 %v3214
    %v4707 = vunpack.c.l.b16 %v3215
    %v4708 = vunpack.c.h.b16 %v3215
    %v4709 = vunpack.c.l.b16 %v3216
    %v4710 = vunpack.c.h.b16 %v3216
    %v4711 = vunpack.c.l.b16 %v3217
    %v4712 = vunpack.c.h.b16 %v3217
    %v4713 = vunpack.c.l.b16 %v3218
    %v4714 = vunpack.c.h.b16 %v3218
    %v4715 = vunpack.c.l.b16 %v3219
    %v4716 = vunpack.c.h.b16 %v3219
    %v4717 = vunpack.c.l.b16 %v3220
    %v4718 = vunpack.c.h.b16 %v3220
    %v4719 = vunpack.c.l.b16 %v3221
    %v4720 = vunpack.c.h.b16 %v3221
    %v4721 = vunpack.c.l.b16 %v3222
    %v4722 = vunpack.c.h.b16 %v3222
    %v4723 = vunpack.c.l.b16 %v3223
    %v4724 = vunpack.c.h.b16 %v3223
    %v4725 = vunpack.c.l.b16 %v3224
    %v4726 = vunpack.c.h.b16 %v3224
    %v4727 = vunpack.c.l.b16 %v3225
    %v4728 = vunpack.c.h.b16 %v3225
    %v4729 = vunpack.c.l.b16 %v3226
    %v4730 = vunpack.c.h.b16 %v3226
    %v4731 = vunpack.c.l.b16 %v3227
    %v4732 = vunpack.c.h.b16 %v3227
    %v4733 = vunpack.c.l.b16 %v3228
    %v4734 = vunpack.c.h.b16 %v3228
    %v4735 = vunpack.c.l.b16 %v3229
    %v4736 = vunpack.c.h.b16 %v3229
    %v4737 = vunpack.c.l.b16 %v3230
    %v4738 = vunpack.c.h.b16 %v3230
    %v4739 = vunpack.c.l.b16 %v3231
    %v4740 = vunpack.c.h.b16 %v3231
    %v4741 = vunpack.c.l.b16 %v3232
    %v4742 = vunpack.c.h.b16 %v3232
    %v4743 = vunpack.c.l.b16 %v3233
    %v4744 = vunpack.c.h.b16 %v3233
    %v4745 = vunpack.c.l.b16 %v3234
    %v4746 = vunpack.c.h.b16 %v3234
    %v4747 = vunpack.c.l.b16 %v3235
    %v4748 = vunpack.c.h.b16 %v3235
    %v4749 = vunpack.c.l.b16 %v3236
    %v4750 = vunpack.c.h.b16 %v3236
    %v4751 = vunpack.c.l.b16 %v3237
    %v4752 = vunpack.c.h.b16 %v3237
    %v4753 = vunpack.c.l.b16 %v3238
    %v4754 = vunpack.c.h.b16 %v3238
    %v4755 = vunpack.c.l.b16 %v3239
    %v4756 = vunpack.c.h.b16 %v3239
    %v4757 = vunpack.c.l.b16 %v3240
    %v4758 = vunpack.c.h.b16 %v3240
    %v4759 = vunpack.c.l.b16 %v3241
    %v4760 = vunpack.c.h.b16 %v3241
    %v4761 = vunpack.c.l.b16 %v3242
    %v4762 = vunpack.c.h.b16 %v3242
    %v4763 = vunpack.c.l.b16 %v3243
    %v4764 = vunpack.c.h.b16 %v3243
    %v4765 = vunpack.c.l.b16 %v3244
    %v4766 = vunpack.c.h.b16 %v3244
    %v4767 = vunpack.c.l.b16 %v3245
    %v4768 = vunpack.c.h.b16 %v3245
    %v4769 = vunpack.c.l.b16 %v3246
    %v4770 = vunpack.c.h.b16 %v3246
    %v4771 = vunpack.c.l.b16 %v3247
    %v4772 = vunpack.c.h.b16 %v3247
    %v4773 = vunpack.c.l.b16 %v3248
    %v4774 = vunpack.c.h.b16 %v3248
    %v4775 = vunpack.c.l.b16 %v3249
    %v4776 = vunpack.c.h.b16 %v3249
    %v4777 = vunpack.c.l.b16 %v3250
    %v4778 = vunpack.c.h.b16 %v3250
    %v4779 = vunpack.c.l.b16 %v3251
    %v4780 = vunpack.c.h.b16 %v3251
    %v4781 = vunpack.c.l.b16 %v3252
    %v4782 = vunpack.c.h.b16 %v3252
    %v4783 = vunpack.c.l.b16 %v3253
    %v4784 = vunpack.c.h.b16 %v3253
    %v4785 = vunpack.c.l.b16 %v3254
    %v4786 = vunpack.c.h.b16 %v3254
    %v4787 = vunpack.c.l.b16 %v3255
    %v4788 = vunpack.c.h.b16 %v3255
    %v4789 = vunpack.c.l.b16 %v3256
    %v4790 = vunpack.c.h.b16 %v3256
    %v4791 = vunpack.c.l.b16 %v3257
    %v4792 = vunpack.c.h.b16 %v3257
    %v4793 = vunpack.c.l.b16 %v3258
    %v4794 = vunpack.c.h.b16 %v3258
    %v4795 = vunpack.c.l.b16 %v3259
    %v4796 = vunpack.c.h.b16 %v3259
    %v4797 = vunpack.c.l.b16 %v3260
    %v4798 = vunpack.c.h.b16 %v3260
    %v4799 = vunpack.c.l.b16 %v3261
    %v4800 = vunpack.c.h.b16 %v3261
    %v4801 = vunpack.c.l.b16 %v3262
    %v4802 = vunpack.c.h.b16 %v3262
    %v4803 = vunpack.c.l.b16 %v3263
    %v4804 = vunpack.c.h.b16 %v3263
    %v4805 = vunpack.c.l.b16 %v3264
    %v4806 = vunpack.c.h.b16 %v3264
    %v4807 = vunpack.c.l.b16 %v3265
    %v4808 = vunpack.c.h.b16 %v3265
    %v4809 = vunpack.c.l.b16 %v3266
    %v4810 = vunpack.c.h.b16 %v3266
    %v4811 = vunpack.c.l.b16 %v3267
    %v4812 = vunpack.c.h.b16 %v3267
    %v4813 = vunpack.c.l.b16 %v3268
    %v4814 = vunpack.c.h.b16 %v3268
    %v4815 = vunpack.c.l.b16 %v3269
    %v4816 = vunpack.c.h.b16 %v3269
    %v4817 = vunpack.c.l.b16 %v3270
    %v4818 = vunpack.c.h.b16 %v3270
    %v4819 = vunpack.c.l.b16 %v3271
    %v4820 = vunpack.c.h.b16 %v3271
    %v4821 = vunpack.c.l.b16 %v3272
    %v4822 = vunpack.c.h.b16 %v3272
    %v4823 = vunpack.c.l.b16 %v3273
    %v4824 = vunpack.c.h.b16 %v3273
    %v4825 = vunpack.c.l.b16 %v3274
    %v4826 = vunpack.c.h.b16 %v3274
    %v4827 = vunpack.c.l.b16 %v3275
    %v4828 = vunpack.c.h.b16 %v3275
    %v4829 = vunpack.c.l.b16 %v3276
    %v4830 = vunpack.c.h.b16 %v3276
    %v4831 = vunpack.c.l.b16 %v3277
    %v4832 = vunpack.c.h.b16 %v3277
    %v4833 = vunpack.c.l.b16 %v3278
    %v4834 = vunpack.c.h.b16 %v3278
    %v4835 = vunpack.c.l.b16 %v3279
    %v4836 = vunpack.c.h.b16 %v3279
    %v4837 = vunpack.c.l.b16 %v3280
    %v4838 = vunpack.c.h.b16 %v3280
    %v4839 = vunpack.c.l.b16 %v3281
    %v4840 = vunpack.c.h.b16 %v3281
    %v4841 = vunpack.c.l.b16 %v3282
    %v4842 = vunpack.c.h.b16 %v3282
    %v4843 = vunpack.c.l.b16 %v3283
    %v4844 = vunpack.c.h.b16 %v3283
    %v4845 = vunpack.c.l.b16 %v3284
    %v4846 = vunpack.c.h.b16 %v3284
    %v4847 = vunpack.c.l.b16 %v3285
    %v4848 = vunpack.c.h.b16 %v3285
    %v4849 = vunpack.c.l.b16 %v3286
    %v4850 = vunpack.c.h.b16 %v3286
    %v4851 = vunpack.c.l.b16 %v3287
    %v4852 = vunpack.c.h.b16 %v3287
    %v4853 = vunpack.c.l.b16 %v3288
    %v4854 = vunpack.c.h.b16 %v3288
    %v4855 = vunpack.c.l.b16 %v3289
    %v4856 = vunpack.c.h.b16 %v3289
    %v4857 = vunpack.c.l.b16 %v3290
    %v4858 = vunpack.c.h.b16 %v3290
    %v4859 = vunpack.c.l.b16 %v3291
    %v4860 = vunpack.c.h.b16 %v3291
    %v4861 = vunpack.c.l.b16 %v3292
    %v4862 = vunpack.c.h.b16 %v3292
    %v4863 = vunpack.c.l.b16 %v3293
    %v4864 = vunpack.c.h.b16 %v3293
    %v4865 = vunpack.c.l.b16 %v3294
    %v4866 = vunpack.c.h.b16 %v3294
    %v4867 = vunpack.c.l.b16 %v3295
    %v4868 = vunpack.c.h.b16 %v3295
    %v4869 = vunpack.c.l.b16 %v3296
    %v4870 = vunpack.c.h.b16 %v3296
    %v4871 = vunpack.c.l.b16 %v3297
    %v4872 = vunpack.c.h.b16 %v3297
    %v4873 = vunpack.c.l.b16 %v3298
    %v4874 = vunpack.c.h.b16 %v3298
    %v4875 = vunpack.c.l.b16 %v3299
    %v4876 = vunpack.c.h.b16 %v3299
    %v4877 = vunpack.c.l.b16 %v3300
    %v4878 = vunpack.c.h.b16 %v3300
    %v4879 = vunpack.c.l.b16 %v3301
    %v4880 = vunpack.c.h.b16 %v3301
    %v4881 = vunpack.c.l.b16 %v3302
    %v4882 = vunpack.c.h.b16 %v3302
    %v4883 = vunpack.c.l.b16 %v3303
    %v4884 = vunpack.c.h.b16 %v3303
    %v4885 = vunpack.c.l.b16 %v3304
    %v4886 = vunpack.c.h.b16 %v3304
    %v4887 = vunpack.c.l.b16 %v3305
    %v4888 = vunpack.c.h.b16 %v3305
    %v4889 = vunpack.c.l.b16 %v3306
    %v4890 = vunpack.c.h.b16 %v3306
    %v4891 = vunpack.c.l.b16 %v3307
    %v4892 = vunpack.c.h.b16 %v3307
    %v4893 = vunpack.c.l.b16 %v3308
    %v4894 = vunpack.c.h.b16 %v3308
    %v4895 = vunpack.c.l.b16 %v3309
    %v4896 = vunpack.c.h.b16 %v3309
    %v4897 = vunpack.c.l.b16 %v3310
    %v4898 = vunpack.c.h.b16 %v3310
    %v4899 = vunpack.c.l.b16 %v3311
    %v4900 = vunpack.c.h.b16 %v3311
    %v4901 = vunpack.c.l.b16 %v3312
    %v4902 = vunpack.c.h.b16 %v3312
    %v4903 = vunpack.c.l.b16 %v3313
    %v4904 = vunpack.c.h.b16 %v3313
    %v4905 = vunpack.c.l.b16 %v3314
    %v4906 = vunpack.c.h.b16 %v3314
    %v4907 = vunpack.c.l.b16 %v3315
    %v4908 = vunpack.c.h.b16 %v3315
    %v4909 = vunpack.c.l.b16 %v3316
    %v4910 = vunpack.c.h.b16 %v3316
    %v4911 = vunpack.c.l.b16 %v3317
    %v4912 = vunpack.c.h.b16 %v3317
    %v4913 = vunpack.c.l.b16 %v3318
    %v4914 = vunpack.c.h.b16 %v3318
    %v4915 = vunpack.c.l.b16 %v3319
    %v4916 = vunpack.c.h.b16 %v3319
    %v4917 = vunpack.c.l.b16 %v3320
    %v4918 = vunpack.c.h.b16 %v3320
    %v4919 = vunpack.c.l.b16 %v3321
    %v4920 = vunpack.c.h.b16 %v3321
    %v4921 = vunpack.c.l.b16 %v3322
    %v4922 = vunpack.c.h.b16 %v3322
    %v4923 = vunpack.c.l.b16 %v3323
    %v4924 = vunpack.c.h.b16 %v3323
    %v4925 = vunpack.c.l.b16 %v3324
    %v4926 = vunpack.c.h.b16 %v3324
    %v4927 = vunpack.c.l.b16 %v3325
    %v4928 = vunpack.c.h.b16 %v3325
    %v4929 = vunpack.c.l.b16 %v3326
    %v4930 = vunpack.c.h.b16 %v3326
    %v4931 = vunpack.c.l.b16 %v3327
    %v4932 = vunpack.c.h.b16 %v3327
    %v4933 = vunpack.c.l.b16 %v3328
    %v4934 = vunpack.c.h.b16 %v3328
    %v4935 = vunpack.c.l.b16 %v3329
    %v4936 = vunpack.c.h.b16 %v3329
    %v4937 = vunpack.c.l.b16 %v3330
    %v4938 = vunpack.c.h.b16 %v3330
    %v4939 = vpack.c.b16 %v3883, %v3867
    %v4940 = vpack.c.b16 %v3884, %v3868
    %v4941 = vpack.c.b16 %v3885, %v3869
    %v4942 = vpack.c.b16 %v3886, %v3870
    %v4943 = vpack.c.b16 %v3887, %v3871
    %v4944 = vpack.c.b16 %v3888, %v3872
    %v4945 = vpack.c.b16 %v3889, %v3873
    %v4946 = vpack.c.b16 %v3890, %v3874
    %v4947 = vpack.c.b16 %v3891, %v3875
    %v4948 = vpack.c.b16 %v3892, %v3876
    %v4949 = vpack.c.b16 %v3893, %v3877
    %v4950 = vpack.c.b16 %v3894, %v3878
    %v4951 = vpack.c.b16 %v3895, %v3879
    %v4952 = vpack.c.b16 %v3896, %v3880
    %v4953 = vpack.c.b16 %v3897, %v3881
    %v4954 = vpack.c.b16 %v3898, %v3882
    %v4955 = vpack.c.b16 %v3915, %v3899
    %v4956 = vpack.c.b16 %v3916, %v3900
    %v4957 = vpack.c.b16 %v3917, %v3901
    %v4958 = vpack.c.b16 %v3918, %v3902
    %v4959 = vpack.c.b16 %v3919, %v3903
    %v4960 = vpack.c.b16 %v3920, %v3904
    %v4961 = vpack.c.b16 %v3921, %v3905
    %v4962 = vpack.c.b16 %v3922, %v3906
    %v4963 = vpack.c.b16 %v3923, %v3907
    %v4964 = vpack.c.b16 %v3924, %v3908
    %v4965 = vpack.c.b16 %v3925, %v3909
    %v4966 = vpack.c.b16 %v3926, %v3910
    %v4967 = vpack.c.b16 %v3927, %v3911
    %v4968 = vpack.c.b16 %v3928, %v3912
    %v4969 = vpack.c.b16 %v3929, %v3913
    %v4970 = vpack.c.b16 %v3930, %v3914
    %v4971 = vpack.c.b16 %v3947, %v3931
    %v4972 = vpack.c.b16 %v3948, %v3932
    %v4973 = vpack.c.b16 %v3949, %v3933
    %v4974 = vpack.c.b16 %v3950, %v3934
    %v4975 = vpack.c.b16 %v3951, %v3935
    %v4976 = vpack.c.b16 %v3952, %v3936
    %v4977 = vpack.c.b16 %v3953, %v3937
    %v4978 = vpack.c.b16 %v3954, %v3938
    %v4979 = vpack.c.b16 %v3955, %v3939
    %v4980 = vpack.c.b16 %v3956, %v3940
    %v4981 = vpack.c.b16 %v3957, %v3941
    %v4982 = vpack.c.b16 %v3958, %v3942
    %v4983 = vpack.c.b16 %v3959, %v3943
    %v4984 = vpack.c.b16 %v3960, %v3944
    %v4985 = vpack.c.b16 %v3961, %v3945
    %v4986 = vpack.c.b16 %v3962, %v3946
    %v4987 = vpack.c.b16 %v3979, %v3963
    %v4988 = vpack.c.b16 %v3980, %v3964
    %v4989 = vpack.c.b16 %v3981, %v3965
    %v4990 = vpack.c.b16 %v3982, %v3966
    %v4991 = vpack.c.b16 %v3983, %v3967
    %v4992 = vpack.c.b16 %v3984, %v3968
    %v4993 = vpack.c.b16 %v3985, %v3969
    %v4994 = vpack.c.b16 %v3986, %v3970
    %v4995 = vpack.c.b16 %v3987, %v3971
    %v4996 = vpack.c.b16 %v3988, %v3972
    %v4997 = vpack.c.b16 %v3989, %v3973
    %v4998 = vpack.c.b16 %v3990, %v3974
    %v4999 = vpack.c.b16 %v3991, %v3975
    %v5000 = vpack.c.b16 %v3992, %v3976
    %v5001 = vpack.c.b16 %v3993, %v3977
    %v5002 = vpack.c.b16 %v3994, %v3978
    %v5003 = vpack.c.b16 %v4011, %v3995
    %v5004 = vpack.c.b16 %v4012, %v3996
    %v5005 = vpack.c.b16 %v4013, %v3997
    %v5006 = vpack.c.b16 %v4014, %v3998
    %v5007 = vpack.c.b16 %v4015, %v3999
    %v5008 = vpack.c.b16 %v4016, %v4000
    %v5009 = vpack.c.b16 %v4017, %v4001
    %v5010 = vpack.c.b16 %v4018, %v4002
    %v5011 = vpack.c.b16 %v4019, %v4003
    %v5012 = vpack.c.b16 %v4020, %v4004
    %v5013 = vpack.c.b16 %v4021, %v4005
    %v5014 = vpack.c.b16 %v4022, %v4006
    %v5015 = vpack.c.b16 %v4023, %v4007
    %v5016 = vpack.c.b16 %v4024, %v4008
    %v5017 = vpack.c.b16 %v4025, %v4009
    %v5018 = vpack.c.b16 %v4026, %v4010
    %v5019 = vpack.c.b16 %v4043, %v4027
    %v5020 = vpack.c.b16 %v4044, %v4028
    %v5021 = vpack.c.b16 %v4045, %v4029
    %v5022 = vpack.c.b16 %v4046, %v4030
    %v5023 = vpack.c.b16 %v4047, %v4031
    %v5024 = vpack.c.b16 %v4048, %v4032
    %v5025 = vpack.c.b16 %v4049, %v4033
    %v5026 = vpack.c.b16 %v4050, %v4034
    %v5027 = vpack.c.b16 %v4051, %v4035
    %v5028 = vpack.c.b16 %v4052, %v4036
    %v5029 = vpack.c.b16 %v4053, %v4037
    %v5030 = vpack.c.b16 %v4054, %v4038
    %v5031 = vpack.c.b16 %v4055, %v4039
    %v5032 = vpack.c.b16 %v4056, %v4040
    %v5033 = vpack.c.b16 %v4057, %v4041
    %v5034 = vpack.c.b16 %v4058, %v4042
    %v5035 = vpack.c.b16 %v4075, %v4059
    %v5036 = vpack.c.b16 %v4076, %v4060
    %v5037 = vpack.c.b16 %v4077, %v4061
    %v5038 = vpack.c.b16 %v4078, %v4062
    %v5039 = vpack.c.b16 %v4079, %v4063
    %v5040 = vpack.c.b16 %v4080, %v4064
    %v5041 = vpack.c.b16 %v4081, %v4065
    %v5042 = vpack.c.b16 %v4082, %v4066
    %v5043 = vpack.c.b16 %v4083, %v4067
    %v5044 = vpack.c.b16 %v4084, %v4068
    %v5045 = vpack.c.b16 %v4085, %v4069
    %v5046 = vpack.c.b16 %v4086, %v4070
    %v5047 = vpack.c.b16 %v4087, %v4071
    %v5048 = vpack.c.b16 %v4088, %v4072
    %v5049 = vpack.c.b16 %v4089, %v4073
    %v5050 = vpack.c.b16 %v4090, %v4074
    %v5051 = vpack.c.b16 %v4107, %v4091
    %v5052 = vpack.c.b16 %v4108, %v4092
    %v5053 = vpack.c.b16 %v4109, %v4093
    %v5054 = vpack.c.b16 %v4110, %v4094
    %v5055 = vpack.c.b16 %v4111, %v4095
    %v5056 = vpack.c.b16 %v4112, %v4096
    %v5057 = vpack.c.b16 %v4113, %v4097
    %v5058 = vpack.c.b16 %v4114, %v4098
    %v5059 = vpack.c.b16 %v4115, %v4099
    %v5060 = vpack.c.b16 %v4116, %v4100
    %v5061 = vpack.c.b16 %v4117, %v4101
    %v5062 = vpack.c.b16 %v4118, %v4102
    %v5063 = vpack.c.b16 %v4119, %v4103
    %v5064 = vpack.c.b16 %v4120, %v4104
    %v5065 = vpack.c.b16 %v4121, %v4105
    %v5066 = vpack.c.b16 %v4122, %v4106
    %v5067 = vpack.c.b16 %v4139, %v4123
    %v5068 = vpack.c.b16 %v4140, %v4124
    %v5069 = vpack.c.b16 %v4141, %v4125
    %v5070 = vpack.c.b16 %v4142, %v4126
    %v5071 = vpack.c.b16 %v4143, %v4127
    %v5072 = vpack.c.b16 %v4144, %v4128
    %v5073 = vpack.c.b16 %v4145, %v4129
    %v5074 = vpack.c.b16 %v4146, %v4130
    %v5075 = vpack.c.b16 %v4147, %v4131
    %v5076 = vpack.c.b16 %v4148, %v4132
    %v5077 = vpack.c.b16 %v4149, %v4133
    %v5078 = vpack.c.b16 %v4150, %v4134
    %v5079 = vpack.c.b16 %v4151, %v4135
    %v5080 = vpack.c.b16 %v4152, %v4136
    %v5081 = vpack.c.b16 %v4153, %v4137
    %v5082 = vpack.c.b16 %v4154, %v4138
    %v5083 = vpack.c.b16 %v4171, %v4155
    %v5084 = vpack.c.b16 %v4172, %v4156
    %v5085 = vpack.c.b16 %v4173, %v4157
    %v5086 = vpack.c.b16 %v4174, %v4158
    %v5087 = vpack.c.b16 %v4175, %v4159
    %v5088 = vpack.c.b16 %v4176, %v4160
    %v5089 = vpack.c.b16 %v4177, %v4161
    %v5090 = vpack.c.b16 %v4178, %v4162
    %v5091 = vpack.c.b16 %v4179, %v4163
    %v5092 = vpack.c.b16 %v4180, %v4164
    %v5093 = vpack.c.b16 %v4181, %v4165
    %v5094 = vpack.c.b16 %v4182, %v4166
    %v5095 = vpack.c.b16 %v4183, %v4167
    %v5096 = vpack.c.b16 %v4184, %v4168
    %v5097 = vpack.c.b16 %v4185, %v4169
    %v5098 = vpack.c.b16 %v4186, %v4170
    %v5099 = vpack.c.b16 %v4203, %v4187
    %v5100 = vpack.c.b16 %v4204, %v4188
    %v5101 = vpack.c.b16 %v4205, %v4189
    %v5102 = vpack.c.b16 %v4206, %v4190
    %v5103 = vpack.c.b16 %v4207, %v4191
    %v5104 = vpack.c.b16 %v4208, %v4192
    %v5105 = vpack.c.b16 %v4209, %v4193
    %v5106 = vpack.c.b16 %v4210, %v4194
    %v5107 = vpack.c.b16 %v4211, %v4195
    %v5108 = vpack.c.b16 %v4212, %v4196
    %v5109 = vpack.c.b16 %v4213, %v4197
    %v5110 = vpack.c.b16 %v4214, %v4198
    %v5111 = vpack.c.b16 %v4215, %v4199
    %v5112 = vpack.c.b16 %v4216, %v4200
    %v5113 = vpack.c.b16 %v4217, %v4201
    %v5114 = vpack.c.b16 %v4218, %v4202
    %v5115 = vpack.c.b16 %v4235, %v4219
    %v5116 = vpack.c.b16 %v4236, %v4220
    %v5117 = vpack.c.b16 %v4237, %v4221
    %v5118 = vpack.c.b16 %v4238, %v4222
    %v5119 = vpack.c.b16 %v4239, %v4223
    %v5120 = vpack.c.b16 %v4240, %v4224
    %v5121 = vpack.c.b16 %v4241, %v4225
    %v5122 = vpack.c.b16 %v4242, %v4226
    %v5123 = vpack.c.b16 %v4243, %v4227
    %v5124 = vpack.c.b16 %v4244, %v4228
    %v5125 = vpack.c.b16 %v4245, %v4229
    %v5126 = vpack.c.b16 %v4246, %v4230
    %v5127 = vpack.c.b16 %v4247, %v4231
    %v5128 = vpack.c.b16 %v4248, %v4232
    %v5129 = vpack.c.b16 %v4249, %v4233
    %v5130 = vpack.c.b16 %v4250, %v4234
    %v5131 = vpack.c.b16 %v4267, %v4251
    %v5132 = vpack.c.b16 %v4268, %v4252
    %v5133 = vpack.c.b16 %v4269, %v4253
    %v5134 = vpack.c.b16 %v4270, %v4254
    %v5135 = vpack.c.b16 %v4271, %v4255
    %v5136 = vpack.c.b16 %v4272, %v4256
    %v5137 = vpack.c.b16 %v4273, %v4257
    %v5138 = vpack.c.b16 %v4274, %v4258
    %v5139 = vpack.c.b16 %v4275, %v4259
    %v5140 = vpack.c.b16 %v4276, %v4260
    %v5141 = vpack.c.b16 %v4277, %v4261
    %v5142 = vpack.c.b16 %v4278, %v4262
    %v5143 = vpack.c.b16 %v4279, %v4263
    %v5144 = vpack.c.b16 %v4280, %v4264
    %v5145 = vpack.c.b16 %v4281, %v4265
    %v5146 = vpack.c.b16 %v4282, %v4266
    %v5147 = vpack.c.b16 %v4299, %v4283
    %v5148 = vpack.c.b16 %v4300, %v4284
    %v5149 = vpack.c.b16 %v4301, %v4285
    %v5150 = vpack.c.b16 %v4302, %v4286
    %v5151 = vpack.c.b16 %v4303, %v4287
    %v5152 = vpack.c.b16 %v4304, %v4288
    %v5153 = vpack.c.b16 %v4305, %v4289
    %v5154 = vpack.c.b16 %v4306, %v4290
    %v5155 = vpack.c.b16 %v4307, %v4291
    %v5156 = vpack.c.b16 %v4308, %v4292
    %v5157 = vpack.c.b16 %v4309, %v4293
    %v5158 = vpack.c.b16 %v4310, %v4294
    %v5159 = vpack.c.b16 %v4311, %v4295
    %v5160 = vpack.c.b16 %v4312, %v4296
    %v5161 = vpack.c.b16 %v4313, %v4297
    %v5162 = vpack.c.b16 %v4314, %v4298
    %v5163 = vpack.c.b16 %v4331, %v4315
    %v5164 = vpack.c.b16 %v4332, %v4316
    %v5165 = vpack.c.b16 %v4333, %v4317
    %v5166 = vpack.c.b16 %v4334, %v4318
    %v5167 = vpack.c.b16 %v4335, %v4319
    %v5168 = vpack.c.b16 %v4336, %v4320
    %v5169 = vpack.c.b16 %v4337, %v4321
    %v5170 = vpack.c.b16 %v4338, %v4322
    %v5171 = vpack.c.b16 %v4339, %v4323
    %v5172 = vpack.c.b16 %v4340, %v4324
    %v5173 = vpack.c.b16 %v4341, %v4325
    %v5174 = vpack.c.b16 %v4342, %v4326
    %v5175 = vpack.c.b16 %v4343, %v4327
    %v5176 = vpack.c.b16 %v4344, %v4328
    %v5177 = vpack.c.b16 %v4345, %v4329
    %v5178 = vpack.c.b16 %v4346, %v4330
    %v5179 = vpack.c.b16 %v4363, %v4347
    %v5180 = vpack.c.b16 %v4364, %v4348
    %v5181 = vpack.c.b16 %v4365, %v4349
    %v5182 = vpack.c.b16 %v4366, %v4350
    %v5183 = vpack.c.b16 %v4367, %v4351
    %v5184 = vpack.c.b16 %v4368, %v4352
    %v5185 = vpack.c.b16 %v4369, %v4353
    %v5186 = vpack.c.b16 %v4370, %v4354
    %v5187 = vpack.c.b16 %v4371, %v4355
    %v5188 = vpack.c.b16 %v4372, %v4356
    %v5189 = vpack.c.b16 %v4373, %v4357
    %v5190 = vpack.c.b16 %v4374, %v4358
    %v5191 = vpack.c.b16 %v4375, %v4359
    %v5192 = vpack.c.b16 %v4376, %v4360
    %v5193 = vpack.c.b16 %v4377, %v4361
    %v5194 = vpack.c.b16 %v4378, %v4362
    %v5195 = vpack.c.b16 %v4395, %v4379
    %v5196 = vpack.c.b16 %v4396, %v4380
    %v5197 = vpack.c.b16 %v4397, %v4381
    %v5198 = vpack.c.b16 %v4398, %v4382
    %v5199 = vpack.c.b16 %v4399, %v4383
    %v5200 = vpack.c.b16 %v4400, %v4384
    %v5201 = vpack.c.b16 %v4401, %v4385
    %v5202 = vpack.c.b16 %v4402, %v4386
    %v5203 = vpack.c.b16 %v4403, %v4387
    %v5204 = vpack.c.b16 %v4404, %v4388
    %v5205 = vpack.c.b16 %v4405, %v4389
    %v5206 = vpack.c.b16 %v4406, %v4390
    %v5207 = vpack.c.b16 %v4407, %v4391
    %v5208 = vpack.c.b16 %v4408, %v4392
    %v5209 = vpack.c.b16 %v4409, %v4393
    %v5210 = vpack.c.b16 %v4410, %v4394
    %v5211 = vpack.c.b16 %v4427, %v4411
    %v5212 = vpack.c.b16 %v4428, %v4412
    %v5213 = vpack.c.b16 %v4429, %v4413
    %v5214 = vpack.c.b16 %v4430, %v4414
    %v5215 = vpack.c.b16 %v4431, %v4415
    %v5216 = vpack.c.b16 %v4432, %v4416
    %v5217 = vpack.c.b16 %v4433, %v4417
    %v5218 = vpack.c.b16 %v4434, %v4418
    %v5219 = vpack.c.b16 %v4435, %v4419
    %v5220 = vpack.c.b16 %v4436, %v4420
    %v5221 = vpack.c.b16 %v4437, %v4421
    %v5222 = vpack.c.b16 %v4438, %v4422
    %v5223 = vpack.c.b16 %v4439, %v4423
    %v5224 = vpack.c.b16 %v4440, %v4424
    %v5225 = vpack.c.b16 %v4441, %v4425
    %v5226 = vpack.c.b16 %v4442, %v4426
    %v5227 = vpack.c.b16 %v4459, %v4443
    %v5228 = vpack.c.b16 %v4460, %v4444
    %v5229 = vpack.c.b16 %v4461, %v4445
    %v5230 = vpack.c.b16 %v4462, %v4446
    %v5231 = vpack.c.b16 %v4463, %v4447
    %v5232 = vpack.c.b16 %v4464, %v4448
    %v5233 = vpack.c.b16 %v4465, %v4449
    %v5234 = vpack.c.b16 %v4466, %v4450
    %v5235 = vpack.c.b16 %v4467, %v4451
    %v5236 = vpack.c.b16 %v4468, %v4452
    %v5237 = vpack.c.b16 %v4469, %v4453
    %v5238 = vpack.c.b16 %v4470, %v4454
    %v5239 = vpack.c.b16 %v4471, %v4455
    %v5240 = vpack.c.b16 %v4472, %v4456
    %v5241 = vpack.c.b16 %v4473, %v4457
    %v5242 = vpack.c.b16 %v4474, %v4458
    %v5243 = vpack.c.b16 %v4491, %v4475
    %v5244 = vpack.c.b16 %v4492, %v4476
    %v5245 = vpack.c.b16 %v4493, %v4477
    %v5246 = vpack.c.b16 %v4494, %v4478
    %v5247 = vpack.c.b16 %v4495, %v4479
    %v5248 = vpack.c.b16 %v4496, %v4480
    %v5249 = vpack.c.b16 %v4497, %v4481
    %v5250 = vpack.c.b16 %v4498, %v4482
    %v5251 = vpack.c.b16 %v4499, %v4483
    %v5252 = vpack.c.b16 %v4500, %v4484
    %v5253 = vpack.c.b16 %v4501, %v4485
    %v5254 = vpack.c.b16 %v4502, %v4486
    %v5255 = vpack.c.b16 %v4503, %v4487
    %v5256 = vpack.c.b16 %v4504, %v4488
    %v5257 = vpack.c.b16 %v4505, %v4489
    %v5258 = vpack.c.b16 %v4506, %v4490
    %v5259 = vpack.c.b16 %v4523, %v4507
    %v5260 = vpack.c.b16 %v4524, %v4508
    %v5261 = vpack.c.b16 %v4525, %v4509
    %v5262 = vpack.c.b16 %v4526, %v4510
    %v5263 = vpack.c.b16 %v4527, %v4511
    %v5264 = vpack.c.b16 %v4528, %v4512
    %v5265 = vpack.c.b16 %v4529, %v4513
    %v5266 = vpack.c.b16 %v4530, %v4514
    %v5267 = vpack.c.b16 %v4531, %v4515
    %v5268 = vpack.c.b16 %v4532, %v4516
    %v5269 = vpack.c.b16 %v4533, %v4517
    %v5270 = vpack.c.b16 %v4534, %v4518
    %v5271 = vpack.c.b16 %v4535, %v4519
    %v5272 = vpack.c.b16 %v4536, %v4520
    %v5273 = vpack.c.b16 %v4537, %v4521
    %v5274 = vpack.c.b16 %v4538, %v4522
    %v5275 = vpack.c.b16 %v4555, %v4539
    %v5276 = vpack.c.b16 %v4556, %v4540
    %v5277 = vpack.c.b16 %v4557, %v4541
    %v5278 = vpack.c.b16 %v4558, %v4542
    %v5279 = vpack.c.b16 %v4559, %v4543
    %v5280 = vpack.c.b16 %v4560, %v4544
    %v5281 = vpack.c.b16 %v4561, %v4545
    %v5282 = vpack.c.b16 %v4562, %v4546
    %v5283 = vpack.c.b16 %v4563, %v4547
    %v5284 = vpack.c.b16 %v4564, %v4548
    %v5285 = vpack.c.b16 %v4565, %v4549
    %v5286 = vpack.c.b16 %v4566, %v4550
    %v5287 = vpack.c.b16 %v4567, %v4551
    %v5288 = vpack.c.b16 %v4568, %v4552
    %v5289 = vpack.c.b16 %v4569, %v4553
    %v5290 = vpack.c.b16 %v4570, %v4554
    %v5291 = vpack.c.b16 %v4587, %v4571
    %v5292 = vpack.c.b16 %v4588, %v4572
    %v5293 = vpack.c.b16 %v4589, %v4573
    %v5294 = vpack.c.b16 %v4590, %v4574
    %v5295 = vpack.c.b16 %v4591, %v4575
    %v5296 = vpack.c.b16 %v4592, %v4576
    %v5297 = vpack.c.b16 %v4593, %v4577
    %v5298 = vpack.c.b16 %v4594, %v4578
    %v5299 = vpack.c.b16 %v4595, %v4579
    %v5300 = vpack.c.b16 %v4596, %v4580
    %v5301 = vpack.c.b16 %v4597, %v4581
    %v5302 = vpack.c.b16 %v4598, %v4582
    %v5303 = vpack.c.b16 %v4599, %v4583
    %v5304 = vpack.c.b16 %v4600, %v4584
    %v5305 = vpack.c.b16 %v4601, %v4585
    %v5306 = vpack.c.b16 %v4602, %v4586
    %v5307 = vpack.c.b16 %v4619, %v4603
    %v5308 = vpack.c.b16 %v4620, %v4604
    %v5309 = vpack.c.b16 %v4621, %v4605
    %v5310 = vpack.c.b16 %v4622, %v4606
    %v5311 = vpack.c.b16 %v4623, %v4607
    %v5312 = vpack.c.b16 %v4624, %v4608
    %v5313 = vpack.c.b16 %v4625, %v4609
    %v5314 = vpack.c.b16 %v4626, %v4610
    %v5315 = vpack.c.b16 %v4627, %v4611
    %v5316 = vpack.c.b16 %v4628, %v4612
    %v5317 = vpack.c.b16 %v4629, %v4613
    %v5318 = vpack.c.b16 %v4630, %v4614
    %v5319 = vpack.c.b16 %v4631, %v4615
    %v5320 = vpack.c.b16 %v4632, %v4616
    %v5321 = vpack.c.b16 %v4633, %v4617
    %v5322 = vpack.c.b16 %v4634, %v4618
    %v5323 = vpack.c.b16 %v4651, %v4635
    %v5324 = vpack.c.b16 %v4652, %v4636
    %v5325 = vpack.c.b16 %v4653, %v4637
    %v5326 = vpack.c.b16 %v4654, %v4638
    %v5327 = vpack.c.b16 %v4655, %v4639
    %v5328 = vpack.c.b16 %v4656, %v4640
    %v5329 = vpack.c.b16 %v4657, %v4641
    %v5330 = vpack.c.b16 %v4658, %v4642
    %v5331 = vpack.c.b16 %v4659, %v4643
    %v5332 = vpack.c.b16 %v4660, %v4644
    %v5333 = vpack.c.b16 %v4661, %v4645
    %v5334 = vpack.c.b16 %v4662, %v4646
    %v5335 = vpack.c.b16 %v4663, %v4647
    %v5336 = vpack.c.b16 %v4664, %v4648
    %v5337 = vpack.c.b16 %v4665, %v4649
    %v5338 = vpack.c.b16 %v4666, %v4650
    %v5339 = vpack.c.b16 %v4683, %v4667
    %v5340 = vpack.c.b16 %v4684, %v4668
    %v5341 = vpack.c.b16 %v4685, %v4669
    %v5342 = vpack.c.b16 %v4686, %v4670
    %v5343 = vpack.c.b16 %v4687, %v4671
    %v5344 = vpack.c.b16 %v4688, %v4672
    %v5345 = vpack.c.b16 %v4689, %v4673
    %v5346 = vpack.c.b16 %v4690, %v4674
    %v5347 = vpack.c.b16 %v4691, %v4675
    %v5348 = vpack.c.b16 %v4692, %v4676
    %v5349 = vpack.c.b16 %v4693, %v4677
    %v5350 = vpack.c.b16 %v4694, %v4678
    %v5351 = vpack.c.b16 %v4695, %v4679
    %v5352 = vpack.c.b16 %v4696, %v4680
    %v5353 = vpack.c.b16 %v4697, %v4681
    %v5354 = vpack.c.b16 %v4698, %v4682
    %v5355 = vpack.c.b16 %v4715, %v4699
    %v5356 = vpack.c.b16 %v4716, %v4700
    %v5357 = vpack.c.b16 %v4717, %v4701
    %v5358 = vpack.c.b16 %v4718, %v4702
    %v5359 = vpack.c.b16 %v4719, %v4703
    %v5360 = vpack.c.b16 %v4720, %v4704
    %v5361 = vpack.c.b16 %v4721, %v4705
    %v5362 = vpack.c.b16 %v4722, %v4706
    %v5363 = vpack.c.b16 %v4723, %v4707
    %v5364 = vpack.c.b16 %v4724, %v4708
    %v5365 = vpack.c.b16 %v4725, %v4709
    %v5366 = vpack.c.b16 %v4726, %v4710
    %v5367 = vpack.c.b16 %v4727, %v4711
    %v5368 = vpack.c.b16 %v4728, %v4712
    %v5369 = vpack.c.b16 %v4729, %v4713
    %v5370 = vpack.c.b16 %v4730, %v4714
    %v5371 = vpack.c.b16 %v4747, %v4731
    %v5372 = vpack.c.b16 %v4748, %v4732
    %v5373 = vpack.c.b16 %v4749, %v4733
    %v5374 = vpack.c.b16 %v4750, %v4734
    %v5375 = vpack.c.b16 %v4751, %v4735
    %v5376 = vpack.c.b16 %v4752, %v4736
    %v5377 = vpack.c.b16 %v4753, %v4737
    %v5378 = vpack.c.b16 %v4754, %v4738
    %v5379 = vpack.c.b16 %v4755, %v4739
    %v5380 = vpack.c.b16 %v4756, %v4740
    %v5381 = vpack.c.b16 %v4757, %v4741
    %v5382 = vpack.c.b16 %v4758, %v4742
    %v5383 = vpack.c.b16 %v4759, %v4743
    %v5384 = vpack.c.b16 %v4760, %v4744
    %v5385 = vpack.c.b16 %v4761, %v4745
    %v5386 = vpack.c.b16 %v4762, %v4746
    %v5387 = vpack.c.b16 %v4779, %v4763
    %v5388 = vpack.c.b16 %v4780, %v4764
    %v5389 = vpack.c.b16 %v4781, %v4765
    %v5390 = vpack.c.b16 %v4782, %v4766
    %v5391 = vpack.c.b16 %v4783, %v4767
    %v5392 = vpack.c.b16 %v4784, %v4768
    %v5393 = vpack.c.b16 %v4785, %v4769
    %v5394 = vpack.c.b16 %v4786, %v4770
    %v5395 = vpack.c.b16 %v4787, %v4771
    %v5396 = vpack.c.b16 %v4788, %v4772
    %v5397 = vpack.c.b16 %v4789, %v4773
    %v5398 = vpack.c.b16 %v4790, %v4774
    %v5399 = vpack.c.b16 %v4791, %v4775
    %v5400 = vpack.c.b16 %v4792, %v4776
    %v5401 = vpack.c.b16 %v4793, %v4777
    %v5402 = vpack.c.b16 %v4794, %v4778
    %v5403 = vpack.c.b16 %v4811, %v4795
    %v5404 = vpack.c.b16 %v4812, %v4796
    %v5405 = vpack.c.b16 %v4813, %v4797
    %v5406 = vpack.c.b16 %v4814, %v4798
    %v5407 = vpack.c.b16 %v4815, %v4799
    %v5408 = vpack.c.b16 %v4816, %v4800
    %v5409 = vpack.c.b16 %v4817, %v4801
    %v5410 = vpack.c.b16 %v4818, %v4802
    %v5411 = vpack.c.b16 %v4819, %v4803
    %v5412 = vpack.c.b16 %v4820, %v4804
    %v5413 = vpack.c.b16 %v4821, %v4805
    %v5414 = vpack.c.b16 %v4822, %v4806
    %v5415 = vpack.c.b16 %v4823, %v4807
    %v5416 = vpack.c.b16 %v4824, %v4808
    %v5417 = vpack.c.b16 %v4825, %v4809
    %v5418 = vpack.c.b16 %v4826, %v4810
    %v5419 = vpack.c.b16 %v4843, %v4827
    %v5420 = vpack.c.b16 %v4844, %v4828
    %v5421 = vpack.c.b16 %v4845, %v4829
    %v5422 = vpack.c.b16 %v4846, %v4830
    %v5423 = vpack.c.b16 %v4847, %v4831
    %v5424 = vpack.c.b16 %v4848, %v4832
    %v5425 = vpack.c.b16 %v4849, %v4833
    %v5426 = vpack.c.b16 %v4850, %v4834
    %v5427 = vpack.c.b16 %v4851, %v4835
    %v5428 = vpack.c.b16 %v4852, %v4836
    %v5429 = vpack.c.b16 %v4853, %v4837
    %v5430 = vpack.c.b16 %v4854, %v4838
    %v5431 = vpack.c.b16 %v4855, %v4839
    %v5432 = vpack.c.b16 %v4856, %v4840
    %v5433 = vpack.c.b16 %v4857, %v4841
    %v5434 = vpack.c.b16 %v4858, %v4842
    %v5435 = vpack.c.b16 %v4875, %v4859
    %v5436 = vpack.c.b16 %v4876, %v4860
    %v5437 = vpack.c.b16 %v4877, %v4861
    %v5438 = vpack.c.b16 %v4878, %v4862
    %v5439 = vpack.c.b16 %v4879, %v4863
    %v5440 = vpack.c.b16 %v4880, %v4864
    %v5441 = vpack.c.b16 %v4881, %v4865
    %v5442 = vpack.c.b16 %v4882, %v4866
    %v5443 = vpack.c.b16 %v4883, %v4867
    %v5444 = vpack.c.b16 %v4884, %v4868
    %v5445 = vpack.c.b16 %v4885, %v4869
    %v5446 = vpack.c.b16 %v4886, %v4870
    %v5447 = vpack.c.b16 %v4887, %v4871
    %v5448 = vpack.c.b16 %v4888, %v4872
    %v5449 = vpack.c.b16 %v4889, %v4873
    %v5450 = vpack.c.b16 %v4890, %v4874
    %v5451 = vpack.c.b16 %v4907, %v4891
    %v5452 = vpack.c.b16 %v4908, %v4892
    %v5453 = vpack.c.b16 %v4909, %v4893
    %v5454 = vpack.c.b16 %v4910, %v4894
    %v5455 = vpack.c.b16 %v4911, %v4895
    %v5456 = vpack.c.b16 %v4912, %v4896
    %v5457 = vpack.c.b16 %v4913, %v4897
    %v5458 = vpack.c.b16 %v4914, %v4898
    %v5459 = vpack.c.b16 %v4915, %v4899
    %v5460 = vpack.c.b16 %v4916, %v4900
    %v5461 = vpack.c.b16 %v4917, %v4901
    %v5462 = vpack.c.b16 %v4918, %v4902
    %v5463 = vpack.c.b16 %v4919, %v4903
    %v5464 = vpack.c.b16 %v4920, %v4904
    %v5465 = vpack.c.b16 %v4921, %v4905
    %v5466 = vpack.c.b16 %v4922, %v4906
    %v5467 = vpack.c.b16 %v4923, %v4923
    %v5468 = vpack.c.b16 %v4924, %v4924
    %v5469 = vpack.c.b16 %v4925, %v4925
    %v5470 = vpack.c.b16 %v4926, %v4926
    %v5471 = vpack.c.b16 %v4927, %v4927
    %v5472 = vpack.c.b16 %v4928, %v4928
    %v5473 = vpack.c.b16 %v4929, %v4929
    %v5474 = vpack.c.b16 %v4930, %v4930
    %v5475 = vpack.c.b16 %v4931, %v4931
    %v5476 = vpack.c.b16 %v4932, %v4932
    %v5477 = vpack.c.b16 %v4933, %v4933
    %v5478 = vpack.c.b16 %v4934, %v4934
    %v5479 = vpack.c.b16 %v4935, %v4935
    %v5480 = vpack.c.b16 %v4936, %v4936
    %v5481 = vpack.c.b16 %v4937, %v4937
    %v5482 = vpack.c.b16 %v4938, %v4938
    %vm6011 = vcmask 138240
    %v6013 = vsel %vm6011, %v2794, 0
    %vm6015 = vcmask 1040384
    %v6016 = vsel 0, 4294967295, 65535
    %v6017 = vsel %vm6015, %v6016, 0
    %v6019 = vand.u32 %v5467, %v6017
    %v6022 = vand.u32 %v5468, %v6017
    %v6025 = vand.u32 %v5469, %v6017
    %v6028 = vand.u32 %v5470, %v6017
    %v6031 = vand.u32 %v5471, %v6017
    %v6034 = vand.u32 %v5472, %v6017
    %v6037 = vand.u32 %v5473, %v6017
    %v6040 = vand.u32 %v5474, %v6017
    %v6043 = vand.u32 %v5475, %v6017
    %v6046 = vand.u32 %v5476, %v6017
    %v6049 = vand.u32 %v5477, %v6017
    %v6052 = vand.u32 %v5478, %v6017
    %v6055 = vand.u32 %v5479, %v6017
    %v6058 = vand.u32 %v5480, %v6017
    %v6061 = vand.u32 %v5481, %v6017
    %v6064 = vand.u32 %v5482, %v6017
    %6066 = vmatprep.subr.bf16.mxu0 %v5052
    %6067 = vmatpush1.bf16.msra.mxu0 %v5051
    %6068 = vmatprep.subr.bf16.mxu0 %v5036
    %6069 = vmatpush1.bf16.msra.mxu0 %v5035
    %6070 = vmatprep.subr.bf16.mxu0 %v5020
    %6071 = vmatpush1.bf16.msra.mxu0 %v5019
    %6072 = vmatprep.subr.bf16.mxu0 %v5004
    %6073 = vmatpush1.bf16.msra.mxu0 %v5003
    %6074 = vmatprep.subr.bf16.mxu0 %v4988
    %6075 = vmatpush1.bf16.msra.mxu0 %v4987
    %6076 = vmatprep.subr.bf16.mxu0 %v4972
    %6077 = vmatpush1.bf16.msra.mxu0 %v4971
    %6078 = vmatprep.subr.bf16.mxu0 %v4956
    %6079 = vmatpush1.bf16.msra.mxu0 %v4955
    %6080 = vmatprep.subr.bf16.mxu0 %v4940
    %6081 = vmatpush1.bf16.msra.mxu0 %v4939
    %6082 = vmatprep.subr.bf16.mxu0 %v5180
    %6083 = vmatpush2.bf16.msra.mxu0 %v5179
    %6084 = vmatprep.subr.bf16.mxu0 %v5164
    %6085 = vmatpush2.bf16.msra.mxu0 %v5163
    %6086 = vmatprep.subr.bf16.mxu0 %v5148
    %6087 = vmatpush2.bf16.msra.mxu0 %v5147
    %6088 = vmatprep.subr.bf16.mxu0 %v5132
    %6089 = vmatpush2.bf16.msra.mxu0 %v5131
    %6090 = vmatprep.subr.bf16.mxu0 %v5116
    %6091 = vmatpush2.bf16.msra.mxu0 %v5115
    %6092 = vmatprep.subr.bf16.mxu0 %v5100
    %6093 = vmatpush2.bf16.msra.mxu0 %v5099
    %6094 = vmatprep.subr.bf16.mxu0 %v5084
    %6095 = vmatpush2.bf16.msra.mxu0 %v5083
    %6096 = vmatprep.subr.bf16.mxu0 %v5068
    %6097 = vmatpush2.bf16.msra.mxu0 %v5067
    %6098 = vmatprep.mubr.bf16.mxu0 %v2791
    %6099 = vmatmul.mubr.bf16.gmra.mxu0 %v2790
    %v6100 = vpop.f32.mrf.mxu0
    %v6101 = vadd.f32 0.0, %v6100
    %v6102 = vpop.f32.mrf.mxu0
    %v6103 = vadd.f32 0.0, %v6102
    %v6104 = vpop.f32.mrf.mxu0
    %v6105 = vpop.f32.mrf.mxu0
    %6106 = vdwg.mxu0
    %6107 = vmatprep.subr.bf16.mxu0 %v5308
    %6108 = vmatpush1.bf16.msra.mxu0 %v5307
    %6109 = vmatprep.subr.bf16.mxu0 %v5292
    %6110 = vmatpush1.bf16.msra.mxu0 %v5291
    %6111 = vmatprep.subr.bf16.mxu0 %v5276
    %6112 = vmatpush1.bf16.msra.mxu0 %v5275
    %6113 = vmatprep.subr.bf16.mxu0 %v5260
    %6114 = vmatpush1.bf16.msra.mxu0 %v5259
    %6115 = vmatprep.subr.bf16.mxu0 %v5244
    %6116 = vmatpush1.bf16.msra.mxu0 %v5243
    %6117 = vmatprep.subr.bf16.mxu0 %v5228
    %6118 = vmatpush1.bf16.msra.mxu0 %v5227
    %6119 = vmatprep.subr.bf16.mxu0 %v5212
    %6120 = vmatpush1.bf16.msra.mxu0 %v5211
    %6121 = vmatprep.subr.bf16.mxu0 %v5196
    %6122 = vmatpush1.bf16.msra.mxu0 %v5195
    %6123 = vmatprep.subr.bf16.mxu0 %v5436
    %6124 = vmatpush2.bf16.msra.mxu0 %v5435
    %6125 = vmatprep.subr.bf16.mxu0 %v5420
    %6126 = vmatpush2.bf16.msra.mxu0 %v5419
    %6127 = vmatprep.subr.bf16.mxu0 %v5404
    %6128 = vmatpush2.bf16.msra.mxu0 %v5403
    %6129 = vmatprep.subr.bf16.mxu0 %v5388
    %6130 = vmatpush2.bf16.msra.mxu0 %v5387
    %6131 = vmatprep.subr.bf16.mxu0 %v5372
    %6132 = vmatpush2.bf16.msra.mxu0 %v5371
    %6133 = vmatprep.subr.bf16.mxu0 %v5356
    %6134 = vmatpush2.bf16.msra.mxu0 %v5355
    %6135 = vmatprep.subr.bf16.mxu0 %v5340
    %6136 = vmatpush2.bf16.msra.mxu0 %v5339
    %6137 = vmatprep.subr.bf16.mxu0 %v5324
    %6138 = vmatpush2.bf16.msra.mxu0 %v5323
    %6139 = vmatprep.mubr.bf16.mxu0 %v2793
    %6140 = vmatmul.mubr.bf16.gmra.mxu0 %v2792
    %v6141 = vpop.f32.mrf.mxu0
    %v6142 = vadd.f32 %v6101, %v6141
    %v6143 = vpop.f32.mrf.mxu0
    %v6144 = vadd.f32 %v6103, %v6143
    %v6145 = vpop.f32.mrf.mxu0
    %v6146 = vpop.f32.mrf.mxu0
    %6147 = vdwg.mxu0
    %6148 = vmatprep.subr.bf16.mxu0 0
    %6149 = vmatpush1.bf16.msra.mxu0 0
    %6150 = vmatprep.subr.bf16.mxu0 0
    %6151 = vmatpush1.bf16.msra.mxu0 0
    %6152 = vmatprep.subr.bf16.mxu0 0
    %6153 = vmatpush1.bf16.msra.mxu0 0
    %6154 = vmatprep.subr.bf16.mxu0 0
    %6155 = vmatpush1.bf16.msra.mxu0 0
    %6156 = vmatprep.subr.bf16.mxu0 0
    %6157 = vmatpush1.bf16.msra.mxu0 0
    %6158 = vmatprep.subr.bf16.mxu0 0
    %6159 = vmatpush1.bf16.msra.mxu0 0
    %6160 = vmatprep.subr.bf16.mxu0 %v6022
    %6161 = vmatpush1.bf16.msra.mxu0 %v6019
    %6162 = vmatprep.subr.bf16.mxu0 %v5452
    %6163 = vmatpush1.bf16.msra.mxu0 %v5451
    %6164 = vmatprep.subr.bf16.mxu0 0
    %6165 = vmatpush2.bf16.msra.mxu0 0
    %6166 = vmatprep.subr.bf16.mxu0 0
    %6167 = vmatpush2.bf16.msra.mxu0 0
    %6168 = vmatprep.subr.bf16.mxu0 0
    %6169 = vmatpush2.bf16.msra.mxu0 0
    %6170 = vmatprep.subr.bf16.mxu0 0
    %6171 = vmatpush2.bf16.msra.mxu0 0
    %6172 = vmatprep.subr.bf16.mxu0 0
    %6173 = vmatpush2.bf16.msra.mxu0 0
    %6174 = vmatprep.subr.bf16.mxu0 0
    %6175 = vmatpush2.bf16.msra.mxu0 0
    %6176 = vmatprep.subr.bf16.mxu0 0
    %6177 = vmatpush2.bf16.msra.mxu0 0
    %6178 = vmatprep.subr.bf16.mxu0 0
    %6179 = vmatpush2.bf16.msra.mxu0 0
    %6180 = vmatprep.mubr.bf16.mxu0 0
    %6181 = vmatmul.mubr.bf16.gmra.mxu0 %v6013
    %v6182 = vpop.f32.mrf.mxu0
    %v6183 = vadd.f32 %v6142, %v6182
    %v6184 = vpop.f32.mrf.mxu0
    %v6185 = vadd.f32 %v6144, %v6184
    %v6186 = vpop.f32.mrf.mxu0
    %v6187 = vpop.f32.mrf.mxu0
    %6188 = vdwg.mxu0
    %6189 = vmatprep.subr.bf16.mxu0 %v5054
    %6190 = vmatpush1.bf16.msra.mxu0 %v5053
    %6191 = vmatprep.subr.bf16.mxu0 %v5038
    %6192 = vmatpush1.bf16.msra.mxu0 %v5037
    %6193 = vmatprep.subr.bf16.mxu0 %v5022
    %6194 = vmatpush1.bf16.msra.mxu0 %v5021
    %6195 = vmatprep.subr.bf16.mxu0 %v5006
    %6196 = vmatpush1.bf16.msra.mxu0 %v5005
    %6197 = vmatprep.subr.bf16.mxu0 %v4990
    %6198 = vmatpush1.bf16.msra.mxu0 %v4989
    %6199 = vmatprep.subr.bf16.mxu0 %v4974
    %6200 = vmatpush1.bf16.msra.mxu0 %v4973
    %6201 = vmatprep.subr.bf16.mxu0 %v4958
    %6202 = vmatpush1.bf16.msra.mxu0 %v4957
    %6203 = vmatprep.subr.bf16.mxu0 %v4942
    %6204 = vmatpush1.bf16.msra.mxu0 %v4941
    %6205 = vmatprep.subr.bf16.mxu0 %v5182
    %6206 = vmatpush2.bf16.msra.mxu0 %v5181
    %6207 = vmatprep.subr.bf16.mxu0 %v5166
    %6208 = vmatpush2.bf16.msra.mxu0 %v5165
    %6209 = vmatprep.subr.bf16.mxu0 %v5150
    %6210 = vmatpush2.bf16.msra.mxu0 %v5149
    %6211 = vmatprep.subr.bf16.mxu0 %v5134
    %6212 = vmatpush2.bf16.msra.mxu0 %v5133
    %6213 = vmatprep.subr.bf16.mxu0 %v5118
    %6214 = vmatpush2.bf16.msra.mxu0 %v5117
    %6215 = vmatprep.subr.bf16.mxu0 %v5102
    %6216 = vmatpush2.bf16.msra.mxu0 %v5101
    %6217 = vmatprep.subr.bf16.mxu0 %v5086
    %6218 = vmatpush2.bf16.msra.mxu0 %v5085
    %6219 = vmatprep.subr.bf16.mxu0 %v5070
    %6220 = vmatpush2.bf16.msra.mxu0 %v5069
    %6221 = vmatprep.mubr.bf16.mxu0 %v2791
    %6222 = vmatmul.mubr.bf16.gmra.mxu0 %v2790
    %v6223 = vpop.f32.mrf.mxu0
    %v6224 = vadd.f32 0.0, %v6223
    %v6225 = vpop.f32.mrf.mxu0
    %v6226 = vadd.f32 0.0, %v6225
    %v6227 = vpop.f32.mrf.mxu0
    %v6228 = vpop.f32.mrf.mxu0
    %6229 = vdwg.mxu0
    %6230 = vmatprep.subr.bf16.mxu0 %v5310
    %6231 = vmatpush1.bf16.msra.mxu0 %v5309
    %6232 = vmatprep.subr.bf16.mxu0 %v5294
    %6233 = vmatpush1.bf16.msra.mxu0 %v5293
    %6234 = vmatprep.subr.bf16.mxu0 %v5278
    %6235 = vmatpush1.bf16.msra.mxu0 %v5277
    %6236 = vmatprep.subr.bf16.mxu0 %v5262
    %6237 = vmatpush1.bf16.msra.mxu0 %v5261
    %6238 = vmatprep.subr.bf16.mxu0 %v5246
    %6239 = vmatpush1.bf16.msra.mxu0 %v5245
    %6240 = vmatprep.subr.bf16.mxu0 %v5230
    %6241 = vmatpush1.bf16.msra.mxu0 %v5229
    %6242 = vmatprep.subr.bf16.mxu0 %v5214
    %6243 = vmatpush1.bf16.msra.mxu0 %v5213
    %6244 = vmatprep.subr.bf16.mxu0 %v5198
    %6245 = vmatpush1.bf16.msra.mxu0 %v5197
    %6246 = vmatprep.subr.bf16.mxu0 %v5438
    %6247 = vmatpush2.bf16.msra.mxu0 %v5437
    %6248 = vmatprep.subr.bf16.mxu0 %v5422
    %6249 = vmatpush2.bf16.msra.mxu0 %v5421
    %6250 = vmatprep.subr.bf16.mxu0 %v5406
    %6251 = vmatpush2.bf16.msra.mxu0 %v5405
    %6252 = vmatprep.subr.bf16.mxu0 %v5390
    %6253 = vmatpush2.bf16.msra.mxu0 %v5389
    %6254 = vmatprep.subr.bf16.mxu0 %v5374
    %6255 = vmatpush2.bf16.msra.mxu0 %v5373
    %6256 = vmatprep.subr.bf16.mxu0 %v5358
    %6257 = vmatpush2.bf16.msra.mxu0 %v5357
    %6258 = vmatprep.subr.bf16.mxu0 %v5342
    %6259 = vmatpush2.bf16.msra.mxu0 %v5341
    %6260 = vmatprep.subr.bf16.mxu0 %v5326
    %6261 = vmatpush2.bf16.msra.mxu0 %v5325
    %6262 = vmatprep.mubr.bf16.mxu0 %v2793
    %6263 = vmatmul.mubr.bf16.gmra.mxu0 %v2792
    %v6264 = vpop.f32.mrf.mxu0
    %v6265 = vadd.f32 %v6224, %v6264
    %v6266 = vpop.f32.mrf.mxu0
    %v6267 = vadd.f32 %v6226, %v6266
    %v6268 = vpop.f32.mrf.mxu0
    %v6269 = vpop.f32.mrf.mxu0
    %6270 = vdwg.mxu0
    %6271 = vmatprep.subr.bf16.mxu0 0
    %6272 = vmatpush1.bf16.msra.mxu0 0
    %6273 = vmatprep.subr.bf16.mxu0 0
    %6274 = vmatpush1.bf16.msra.mxu0 0
    %6275 = vmatprep.subr.bf16.mxu0 0
    %6276 = vmatpush1.bf16.msra.mxu0 0
    %6277 = vmatprep.subr.bf16.mxu0 0
    %6278 = vmatpush1.bf16.msra.mxu0 0
    %6279 = vmatprep.subr.bf16.mxu0 0
    %6280 = vmatpush1.bf16.msra.mxu0 0
    %6281 = vmatprep.subr.bf16.mxu0 0
    %6282 = vmatpush1.bf16.msra.mxu0 0
    %6283 = vmatprep.subr.bf16.mxu0 %v6028
    %6284 = vmatpush1.bf16.msra.mxu0 %v6025
    %6285 = vmatprep.subr.bf16.mxu0 %v5454
    %6286 = vmatpush1.bf16.msra.mxu0 %v5453
    %6287 = vmatprep.subr.bf16.mxu0 0
    %6288 = vmatpush2.bf16.msra.mxu0 0
    %6289 = vmatprep.subr.bf16.mxu0 0
    %6290 = vmatpush2.bf16.msra.mxu0 0
    %6291 = vmatprep.subr.bf16.mxu0 0
    %6292 = vmatpush2.bf16.msra.mxu0 0
    %6293 = vmatprep.subr.bf16.mxu0 0
    %6294 = vmatpush2.bf16.msra.mxu0 0
    %6295 = vmatprep.subr.bf16.mxu0 0
    %6296 = vmatpush2.bf16.msra.mxu0 0
    %6297 = vmatprep.subr.bf16.mxu0 0
    %6298 = vmatpush2.bf16.msra.mxu0 0
    %6299 = vmatprep.subr.bf16.mxu0 0
    %6300 = vmatpush2.bf16.msra.mxu0 0
    %6301 = vmatprep.subr.bf16.mxu0 0
    %6302 = vmatpush2.bf16.msra.mxu0 0
    %6303 = vmatprep.mubr.bf16.mxu0 0
    %6304 = vmatmul.mubr.bf16.gmra.mxu0 %v6013
    %v6305 = vpop.f32.mrf.mxu0
    %v6306 = vadd.f32 %v6265, %v6305
    %v6307 = vpop.f32.mrf.mxu0
    %v6308 = vadd.f32 %v6267, %v6307
    %v6309 = vpop.f32.mrf.mxu0
    %v6310 = vpop.f32.mrf.mxu0
    %6311 = vdwg.mxu0
    %6312 = vmatprep.subr.bf16.mxu0 %v5056
    %6313 = vmatpush1.bf16.msra.mxu0 %v5055
    %6314 = vmatprep.subr.bf16.mxu0 %v5040
    %6315 = vmatpush1.bf16.msra.mxu0 %v5039
    %6316 = vmatprep.subr.bf16.mxu0 %v5024
    %6317 = vmatpush1.bf16.msra.mxu0 %v5023
    %6318 = vmatprep.subr.bf16.mxu0 %v5008
    %6319 = vmatpush1.bf16.msra.mxu0 %v5007
    %6320 = vmatprep.subr.bf16.mxu0 %v4992
    %6321 = vmatpush1.bf16.msra.mxu0 %v4991
    %6322 = vmatprep.subr.bf16.mxu0 %v4976
    %6323 = vmatpush1.bf16.msra.mxu0 %v4975
    %6324 = vmatprep.subr.bf16.mxu0 %v4960
    %6325 = vmatpush1.bf16.msra.mxu0 %v4959
    %6326 = vmatprep.subr.bf16.mxu0 %v4944
    %6327 = vmatpush1.bf16.msra.mxu0 %v4943
    %6328 = vmatprep.subr.bf16.mxu0 %v5184
    %6329 = vmatpush2.bf16.msra.mxu0 %v5183
    %6330 = vmatprep.subr.bf16.mxu0 %v5168
    %6331 = vmatpush2.bf16.msra.mxu0 %v5167
    %6332 = vmatprep.subr.bf16.mxu0 %v5152
    %6333 = vmatpush2.bf16.msra.mxu0 %v5151
    %6334 = vmatprep.subr.bf16.mxu0 %v5136
    %6335 = vmatpush2.bf16.msra.mxu0 %v5135
    %6336 = vmatprep.subr.bf16.mxu0 %v5120
    %6337 = vmatpush2.bf16.msra.mxu0 %v5119
    %6338 = vmatprep.subr.bf16.mxu0 %v5104
    %6339 = vmatpush2.bf16.msra.mxu0 %v5103
    %6340 = vmatprep.subr.bf16.mxu0 %v5088
    %6341 = vmatpush2.bf16.msra.mxu0 %v5087
    %6342 = vmatprep.subr.bf16.mxu0 %v5072
    %6343 = vmatpush2.bf16.msra.mxu0 %v5071
    %6344 = vmatprep.mubr.bf16.mxu0 %v2791
    %6345 = vmatmul.mubr.bf16.gmra.mxu0 %v2790
    %v6346 = vpop.f32.mrf.mxu0
    %v6347 = vadd.f32 0.0, %v6346
    %v6348 = vpop.f32.mrf.mxu0
    %v6349 = vadd.f32 0.0, %v6348
    %v6350 = vpop.f32.mrf.mxu0
    %v6351 = vpop.f32.mrf.mxu0
    %6352 = vdwg.mxu0
    %6353 = vmatprep.subr.bf16.mxu0 %v5312
    %6354 = vmatpush1.bf16.msra.mxu0 %v5311
    %6355 = vmatprep.subr.bf16.mxu0 %v5296
    %6356 = vmatpush1.bf16.msra.mxu0 %v5295
    %6357 = vmatprep.subr.bf16.mxu0 %v5280
    %6358 = vmatpush1.bf16.msra.mxu0 %v5279
    %6359 = vmatprep.subr.bf16.mxu0 %v5264
    %6360 = vmatpush1.bf16.msra.mxu0 %v5263
    %6361 = vmatprep.subr.bf16.mxu0 %v5248
    %6362 = vmatpush1.bf16.msra.mxu0 %v5247
    %6363 = vmatprep.subr.bf16.mxu0 %v5232
    %6364 = vmatpush1.bf16.msra.mxu0 %v5231
    %6365 = vmatprep.subr.bf16.mxu0 %v5216
    %6366 = vmatpush1.bf16.msra.mxu0 %v5215
    %6367 = vmatprep.subr.bf16.mxu0 %v5200
    %6368 = vmatpush1.bf16.msra.mxu0 %v5199
    %6369 = vmatprep.subr.bf16.mxu0 %v5440
    %6370 = vmatpush2.bf16.msra.mxu0 %v5439
    %6371 = vmatprep.subr.bf16.mxu0 %v5424
    %6372 = vmatpush2.bf16.msra.mxu0 %v5423
    %6373 = vmatprep.subr.bf16.mxu0 %v5408
    %6374 = vmatpush2.bf16.msra.mxu0 %v5407
    %6375 = vmatprep.subr.bf16.mxu0 %v5392
    %6376 = vmatpush2.bf16.msra.mxu0 %v5391
    %6377 = vmatprep.subr.bf16.mxu0 %v5376
    %6378 = vmatpush2.bf16.msra.mxu0 %v5375
    %6379 = vmatprep.subr.bf16.mxu0 %v5360
    %6380 = vmatpush2.bf16.msra.mxu0 %v5359
    %6381 = vmatprep.subr.bf16.mxu0 %v5344
    %6382 = vmatpush2.bf16.msra.mxu0 %v5343
    %6383 = vmatprep.subr.bf16.mxu0 %v5328
    %6384 = vmatpush2.bf16.msra.mxu0 %v5327
    %6385 = vmatprep.mubr.bf16.mxu0 %v2793
    %6386 = vmatmul.mubr.bf16.gmra.mxu0 %v2792
    %v6387 = vpop.f32.mrf.mxu0
    %v6388 = vadd.f32 %v6347, %v6387
    %v6389 = vpop.f32.mrf.mxu0
    %v6390 = vadd.f32 %v6349, %v6389
    %v6391 = vpop.f32.mrf.mxu0
    %v6392 = vpop.f32.mrf.mxu0
    %6393 = vdwg.mxu0
    %6394 = vmatprep.subr.bf16.mxu0 0
    %6395 = vmatpush1.bf16.msra.mxu0 0
    %6396 = vmatprep.subr.bf16.mxu0 0
    %6397 = vmatpush1.bf16.msra.mxu0 0
    %6398 = vmatprep.subr.bf16.mxu0 0
    %6399 = vmatpush1.bf16.msra.mxu0 0
    %6400 = vmatprep.subr.bf16.mxu0 0
    %6401 = vmatpush1.bf16.msra.mxu0 0
    %6402 = vmatprep.subr.bf16.mxu0 0
    %6403 = vmatpush1.bf16.msra.mxu0 0
    %6404 = vmatprep.subr.bf16.mxu0 0
    %6405 = vmatpush1.bf16.msra.mxu0 0
    %6406 = vmatprep.subr.bf16.mxu0 %v6034
    %6407 = vmatpush1.bf16.msra.mxu0 %v6031
    %6408 = vmatprep.subr.bf16.mxu0 %v5456
    %6409 = vmatpush1.bf16.msra.mxu0 %v5455
    %6410 = vmatprep.subr.bf16.mxu0 0
    %6411 = vmatpush2.bf16.msra.mxu0 0
    %6412 = vmatprep.subr.bf16.mxu0 0
    %6413 = vmatpush2.bf16.msra.mxu0 0
    %6414 = vmatprep.subr.bf16.mxu0 0
    %6415 = vmatpush2.bf16.msra.mxu0 0
    %6416 = vmatprep.subr.bf16.mxu0 0
    %6417 = vmatpush2.bf16.msra.mxu0 0
    %6418 = vmatprep.subr.bf16.mxu0 0
    %6419 = vmatpush2.bf16.msra.mxu0 0
    %6420 = vmatprep.subr.bf16.mxu0 0
    %6421 = vmatpush2.bf16.msra.mxu0 0
    %6422 = vmatprep.subr.bf16.mxu0 0
    %6423 = vmatpush2.bf16.msra.mxu0 0
    %6424 = vmatprep.subr.bf16.mxu0 0
    %6425 = vmatpush2.bf16.msra.mxu0 0
    %6426 = vmatprep.mubr.bf16.mxu0 0
    %6427 = vmatmul.mubr.bf16.gmra.mxu0 %v6013
    %v6428 = vpop.f32.mrf.mxu0
    %v6429 = vadd.f32 %v6388, %v6428
    %v6430 = vpop.f32.mrf.mxu0
    %v6431 = vadd.f32 %v6390, %v6430
    %v6432 = vpop.f32.mrf.mxu0
    %v6433 = vpop.f32.mrf.mxu0
    %6434 = vdwg.mxu0
    %6435 = vmatprep.subr.bf16.mxu0 %v5058
    %6436 = vmatpush1.bf16.msra.mxu0 %v5057
    %6437 = vmatprep.subr.bf16.mxu0 %v5042
    %6438 = vmatpush1.bf16.msra.mxu0 %v5041
    %6439 = vmatprep.subr.bf16.mxu0 %v5026
    %6440 = vmatpush1.bf16.msra.mxu0 %v5025
    %6441 = vmatprep.subr.bf16.mxu0 %v5010
    %6442 = vmatpush1.bf16.msra.mxu0 %v5009
    %6443 = vmatprep.subr.bf16.mxu0 %v4994
    %6444 = vmatpush1.bf16.msra.mxu0 %v4993
    %6445 = vmatprep.subr.bf16.mxu0 %v4978
    %6446 = vmatpush1.bf16.msra.mxu0 %v4977
    %6447 = vmatprep.subr.bf16.mxu0 %v4962
    %6448 = vmatpush1.bf16.msra.mxu0 %v4961
    %6449 = vmatprep.subr.bf16.mxu0 %v4946
    %6450 = vmatpush1.bf16.msra.mxu0 %v4945
    %6451 = vmatprep.subr.bf16.mxu0 %v5186
    %6452 = vmatpush2.bf16.msra.mxu0 %v5185
    %6453 = vmatprep.subr.bf16.mxu0 %v5170
    %6454 = vmatpush2.bf16.msra.mxu0 %v5169
    %6455 = vmatprep.subr.bf16.mxu0 %v5154
    %6456 = vmatpush2.bf16.msra.mxu0 %v5153
    %6457 = vmatprep.subr.bf16.mxu0 %v5138
    %6458 = vmatpush2.bf16.msra.mxu0 %v5137
    %6459 = vmatprep.subr.bf16.mxu0 %v5122
    %6460 = vmatpush2.bf16.msra.mxu0 %v5121
    %6461 = vmatprep.subr.bf16.mxu0 %v5106
    %6462 = vmatpush2.bf16.msra.mxu0 %v5105
    %6463 = vmatprep.subr.bf16.mxu0 %v5090
    %6464 = vmatpush2.bf16.msra.mxu0 %v5089
    %6465 = vmatprep.subr.bf16.mxu0 %v5074
    %6466 = vmatpush2.bf16.msra.mxu0 %v5073
    %6467 = vmatprep.mubr.bf16.mxu0 %v2791
    %6468 = vmatmul.mubr.bf16.gmra.mxu0 %v2790
    %v6469 = vpop.f32.mrf.mxu0
    %v6470 = vadd.f32 0.0, %v6469
    %v6471 = vpop.f32.mrf.mxu0
    %v6472 = vadd.f32 0.0, %v6471
    %v6473 = vpop.f32.mrf.mxu0
    %v6474 = vpop.f32.mrf.mxu0
    %6475 = vdwg.mxu0
    %6476 = vmatprep.subr.bf16.mxu0 %v5314
    %6477 = vmatpush1.bf16.msra.mxu0 %v5313
    %6478 = vmatprep.subr.bf16.mxu0 %v5298
    %6479 = vmatpush1.bf16.msra.mxu0 %v5297
    %6480 = vmatprep.subr.bf16.mxu0 %v5282
    %6481 = vmatpush1.bf16.msra.mxu0 %v5281
    %6482 = vmatprep.subr.bf16.mxu0 %v5266
    %6483 = vmatpush1.bf16.msra.mxu0 %v5265
    %6484 = vmatprep.subr.bf16.mxu0 %v5250
    %6485 = vmatpush1.bf16.msra.mxu0 %v5249
    %6486 = vmatprep.subr.bf16.mxu0 %v5234
    %6487 = vmatpush1.bf16.msra.mxu0 %v5233
    %6488 = vmatprep.subr.bf16.mxu0 %v5218
    %6489 = vmatpush1.bf16.msra.mxu0 %v5217
    %6490 = vmatprep.subr.bf16.mxu0 %v5202
    %6491 = vmatpush1.bf16.msra.mxu0 %v5201
    %6492 = vmatprep.subr.bf16.mxu0 %v5442
    %6493 = vmatpush2.bf16.msra.mxu0 %v5441
    %6494 = vmatprep.subr.bf16.mxu0 %v5426
    %6495 = vmatpush2.bf16.msra.mxu0 %v5425
    %6496 = vmatprep.subr.bf16.mxu0 %v5410
    %6497 = vmatpush2.bf16.msra.mxu0 %v5409
    %6498 = vmatprep.subr.bf16.mxu0 %v5394
    %6499 = vmatpush2.bf16.msra.mxu0 %v5393
    %6500 = vmatprep.subr.bf16.mxu0 %v5378
    %6501 = vmatpush2.bf16.msra.mxu0 %v5377
    %6502 = vmatprep.subr.bf16.mxu0 %v5362
    %6503 = vmatpush2.bf16.msra.mxu0 %v5361
    %6504 = vmatprep.subr.bf16.mxu0 %v5346
    %6505 = vmatpush2.bf16.msra.mxu0 %v5345
    %6506 = vmatprep.subr.bf16.mxu0 %v5330
    %6507 = vmatpush2.bf16.msra.mxu0 %v5329
    %6508 = vmatprep.mubr.bf16.mxu0 %v2793
    %6509 = vmatmul.mubr.bf16.gmra.mxu0 %v2792
    %v6510 = vpop.f32.mrf.mxu0
    %v6511 = vadd.f32 %v6470, %v6510
    %v6512 = vpop.f32.mrf.mxu0
    %v6513 = vadd.f32 %v6472, %v6512
    %v6514 = vpop.f32.mrf.mxu0
    %v6515 = vpop.f32.mrf.mxu0
    %6516 = vdwg.mxu0
    %6517 = vmatprep.subr.bf16.mxu0 0
    %6518 = vmatpush1.bf16.msra.mxu0 0
    %6519 = vmatprep.subr.bf16.mxu0 0
    %6520 = vmatpush1.bf16.msra.mxu0 0
    %6521 = vmatprep.subr.bf16.mxu0 0
    %6522 = vmatpush1.bf16.msra.mxu0 0
    %6523 = vmatprep.subr.bf16.mxu0 0
    %6524 = vmatpush1.bf16.msra.mxu0 0
    %6525 = vmatprep.subr.bf16.mxu0 0
    %6526 = vmatpush1.bf16.msra.mxu0 0
    %6527 = vmatprep.subr.bf16.mxu0 0
    %6528 = vmatpush1.bf16.msra.mxu0 0
    %6529 = vmatprep.subr.bf16.mxu0 %v6040
    %6530 = vmatpush1.bf16.msra.mxu0 %v6037
    %6531 = vmatprep.subr.bf16.mxu0 %v5458
    %6532 = vmatpush1.bf16.msra.mxu0 %v5457
    %6533 = vmatprep.subr.bf16.mxu0 0
    %6534 = vmatpush2.bf16.msra.mxu0 0
    %6535 = vmatprep.subr.bf16.mxu0 0
    %6536 = vmatpush2.bf16.msra.mxu0 0
    %6537 = vmatprep.subr.bf16.mxu0 0
    %6538 = vmatpush2.bf16.msra.mxu0 0
    %6539 = vmatprep.subr.bf16.mxu0 0
    %6540 = vmatpush2.bf16.msra.mxu0 0
    %6541 = vmatprep.subr.bf16.mxu0 0
    %6542 = vmatpush2.bf16.msra.mxu0 0
    %6543 = vmatprep.subr.bf16.mxu0 0
    %6544 = vmatpush2.bf16.msra.mxu0 0
    %6545 = vmatprep.subr.bf16.mxu0 0
    %6546 = vmatpush2.bf16.msra.mxu0 0
    %6547 = vmatprep.subr.bf16.mxu0 0
    %6548 = vmatpush2.bf16.msra.mxu0 0
    %6549 = vmatprep.mubr.bf16.mxu0 0
    %6550 = vmatmul.mubr.bf16.gmra.mxu0 %v6013
    %v6551 = vpop.f32.mrf.mxu0
    %v6552 = vadd.f32 %v6511, %v6551
    %v6553 = vpop.f32.mrf.mxu0
    %v6554 = vadd.f32 %v6513, %v6553
    %v6555 = vpop.f32.mrf.mxu0
    %v6556 = vpop.f32.mrf.mxu0
    %6557 = vdwg.mxu0
    %6558 = vmatprep.subr.bf16.mxu0 %v5060
    %6559 = vmatpush1.bf16.msra.mxu0 %v5059
    %6560 = vmatprep.subr.bf16.mxu0 %v5044
    %6561 = vmatpush1.bf16.msra.mxu0 %v5043
    %6562 = vmatprep.subr.bf16.mxu0 %v5028
    %6563 = vmatpush1.bf16.msra.mxu0 %v5027
    %6564 = vmatprep.subr.bf16.mxu0 %v5012
    %6565 = vmatpush1.bf16.msra.mxu0 %v5011
    %6566 = vmatprep.subr.bf16.mxu0 %v4996
    %6567 = vmatpush1.bf16.msra.mxu0 %v4995
    %6568 = vmatprep.subr.bf16.mxu0 %v4980
    %6569 = vmatpush1.bf16.msra.mxu0 %v4979
    %6570 = vmatprep.subr.bf16.mxu0 %v4964
    %6571 = vmatpush1.bf16.msra.mxu0 %v4963
    %6572 = vmatprep.subr.bf16.mxu0 %v4948
    %6573 = vmatpush1.bf16.msra.mxu0 %v4947
    %6574 = vmatprep.subr.bf16.mxu0 %v5188
    %6575 = vmatpush2.bf16.msra.mxu0 %v5187
    %6576 = vmatprep.subr.bf16.mxu0 %v5172
    %6577 = vmatpush2.bf16.msra.mxu0 %v5171
    %6578 = vmatprep.subr.bf16.mxu0 %v5156
    %6579 = vmatpush2.bf16.msra.mxu0 %v5155
    %6580 = vmatprep.subr.bf16.mxu0 %v5140
    %6581 = vmatpush2.bf16.msra.mxu0 %v5139
    %6582 = vmatprep.subr.bf16.mxu0 %v5124
    %6583 = vmatpush2.bf16.msra.mxu0 %v5123
    %6584 = vmatprep.subr.bf16.mxu0 %v5108
    %6585 = vmatpush2.bf16.msra.mxu0 %v5107
    %6586 = vmatprep.subr.bf16.mxu0 %v5092
    %6587 = vmatpush2.bf16.msra.mxu0 %v5091
    %6588 = vmatprep.subr.bf16.mxu0 %v5076
    %6589 = vmatpush2.bf16.msra.mxu0 %v5075
    %6590 = vmatprep.mubr.bf16.mxu0 %v2791
    %6591 = vmatmul.mubr.bf16.gmra.mxu0 %v2790
    %v6592 = vpop.f32.mrf.mxu0
    %v6593 = vpop.f32.mrf.mxu0
    %v6594 = vpop.f32.mrf.mxu0
    %v6595 = vadd.f32 0.0, %v6594
    %v6596 = vpop.f32.mrf.mxu0
    %v6597 = vadd.f32 0.0, %v6596
    %6598 = vdwg.mxu0
    %6599 = vmatprep.subr.bf16.mxu0 %v5316
    %6600 = vmatpush1.bf16.msra.mxu0 %v5315
    %6601 = vmatprep.subr.bf16.mxu0 %v5300
    %6602 = vmatpush1.bf16.msra.mxu0 %v5299
    %6603 = vmatprep.subr.bf16.mxu0 %v5284
    %6604 = vmatpush1.bf16.msra.mxu0 %v5283
    %6605 = vmatprep.subr.bf16.mxu0 %v5268
    %6606 = vmatpush1.bf16.msra.mxu0 %v5267
    %6607 = vmatprep.subr.bf16.mxu0 %v5252
    %6608 = vmatpush1.bf16.msra.mxu0 %v5251
    %6609 = vmatprep.subr.bf16.mxu0 %v5236
    %6610 = vmatpush1.bf16.msra.mxu0 %v5235
    %6611 = vmatprep.subr.bf16.mxu0 %v5220
    %6612 = vmatpush1.bf16.msra.mxu0 %v5219
    %6613 = vmatprep.subr.bf16.mxu0 %v5204
    %6614 = vmatpush1.bf16.msra.mxu0 %v5203
    %6615 = vmatprep.subr.bf16.mxu0 %v5444
    %6616 = vmatpush2.bf16.msra.mxu0 %v5443
    %6617 = vmatprep.subr.bf16.mxu0 %v5428
    %6618 = vmatpush2.bf16.msra.mxu0 %v5427
    %6619 = vmatprep.subr.bf16.mxu0 %v5412
    %6620 = vmatpush2.bf16.msra.mxu0 %v5411
    %6621 = vmatprep.subr.bf16.mxu0 %v5396
    %6622 = vmatpush2.bf16.msra.mxu0 %v5395
    %6623 = vmatprep.subr.bf16.mxu0 %v5380
    %6624 = vmatpush2.bf16.msra.mxu0 %v5379
    %6625 = vmatprep.subr.bf16.mxu0 %v5364
    %6626 = vmatpush2.bf16.msra.mxu0 %v5363
    %6627 = vmatprep.subr.bf16.mxu0 %v5348
    %6628 = vmatpush2.bf16.msra.mxu0 %v5347
    %6629 = vmatprep.subr.bf16.mxu0 %v5332
    %6630 = vmatpush2.bf16.msra.mxu0 %v5331
    %6631 = vmatprep.mubr.bf16.mxu0 %v2793
    %6632 = vmatmul.mubr.bf16.gmra.mxu0 %v2792
    %v6633 = vpop.f32.mrf.mxu0
    %v6634 = vpop.f32.mrf.mxu0
    %v6635 = vpop.f32.mrf.mxu0
    %v6636 = vadd.f32 %v6595, %v6635
    %v6637 = vpop.f32.mrf.mxu0
    %v6638 = vadd.f32 %v6597, %v6637
    %6639 = vdwg.mxu0
    %6640 = vmatprep.subr.bf16.mxu0 0
    %6641 = vmatpush1.bf16.msra.mxu0 0
    %6642 = vmatprep.subr.bf16.mxu0 0
    %6643 = vmatpush1.bf16.msra.mxu0 0
    %6644 = vmatprep.subr.bf16.mxu0 0
    %6645 = vmatpush1.bf16.msra.mxu0 0
    %6646 = vmatprep.subr.bf16.mxu0 0
    %6647 = vmatpush1.bf16.msra.mxu0 0
    %6648 = vmatprep.subr.bf16.mxu0 0
    %6649 = vmatpush1.bf16.msra.mxu0 0
    %6650 = vmatprep.subr.bf16.mxu0 0
    %6651 = vmatpush1.bf16.msra.mxu0 0
    %6652 = vmatprep.subr.bf16.mxu0 %v6046
    %6653 = vmatpush1.bf16.msra.mxu0 %v6043
    %6654 = vmatprep.subr.bf16.mxu0 %v5460
    %6655 = vmatpush1.bf16.msra.mxu0 %v5459
    %6656 = vmatprep.subr.bf16.mxu0 0
    %6657 = vmatpush2.bf16.msra.mxu0 0
    %6658 = vmatprep.subr.bf16.mxu0 0
    %6659 = vmatpush2.bf16.msra.mxu0 0
    %6660 = vmatprep.subr.bf16.mxu0 0
    %6661 = vmatpush2.bf16.msra.mxu0 0
    %6662 = vmatprep.subr.bf16.mxu0 0
    %6663 = vmatpush2.bf16.msra.mxu0 0
    %6664 = vmatprep.subr.bf16.mxu0 0
    %6665 = vmatpush2.bf16.msra.mxu0 0
    %6666 = vmatprep.subr.bf16.mxu0 0
    %6667 = vmatpush2.bf16.msra.mxu0 0
    %6668 = vmatprep.subr.bf16.mxu0 0
    %6669 = vmatpush2.bf16.msra.mxu0 0
    %6670 = vmatprep.subr.bf16.mxu0 0
    %6671 = vmatpush2.bf16.msra.mxu0 0
    %6672 = vmatprep.mubr.bf16.mxu0 0
    %6673 = vmatmul.mubr.bf16.gmra.mxu0 %v6013
    %v6674 = vpop.f32.mrf.mxu0
    %v6675 = vpop.f32.mrf.mxu0
    %v6676 = vpop.f32.mrf.mxu0
    %v6677 = vadd.f32 %v6636, %v6676
    %v6678 = vpop.f32.mrf.mxu0
    %v6679 = vadd.f32 %v6638, %v6678
    %6680 = vdwg.mxu0
    %6681 = vmatprep.subr.bf16.mxu0 %v5062
    %6682 = vmatpush1.bf16.msra.mxu0 %v5061
    %6683 = vmatprep.subr.bf16.mxu0 %v5046
    %6684 = vmatpush1.bf16.msra.mxu0 %v5045
    %6685 = vmatprep.subr.bf16.mxu0 %v5030
    %6686 = vmatpush1.bf16.msra.mxu0 %v5029
    %6687 = vmatprep.subr.bf16.mxu0 %v5014
    %6688 = vmatpush1.bf16.msra.mxu0 %v5013
    %6689 = vmatprep.subr.bf16.mxu0 %v4998
    %6690 = vmatpush1.bf16.msra.mxu0 %v4997
    %6691 = vmatprep.subr.bf16.mxu0 %v4982
    %6692 = vmatpush1.bf16.msra.mxu0 %v4981
    %6693 = vmatprep.subr.bf16.mxu0 %v4966
    %6694 = vmatpush1.bf16.msra.mxu0 %v4965
    %6695 = vmatprep.subr.bf16.mxu0 %v4950
    %6696 = vmatpush1.bf16.msra.mxu0 %v4949
    %6697 = vmatprep.subr.bf16.mxu0 %v5190
    %6698 = vmatpush2.bf16.msra.mxu0 %v5189
    %6699 = vmatprep.subr.bf16.mxu0 %v5174
    %6700 = vmatpush2.bf16.msra.mxu0 %v5173
    %6701 = vmatprep.subr.bf16.mxu0 %v5158
    %6702 = vmatpush2.bf16.msra.mxu0 %v5157
    %6703 = vmatprep.subr.bf16.mxu0 %v5142
    %6704 = vmatpush2.bf16.msra.mxu0 %v5141
    %6705 = vmatprep.subr.bf16.mxu0 %v5126
    %6706 = vmatpush2.bf16.msra.mxu0 %v5125
    %6707 = vmatprep.subr.bf16.mxu0 %v5110
    %6708 = vmatpush2.bf16.msra.mxu0 %v5109
    %6709 = vmatprep.subr.bf16.mxu0 %v5094
    %6710 = vmatpush2.bf16.msra.mxu0 %v5093
    %6711 = vmatprep.subr.bf16.mxu0 %v5078
    %6712 = vmatpush2.bf16.msra.mxu0 %v5077
    %6713 = vmatprep.mubr.bf16.mxu0 %v2791
    %6714 = vmatmul.mubr.bf16.gmra.mxu0 %v2790
    %v6715 = vpop.f32.mrf.mxu0
    %v6716 = vpop.f32.mrf.mxu0
    %v6717 = vpop.f32.mrf.mxu0
    %v6718 = vadd.f32 0.0, %v6717
    %v6719 = vpop.f32.mrf.mxu0
    %v6720 = vadd.f32 0.0, %v6719
    %6721 = vdwg.mxu0
    %6722 = vmatprep.subr.bf16.mxu0 %v5318
    %6723 = vmatpush1.bf16.msra.mxu0 %v5317
    %6724 = vmatprep.subr.bf16.mxu0 %v5302
    %6725 = vmatpush1.bf16.msra.mxu0 %v5301
    %6726 = vmatprep.subr.bf16.mxu0 %v5286
    %6727 = vmatpush1.bf16.msra.mxu0 %v5285
    %6728 = vmatprep.subr.bf16.mxu0 %v5270
    %6729 = vmatpush1.bf16.msra.mxu0 %v5269
    %6730 = vmatprep.subr.bf16.mxu0 %v5254
    %6731 = vmatpush1.bf16.msra.mxu0 %v5253
    %6732 = vmatprep.subr.bf16.mxu0 %v5238
    %6733 = vmatpush1.bf16.msra.mxu0 %v5237
    %6734 = vmatprep.subr.bf16.mxu0 %v5222
    %6735 = vmatpush1.bf16.msra.mxu0 %v5221
    %6736 = vmatprep.subr.bf16.mxu0 %v5206
    %6737 = vmatpush1.bf16.msra.mxu0 %v5205
    %6738 = vmatprep.subr.bf16.mxu0 %v5446
    %6739 = vmatpush2.bf16.msra.mxu0 %v5445
    %6740 = vmatprep.subr.bf16.mxu0 %v5430
    %6741 = vmatpush2.bf16.msra.mxu0 %v5429
    %6742 = vmatprep.subr.bf16.mxu0 %v5414
    %6743 = vmatpush2.bf16.msra.mxu0 %v5413
    %6744 = vmatprep.subr.bf16.mxu0 %v5398
    %6745 = vmatpush2.bf16.msra.mxu0 %v5397
    %6746 = vmatprep.subr.bf16.mxu0 %v5382
    %6747 = vmatpush2.bf16.msra.mxu0 %v5381
    %6748 = vmatprep.subr.bf16.mxu0 %v5366
    %6749 = vmatpush2.bf16.msra.mxu0 %v5365
    %6750 = vmatprep.subr.bf16.mxu0 %v5350
    %6751 = vmatpush2.bf16.msra.mxu0 %v5349
    %6752 = vmatprep.subr.bf16.mxu0 %v5334
    %6753 = vmatpush2.bf16.msra.mxu0 %v5333
    %6754 = vmatprep.mubr.bf16.mxu0 %v2793
    %6755 = vmatmul.mubr.bf16.gmra.mxu0 %v2792
    %v6756 = vpop.f32.mrf.mxu0
    %v6757 = vpop.f32.mrf.mxu0
    %v6758 = vpop.f32.mrf.mxu0
    %v6759 = vadd.f32 %v6718, %v6758
    %v6760 = vpop.f32.mrf.mxu0
    %v6761 = vadd.f32 %v6720, %v6760
    %6762 = vdwg.mxu0
    %6763 = vmatprep.subr.bf16.mxu0 0
    %6764 = vmatpush1.bf16.msra.mxu0 0
    %6765 = vmatprep.subr.bf16.mxu0 0
    %6766 = vmatpush1.bf16.msra.mxu0 0
    %6767 = vmatprep.subr.bf16.mxu0 0
    %6768 = vmatpush1.bf16.msra.mxu0 0
    %6769 = vmatprep.subr.bf16.mxu0 0
    %6770 = vmatpush1.bf16.msra.mxu0 0
    %6771 = vmatprep.subr.bf16.mxu0 0
    %6772 = vmatpush1.bf16.msra.mxu0 0
    %6773 = vmatprep.subr.bf16.mxu0 0
    %6774 = vmatpush1.bf16.msra.mxu0 0
    %6775 = vmatprep.subr.bf16.mxu0 %v6052
    %6776 = vmatpush1.bf16.msra.mxu0 %v6049
    %6777 = vmatprep.subr.bf16.mxu0 %v5462
    %6778 = vmatpush1.bf16.msra.mxu0 %v5461
    %6779 = vmatprep.subr.bf16.mxu0 0
    %6780 = vmatpush2.bf16.msra.mxu0 0
    %6781 = vmatprep.subr.bf16.mxu0 0
    %6782 = vmatpush2.bf16.msra.mxu0 0
    %6783 = vmatprep.subr.bf16.mxu0 0
    %6784 = vmatpush2.bf16.msra.mxu0 0
    %6785 = vmatprep.subr.bf16.mxu0 0
    %6786 = vmatpush2.bf16.msra.mxu0 0
    %6787 = vmatprep.subr.bf16.mxu0 0
    %6788 = vmatpush2.bf16.msra.mxu0 0
    %6789 = vmatprep.subr.bf16.mxu0 0
    %6790 = vmatpush2.bf16.msra.mxu0 0
    %6791 = vmatprep.subr.bf16.mxu0 0
    %6792 = vmatpush2.bf16.msra.mxu0 0
    %6793 = vmatprep.subr.bf16.mxu0 0
    %6794 = vmatpush2.bf16.msra.mxu0 0
    %6795 = vmatprep.mubr.bf16.mxu0 0
    %6796 = vmatmul.mubr.bf16.gmra.mxu0 %v6013
    %v6797 = vpop.f32.mrf.mxu0
    %v6798 = vpop.f32.mrf.mxu0
    %v6799 = vpop.f32.mrf.mxu0
    %v6800 = vadd.f32 %v6759, %v6799
    %v6801 = vpop.f32.mrf.mxu0
    %v6802 = vadd.f32 %v6761, %v6801
    %6803 = vdwg.mxu0
    %6804 = vmatprep.subr.bf16.mxu0 %v5064
    %6805 = vmatpush1.bf16.msra.mxu0 %v5063
    %6806 = vmatprep.subr.bf16.mxu0 %v5048
    %6807 = vmatpush1.bf16.msra.mxu0 %v5047
    %6808 = vmatprep.subr.bf16.mxu0 %v5032
    %6809 = vmatpush1.bf16.msra.mxu0 %v5031
    %6810 = vmatprep.subr.bf16.mxu0 %v5016
    %6811 = vmatpush1.bf16.msra.mxu0 %v5015
    %6812 = vmatprep.subr.bf16.mxu0 %v5000
    %6813 = vmatpush1.bf16.msra.mxu0 %v4999
    %6814 = vmatprep.subr.bf16.mxu0 %v4984
    %6815 = vmatpush1.bf16.msra.mxu0 %v4983
    %6816 = vmatprep.subr.bf16.mxu0 %v4968
    %6817 = vmatpush1.bf16.msra.mxu0 %v4967
    %6818 = vmatprep.subr.bf16.mxu0 %v4952
    %6819 = vmatpush1.bf16.msra.mxu0 %v4951
    %6820 = vmatprep.subr.bf16.mxu0 %v5192
    %6821 = vmatpush2.bf16.msra.mxu0 %v5191
    %6822 = vmatprep.subr.bf16.mxu0 %v5176
    %6823 = vmatpush2.bf16.msra.mxu0 %v5175
    %6824 = vmatprep.subr.bf16.mxu0 %v5160
    %6825 = vmatpush2.bf16.msra.mxu0 %v5159
    %6826 = vmatprep.subr.bf16.mxu0 %v5144
    %6827 = vmatpush2.bf16.msra.mxu0 %v5143
    %6828 = vmatprep.subr.bf16.mxu0 %v5128
    %6829 = vmatpush2.bf16.msra.mxu0 %v5127
    %6830 = vmatprep.subr.bf16.mxu0 %v5112
    %6831 = vmatpush2.bf16.msra.mxu0 %v5111
    %6832 = vmatprep.subr.bf16.mxu0 %v5096
    %6833 = vmatpush2.bf16.msra.mxu0 %v5095
    %6834 = vmatprep.subr.bf16.mxu0 %v5080
    %6835 = vmatpush2.bf16.msra.mxu0 %v5079
    %6836 = vmatprep.mubr.bf16.mxu0 %v2791
    %6837 = vmatmul.mubr.bf16.gmra.mxu0 %v2790
    %v6838 = vpop.f32.mrf.mxu0
    %v6839 = vpop.f32.mrf.mxu0
    %v6840 = vpop.f32.mrf.mxu0
    %v6841 = vadd.f32 0.0, %v6840
    %v6842 = vpop.f32.mrf.mxu0
    %v6843 = vadd.f32 0.0, %v6842
    %6844 = vdwg.mxu0
    %6845 = vmatprep.subr.bf16.mxu0 %v5320
    %6846 = vmatpush1.bf16.msra.mxu0 %v5319
    %6847 = vmatprep.subr.bf16.mxu0 %v5304
    %6848 = vmatpush1.bf16.msra.mxu0 %v5303
    %6849 = vmatprep.subr.bf16.mxu0 %v5288
    %6850 = vmatpush1.bf16.msra.mxu0 %v5287
    %6851 = vmatprep.subr.bf16.mxu0 %v5272
    %6852 = vmatpush1.bf16.msra.mxu0 %v5271
    %6853 = vmatprep.subr.bf16.mxu0 %v5256
    %6854 = vmatpush1.bf16.msra.mxu0 %v5255
    %6855 = vmatprep.subr.bf16.mxu0 %v5240
    %6856 = vmatpush1.bf16.msra.mxu0 %v5239
    %6857 = vmatprep.subr.bf16.mxu0 %v5224
    %6858 = vmatpush1.bf16.msra.mxu0 %v5223
    %6859 = vmatprep.subr.bf16.mxu0 %v5208
    %6860 = vmatpush1.bf16.msra.mxu0 %v5207
    %6861 = vmatprep.subr.bf16.mxu0 %v5448
    %6862 = vmatpush2.bf16.msra.mxu0 %v5447
    %6863 = vmatprep.subr.bf16.mxu0 %v5432
    %6864 = vmatpush2.bf16.msra.mxu0 %v5431
    %6865 = vmatprep.subr.bf16.mxu0 %v5416
    %6866 = vmatpush2.bf16.msra.mxu0 %v5415
    %6867 = vmatprep.subr.bf16.mxu0 %v5400
    %6868 = vmatpush2.bf16.msra.mxu0 %v5399
    %6869 = vmatprep.subr.bf16.mxu0 %v5384
    %6870 = vmatpush2.bf16.msra.mxu0 %v5383
    %6871 = vmatprep.subr.bf16.mxu0 %v5368
    %6872 = vmatpush2.bf16.msra.mxu0 %v5367
    %6873 = vmatprep.subr.bf16.mxu0 %v5352
    %6874 = vmatpush2.bf16.msra.mxu0 %v5351
    %6875 = vmatprep.subr.bf16.mxu0 %v5336
    %6876 = vmatpush2.bf16.msra.mxu0 %v5335
    %6877 = vmatprep.mubr.bf16.mxu0 %v2793
    %6878 = vmatmul.mubr.bf16.gmra.mxu0 %v2792
    %v6879 = vpop.f32.mrf.mxu0
    %v6880 = vpop.f32.mrf.mxu0
    %v6881 = vpop.f32.mrf.mxu0
    %v6882 = vadd.f32 %v6841, %v6881
    %v6883 = vpop.f32.mrf.mxu0
    %v6884 = vadd.f32 %v6843, %v6883
    %6885 = vdwg.mxu0
    %6886 = vmatprep.subr.bf16.mxu0 0
    %6887 = vmatpush1.bf16.msra.mxu0 0
    %6888 = vmatprep.subr.bf16.mxu0 0
    %6889 = vmatpush1.bf16.msra.mxu0 0
    %6890 = vmatprep.subr.bf16.mxu0 0
    %6891 = vmatpush1.bf16.msra.mxu0 0
    %6892 = vmatprep.subr.bf16.mxu0 0
    %6893 = vmatpush1.bf16.msra.mxu0 0
    %6894 = vmatprep.subr.bf16.mxu0 0
    %6895 = vmatpush1.bf16.msra.mxu0 0
    %6896 = vmatprep.subr.bf16.mxu0 0
    %6897 = vmatpush1.bf16.msra.mxu0 0
    %6898 = vmatprep.subr.bf16.mxu0 %v6058
    %6899 = vmatpush1.bf16.msra.mxu0 %v6055
    %6900 = vmatprep.subr.bf16.mxu0 %v5464
    %6901 = vmatpush1.bf16.msra.mxu0 %v5463
    %6902 = vmatprep.subr.bf16.mxu0 0
    %6903 = vmatpush2.bf16.msra.mxu0 0
    %6904 = vmatprep.subr.bf16.mxu0 0
    %6905 = vmatpush2.bf16.msra.mxu0 0
    %6906 = vmatprep.subr.bf16.mxu0 0
    %6907 = vmatpush2.bf16.msra.mxu0 0
    %6908 = vmatprep.subr.bf16.mxu0 0
    %6909 = vmatpush2.bf16.msra.mxu0 0
    %6910 = vmatprep.subr.bf16.mxu0 0
    %6911 = vmatpush2.bf16.msra.mxu0 0
    %6912 = vmatprep.subr.bf16.mxu0 0
    %6913 = vmatpush2.bf16.msra.mxu0 0
    %6914 = vmatprep.subr.bf16.mxu0 0
    %6915 = vmatpush2.bf16.msra.mxu0 0
    %6916 = vmatprep.subr.bf16.mxu0 0
    %6917 = vmatpush2.bf16.msra.mxu0 0
    %6918 = vmatprep.mubr.bf16.mxu0 0
    %6919 = vmatmul.mubr.bf16.gmra.mxu0 %v6013
    %v6920 = vpop.f32.mrf.mxu0
    %v6921 = vpop.f32.mrf.mxu0
    %v6922 = vpop.f32.mrf.mxu0
    %v6923 = vadd.f32 %v6882, %v6922
    %v6924 = vpop.f32.mrf.mxu0
    %v6925 = vadd.f32 %v6884, %v6924
    %6926 = vdwg.mxu0
    %6927 = vmatprep.subr.bf16.mxu0 %v5066
    %6928 = vmatpush1.bf16.msra.mxu0 %v5065
    %6929 = vmatprep.subr.bf16.mxu0 %v5050
    %6930 = vmatpush1.bf16.msra.mxu0 %v5049
    %6931 = vmatprep.subr.bf16.mxu0 %v5034
    %6932 = vmatpush1.bf16.msra.mxu0 %v5033
    %6933 = vmatprep.subr.bf16.mxu0 %v5018
    %6934 = vmatpush1.bf16.msra.mxu0 %v5017
    %6935 = vmatprep.subr.bf16.mxu0 %v5002
    %6936 = vmatpush1.bf16.msra.mxu0 %v5001
    %6937 = vmatprep.subr.bf16.mxu0 %v4986
    %6938 = vmatpush1.bf16.msra.mxu0 %v4985
    %6939 = vmatprep.subr.bf16.mxu0 %v4970
    %6940 = vmatpush1.bf16.msra.mxu0 %v4969
    %6941 = vmatprep.subr.bf16.mxu0 %v4954
    %6942 = vmatpush1.bf16.msra.mxu0 %v4953
    %6943 = vmatprep.subr.bf16.mxu0 %v5194
    %6944 = vmatpush2.bf16.msra.mxu0 %v5193
    %6945 = vmatprep.subr.bf16.mxu0 %v5178
    %6946 = vmatpush2.bf16.msra.mxu0 %v5177
    %6947 = vmatprep.subr.bf16.mxu0 %v5162
    %6948 = vmatpush2.bf16.msra.mxu0 %v5161
    %6949 = vmatprep.subr.bf16.mxu0 %v5146
    %6950 = vmatpush2.bf16.msra.mxu0 %v5145
    %6951 = vmatprep.subr.bf16.mxu0 %v5130
    %6952 = vmatpush2.bf16.msra.mxu0 %v5129
    %6953 = vmatprep.subr.bf16.mxu0 %v5114
    %6954 = vmatpush2.bf16.msra.mxu0 %v5113
    %6955 = vmatprep.subr.bf16.mxu0 %v5098
    %6956 = vmatpush2.bf16.msra.mxu0 %v5097
    %6957 = vmatprep.subr.bf16.mxu0 %v5082
    %6958 = vmatpush2.bf16.msra.mxu0 %v5081
    %6959 = vmatprep.mubr.bf16.mxu0 %v2791
    %6960 = vmatmul.mubr.bf16.gmra.mxu0 %v2790
    %v6961 = vpop.f32.mrf.mxu0
    %v6962 = vpop.f32.mrf.mxu0
    %v6963 = vpop.f32.mrf.mxu0
    %v6964 = vadd.f32 0.0, %v6963
    %v6965 = vpop.f32.mrf.mxu0
    %v6966 = vadd.f32 0.0, %v6965
    %6967 = vdwg.mxu0
    %6968 = vmatprep.subr.bf16.mxu0 %v5322
    %6969 = vmatpush1.bf16.msra.mxu0 %v5321
    %6970 = vmatprep.subr.bf16.mxu0 %v5306
    %6971 = vmatpush1.bf16.msra.mxu0 %v5305
    %6972 = vmatprep.subr.bf16.mxu0 %v5290
    %6973 = vmatpush1.bf16.msra.mxu0 %v5289
    %6974 = vmatprep.subr.bf16.mxu0 %v5274
    %6975 = vmatpush1.bf16.msra.mxu0 %v5273
    %6976 = vmatprep.subr.bf16.mxu0 %v5258
    %6977 = vmatpush1.bf16.msra.mxu0 %v5257
    %6978 = vmatprep.subr.bf16.mxu0 %v5242
    %6979 = vmatpush1.bf16.msra.mxu0 %v5241
    %6980 = vmatprep.subr.bf16.mxu0 %v5226
    %6981 = vmatpush1.bf16.msra.mxu0 %v5225
    %6982 = vmatprep.subr.bf16.mxu0 %v5210
    %6983 = vmatpush1.bf16.msra.mxu0 %v5209
    %6984 = vmatprep.subr.bf16.mxu0 %v5450
    %6985 = vmatpush2.bf16.msra.mxu0 %v5449
    %6986 = vmatprep.subr.bf16.mxu0 %v5434
    %6987 = vmatpush2.bf16.msra.mxu0 %v5433
    %6988 = vmatprep.subr.bf16.mxu0 %v5418
    %6989 = vmatpush2.bf16.msra.mxu0 %v5417
    %6990 = vmatprep.subr.bf16.mxu0 %v5402
    %6991 = vmatpush2.bf16.msra.mxu0 %v5401
    %6992 = vmatprep.subr.bf16.mxu0 %v5386
    %6993 = vmatpush2.bf16.msra.mxu0 %v5385
    %6994 = vmatprep.subr.bf16.mxu0 %v5370
    %6995 = vmatpush2.bf16.msra.mxu0 %v5369
    %6996 = vmatprep.subr.bf16.mxu0 %v5354
    %6997 = vmatpush2.bf16.msra.mxu0 %v5353
    %6998 = vmatprep.subr.bf16.mxu0 %v5338
    %6999 = vmatpush2.bf16.msra.mxu0 %v5337
    %7000 = vmatprep.mubr.bf16.mxu0 %v2793
    %7001 = vmatmul.mubr.bf16.gmra.mxu0 %v2792
    %v7002 = vpop.f32.mrf.mxu0
    %v7003 = vpop.f32.mrf.mxu0
    %v7004 = vpop.f32.mrf.mxu0
    %v7005 = vadd.f32 %v6964, %v7004
    %v7006 = vpop.f32.mrf.mxu0
    %v7007 = vadd.f32 %v6966, %v7006
    %7008 = vdwg.mxu0
    %7009 = vmatprep.subr.bf16.mxu0 0
    %7010 = vmatpush1.bf16.msra.mxu0 0
    %7011 = vmatprep.subr.bf16.mxu0 0
    %7012 = vmatpush1.bf16.msra.mxu0 0
    %7013 = vmatprep.subr.bf16.mxu0 0
    %7014 = vmatpush1.bf16.msra.mxu0 0
    %7015 = vmatprep.subr.bf16.mxu0 0
    %7016 = vmatpush1.bf16.msra.mxu0 0
    %7017 = vmatprep.subr.bf16.mxu0 0
    %7018 = vmatpush1.bf16.msra.mxu0 0
    %7019 = vmatprep.subr.bf16.mxu0 0
    %7020 = vmatpush1.bf16.msra.mxu0 0
    %7021 = vmatprep.subr.bf16.mxu0 %v6064
    %7022 = vmatpush1.bf16.msra.mxu0 %v6061
    %7023 = vmatprep.subr.bf16.mxu0 %v5466
    %7024 = vmatpush1.bf16.msra.mxu0 %v5465
    %7025 = vmatprep.subr.bf16.mxu0 0
    %7026 = vmatpush2.bf16.msra.mxu0 0
    %7027 = vmatprep.subr.bf16.mxu0 0
    %7028 = vmatpush2.bf16.msra.mxu0 0
    %7029 = vmatprep.subr.bf16.mxu0 0
    %7030 = vmatpush2.bf16.msra.mxu0 0
    %7031 = vmatprep.subr.bf16.mxu0 0
    %7032 = vmatpush2.bf16.msra.mxu0 0
    %7033 = vmatprep.subr.bf16.mxu0 0
    %7034 = vmatpush2.bf16.msra.mxu0 0
    %7035 = vmatprep.subr.bf16.mxu0 0
    %7036 = vmatpush2.bf16.msra.mxu0 0
    %7037 = vmatprep.subr.bf16.mxu0 0
    %7038 = vmatpush2.bf16.msra.mxu0 0
    %7039 = vmatprep.subr.bf16.mxu0 0
    %7040 = vmatpush2.bf16.msra.mxu0 0
    %7041 = vmatprep.mubr.bf16.mxu0 0
    %7042 = vmatmul.mubr.bf16.gmra.mxu0 %v6013
    %v7043 = vpop.f32.mrf.mxu0
    %v7044 = vpop.f32.mrf.mxu0
    %v7045 = vpop.f32.mrf.mxu0
    %v7046 = vadd.f32 %v7005, %v7045
    %v7047 = vpop.f32.mrf.mxu0
    %v7048 = vadd.f32 %v7007, %v7047
    %7049 = vdwg.mxu0
    %v7050 = vld [vmem:[#allocation9] sm:$0x1]
    %v7051 = vadd.f32 %v7050, %v6183
    %v7054 = vunpack.c.l.s4 1966171168
    %v7055 = vunpack.c.0.s8 %v7054
    %v7056 = vlaneseq
    %v7057 = vshrl.u32 %v7056, 7
    %v7058 = vsub.s32 %v7055, %v7057
    %v7059 = vrot.slane %v6185, %v7058
    %v7060 = vcombine.high %v7059, %v7059
    %v7062 = vunpack.c.l.s4 1966171168
    %v7063 = vunpack.c.0.s8 %v7062
    %v7064 = vlaneseq
    %v7065 = vshrl.u32 %v7064, 7
    %v7066 = vsub.s32 %v7063, %v7065
    %v7067 = vrot.slane %v7060, %v7066
    %v7069 = vadd.f32 %v7051, %v7067
    %v7072 = vunpack.c.l.s4 1966171168
    %v7073 = vunpack.c.0.s8 %v7072
    %v7074 = vlaneseq
    %v7075 = vshrl.u32 %v7074, 7
    %v7076 = vsub.s32 %v7073, %v7075
    %v7077 = vrot.slane %v6306, %v7076
    %v7079 = vunpack.c.l.s4 1966171168
    %v7080 = vunpack.c.0.s8 %v7079
    %v7081 = vlaneseq
    %v7082 = vshrl.u32 %v7081, 7
    %v7083 = vsub.s32 %v7080, %v7082
    %v7084 = vrot.slane %v7077, %v7083
    %v7085 = vcombine.high %v7084, %v7084
    %v7087 = vadd.f32 %v7069, %v7085
    %v7090 = vunpack.c.l.s4 1966171168
    %v7091 = vunpack.c.0.s8 %v7090
    %v7092 = vlaneseq
    %v7093 = vshrl.u32 %v7092, 7
    %v7094 = vsub.s32 %v7091, %v7093
    %v7095 = vrot.slane %v6308, %v7094
    %v7096 = vcombine.high %v7095, %v7095
    %v7098 = vunpack.c.l.s4 1966171168
    %v7099 = vunpack.c.0.s8 %v7098
    %v7100 = vlaneseq
    %v7101 = vshrl.u32 %v7100, 7
    %v7102 = vsub.s32 %v7099, %v7101
    %v7103 = vrot.slane %v7096, %v7102
    %v7104 = vcombine.high %v7103, %v7103
    %v7106 = vadd.f32 %v7087, %v7104
    %v7108 = vcombine.high %v6429, %v6429
    %v7110 = vunpack.c.l.s4 1966171168
    %v7111 = vunpack.c.0.s8 %v7110
    %v7112 = vlaneseq
    %v7113 = vshrl.u32 %v7112, 7
    %v7114 = vsub.s32 %v7111, %v7113
    %v7115 = vrot.slane %v7108, %v7114
    %v7117 = vunpack.c.l.s4 1966171168
    %v7118 = vunpack.c.0.s8 %v7117
    %v7119 = vlaneseq
    %v7120 = vshrl.u32 %v7119, 7
    %v7121 = vsub.s32 %v7118, %v7120
    %v7122 = vrot.slane %v7115, %v7121
    %v7124 = vadd.f32 %v7106, %v7122
    %v7126 = vcombine.high %v6431, %v6431
    %v7128 = vunpack.c.l.s4 1966171168
    %v7129 = vunpack.c.0.s8 %v7128
    %v7130 = vlaneseq
    %v7131 = vshrl.u32 %v7130, 7
    %v7132 = vsub.s32 %v7129, %v7131
    %v7133 = vrot.slane %v7126, %v7132
    %v7134 = vcombine.high %v7133, %v7133
    %v7136 = vunpack.c.l.s4 1966171168
    %v7137 = vunpack.c.0.s8 %v7136
    %v7138 = vlaneseq
    %v7139 = vshrl.u32 %v7138, 7
    %v7140 = vsub.s32 %v7137, %v7139
    %v7141 = vrot.slane %v7134, %v7140
    %v7143 = vadd.f32 %v7124, %v7141
    %v7145 = vcombine.high %v6552, %v6552
    %v7147 = vunpack.c.l.s4 1966171168
    %v7148 = vunpack.c.0.s8 %v7147
    %v7149 = vlaneseq
    %v7150 = vshrl.u32 %v7149, 7
    %v7151 = vsub.s32 %v7148, %v7150
    %v7152 = vrot.slane %v7145, %v7151
    %v7154 = vunpack.c.l.s4 1966171168
    %v7155 = vunpack.c.0.s8 %v7154
    %v7156 = vlaneseq
    %v7157 = vshrl.u32 %v7156, 7
    %v7158 = vsub.s32 %v7155, %v7157
    %v7159 = vrot.slane %v7152, %v7158
    %v7160 = vcombine.high %v7159, %v7159
    %v7162 = vadd.f32 %v7143, %v7160
    %v7164 = vcombine.high %v6554, %v6554
    %v7166 = vunpack.c.l.s4 1966171168
    %v7167 = vunpack.c.0.s8 %v7166
    %v7168 = vlaneseq
    %v7169 = vshrl.u32 %v7168, 7
    %v7170 = vsub.s32 %v7167, %v7169
    %v7171 = vrot.slane %v7164, %v7170
    %v7172 = vcombine.high %v7171, %v7171
    %v7174 = vunpack.c.l.s4 1966171168
    %v7175 = vunpack.c.0.s8 %v7174
    %v7176 = vlaneseq
    %v7177 = vshrl.u32 %v7176, 7
    %v7178 = vsub.s32 %v7175, %v7177
    %v7179 = vrot.slane %v7172, %v7178
    %v7180 = vcombine.high %v7179, %v7179
    %v7182 = vadd.f32 %v7162, %v7180
    %v7183 = vadd.f32 %v7182, %v6677
    %v7186 = vunpack.c.l.s4 1966171168
    %v7187 = vunpack.c.0.s8 %v7186
    %v7188 = vlaneseq
    %v7189 = vshrl.u32 %v7188, 7
    %v7190 = vsub.s32 %v7187, %v7189
    %v7191 = vrot.slane %v6679, %v7190
    %v7192 = vcombine.high %v7191, %v7191
    %v7194 = vunpack.c.l.s4 1966171168
    %v7195 = vunpack.c.0.s8 %v7194
    %v7196 = vlaneseq
    %v7197 = vshrl.u32 %v7196, 7
    %v7198 = vsub.s32 %v7195, %v7197
    %v7199 = vrot.slane %v7192, %v7198
    %v7201 = vadd.f32 %v7183, %v7199
    %v7204 = vunpack.c.l.s4 1966171168
    %v7205 = vunpack.c.0.s8 %v7204
    %v7206 = vlaneseq
    %v7207 = vshrl.u32 %v7206, 7
    %v7208 = vsub.s32 %v7205, %v7207
    %v7209 = vrot.slane %v6800, %v7208
    %v7211 = vunpack.c.l.s4 1966171168
    %v7212 = vunpack.c.0.s8 %v7211
    %v7213 = vlaneseq
    %v7214 = vshrl.u32 %v7213, 7
    %v7215 = vsub.s32 %v7212, %v7214
    %v7216 = vrot.slane %v7209, %v7215
    %v7217 = vcombine.high %v7216, %v7216
    %v7219 = vadd.f32 %v7201, %v7217
    %v7222 = vunpack.c.l.s4 1966171168
    %v7223 = vunpack.c.0.s8 %v7222
    %v7224 = vlaneseq
    %v7225 = vshrl.u32 %v7224, 7
    %v7226 = vsub.s32 %v7223, %v7225
    %v7227 = vrot.slane %v6802, %v7226
    %v7228 = vcombine.high %v7227, %v7227
    %v7230 = vunpack.c.l.s4 1966171168
    %v7231 = vunpack.c.0.s8 %v7230
    %v7232 = vlaneseq
    %v7233 = vshrl.u32 %v7232, 7
    %v7234 = vsub.s32 %v7231, %v7233
    %v7235 = vrot.slane %v7228, %v7234
    %v7236 = vcombine.high %v7235, %v7235
    %v7238 = vadd.f32 %v7219, %v7236
    %v7240 = vcombine.high %v6923, %v6923
    %v7242 = vunpack.c.l.s4 1966171168
    %v7243 = vunpack.c.0.s8 %v7242
    %v7244 = vlaneseq
    %v7245 = vshrl.u32 %v7244, 7
    %v7246 = vsub.s32 %v7243, %v7245
    %v7247 = vrot.slane %v7240, %v7246
    %v7249 = vunpack.c.l.s4 1966171168
    %v7250 = vunpack.c.0.s8 %v7249
    %v7251 = vlaneseq
    %v7252 = vshrl.u32 %v7251, 7
    %v7253 = vsub.s32 %v7250, %v7252
    %v7254 = vrot.slane %v7247, %v7253
    %v7256 = vadd.f32 %v7238, %v7254
    %v7258 = vcombine.high %v6925, %v6925
    %v7260 = vunpack.c.l.s4 1966171168
    %v7261 = vunpack.c.0.s8 %v7260
    %v7262 = vlaneseq
    %v7263 = vshrl.u32 %v7262, 7
    %v7264 = vsub.s32 %v7261, %v7263
    %v7265 = vrot.slane %v7258, %v7264
    %v7266 = vcombine.high %v7265, %v7265
    %v7268 = vunpack.c.l.s4 1966171168
    %v7269 = vunpack.c.0.s8 %v7268
    %v7270 = vlaneseq
    %v7271 = vshrl.u32 %v7270, 7
    %v7272 = vsub.s32 %v7269, %v7271
    %v7273 = vrot.slane %v7266, %v7272
    %v7275 = vadd.f32 %v7256, %v7273
    %v7277 = vcombine.high %v7046, %v7046
    %v7279 = vunpack.c.l.s4 1966171168
    %v7280 = vunpack.c.0.s8 %v7279
    %v7281 = vlaneseq
    %v7282 = vshrl.u32 %v7281, 7
    %v7283 = vsub.s32 %v7280, %v7282
    %v7284 = vrot.slane %v7277, %v7283
    %v7286 = vunpack.c.l.s4 1966171168
    %v7287 = vunpack.c.0.s8 %v7286
    %v7288 = vlaneseq
    %v7289 = vshrl.u32 %v7288, 7
    %v7290 = vsub.s32 %v7287, %v7289
    %v7291 = vrot.slane %v7284, %v7290
    %v7292 = vcombine.high %v7291, %v7291
    %v7294 = vadd.f32 %v7275, %v7292
    %v7296 = vcombine.high %v7048, %v7048
    %v7298 = vunpack.c.l.s4 1966171168
    %v7299 = vunpack.c.0.s8 %v7298
    %v7300 = vlaneseq
    %v7301 = vshrl.u32 %v7300, 7
    %v7302 = vsub.s32 %v7299, %v7301
    %v7303 = vrot.slane %v7296, %v7302
    %v7304 = vcombine.high %v7303, %v7303
    %v7306 = vunpack.c.l.s4 1966171168
    %v7307 = vunpack.c.0.s8 %v7306
    %v7308 = vlaneseq
    %v7309 = vshrl.u32 %v7308, 7
    %v7310 = vsub.s32 %v7307, %v7309
    %v7311 = vrot.slane %v7304, %v7310
    %v7312 = vcombine.high %v7311, %v7311
    %v7314 = vadd.f32 %v7294, %v7312
    %v7315 = vmax.f32 %v7314, 0.0
    %v7316 = vpack.c.bf16 %v7315, %v7315
    %v7317 = vld [vmem:[#allocation11] sm:$0xf]
    %v7318 = vld [vmem:[#allocation11 + $0x4] sm:$0xf]
    %v7319 = vld [vmem:[#allocation11 + $0x8] sm:$0xf]
    %v7320 = vld [vmem:[#allocation11 + $0xc] sm:$0xf]
    %v7321 = vld [vmem:[#allocation11 + $0x10] sm:$0xf]
    %v7322 = vld [vmem:[#allocation11 + $0x14] sm:$0xf]
    %v7323 = vld [vmem:[#allocation11 + $0x18] sm:$0xf]
    %v7324 = vld [vmem:[#allocation11 + $0x1c] sm:$0xf]
    %v7325 = vld [vmem:[#allocation11 + $0x20] sm:$0xf]
    %v7326 = vld [vmem:[#allocation11 + $0x24] sm:$0xf]
    %v7327 = vld [vmem:[#allocation11 + $0x28] sm:$0xf]
    %v7328 = vld [vmem:[#allocation11 + $0x2c] sm:$0xf]
    %v7329 = vld [vmem:[#allocation11 + $0x30] sm:$0xf]
    %v7330 = vld [vmem:[#allocation11 + $0x34] sm:$0xf]
    %v7331 = vld [vmem:[#allocation11 + $0x38] sm:$0xf]
    %v7332 = vld [vmem:[#allocation11 + $0x3c] sm:$0xf]
    %v7333 = vld [vmem:[#allocation12] sm:$0x1]
    %v7350 = vunpack.c.l.b16 %v7317
    %v7351 = vunpack.c.l.b16 %v7318
    %v7352 = vunpack.c.l.b16 %v7319
    %v7353 = vunpack.c.l.b16 %v7320
    %v7354 = vunpack.c.l.b16 %v7321
    %v7355 = vunpack.c.l.b16 %v7322
    %v7356 = vunpack.c.l.b16 %v7323
    %v7357 = vunpack.c.l.b16 %v7324
    %v7358 = vunpack.c.l.b16 %v7325
    %v7359 = vunpack.c.l.b16 %v7326
    %v7360 = vunpack.c.l.b16 %v7327
    %v7361 = vunpack.c.l.b16 %v7328
    %v7362 = vunpack.c.l.b16 %v7329
    %v7363 = vunpack.c.l.b16 %v7330
    %v7364 = vunpack.c.l.b16 %v7331
    %v7365 = vunpack.c.l.b16 %v7332
    %v7366 = vpack.c.b16 %v7351, %v7350
    %v7367 = vpack.c.b16 %v7353, %v7352
    %v7368 = vpack.c.b16 %v7355, %v7354
    %v7369 = vpack.c.b16 %v7357, %v7356
    %v7370 = vpack.c.b16 %v7359, %v7358
    %v7371 = vpack.c.b16 %v7361, %v7360
    %v7372 = vpack.c.b16 %v7363, %v7362
    %v7373 = vpack.c.b16 %v7365, %v7364
    %7382 = vmatprep.subr.bf16.mxu0 0
    %7383 = vmatpush1.bf16.msra.mxu0 %v7373
    %7384 = vmatprep.subr.bf16.mxu0 0
    %7385 = vmatpush1.bf16.msra.mxu0 %v7372
    %7386 = vmatprep.subr.bf16.mxu0 0
    %7387 = vmatpush1.bf16.msra.mxu0 %v7371
    %7388 = vmatprep.subr.bf16.mxu0 0
    %7389 = vmatpush1.bf16.msra.mxu0 %v7370
    %7390 = vmatprep.subr.bf16.mxu0 0
    %7391 = vmatpush1.bf16.msra.mxu0 %v7369
    %7392 = vmatprep.subr.bf16.mxu0 0
    %7393 = vmatpush1.bf16.msra.mxu0 %v7368
    %7394 = vmatprep.subr.bf16.mxu0 0
    %7395 = vmatpush1.bf16.msra.mxu0 %v7367
    %7396 = vmatprep.subr.bf16.mxu0 0
    %7397 = vmatpush1.bf16.msra.mxu0 %v7366
    %7398 = vmatprep.subr.bf16.mxu0 0
    %7399 = vmatpush2.bf16.msra.mxu0 0
    %7400 = vmatprep.subr.bf16.mxu0 0
    %7401 = vmatpush2.bf16.msra.mxu0 0
    %7402 = vmatprep.subr.bf16.mxu0 0
    %7403 = vmatpush2.bf16.msra.mxu0 0
    %7404 = vmatprep.subr.bf16.mxu0 0
    %7405 = vmatpush2.bf16.msra.mxu0 0
    %7406 = vmatprep.subr.bf16.mxu0 0
    %7407 = vmatpush2.bf16.msra.mxu0 0
    %7408 = vmatprep.subr.bf16.mxu0 0
    %7409 = vmatpush2.bf16.msra.mxu0 0
    %7410 = vmatprep.subr.bf16.mxu0 0
    %7411 = vmatpush2.bf16.msra.mxu0 0
    %7412 = vmatprep.subr.bf16.mxu0 0
    %7413 = vmatpush2.bf16.msra.mxu0 0
    %7414 = vmatprep.mubr.bf16.mxu0 0
    %7415 = vmatmul.mubr.bf16.gmra.mxu0 %v7316
    %v7416 = vpop.f32.mrf.mxu0
    %v7417 = vadd.f32 %v7333, %v7416
    %v7418 = vpop.f32.mrf.mxu0
    %v7419 = vpop.f32.mrf.mxu0
    %v7420 = vpop.f32.mrf.mxu0
    %7421 = vdwg.mxu0
    %v7422 = vmax.f32 %v7417, 0.0
    %v7423 = vpack.c.bf16 %v7422, %v7422
    %v7424 = vld [vmem:[#allocation14] sm:$0xf]
    %v7425 = vld [vmem:[#allocation14 + $0x4] sm:$0xf]
    %v7426 = vld [vmem:[#allocation14 + $0x8] sm:$0xf]
    %v7427 = vld [vmem:[#allocation14 + $0xc] sm:$0xf]
    %v7428 = vld [vmem:[#allocation14 + $0x10] sm:$0xf]
    %v7429 = vld [vmem:[#allocation14 + $0x14] sm:$0xf]
    %v7430 = vld [vmem:[#allocation14 + $0x18] sm:$0xf]
    %v7431 = vld [vmem:[#allocation14 + $0x1c] sm:$0xf]
    %v7432 = vld [vmem:[#allocation14 + $0x20] sm:$0xf]
    %v7433 = vld [vmem:[#allocation14 + $0x24] sm:$0xf]
    %v7434 = vld [vmem:[#allocation14 + $0x28] sm:$0xf]
    %v7435 = vld [vmem:[#allocation14 + $0x2c] sm:$0xf]
    %v7436 = vld [vmem:[#allocation14 + $0x30] sm:$0xf]
    %v7437 = vld [vmem:[#allocation14 + $0x34] sm:$0xf]
    %v7438 = vld [vmem:[#allocation14 + $0x38] sm:$0xf]
    %v7439 = vld [vmem:[#allocation14 + $0x3c] sm:$0xf]
    %v7440 = vld [vmem:[#allocation15] sm:$0x1]
    %v7457 = vunpack.c.l.b16 %v7424
    %v7458 = vunpack.c.l.b16 %v7425
    %v7459 = vunpack.c.l.b16 %v7426
    %v7460 = vunpack.c.l.b16 %v7427
    %v7461 = vunpack.c.l.b16 %v7428
    %v7462 = vunpack.c.l.b16 %v7429
    %v7463 = vunpack.c.l.b16 %v7430
    %v7464 = vunpack.c.l.b16 %v7431
    %v7465 = vunpack.c.l.b16 %v7432
    %v7466 = vunpack.c.l.b16 %v7433
    %v7467 = vunpack.c.l.b16 %v7434
    %v7468 = vunpack.c.l.b16 %v7435
    %v7469 = vunpack.c.l.b16 %v7436
    %v7470 = vunpack.c.l.b16 %v7437
    %v7471 = vunpack.c.l.b16 %v7438
    %v7472 = vunpack.c.l.b16 %v7439
    %v7473 = vpack.c.b16 %v7458, %v7457
    %v7474 = vpack.c.b16 %v7460, %v7459
    %v7475 = vpack.c.b16 %v7462, %v7461
    %v7476 = vpack.c.b16 %v7464, %v7463
    %v7477 = vpack.c.b16 %v7466, %v7465
    %v7478 = vpack.c.b16 %v7468, %v7467
    %v7479 = vpack.c.b16 %v7470, %v7469
    %v7480 = vpack.c.b16 %v7472, %v7471
    %7489 = vmatprep.subr.bf16.mxu0 0
    %7490 = vmatpush1.bf16.msra.mxu0 %v7480
    %7491 = vmatprep.subr.bf16.mxu0 0
    %7492 = vmatpush1.bf16.msra.mxu0 %v7479
    %7493 = vmatprep.subr.bf16.mxu0 0
    %7494 = vmatpush1.bf16.msra.mxu0 %v7478
    %7495 = vmatprep.subr.bf16.mxu0 0
    %7496 = vmatpush1.bf16.msra.mxu0 %v7477
    %7497 = vmatprep.subr.bf16.mxu0 0
    %7498 = vmatpush1.bf16.msra.mxu0 %v7476
    %7499 = vmatprep.subr.bf16.mxu0 0
    %7500 = vmatpush1.bf16.msra.mxu0 %v7475
    %7501 = vmatprep.subr.bf16.mxu0 0
    %7502 = vmatpush1.bf16.msra.mxu0 %v7474
    %7503 = vmatprep.subr.bf16.mxu0 0
    %7504 = vmatpush1.bf16.msra.mxu0 %v7473
    %7505 = vmatprep.subr.bf16.mxu0 0
    %7506 = vmatpush2.bf16.msra.mxu0 0
    %7507 = vmatprep.subr.bf16.mxu0 0
    %7508 = vmatpush2.bf16.msra.mxu0 0
    %7509 = vmatprep.subr.bf16.mxu0 0
    %7510 = vmatpush2.bf16.msra.mxu0 0
    %7511 = vmatprep.subr.bf16.mxu0 0
    %7512 = vmatpush2.bf16.msra.mxu0 0
    %7513 = vmatprep.subr.bf16.mxu0 0
    %7514 = vmatpush2.bf16.msra.mxu0 0
    %7515 = vmatprep.subr.bf16.mxu0 0
    %7516 = vmatpush2.bf16.msra.mxu0 0
    %7517 = vmatprep.subr.bf16.mxu0 0
    %7518 = vmatpush2.bf16.msra.mxu0 0
    %7519 = vmatprep.subr.bf16.mxu0 0
    %7520 = vmatpush2.bf16.msra.mxu0 0
    %7521 = vmatprep.mubr.bf16.mxu0 0
    %7522 = vmatmul.mubr.bf16.gmra.mxu0 %v7423
    %v7523 = vpop.f32.mrf.mxu0
    %v7524 = vadd.f32 %v7440, %v7523
    %v7525 = vpop.f32.mrf.mxu0
    %v7526 = vpop.f32.mrf.mxu0
    %v7527 = vpop.f32.mrf.mxu0
    %7528 = vdwg.mxu0
    %7529 = vst [vmem:[%s11] sm:$0x1] %v7524
    // Predicated region
    $region78: #{net_forward.1} parent=1 // pred_check
      _
    $region79: #{net_forward.1} parent=1 // pred_check_branch
      %7531 = sbr.rel (0) target = $region81
    $region80: #{net_forward.1} parent=1 // pred_region
      _
    $region81: #{net_forward.1} parent=1 // pred_fallthru
      _
    // Predicated region
    $region82: #{net_forward.1} parent=1 // pred_check
      _
    $region83: #{net_forward.1} parent=1 // pred_check_branch
      %7533 = sbr.rel (0) target = $region85
    $region84: #{net_forward.1} parent=1 // pred_region
      _
    $region85: #{net_forward.1} parent=1 // pred_fallthru
      _
    %7534 = vsyncpa [#allocation5], 1
    %7535 = vsyncpa [#allocation7], 1
    %7536 = vsyncpa [#allocation10], 1
    %7537 = vsyncpa [#allocation13], 1
    %7538 = vsyncpa [#allocation16], 1

</llo_original>
